<compile_context>
chip_gen: v5e
topology: v5e:2x2
jax: 0.10.0
libtpu: 0.0.40
codegen_flags: <defaults>
</compile_context>

<pallas_src>
import jax
import jax.numpy as jnp
from jax.experimental import pallas as pl
from jax.experimental.pallas import tpu as pltpu

TM_GEMM = 512          # GEMM row tile (M)
ROW_TILE_EW = 1024     # max row tile for the elementwise BN/ReLU pass
VMEM_LIMIT = 32 * 1024 * 1024


def _round_up(x, m):
    return (x + m - 1) // m * m


def _pad_rows(m):
    """Row padding for GEMM M: multiples of 512 (big) / 128 (small)."""
    if m >= TM_GEMM:
        return _round_up(m, TM_GEMM)
    return _round_up(m, 128)


def _pick_rows(r):
    for te in (ROW_TILE_EW, 512, 256, 128, 64, 32, 16, 8):
        if r >= te and r % te == 0:
            return te
    return r


# ---------------------------------------------------------------------------
# Pallas kernels
# ---------------------------------------------------------------------------

def _gemm_bn_stats_kernel(a_ref, b_ref, y_ref, st_ref):
    """Y = A @ B (bf16 in, f32 acc) + per-block column sum / sum-of-squares."""
    acc = jnp.dot(a_ref[0], b_ref[0], preferred_element_type=jnp.float32)
    y_ref[...] = acc[None].astype(y_ref.dtype)
    n = acc.shape[1]
    s = jnp.sum(acc, axis=0, keepdims=True)
    sq = jnp.sum(acc * acc, axis=0, keepdims=True)
    pad = jnp.zeros((6, n), jnp.float32)
    st_ref[...] = jnp.concatenate([s, sq, pad], axis=0)[None, None]


def _gemm_tanh_kernel(a_ref, b_ref, y_ref):
    """Y = tanh(A @ B): final layer, activation fused into the epilogue."""
    acc = jnp.dot(a_ref[0], b_ref[0], preferred_element_type=jnp.float32)
    y_ref[...] = jnp.tanh(acc)[None].astype(y_ref.dtype)


def _bn_relu_kernel(y_ref, sc_ref, sh_ref, o_ref):
    y = y_ref[...].astype(jnp.float32)
    o_ref[...] = jnp.maximum(y * sc_ref[...] + sh_ref[...], 0.0).astype(o_ref.dtype)


def pallas_convt_gemm(a, b, *, fuse_bn_stats, out_dtype):
    """Batched GEMM.  a: [B, Mp, K] bf16, b: [B, K, N] bf16.

    fuse_bn_stats=True : returns (Y [B,Mp,N], stats [B,G,8,N]) where
                         stats[...,0,:] / stats[...,1,:] are per-M-block
                         column sums / sums of squares (f32).
    fuse_bn_stats=False: returns tanh(A@B)  (final layer).
    """
    bb, mp, k = a.shape
    _, _, np_ = b.shape
    tm = TM_GEMM if mp >= TM_GEMM else mp
    g = mp // tm
    a_spec = pl.BlockSpec((1, tm, k), lambda bi, i: (bi, i, 0))
    b_spec = pl.BlockSpec((1, k, np_), lambda bi, i: (bi, 0, 0))   # resident B
    y_spec = pl.BlockSpec((1, tm, np_), lambda bi, i: (bi, i, 0))

    if fuse_bn_stats:
        kernel = _gemm_bn_stats_kernel
        out_shape = (jax.ShapeDtypeStruct((bb, mp, np_), out_dtype),
                     jax.ShapeDtypeStruct((bb, g, 8, np_), jnp.float32))
        out_specs = (y_spec,
                     pl.BlockSpec((1, 1, 8, np_), lambda bi, i: (bi, i, 0, 0)))
    else:
        kernel = _gemm_tanh_kernel
        out_shape = jax.ShapeDtypeStruct((bb, mp, np_), out_dtype)
        out_specs = y_spec

    return pl.pallas_call(
        kernel,
        out_shape=out_shape,
        grid_spec=pltpu.PrefetchScalarGridSpec(
            num_scalar_prefetch=0,
            grid=(bb, g),
            in_specs=[a_spec, b_spec],
            out_specs=out_specs),
        compiler_params=pltpu.CompilerParams(
            dimension_semantics=("parallel", "parallel"),
            vmem_limit_bytes=VMEM_LIMIT),
    )(a, b)


def pallas_bn_relu(y2d, scale_col, shift_col):
    """y2d: [R, C] bf16; scale_col/shift_col: [C] f32 (per GEMM column).

    Small-C tensors are repacked lane-dense as [R*C/128, 128] with the
    scale/shift tiled 128/C times, so the mem-bound pass uses full lanes.
    """
    r0, c0 = y2d.shape
    y = y2d
    sc = scale_col.astype(jnp.float32)
    sh = shift_col.astype(jnp.float32)
    if c0 < 128 and 128 % c0 == 0 and (r0 * c0) % 128 == 0:
        rep = 128 // c0
        y = y.reshape(r0 * c0 // 128, 128)
        sc = jnp.tile(sc, rep)
        sh = jnp.tile(sh, rep)
    r, c = y.shape
    te = _pick_rows(r)
    out = pl.pallas_call(
        _bn_relu_kernel,
        out_shape=jax.ShapeDtypeStruct((r, c), jnp.bfloat16),
        grid_spec=pltpu.PrefetchScalarGridSpec(
            num_scalar_prefetch=0,
            grid=(r // te,),
            in_specs=[pl.BlockSpec((te, c), lambda i: (i, 0)),
                      pl.BlockSpec((1, c), lambda i: (0, 0)),
                      pl.BlockSpec((1, c), lambda i: (0, 0))],
            out_specs=pl.BlockSpec((te, c), lambda i: (i, 0))),
        compiler_params=pltpu.CompilerParams(
            dimension_semantics=("parallel",),
            vmem_limit_bytes=VMEM_LIMIT),
    )(y, sc[None, :], sh[None, :])
    return out.reshape(r0, c0)


# ---------------------------------------------------------------------------
# ConvTranspose2d(k=4, s=2, p=1) via subpixel (output-parity) decomposition
# ---------------------------------------------------------------------------

def _subpixel_lower(x_nhwc, w):
    """x: [N,H,W,Cin] bf16, w: [Cin,Cout,4,4] -> A [4, N*H*W, 4Cin], B [4, 4Cin, Cout].

    Output parity (rh, rw) -> y[n, 2h+rh, 2w+rw, :] = A_p[n*H*W + h*W + w] @ B_p.
    Each parity only needs 2x2 kernel taps (no structural zeros).
    """
    n, h, wd, cin = x_nhwc.shape
    _, cout, k, _ = w.shape
    assert k == 4
    xp = jnp.pad(x_nhwc, ((0, 0), (1, 1), (1, 1), (0, 0)))
    a_parts, b_parts = [], []
    for rh in range(2):
        for rw in range(2):
            taps = [xp[:, rh + th: rh + th + h, rw + tw: rw + tw + wd, :]
                    for th in range(2) for tw in range(2)]
            a = jnp.stack(taps, axis=3).reshape(n * h * wd, 4 * cin)
            # tap (th, tw) pairs with kernel element (3-rh-2*th, 3-rw-2*tw)
            wsub = w[:, :, (3 - rh)::-2, (3 - rw)::-2]            # [Cin,Cout,2,2]
            bm = jnp.transpose(wsub, (2, 3, 0, 1)).reshape(4 * cin, cout)
            a_parts.append(a)
            b_parts.append(bm)
    a_all = jnp.stack(a_parts, axis=0).astype(jnp.bfloat16)
    b_all = jnp.stack(b_parts, axis=0).astype(jnp.bfloat16)
    return a_all, b_all


def _interleave_parities(y4, n, h, w, cout):
    """y4: [4, N*H*W, Cout] (parity = 2*rh + rw) -> [N, 2H, 2W, Cout]."""
    y = y4.reshape(2, 2, n, h, w, cout)
    y = jnp.transpose(y, (2, 3, 0, 4, 1, 5))
    return y.reshape(n, 2 * h, 2 * w, cout)


# ---------------------------------------------------------------------------
# Generator forward
# ---------------------------------------------------------------------------

def generator_forward(z, params):
    ws, gammas, betas = params["w"], params["gamma"], params["beta"]
    n_layers = len(ws)
    n = z.shape[0]
    eps = 1e-5

    # ---- layer 0: ConvTranspose2d(stride=1, pad=0) on a 1x1 input ---------
    w0 = ws[0]
    cin0, cout0, k, _ = w0.shape
    a0 = z.reshape(n, cin0).astype(jnp.bfloat16)
    b0 = jnp.transpose(w0, (0, 2, 3, 1)).reshape(cin0, k * k * cout0)
    mp0 = _pad_rows(n)
    a0 = jnp.pad(a0, ((0, mp0 - n), (0, 0)))
    y, st = pallas_convt_gemm(a0[None], b0.astype(jnp.bfloat16)[None],
                              fuse_bn_stats=True, out_dtype=jnp.bfloat16)
    cs = st[:, :, 0, :].sum(axis=(0, 1)).reshape(k * k, cout0).sum(axis=0)
    cq = st[:, :, 1, :].sum(axis=(0, 1)).reshape(k * k, cout0).sum(axis=0)
    cnt = n * k * k
    mean = cs / cnt
    var = jnp.maximum(cq / cnt - mean * mean, 0.0)   # biased (train-mode BN)
    scale = gammas[0] * jax.lax.rsqrt(var + eps)
    shift = betas[0] - mean * scale
    yact = pallas_bn_relu(y[0], jnp.tile(scale, k * k), jnp.tile(shift, k * k))
    x = yact[:n].reshape(n, k, k, cout0)             # NHWC

    # ---- layers 1..L-1: ConvTranspose2d(stride=2, pad=1) ------------------
    for li in range(1, n_layers):
        w = ws[li]
        cout = w.shape[1]
        nb, h, wd, _ = x.shape
        a, bm = _subpixel_lower(x, w)                # [4, M', 4Cin], [4, 4Cin, Cout]
        mr = nb * h * wd
        mp = _pad_rows(mr)
        a = jnp.pad(a, ((0, 0), (0, mp - mr), (0, 0)))
        last = li == n_layers - 1
        if not last:
            y, st = pallas_convt_gemm(a, bm, fuse_bn_stats=True,
                                      out_dtype=jnp.bfloat16)
            cs = st[:, :, 0, :].sum(axis=(0, 1))
            cq = st[:, :, 1, :].sum(axis=(0, 1))
            cnt = 4.0 * mr                           # = Nb * OH * OW
            mean = cs / cnt
            var = jnp.maximum(cq / cnt - mean * mean, 0.0)
            scale = gammas[li] * jax.lax.rsqrt(var + eps)
            shift = betas[li] - mean * scale
            yact = pallas_bn_relu(y.reshape(4 * mp, cout), scale, shift)
            yact = yact.reshape(4, mp, cout)
        else:
            yact = pallas_convt_gemm(a, bm, fuse_bn_stats=False,
                                     out_dtype=jnp.float32)
        x = _interleave_parities(yact[:, :mr, :], nb, h, wd, cout)

    return jnp.transpose(x, (0, 3, 1, 2))            # NCHW, like the module


# ---------------------------------------------------------------------------
# Pure-JAX reference (for the in-script correctness check)
# ---------------------------------------------------------------------------

def reference_forward(z, params):
    x = z
    n_layers = len(params["w"])
    for li in range(n_layers):
        w = params["w"][li]
        stride = 1 if li == 0 else 2
        pad = 0 if li == 0 else 1
        k = w.shape[2]
        w_conv = jnp.transpose(w[:, :, ::-1, ::-1], (1, 0, 2, 3))  # OIHW
        y = jax.lax.conv_general_dilated(
            x, w_conv, window_strides=(1, 1),
            padding=[(k - 1 - pad, k - 1 - pad)] * 2,
            lhs_dilation=(stride, stride),
            dimension_numbers=("NCHW", "OIHW", "NCHW"))
        if li < n_layers - 1:
            mean = y.mean(axis=(0, 2, 3), keepdims=True)
            var = y.var(axis=(0, 2, 3), keepdims=True)
            g = params["gamma"][li].reshape(1, -1, 1, 1)
            b = params["beta"][li].reshape(1, -1, 1, 1)
            y = jnp.maximum((y - mean) * jax.lax.rsqrt(var + 1e-5) * g + b, 0.0)
        else:
            y = jnp.tanh(y)
        x = y
    return x


def init_params(key, num_latent_ch, num_hidden_ch, num_img_ch):
    nh = num_hidden_ch
    chans = [num_latent_ch, nh * 16, nh * 8, nh * 4, nh * 2, nh, num_img_ch]
    ws, gammas, betas = [], [], []
    for li in range(6):
        key, k1, k2, k3 = jax.random.split(key, 4)
        cin, cout = chans[li], chans[li + 1]
        ws.append(0.02 * jax.random.normal(k1, (cin, cout, 4, 4), jnp.float32))
        if li < 5:
            gammas.append(1.0 + 0.02 * jax.random.normal(k2, (cout,), jnp.float32))
            betas.append(0.02 * jax.random.normal(k3, (cout,), jnp.float32))
    return {"w": ws, "gamma": gammas, "beta": betas}


if __name__ == "__main__":
    # Small config consistent with the module: 6 ConvTranspose2d layers,
    # 1x1 latent -> 128x128 image.
    batch = 2
    num_latent_ch = 16
    num_hidden_ch = 8
    num_img_ch = 3

    key = jax.random.PRNGKey(0)
    key, kz = jax.random.split(key)
    params = init_params(key, num_latent_ch, num_hidden_ch, num_img_ch)
    z = jax.random.normal(kz, (batch, num_latent_ch, 1, 1), jnp.float32)

    fwd = jax.jit(generator_forward)
    out = jax.block_until_ready(fwd(z, params))

    assert out.shape == (batch, num_img_ch, 128, 128), out.shape
    assert bool(jnp.all(jnp.isfinite(out)))
    assert bool(jnp.all(jnp.abs(out) <= 1.0 + 1e-6))       # tanh output range

    ref = reference_forward(z, params)
    max_diff = float(jnp.max(jnp.abs(out.astype(jnp.float32) - ref)))
    assert max_diff < 0.1, f"max |kernel - reference| = {max_diff}"

    print("KERNEL_OK")
</pallas_src>

<mosaic_0001>
module attributes {stable_mosaic.version = 11 : i64} {
  func.func @_bn_relu_kernel(%arg0: i32, %arg1: memref<128x2048xbf16, #tpu.memory_space<vmem>>, %arg2: memref<1x2048xf32, #tpu.memory_space<vmem>>, %arg3: memref<1x2048xf32, #tpu.memory_space<vmem>>, %arg4: memref<128x2048xbf16, #tpu.memory_space<vmem>>) attributes {dimension_semantics = [#tpu.dimension_semantics<parallel>], iteration_bounds = array<i64: 1>, scalar_prefetch = 0 : i64, scratch_operands = 0 : i64, tpu.core_type = #tpu.core_type<tc>, window_params = [{transform_indices = @transform_0, window_bounds = array<i64: 128, 2048>}, {pipeline_mode = #tpu.pipeline_mode<synchronous>, transform_indices = @transform_1, window_bounds = array<i64: 1, 2048>}, {pipeline_mode = #tpu.pipeline_mode<synchronous>, transform_indices = @transform_2, window_bounds = array<i64: 1, 2048>}, {transform_indices = @transform_3, window_bounds = array<i64: 128, 2048>}]} {
    %c0 = arith.constant 0 : index
    %c0_0 = arith.constant 0 : index
    %0 = vector.load %arg1[%c0, %c0_0] : memref<128x2048xbf16, #tpu.memory_space<vmem>>, vector<128x2048xbf16>
    %1 = arith.extf %0 : vector<128x2048xbf16> to vector<128x2048xf32>
    %c0_1 = arith.constant 0 : index
    %c0_2 = arith.constant 0 : index
    %2 = vector.load %arg2[%c0_1, %c0_2] : memref<1x2048xf32, #tpu.memory_space<vmem>>, vector<1x2048xf32>
    %3 = vector.broadcast %2 : vector<1x2048xf32> to vector<128x2048xf32>
    %4 = arith.mulf %1, %3 : vector<128x2048xf32>
    %c0_3 = arith.constant 0 : index
    %c0_4 = arith.constant 0 : index
    %5 = vector.load %arg3[%c0_3, %c0_4] : memref<1x2048xf32, #tpu.memory_space<vmem>>, vector<1x2048xf32>
    %6 = vector.broadcast %5 : vector<1x2048xf32> to vector<128x2048xf32>
    %7 = arith.addf %4, %6 : vector<128x2048xf32>
    %cst = arith.constant 0.000000e+00 : f32
    %8 = vector.broadcast %cst : f32 to vector<128x2048xf32>
    %9 = arith.maximumf %7, %8 : vector<128x2048xf32>
    %10 = arith.truncf %9 : vector<128x2048xf32> to vector<128x2048xbf16>
    %c0_5 = arith.constant 0 : index
    %c0_6 = arith.constant 0 : index
    %11 = vector.load %arg4[%c0_5, %c0_6] : memref<128x2048xbf16, #tpu.memory_space<vmem>>, vector<128x2048xbf16>
    tpu.vector_store %arg4[%c0_5, %c0_6], %10 {strides = array<i32>} : memref<128x2048xbf16, #tpu.memory_space<vmem>>, vector<128x2048xbf16>,
    return
  }
  func.func @transform_0(%arg0: i32) -> (i32, i32) {
    %c0_i32 = arith.constant 0 : i32
    %c0_i32_0 = arith.constant 0 : i32
    return %arg0, %c0_i32 : i32, i32
  }
  func.func @transform_1(%arg0: i32) -> (i32, i32) {
    %c0_i32 = arith.constant 0 : i32
    %c0_i32_0 = arith.constant 0 : i32
    %c0_i32_1 = arith.constant 0 : i32
    return %c0_i32, %c0_i32_0 : i32, i32
  }
  func.func @transform_2(%arg0: i32) -> (i32, i32) {
    %c0_i32 = arith.constant 0 : i32
    %c0_i32_0 = arith.constant 0 : i32
    %c0_i32_1 = arith.constant 0 : i32
    return %c0_i32, %c0_i32_0 : i32, i32
  }
  func.func @transform_3(%arg0: i32) -> (i32, i32) {
    %c0_i32 = arith.constant 0 : i32
    %c0_i32_0 = arith.constant 0 : i32
    return %arg0, %c0_i32 : i32, i32
  }
}

module attributes {stable_mosaic.version = 11 : i64} {
  func.func @_gemm_bn_stats_kernel(%arg0: i32, %arg1: i32, %arg2: memref<1x128x16xbf16, #tpu.memory_space<vmem>>, %arg3: memref<1x16x2048xbf16, #tpu.memory_space<vmem>>, %arg4: memref<1x128x2048xbf16, #tpu.memory_space<vmem>>, %arg5: memref<1x1x8x2048xf32, #tpu.memory_space<vmem>>) attributes {dimension_semantics = [#tpu.dimension_semantics<parallel>, #tpu.dimension_semantics<parallel>], iteration_bounds = array<i64: 1, 1>, scalar_prefetch = 0 : i64, scratch_operands = 0 : i64, tpu.core_type = #tpu.core_type<tc>, window_params = [{transform_indices = @transform_0, window_bounds = array<i64: 1, 128, 16>}, {transform_indices = @transform_1, window_bounds = array<i64: 1, 16, 2048>}, {transform_indices = @transform_2, window_bounds = array<i64: 1, 128, 2048>}, {transform_indices = @transform_3, window_bounds = array<i64: 1, 1, 8, 2048>}]} {
    %c0 = arith.constant 0 : index
    %c0_0 = arith.constant 0 : index
    %c0_1 = arith.constant 0 : index
    %0 = vector.load %arg2[%c0, %c0_0, %c0_1] : memref<1x128x16xbf16, #tpu.memory_space<vmem>>, vector<1x128x16xbf16>
    %1 = vector.shape_cast %0 : vector<1x128x16xbf16> to vector<128x16xbf16>
    %c0_2 = arith.constant 0 : index
    %c0_3 = arith.constant 0 : index
    %c0_4 = arith.constant 0 : index
    %2 = vector.load %arg3[%c0_2, %c0_3, %c0_4] : memref<1x16x2048xbf16, #tpu.memory_space<vmem>>, vector<1x16x2048xbf16>
    %3 = vector.shape_cast %2 : vector<1x16x2048xbf16> to vector<16x2048xbf16>
    %cst = arith.constant dense<0.000000e+00> : vector<128x2048xf32>
    %4 = tpu.matmul %1, %3, %cst {dimension_numbers = #tpu.dot_dimension_numbers<[1], [0], [0], [1], [0, 0, 1, 1], [], []>} : vector<128x16xbf16>, vector<16x2048xbf16>, vector<128x2048xf32> -> vector<128x2048xf32>
    %5 = vector.shape_cast %4 : vector<128x2048xf32> to vector<1x128x2048xf32>
    %6 = arith.truncf %5 : vector<1x128x2048xf32> to vector<1x128x2048xbf16>
    %c0_5 = arith.constant 0 : index
    %c0_6 = arith.constant 0 : index
    %c0_7 = arith.constant 0 : index
    %7 = vector.load %arg4[%c0_5, %c0_6, %c0_7] : memref<1x128x2048xbf16, #tpu.memory_space<vmem>>, vector<1x128x2048xbf16>
    tpu.vector_store %arg4[%c0_5, %c0_6, %c0_7], %6 {strides = array<i32>} : memref<1x128x2048xbf16, #tpu.memory_space<vmem>>, vector<1x128x2048xbf16>,
    %cst_8 = arith.constant dense<0.000000e+00> : vector<2048xf32>
    %8 = vector.multi_reduction <add>, %4, %cst_8 [0] : vector<128x2048xf32> to vector<2048xf32>
    %9 = vector.shape_cast %8 : vector<2048xf32> to vector<1x2048xf32>
    %10 = arith.mulf %4, %4 : vector<128x2048xf32>
    %cst_9 = arith.constant dense<0.000000e+00> : vector<2048xf32>
    %11 = vector.multi_reduction <add>, %10, %cst_9 [0] : vector<128x2048xf32> to vector<2048xf32>
    %12 = vector.shape_cast %11 : vector<2048xf32> to vector<1x2048xf32>
    %cst_10 = arith.constant 0.000000e+00 : f32
    %13 = vector.broadcast %cst_10 : f32 to vector<6x2048xf32>
    %14 = tpu.concatenate %9, %12, %13 in 0 : vector<1x2048xf32>, vector<1x2048xf32>, vector<6x2048xf32> -> vector<8x2048xf32>
    %15 = vector.shape_cast %14 : vector<8x2048xf32> to vector<1x1x8x2048xf32>
    %c0_11 = arith.constant 0 : index
    %c0_12 = arith.constant 0 : index
    %c0_13 = arith.constant 0 : index
    %c0_14 = arith.constant 0 : index
    %16 = vector.load %arg5[%c0_11, %c0_12, %c0_13, %c0_14] : memref<1x1x8x2048xf32, #tpu.memory_space<vmem>>, vector<1x1x8x2048xf32>
    tpu.vector_store %arg5[%c0_11, %c0_12, %c0_13, %c0_14], %15 {strides = array<i32>} : memref<1x1x8x2048xf32, #tpu.memory_space<vmem>>, vector<1x1x8x2048xf32>,
    return
  }
  func.func @transform_0(%arg0: i32, %arg1: i32) -> (i32, i32, i32) {
    %c0_i32 = arith.constant 0 : i32
    %c0_i32_0 = arith.constant 0 : i32
    return %arg0, %arg1, %c0_i32 : i32, i32, i32
  }
  func.func @transform_1(%arg0: i32, %arg1: i32) -> (i32, i32, i32) {
    %c0_i32 = arith.constant 0 : i32
    %c0_i32_0 = arith.constant 0 : i32
    %c0_i32_1 = arith.constant 0 : i32
    return %arg0, %c0_i32, %c0_i32_0 : i32, i32, i32
  }
  func.func @transform_2(%arg0: i32, %arg1: i32) -> (i32, i32, i32) {
    %c0_i32 = arith.constant 0 : i32
    %c0_i32_0 = arith.constant 0 : i32
    return %arg0, %arg1, %c0_i32 : i32, i32, i32
  }
  func.func @transform_3(%arg0: i32, %arg1: i32) -> (i32, i32, i32, i32) {
    %c0_i32 = arith.constant 0 : i32
    %c0_i32_0 = arith.constant 0 : i32
    %c0_i32_1 = arith.constant 0 : i32
    return %arg0, %arg1, %c0_i32, %c0_i32_0 : i32, i32, i32, i32
  }
}

module attributes {stable_mosaic.version = 11 : i64} {
  func.func @_gemm_bn_stats_kernel(%arg0: i32, %arg1: i32, %arg2: memref<1x128x512xbf16, #tpu.memory_space<vmem>>, %arg3: memref<1x512x64xbf16, #tpu.memory_space<vmem>>, %arg4: memref<1x128x64xbf16, #tpu.memory_space<vmem>>, %arg5: memref<1x1x8x64xf32, #tpu.memory_space<vmem>>) attributes {dimension_semantics = [#tpu.dimension_semantics<parallel>, #tpu.dimension_semantics<parallel>], iteration_bounds = array<i64: 4, 1>, scalar_prefetch = 0 : i64, scratch_operands = 0 : i64, tpu.core_type = #tpu.core_type<tc>, window_params = [{transform_indices = @transform_0, window_bounds = array<i64: 1, 128, 512>}, {transform_indices = @transform_1, window_bounds = array<i64: 1, 512, 64>}, {transform_indices = @transform_2, window_bounds = array<i64: 1, 128, 64>}, {transform_indices = @transform_3, window_bounds = array<i64: 1, 1, 8, 64>}]} {
    %c0 = arith.constant 0 : index
    %c0_0 = arith.constant 0 : index
    %c0_1 = arith.constant 0 : index
    %0 = vector.load %arg2[%c0, %c0_0, %c0_1] : memref<1x128x512xbf16, #tpu.memory_space<vmem>>, vector<1x128x512xbf16>
    %1 = vector.shape_cast %0 : vector<1x128x512xbf16> to vector<128x512xbf16>
    %c0_2 = arith.constant 0 : index
    %c0_3 = arith.constant 0 : index
    %c0_4 = arith.constant 0 : index
    %2 = vector.load %arg3[%c0_2, %c0_3, %c0_4] : memref<1x512x64xbf16, #tpu.memory_space<vmem>>, vector<1x512x64xbf16>
    %3 = vector.shape_cast %2 : vector<1x512x64xbf16> to vector<512x64xbf16>
    %cst = arith.constant dense<0.000000e+00> : vector<128x64xf32>
    %4 = tpu.matmul %1, %3, %cst {dimension_numbers = #tpu.dot_dimension_numbers<[1], [0], [0], [1], [0, 0, 1, 1], [], []>} : vector<128x512xbf16>, vector<512x64xbf16>, vector<128x64xf32> -> vector<128x64xf32>
    %5 = vector.shape_cast %4 : vector<128x64xf32> to vector<1x128x64xf32>
    %6 = arith.truncf %5 : vector<1x128x64xf32> to vector<1x128x64xbf16>
    %c0_5 = arith.constant 0 : index
    %c0_6 = arith.constant 0 : index
    %c0_7 = arith.constant 0 : index
    %7 = vector.load %arg4[%c0_5, %c0_6, %c0_7] : memref<1x128x64xbf16, #tpu.memory_space<vmem>>, vector<1x128x64xbf16>
    tpu.vector_store %arg4[%c0_5, %c0_6, %c0_7], %6 {strides = array<i32>} : memref<1x128x64xbf16, #tpu.memory_space<vmem>>, vector<1x128x64xbf16>,
    %cst_8 = arith.constant dense<0.000000e+00> : vector<64xf32>
    %8 = vector.multi_reduction <add>, %4, %cst_8 [0] : vector<128x64xf32> to vector<64xf32>
    %9 = vector.shape_cast %8 : vector<64xf32> to vector<1x64xf32>
    %10 = arith.mulf %4, %4 : vector<128x64xf32>
    %cst_9 = arith.constant dense<0.000000e+00> : vector<64xf32>
    %11 = vector.multi_reduction <add>, %10, %cst_9 [0] : vector<128x64xf32> to vector<64xf32>
    %12 = vector.shape_cast %11 : vector<64xf32> to vector<1x64xf32>
    %cst_10 = arith.constant 0.000000e+00 : f32
    %13 = vector.broadcast %cst_10 : f32 to vector<6x64xf32>
    %14 = tpu.concatenate %9, %12, %13 in 0 : vector<1x64xf32>, vector<1x64xf32>, vector<6x64xf32> -> vector<8x64xf32>
    %15 = vector.shape_cast %14 : vector<8x64xf32> to vector<1x1x8x64xf32>
    %c0_11 = arith.constant 0 : index
    %c0_12 = arith.constant 0 : index
    %c0_13 = arith.constant 0 : index
    %c0_14 = arith.constant 0 : index
    %16 = vector.load %arg5[%c0_11, %c0_12, %c0_13, %c0_14] : memref<1x1x8x64xf32, #tpu.memory_space<vmem>>, vector<1x1x8x64xf32>
    tpu.vector_store %arg5[%c0_11, %c0_12, %c0_13, %c0_14], %15 {strides = array<i32>} : memref<1x1x8x64xf32, #tpu.memory_space<vmem>>, vector<1x1x8x64xf32>,
    return
  }
  func.func @transform_0(%arg0: i32, %arg1: i32) -> (i32, i32, i32) {
    %c0_i32 = arith.constant 0 : i32
    %c0_i32_0 = arith.constant 0 : i32
    return %arg0, %arg1, %c0_i32 : i32, i32, i32
  }
  func.func @transform_1(%arg0: i32, %arg1: i32) -> (i32, i32, i32) {
    %c0_i32 = arith.constant 0 : i32
    %c0_i32_0 = arith.constant 0 : i32
    %c0_i32_1 = arith.constant 0 : i32
    return %arg0, %c0_i32, %c0_i32_0 : i32, i32, i32
  }
  func.func @transform_2(%arg0: i32, %arg1: i32) -> (i32, i32, i32) {
    %c0_i32 = arith.constant 0 : i32
    %c0_i32_0 = arith.constant 0 : i32
    return %arg0, %arg1, %c0_i32 : i32, i32, i32
  }
  func.func @transform_3(%arg0: i32, %arg1: i32) -> (i32, i32, i32, i32) {
    %c0_i32 = arith.constant 0 : i32
    %c0_i32_0 = arith.constant 0 : i32
    %c0_i32_1 = arith.constant 0 : i32
    return %arg0, %arg1, %c0_i32, %c0_i32_0 : i32, i32, i32, i32
  }
}

module attributes {stable_mosaic.version = 11 : i64} {
  func.func @_bn_relu_kernel(%arg0: i32, %arg1: memref<256x128xbf16, #tpu.memory_space<vmem>>, %arg2: memref<1x128xf32, #tpu.memory_space<vmem>>, %arg3: memref<1x128xf32, #tpu.memory_space<vmem>>, %arg4: memref<256x128xbf16, #tpu.memory_space<vmem>>) attributes {dimension_semantics = [#tpu.dimension_semantics<parallel>], iteration_bounds = array<i64: 1>, scalar_prefetch = 0 : i64, scratch_operands = 0 : i64, tpu.core_type = #tpu.core_type<tc>, window_params = [{transform_indices = @transform_0, window_bounds = array<i64: 256, 128>}, {pipeline_mode = #tpu.pipeline_mode<synchronous>, transform_indices = @transform_1, window_bounds = array<i64: 1, 128>}, {pipeline_mode = #tpu.pipeline_mode<synchronous>, transform_indices = @transform_2, window_bounds = array<i64: 1, 128>}, {transform_indices = @transform_3, window_bounds = array<i64: 256, 128>}]} {
    %c0 = arith.constant 0 : index
    %c0_0 = arith.constant 0 : index
    %0 = vector.load %arg1[%c0, %c0_0] : memref<256x128xbf16, #tpu.memory_space<vmem>>, vector<256x128xbf16>
    %1 = arith.extf %0 : vector<256x128xbf16> to vector<256x128xf32>
    %c0_1 = arith.constant 0 : index
    %c0_2 = arith.constant 0 : index
    %2 = vector.load %arg2[%c0_1, %c0_2] : memref<1x128xf32, #tpu.memory_space<vmem>>, vector<1x128xf32>
    %3 = vector.broadcast %2 : vector<1x128xf32> to vector<256x128xf32>
    %4 = arith.mulf %1, %3 : vector<256x128xf32>
    %c0_3 = arith.constant 0 : index
    %c0_4 = arith.constant 0 : index
    %5 = vector.load %arg3[%c0_3, %c0_4] : memref<1x128xf32, #tpu.memory_space<vmem>>, vector<1x128xf32>
    %6 = vector.broadcast %5 : vector<1x128xf32> to vector<256x128xf32>
    %7 = arith.addf %4, %6 : vector<256x128xf32>
    %cst = arith.constant 0.000000e+00 : f32
    %8 = vector.broadcast %cst : f32 to vector<256x128xf32>
    %9 = arith.maximumf %7, %8 : vector<256x128xf32>
    %10 = arith.truncf %9 : vector<256x128xf32> to vector<256x128xbf16>
    %c0_5 = arith.constant 0 : index
    %c0_6 = arith.constant 0 : index
    %11 = vector.load %arg4[%c0_5, %c0_6] : memref<256x128xbf16, #tpu.memory_space<vmem>>, vector<256x128xbf16>
    tpu.vector_store %arg4[%c0_5, %c0_6], %10 {strides = array<i32>} : memref<256x128xbf16, #tpu.memory_space<vmem>>, vector<256x128xbf16>,
    return
  }
  func.func @transform_0(%arg0: i32) -> (i32, i32) {
    %c0_i32 = arith.constant 0 : i32
    %c0_i32_0 = arith.constant 0 : i32
    return %arg0, %c0_i32 : i32, i32
  }
  func.func @transform_1(%arg0: i32) -> (i32, i32) {
    %c0_i32 = arith.constant 0 : i32
    %c0_i32_0 = arith.constant 0 : i32
    %c0_i32_1 = arith.constant 0 : i32
    return %c0_i32, %c0_i32_0 : i32, i32
  }
  func.func @transform_2(%arg0: i32) -> (i32, i32) {
    %c0_i32 = arith.constant 0 : i32
    %c0_i32_0 = arith.constant 0 : i32
    %c0_i32_1 = arith.constant 0 : i32
    return %c0_i32, %c0_i32_0 : i32, i32
  }
  func.func @transform_3(%arg0: i32) -> (i32, i32) {
    %c0_i32 = arith.constant 0 : i32
    %c0_i32_0 = arith.constant 0 : i32
    return %arg0, %c0_i32 : i32, i32
  }
}

module attributes {stable_mosaic.version = 11 : i64} {
  func.func @_gemm_bn_stats_kernel(%arg0: i32, %arg1: i32, %arg2: memref<1x128x256xbf16, #tpu.memory_space<vmem>>, %arg3: memref<1x256x32xbf16, #tpu.memory_space<vmem>>, %arg4: memref<1x128x32xbf16, #tpu.memory_space<vmem>>, %arg5: memref<1x1x8x32xf32, #tpu.memory_space<vmem>>) attributes {dimension_semantics = [#tpu.dimension_semantics<parallel>, #tpu.dimension_semantics<parallel>], iteration_bounds = array<i64: 4, 1>, scalar_prefetch = 0 : i64, scratch_operands = 0 : i64, tpu.core_type = #tpu.core_type<tc>, window_params = [{transform_indices = @transform_0, window_bounds = array<i64: 1, 128, 256>}, {transform_indices = @transform_1, window_bounds = array<i64: 1, 256, 32>}, {transform_indices = @transform_2, window_bounds = array<i64: 1, 128, 32>}, {transform_indices = @transform_3, window_bounds = array<i64: 1, 1, 8, 32>}]} {
    %c0 = arith.constant 0 : index
    %c0_0 = arith.constant 0 : index
    %c0_1 = arith.constant 0 : index
    %0 = vector.load %arg2[%c0, %c0_0, %c0_1] : memref<1x128x256xbf16, #tpu.memory_space<vmem>>, vector<1x128x256xbf16>
    %1 = vector.shape_cast %0 : vector<1x128x256xbf16> to vector<128x256xbf16>
    %c0_2 = arith.constant 0 : index
    %c0_3 = arith.constant 0 : index
    %c0_4 = arith.constant 0 : index
    %2 = vector.load %arg3[%c0_2, %c0_3, %c0_4] : memref<1x256x32xbf16, #tpu.memory_space<vmem>>, vector<1x256x32xbf16>
    %3 = vector.shape_cast %2 : vector<1x256x32xbf16> to vector<256x32xbf16>
    %cst = arith.constant dense<0.000000e+00> : vector<128x32xf32>
    %4 = tpu.matmul %1, %3, %cst {dimension_numbers = #tpu.dot_dimension_numbers<[1], [0], [0], [1], [0, 0, 1, 1], [], []>} : vector<128x256xbf16>, vector<256x32xbf16>, vector<128x32xf32> -> vector<128x32xf32>
    %5 = vector.shape_cast %4 : vector<128x32xf32> to vector<1x128x32xf32>
    %6 = arith.truncf %5 : vector<1x128x32xf32> to vector<1x128x32xbf16>
    %c0_5 = arith.constant 0 : index
    %c0_6 = arith.constant 0 : index
    %c0_7 = arith.constant 0 : index
    %7 = vector.load %arg4[%c0_5, %c0_6, %c0_7] : memref<1x128x32xbf16, #tpu.memory_space<vmem>>, vector<1x128x32xbf16>
    tpu.vector_store %arg4[%c0_5, %c0_6, %c0_7], %6 {strides = array<i32>} : memref<1x128x32xbf16, #tpu.memory_space<vmem>>, vector<1x128x32xbf16>,
    %cst_8 = arith.constant dense<0.000000e+00> : vector<32xf32>
    %8 = vector.multi_reduction <add>, %4, %cst_8 [0] : vector<128x32xf32> to vector<32xf32>
    %9 = vector.shape_cast %8 : vector<32xf32> to vector<1x32xf32>
    %10 = arith.mulf %4, %4 : vector<128x32xf32>
    %cst_9 = arith.constant dense<0.000000e+00> : vector<32xf32>
    %11 = vector.multi_reduction <add>, %10, %cst_9 [0] : vector<128x32xf32> to vector<32xf32>
    %12 = vector.shape_cast %11 : vector<32xf32> to vector<1x32xf32>
    %cst_10 = arith.constant 0.000000e+00 : f32
    %13 = vector.broadcast %cst_10 : f32 to vector<6x32xf32>
    %14 = tpu.concatenate %9, %12, %13 in 0 : vector<1x32xf32>, vector<1x32xf32>, vector<6x32xf32> -> vector<8x32xf32>
    %15 = vector.shape_cast %14 : vector<8x32xf32> to vector<1x1x8x32xf32>
    %c0_11 = arith.constant 0 : index
    %c0_12 = arith.constant 0 : index
    %c0_13 = arith.constant 0 : index
    %c0_14 = arith.constant 0 : index
    %16 = vector.load %arg5[%c0_11, %c0_12, %c0_13, %c0_14] : memref<1x1x8x32xf32, #tpu.memory_space<vmem>>, vector<1x1x8x32xf32>
    tpu.vector_store %arg5[%c0_11, %c0_12, %c0_13, %c0_14], %15 {strides = array<i32>} : memref<1x1x8x32xf32, #tpu.memory_space<vmem>>, vector<1x1x8x32xf32>,
    return
  }
  func.func @transform_0(%arg0: i32, %arg1: i32) -> (i32, i32, i32) {
    %c0_i32 = arith.constant 0 : i32
    %c0_i32_0 = arith.constant 0 : i32
    return %arg0, %arg1, %c0_i32 : i32, i32, i32
  }
  func.func @transform_1(%arg0: i32, %arg1: i32) -> (i32, i32, i32) {
    %c0_i32 = arith.constant 0 : i32
    %c0_i32_0 = arith.constant 0 : i32
    %c0_i32_1 = arith.constant 0 : i32
    return %arg0, %c0_i32, %c0_i32_0 : i32, i32, i32
  }
  func.func @transform_2(%arg0: i32, %arg1: i32) -> (i32, i32, i32) {
    %c0_i32 = arith.constant 0 : i32
    %c0_i32_0 = arith.constant 0 : i32
    return %arg0, %arg1, %c0_i32 : i32, i32, i32
  }
  func.func @transform_3(%arg0: i32, %arg1: i32) -> (i32, i32, i32, i32) {
    %c0_i32 = arith.constant 0 : i32
    %c0_i32_0 = arith.constant 0 : i32
    %c0_i32_1 = arith.constant 0 : i32
    return %arg0, %arg1, %c0_i32, %c0_i32_0 : i32, i32, i32, i32
  }
}

module attributes {stable_mosaic.version = 11 : i64} {
  func.func @_bn_relu_kernel(%arg0: i32, %arg1: memref<128x128xbf16, #tpu.memory_space<vmem>>, %arg2: memref<1x128xf32, #tpu.memory_space<vmem>>, %arg3: memref<1x128xf32, #tpu.memory_space<vmem>>, %arg4: memref<128x128xbf16, #tpu.memory_space<vmem>>) attributes {dimension_semantics = [#tpu.dimension_semantics<parallel>], iteration_bounds = array<i64: 1>, scalar_prefetch = 0 : i64, scratch_operands = 0 : i64, tpu.core_type = #tpu.core_type<tc>, window_params = [{transform_indices = @transform_0, window_bounds = array<i64: 128, 128>}, {pipeline_mode = #tpu.pipeline_mode<synchronous>, transform_indices = @transform_1, window_bounds = array<i64: 1, 128>}, {pipeline_mode = #tpu.pipeline_mode<synchronous>, transform_indices = @transform_2, window_bounds = array<i64: 1, 128>}, {transform_indices = @transform_3, window_bounds = array<i64: 128, 128>}]} {
    %c0 = arith.constant 0 : index
    %c0_0 = arith.constant 0 : index
    %0 = vector.load %arg1[%c0, %c0_0] : memref<128x128xbf16, #tpu.memory_space<vmem>>, vector<128x128xbf16>
    %1 = arith.extf %0 : vector<128x128xbf16> to vector<128x128xf32>
    %c0_1 = arith.constant 0 : index
    %c0_2 = arith.constant 0 : index
    %2 = vector.load %arg2[%c0_1, %c0_2] : memref<1x128xf32, #tpu.memory_space<vmem>>, vector<1x128xf32>
    %3 = vector.broadcast %2 : vector<1x128xf32> to vector<128x128xf32>
    %4 = arith.mulf %1, %3 : vector<128x128xf32>
    %c0_3 = arith.constant 0 : index
    %c0_4 = arith.constant 0 : index
    %5 = vector.load %arg3[%c0_3, %c0_4] : memref<1x128xf32, #tpu.memory_space<vmem>>, vector<1x128xf32>
    %6 = vector.broadcast %5 : vector<1x128xf32> to vector<128x128xf32>
    %7 = arith.addf %4, %6 : vector<128x128xf32>
    %cst = arith.constant 0.000000e+00 : f32
    %8 = vector.broadcast %cst : f32 to vector<128x128xf32>
    %9 = arith.maximumf %7, %8 : vector<128x128xf32>
    %10 = arith.truncf %9 : vector<128x128xf32> to vector<128x128xbf16>
    %c0_5 = arith.constant 0 : index
    %c0_6 = arith.constant 0 : index
    %11 = vector.load %arg4[%c0_5, %c0_6] : memref<128x128xbf16, #tpu.memory_space<vmem>>, vector<128x128xbf16>
    tpu.vector_store %arg4[%c0_5, %c0_6], %10 {strides = array<i32>} : memref<128x128xbf16, #tpu.memory_space<vmem>>, vector<128x128xbf16>,
    return
  }
  func.func @transform_0(%arg0: i32) -> (i32, i32) {
    %c0_i32 = arith.constant 0 : i32
    %c0_i32_0 = arith.constant 0 : i32
    return %arg0, %c0_i32 : i32, i32
  }
  func.func @transform_1(%arg0: i32) -> (i32, i32) {
    %c0_i32 = arith.constant 0 : i32
    %c0_i32_0 = arith.constant 0 : i32
    %c0_i32_1 = arith.constant 0 : i32
    return %c0_i32, %c0_i32_0 : i32, i32
  }
  func.func @transform_2(%arg0: i32) -> (i32, i32) {
    %c0_i32 = arith.constant 0 : i32
    %c0_i32_0 = arith.constant 0 : i32
    %c0_i32_1 = arith.constant 0 : i32
    return %c0_i32, %c0_i32_0 : i32, i32
  }
  func.func @transform_3(%arg0: i32) -> (i32, i32) {
    %c0_i32 = arith.constant 0 : i32
    %c0_i32_0 = arith.constant 0 : i32
    return %arg0, %c0_i32 : i32, i32
  }
}

module attributes {stable_mosaic.version = 11 : i64} {
  func.func @_gemm_bn_stats_kernel(%arg0: i32, %arg1: i32, %arg2: memref<1x512x128xbf16, #tpu.memory_space<vmem>>, %arg3: memref<1x128x16xbf16, #tpu.memory_space<vmem>>, %arg4: memref<1x512x16xbf16, #tpu.memory_space<vmem>>, %arg5: memref<1x1x8x16xf32, #tpu.memory_space<vmem>>) attributes {dimension_semantics = [#tpu.dimension_semantics<parallel>, #tpu.dimension_semantics<parallel>], iteration_bounds = array<i64: 4, 1>, scalar_prefetch = 0 : i64, scratch_operands = 0 : i64, tpu.core_type = #tpu.core_type<tc>, window_params = [{transform_indices = @transform_0, window_bounds = array<i64: 1, 512, 128>}, {transform_indices = @transform_1, window_bounds = array<i64: 1, 128, 16>}, {transform_indices = @transform_2, window_bounds = array<i64: 1, 512, 16>}, {transform_indices = @transform_3, window_bounds = array<i64: 1, 1, 8, 16>}]} {
    %c0 = arith.constant 0 : index
    %c0_0 = arith.constant 0 : index
    %c0_1 = arith.constant 0 : index
    %0 = vector.load %arg2[%c0, %c0_0, %c0_1] : memref<1x512x128xbf16, #tpu.memory_space<vmem>>, vector<1x512x128xbf16>
    %1 = vector.shape_cast %0 : vector<1x512x128xbf16> to vector<512x128xbf16>
    %c0_2 = arith.constant 0 : index
    %c0_3 = arith.constant 0 : index
    %c0_4 = arith.constant 0 : index
    %2 = vector.load %arg3[%c0_2, %c0_3, %c0_4] : memref<1x128x16xbf16, #tpu.memory_space<vmem>>, vector<1x128x16xbf16>
    %3 = vector.shape_cast %2 : vector<1x128x16xbf16> to vector<128x16xbf16>
    %cst = arith.constant dense<0.000000e+00> : vector<512x16xf32>
    %4 = tpu.matmul %1, %3, %cst {dimension_numbers = #tpu.dot_dimension_numbers<[1], [0], [0], [1], [0, 0, 1, 1], [], []>} : vector<512x128xbf16>, vector<128x16xbf16>, vector<512x16xf32> -> vector<512x16xf32>
    %5 = vector.shape_cast %4 : vector<512x16xf32> to vector<1x512x16xf32>
    %6 = arith.truncf %5 : vector<1x512x16xf32> to vector<1x512x16xbf16>
    %c0_5 = arith.constant 0 : index
    %c0_6 = arith.constant 0 : index
    %c0_7 = arith.constant 0 : index
    %7 = vector.load %arg4[%c0_5, %c0_6, %c0_7] : memref<1x512x16xbf16, #tpu.memory_space<vmem>>, vector<1x512x16xbf16>
    tpu.vector_store %arg4[%c0_5, %c0_6, %c0_7], %6 {strides = array<i32>} : memref<1x512x16xbf16, #tpu.memory_space<vmem>>, vector<1x512x16xbf16>,
    %cst_8 = arith.constant dense<0.000000e+00> : vector<16xf32>
    %8 = vector.multi_reduction <add>, %4, %cst_8 [0] : vector<512x16xf32> to vector<16xf32>
    %9 = vector.shape_cast %8 : vector<16xf32> to vector<1x16xf32>
    %10 = arith.mulf %4, %4 : vector<512x16xf32>
    %cst_9 = arith.constant dense<0.000000e+00> : vector<16xf32>
    %11 = vector.multi_reduction <add>, %10, %cst_9 [0] : vector<512x16xf32> to vector<16xf32>
    %12 = vector.shape_cast %11 : vector<16xf32> to vector<1x16xf32>
    %cst_10 = arith.constant 0.000000e+00 : f32
    %13 = vector.broadcast %cst_10 : f32 to vector<6x16xf32>
    %14 = tpu.concatenate %9, %12, %13 in 0 : vector<1x16xf32>, vector<1x16xf32>, vector<6x16xf32> -> vector<8x16xf32>
    %15 = vector.shape_cast %14 : vector<8x16xf32> to vector<1x1x8x16xf32>
    %c0_11 = arith.constant 0 : index
    %c0_12 = arith.constant 0 : index
    %c0_13 = arith.constant 0 : index
    %c0_14 = arith.constant 0 : index
    %16 = vector.load %arg5[%c0_11, %c0_12, %c0_13, %c0_14] : memref<1x1x8x16xf32, #tpu.memory_space<vmem>>, vector<1x1x8x16xf32>
    tpu.vector_store %arg5[%c0_11, %c0_12, %c0_13, %c0_14], %15 {strides = array<i32>} : memref<1x1x8x16xf32, #tpu.memory_space<vmem>>, vector<1x1x8x16xf32>,
    return
  }
  func.func @transform_0(%arg0: i32, %arg1: i32) -> (i32, i32, i32) {
    %c0_i32 = arith.constant 0 : i32
    %c0_i32_0 = arith.constant 0 : i32
    return %arg0, %arg1, %c0_i32 : i32, i32, i32
  }
  func.func @transform_1(%arg0: i32, %arg1: i32) -> (i32, i32, i32) {
    %c0_i32 = arith.constant 0 : i32
    %c0_i32_0 = arith.constant 0 : i32
    %c0_i32_1 = arith.constant 0 : i32
    return %arg0, %c0_i32, %c0_i32_0 : i32, i32, i32
  }
  func.func @transform_2(%arg0: i32, %arg1: i32) -> (i32, i32, i32) {
    %c0_i32 = arith.constant 0 : i32
    %c0_i32_0 = arith.constant 0 : i32
    return %arg0, %arg1, %c0_i32 : i32, i32, i32
  }
  func.func @transform_3(%arg0: i32, %arg1: i32) -> (i32, i32, i32, i32) {
    %c0_i32 = arith.constant 0 : i32
    %c0_i32_0 = arith.constant 0 : i32
    %c0_i32_1 = arith.constant 0 : i32
    return %arg0, %arg1, %c0_i32, %c0_i32_0 : i32, i32, i32, i32
  }
}

module attributes {stable_mosaic.version = 11 : i64} {
  func.func @_gemm_bn_stats_kernel(%arg0: i32, %arg1: i32, %arg2: memref<1x512x64xbf16, #tpu.memory_space<vmem>>, %arg3: memref<1x64x8xbf16, #tpu.memory_space<vmem>>, %arg4: memref<1x512x8xbf16, #tpu.memory_space<vmem>>, %arg5: memref<1x1x8x8xf32, #tpu.memory_space<vmem>>) attributes {dimension_semantics = [#tpu.dimension_semantics<parallel>, #tpu.dimension_semantics<parallel>], iteration_bounds = array<i64: 4, 4>, scalar_prefetch = 0 : i64, scratch_operands = 0 : i64, tpu.core_type = #tpu.core_type<tc>, window_params = [{transform_indices = @transform_0, window_bounds = array<i64: 1, 512, 64>}, {transform_indices = @transform_1, window_bounds = array<i64: 1, 64, 8>}, {transform_indices = @transform_2, window_bounds = array<i64: 1, 512, 8>}, {transform_indices = @transform_3, window_bounds = array<i64: 1, 1, 8, 8>}]} {
    %c0 = arith.constant 0 : index
    %c0_0 = arith.constant 0 : index
    %c0_1 = arith.constant 0 : index
    %0 = vector.load %arg2[%c0, %c0_0, %c0_1] : memref<1x512x64xbf16, #tpu.memory_space<vmem>>, vector<1x512x64xbf16>
    %1 = vector.shape_cast %0 : vector<1x512x64xbf16> to vector<512x64xbf16>
    %c0_2 = arith.constant 0 : index
    %c0_3 = arith.constant 0 : index
    %c0_4 = arith.constant 0 : index
    %2 = vector.load %arg3[%c0_2, %c0_3, %c0_4] : memref<1x64x8xbf16, #tpu.memory_space<vmem>>, vector<1x64x8xbf16>
    %3 = vector.shape_cast %2 : vector<1x64x8xbf16> to vector<64x8xbf16>
    %cst = arith.constant dense<0.000000e+00> : vector<512x8xf32>
    %4 = tpu.matmul %1, %3, %cst {dimension_numbers = #tpu.dot_dimension_numbers<[1], [0], [0], [1], [0, 0, 1, 1], [], []>} : vector<512x64xbf16>, vector<64x8xbf16>, vector<512x8xf32> -> vector<512x8xf32>
    %5 = vector.shape_cast %4 : vector<512x8xf32> to vector<1x512x8xf32>
    %6 = arith.truncf %5 : vector<1x512x8xf32> to vector<1x512x8xbf16>
    %c0_5 = arith.constant 0 : index
    %c0_6 = arith.constant 0 : index
    %c0_7 = arith.constant 0 : index
    %7 = vector.load %arg4[%c0_5, %c0_6, %c0_7] : memref<1x512x8xbf16, #tpu.memory_space<vmem>>, vector<1x512x8xbf16>
    tpu.vector_store %arg4[%c0_5, %c0_6, %c0_7], %6 {strides = array<i32>} : memref<1x512x8xbf16, #tpu.memory_space<vmem>>, vector<1x512x8xbf16>,
    %cst_8 = arith.constant dense<0.000000e+00> : vector<8xf32>
    %8 = vector.multi_reduction <add>, %4, %cst_8 [0] : vector<512x8xf32> to vector<8xf32>
    %9 = vector.shape_cast %8 : vector<8xf32> to vector<1x8xf32>
    %10 = arith.mulf %4, %4 : vector<512x8xf32>
    %cst_9 = arith.constant dense<0.000000e+00> : vector<8xf32>
    %11 = vector.multi_reduction <add>, %10, %cst_9 [0] : vector<512x8xf32> to vector<8xf32>
    %12 = vector.shape_cast %11 : vector<8xf32> to vector<1x8xf32>
    %cst_10 = arith.constant 0.000000e+00 : f32
    %13 = vector.broadcast %cst_10 : f32 to vector<6x8xf32>
    %14 = tpu.concatenate %9, %12, %13 in 0 : vector<1x8xf32>, vector<1x8xf32>, vector<6x8xf32> -> vector<8x8xf32>
    %15 = vector.shape_cast %14 : vector<8x8xf32> to vector<1x1x8x8xf32>
    %c0_11 = arith.constant 0 : index
    %c0_12 = arith.constant 0 : index
    %c0_13 = arith.constant 0 : index
    %c0_14 = arith.constant 0 : index
    %16 = vector.load %arg5[%c0_11, %c0_12, %c0_13, %c0_14] : memref<1x1x8x8xf32, #tpu.memory_space<vmem>>, vector<1x1x8x8xf32>
    tpu.vector_store %arg5[%c0_11, %c0_12, %c0_13, %c0_14], %15 {strides = array<i32>} : memref<1x1x8x8xf32, #tpu.memory_space<vmem>>, vector<1x1x8x8xf32>,
    return
  }
  func.func @transform_0(%arg0: i32, %arg1: i32) -> (i32, i32, i32) {
    %c0_i32 = arith.constant 0 : i32
    %c0_i32_0 = arith.constant 0 : i32
    return %arg0, %arg1, %c0_i32 : i32, i32, i32
  }
  func.func @transform_1(%arg0: i32, %arg1: i32) -> (i32, i32, i32) {
    %c0_i32 = arith.constant 0 : i32
    %c0_i32_0 = arith.constant 0 : i32
    %c0_i32_1 = arith.constant 0 : i32
    return %arg0, %c0_i32, %c0_i32_0 : i32, i32, i32
  }
  func.func @transform_2(%arg0: i32, %arg1: i32) -> (i32, i32, i32) {
    %c0_i32 = arith.constant 0 : i32
    %c0_i32_0 = arith.constant 0 : i32
    return %arg0, %arg1, %c0_i32 : i32, i32, i32
  }
  func.func @transform_3(%arg0: i32, %arg1: i32) -> (i32, i32, i32, i32) {
    %c0_i32 = arith.constant 0 : i32
    %c0_i32_0 = arith.constant 0 : i32
    %c0_i32_1 = arith.constant 0 : i32
    return %arg0, %arg1, %c0_i32, %c0_i32_0 : i32, i32, i32, i32
  }
}

module attributes {stable_mosaic.version = 11 : i64} {
  func.func @_bn_relu_kernel(%arg0: i32, %arg1: memref<512x128xbf16, #tpu.memory_space<vmem>>, %arg2: memref<1x128xf32, #tpu.memory_space<vmem>>, %arg3: memref<1x128xf32, #tpu.memory_space<vmem>>, %arg4: memref<512x128xbf16, #tpu.memory_space<vmem>>) attributes {dimension_semantics = [#tpu.dimension_semantics<parallel>], iteration_bounds = array<i64: 1>, scalar_prefetch = 0 : i64, scratch_operands = 0 : i64, tpu.core_type = #tpu.core_type<tc>, window_params = [{transform_indices = @transform_0, window_bounds = array<i64: 512, 128>}, {pipeline_mode = #tpu.pipeline_mode<synchronous>, transform_indices = @transform_1, window_bounds = array<i64: 1, 128>}, {pipeline_mode = #tpu.pipeline_mode<synchronous>, transform_indices = @transform_2, window_bounds = array<i64: 1, 128>}, {transform_indices = @transform_3, window_bounds = array<i64: 512, 128>}]} {
    %c0 = arith.constant 0 : index
    %c0_0 = arith.constant 0 : index
    %0 = vector.load %arg1[%c0, %c0_0] : memref<512x128xbf16, #tpu.memory_space<vmem>>, vector<512x128xbf16>
    %1 = arith.extf %0 : vector<512x128xbf16> to vector<512x128xf32>
    %c0_1 = arith.constant 0 : index
    %c0_2 = arith.constant 0 : index
    %2 = vector.load %arg2[%c0_1, %c0_2] : memref<1x128xf32, #tpu.memory_space<vmem>>, vector<1x128xf32>
    %3 = vector.broadcast %2 : vector<1x128xf32> to vector<512x128xf32>
    %4 = arith.mulf %1, %3 : vector<512x128xf32>
    %c0_3 = arith.constant 0 : index
    %c0_4 = arith.constant 0 : index
    %5 = vector.load %arg3[%c0_3, %c0_4] : memref<1x128xf32, #tpu.memory_space<vmem>>, vector<1x128xf32>
    %6 = vector.broadcast %5 : vector<1x128xf32> to vector<512x128xf32>
    %7 = arith.addf %4, %6 : vector<512x128xf32>
    %cst = arith.constant 0.000000e+00 : f32
    %8 = vector.broadcast %cst : f32 to vector<512x128xf32>
    %9 = arith.maximumf %7, %8 : vector<512x128xf32>
    %10 = arith.truncf %9 : vector<512x128xf32> to vector<512x128xbf16>
    %c0_5 = arith.constant 0 : index
    %c0_6 = arith.constant 0 : index
    %11 = vector.load %arg4[%c0_5, %c0_6] : memref<512x128xbf16, #tpu.memory_space<vmem>>, vector<512x128xbf16>
    tpu.vector_store %arg4[%c0_5, %c0_6], %10 {strides = array<i32>} : memref<512x128xbf16, #tpu.memory_space<vmem>>, vector<512x128xbf16>,
    return
  }
  func.func @transform_0(%arg0: i32) -> (i32, i32) {
    %c0_i32 = arith.constant 0 : i32
    %c0_i32_0 = arith.constant 0 : i32
    return %arg0, %c0_i32 : i32, i32
  }
  func.func @transform_1(%arg0: i32) -> (i32, i32) {
    %c0_i32 = arith.constant 0 : i32
    %c0_i32_0 = arith.constant 0 : i32
    %c0_i32_1 = arith.constant 0 : i32
    return %c0_i32, %c0_i32_0 : i32, i32
  }
  func.func @transform_2(%arg0: i32) -> (i32, i32) {
    %c0_i32 = arith.constant 0 : i32
    %c0_i32_0 = arith.constant 0 : i32
    %c0_i32_1 = arith.constant 0 : i32
    return %c0_i32, %c0_i32_0 : i32, i32
  }
  func.func @transform_3(%arg0: i32) -> (i32, i32) {
    %c0_i32 = arith.constant 0 : i32
    %c0_i32_0 = arith.constant 0 : i32
    return %arg0, %c0_i32 : i32, i32
  }
}

module attributes {stable_mosaic.version = 11 : i64} {
  func.func @_gemm_tanh_kernel(%arg0: i32, %arg1: i32, %arg2: memref<1x512x32xbf16, #tpu.memory_space<vmem>>, %arg3: memref<1x32x3xbf16, #tpu.memory_space<vmem>>, %arg4: memref<1x512x3xf32, #tpu.memory_space<vmem>>) attributes {dimension_semantics = [#tpu.dimension_semantics<parallel>, #tpu.dimension_semantics<parallel>], iteration_bounds = array<i64: 4, 16>, scalar_prefetch = 0 : i64, scratch_operands = 0 : i64, tpu.core_type = #tpu.core_type<tc>, window_params = [{transform_indices = @transform_0, window_bounds = array<i64: 1, 512, 32>}, {transform_indices = @transform_1, window_bounds = array<i64: 1, 32, 3>}, {transform_indices = @transform_2, window_bounds = array<i64: 1, 512, 3>}]} {
    %c0 = arith.constant 0 : index
    %c0_0 = arith.constant 0 : index
    %c0_1 = arith.constant 0 : index
    %0 = vector.load %arg2[%c0, %c0_0, %c0_1] : memref<1x512x32xbf16, #tpu.memory_space<vmem>>, vector<1x512x32xbf16>
    %1 = vector.shape_cast %0 : vector<1x512x32xbf16> to vector<512x32xbf16>
    %c0_2 = arith.constant 0 : index
    %c0_3 = arith.constant 0 : index
    %c0_4 = arith.constant 0 : index
    %2 = vector.load %arg3[%c0_2, %c0_3, %c0_4] : memref<1x32x3xbf16, #tpu.memory_space<vmem>>, vector<1x32x3xbf16>
    %3 = vector.shape_cast %2 : vector<1x32x3xbf16> to vector<32x3xbf16>
    %cst = arith.constant dense<0.000000e+00> : vector<512x3xf32>
    %4 = tpu.matmul %1, %3, %cst {dimension_numbers = #tpu.dot_dimension_numbers<[1], [0], [0], [1], [0, 0, 1, 1], [], []>} : vector<512x32xbf16>, vector<32x3xbf16>, vector<512x3xf32> -> vector<512x3xf32>
    %5 = math.tanh %4 : vector<512x3xf32>
    %6 = vector.shape_cast %5 : vector<512x3xf32> to vector<1x512x3xf32>
    %c0_5 = arith.constant 0 : index
    %c0_6 = arith.constant 0 : index
    %c0_7 = arith.constant 0 : index
    %7 = vector.load %arg4[%c0_5, %c0_6, %c0_7] : memref<1x512x3xf32, #tpu.memory_space<vmem>>, vector<1x512x3xf32>
    tpu.vector_store %arg4[%c0_5, %c0_6, %c0_7], %6 {strides = array<i32>} : memref<1x512x3xf32, #tpu.memory_space<vmem>>, vector<1x512x3xf32>,
    return
  }
  func.func @transform_0(%arg0: i32, %arg1: i32) -> (i32, i32, i32) {
    %c0_i32 = arith.constant 0 : i32
    %c0_i32_0 = arith.constant 0 : i32
    return %arg0, %arg1, %c0_i32 : i32, i32, i32
  }
  func.func @transform_1(%arg0: i32, %arg1: i32) -> (i32, i32, i32) {
    %c0_i32 = arith.constant 0 : i32
    %c0_i32_0 = arith.constant 0 : i32
    %c0_i32_1 = arith.constant 0 : i32
    return %arg0, %c0_i32, %c0_i32_0 : i32, i32, i32
  }
  func.func @transform_2(%arg0: i32, %arg1: i32) -> (i32, i32, i32) {
    %c0_i32 = arith.constant 0 : i32
    %c0_i32_0 = arith.constant 0 : i32
    return %arg0, %arg1, %c0_i32 : i32, i32, i32
  }
}

</mosaic_0001>

<llo_original>
// kernel: tile.53
$region0: #{tile.53}
  #allocation0 [shape = 's32[1]{0}', space=sflag, size = 0x4, scoped, tag = 'scoped memory for tile.53']
  %s0 = inlined_call_operand.vmem [shape: f32[128], index: 0, kind: input, shape index: {}]
  %s1 = inlined_call_operand.vmem [shape: f32[16,128], index: 1, kind: output, shape index: {}]
  // Predicated region
  $region2: #{tile.53} parent=0 // pred_check
    _
  $region3: #{tile.53} parent=0 // pred_check_branch
    %3 = sbr.rel (0) target = $region5
  $region4: #{tile.53} parent=0 // pred_region
    _
  $region5: #{tile.53} parent=0 // pred_fallthru
    _
  %v4 = vld [vmem:[%s0] ss:$0 sm:$0xff]
  %5 = vst [vmem:[%s1] sm:$0xff] %v4
  %s6 = scalar_lea.vmem %s1, 8
  %7 = vst [vmem:[%s6] sm:$0xff] %v4

// kernel: generator_forward.12
$region0: #{generator_forward.12}
  #allocation0 [shape = 'u32[]', space=smem, size = 0x4, offset = 0x4, fixed_abs, tag = 'smem constant byte address 0x4 - core index']
  #allocation1 [shape = 'u32[72,128]{1,0:T(1,128)}', space=vmem, size = 0x9000, scoped, tag = 'internal scratch']
  %s0 = inlined_call_operand.vmem [shape: bf16[128,2048], index: 0, kind: input, shape index: {}]
  %s1 = inlined_call_operand.vmem [shape: f32[1,2048], index: 1, kind: input, shape index: {}]
  %s2 = inlined_call_operand.vmem [shape: f32[1,2048], index: 2, kind: input, shape index: {}]
  %s3 = inlined_call_operand.vmem [shape: bf16[128,2048], index: 3, kind: output, shape index: {}]
  %s4 = sld [smem:[#allocation0]]
  $region22: #{generator_forward.12} parent=0
    _
  %s6 = ssub.s32 1, %s4
  %s7 = scalar_select 0, %s6, %s4
  // Predicated region
  $region2: #{generator_forward.12} parent=0 // pred_check
    _
  $region3: #{generator_forward.12} parent=0 // pred_check_branch
    %9 = sbr.rel (0) target = $region5
  $region4: #{generator_forward.12} parent=0 // pred_region
    _
  $region5: #{generator_forward.12} parent=0 // pred_fallthru
    _
  // Predicated region
  $region6: #{generator_forward.12} parent=0 // pred_check
    _
  $region7: #{generator_forward.12} parent=0 // pred_check_branch
    %11 = sbr.rel (0) target = $region9
  $region8: #{generator_forward.12} parent=0 // pred_region
    _
  $region9: #{generator_forward.12} parent=0 // pred_fallthru
    _
  // Predicated region
  $region10: #{generator_forward.12} parent=0 // pred_check
    _
  $region11: #{generator_forward.12} parent=0 // pred_check_branch
    %13 = sbr.rel (0) target = $region13
  $region12: #{generator_forward.12} parent=0 // pred_region
    _
  $region13: #{generator_forward.12} parent=0 // pred_fallthru
    _
  %v14 = vld [vmem:[%s0] sm:$0xff]
  %v15 = vld [vmem:[%s0 + $0x8] sm:$0xff]
  %v16 = vld [vmem:[%s0 + $0x10] sm:$0xff]
  %v17 = vld [vmem:[%s0 + $0x18] sm:$0xff]
  %v18 = vld [vmem:[%s0 + $0x20] sm:$0xff]
  %v19 = vld [vmem:[%s0 + $0x28] sm:$0xff]
  %v20 = vld [vmem:[%s0 + $0x30] sm:$0xff]
  %v21 = vld [vmem:[%s0 + $0x38] sm:$0xff]
  %v22 = vld [vmem:[%s0 + $0x40] sm:$0xff]
  %v23 = vld [vmem:[%s0 + $0x48] sm:$0xff]
  %v24 = vld [vmem:[%s0 + $0x50] sm:$0xff]
  %v25 = vld [vmem:[%s0 + $0x58] sm:$0xff]
  %v26 = vld [vmem:[%s0 + $0x60] sm:$0xff]
  %v27 = vld [vmem:[%s0 + $0x68] sm:$0xff]
  %v28 = vld [vmem:[%s0 + $0x70] sm:$0xff]
  %v29 = vld [vmem:[%s0 + $0x78] sm:$0xff]
  %v30 = vld [vmem:[%s0 + $0x80] sm:$0xff]
  %v31 = vld [vmem:[%s0 + $0x88] sm:$0xff]
  %v32 = vld [vmem:[%s0 + $0x90] sm:$0xff]
  %v33 = vld [vmem:[%s0 + $0x98] sm:$0xff]
  %v34 = vld [vmem:[%s0 + $0xa0] sm:$0xff]
  %v35 = vld [vmem:[%s0 + $0xa8] sm:$0xff]
  %v36 = vld [vmem:[%s0 + $0xb0] sm:$0xff]
  %v37 = vld [vmem:[%s0 + $0xb8] sm:$0xff]
  %v38 = vld [vmem:[%s0 + $0xc0] sm:$0xff]
  %v39 = vld [vmem:[%s0 + $0xc8] sm:$0xff]
  %v40 = vld [vmem:[%s0 + $0xd0] sm:$0xff]
  %v41 = vld [vmem:[%s0 + $0xd8] sm:$0xff]
  %v42 = vld [vmem:[%s0 + $0xe0] sm:$0xff]
  %v43 = vld [vmem:[%s0 + $0xe8] sm:$0xff]
  %v44 = vld [vmem:[%s0 + $0xf0] sm:$0xff]
  %v45 = vld [vmem:[%s0 + $0xf8] sm:$0xff]
  %v46 = vld [vmem:[%s0 + $0x100] sm:$0xff]
  %v47 = vld [vmem:[%s0 + $0x108] sm:$0xff]
  %v48 = vld [vmem:[%s0 + $0x110] sm:$0xff]
  %v49 = vld [vmem:[%s0 + $0x118] sm:$0xff]
  %v50 = vld [vmem:[%s0 + $0x120] sm:$0xff]
  %v51 = vld [vmem:[%s0 + $0x128] sm:$0xff]
  %v52 = vld [vmem:[%s0 + $0x130] sm:$0xff]
  %v53 = vld [vmem:[%s0 + $0x138] sm:$0xff]
  %v54 = vld [vmem:[%s0 + $0x140] sm:$0xff]
  %v55 = vld [vmem:[%s0 + $0x148] sm:$0xff]
  %v56 = vld [vmem:[%s0 + $0x150] sm:$0xff]
  %v57 = vld [vmem:[%s0 + $0x158] sm:$0xff]
  %v58 = vld [vmem:[%s0 + $0x160] sm:$0xff]
  %v59 = vld [vmem:[%s0 + $0x168] sm:$0xff]
  %v60 = vld [vmem:[%s0 + $0x170] sm:$0xff]
  %v61 = vld [vmem:[%s0 + $0x178] sm:$0xff]
  %v62 = vld [vmem:[%s0 + $0x180] sm:$0xff]
  %v63 = vld [vmem:[%s0 + $0x188] sm:$0xff]
  %v64 = vld [vmem:[%s0 + $0x190] sm:$0xff]
  %v65 = vld [vmem:[%s0 + $0x198] sm:$0xff]
  %v66 = vld [vmem:[%s0 + $0x1a0] sm:$0xff]
  %v67 = vld [vmem:[%s0 + $0x1a8] sm:$0xff]
  %v68 = vld [vmem:[%s0 + $0x1b0] sm:$0xff]
  %v69 = vld [vmem:[%s0 + $0x1b8] sm:$0xff]
  %v70 = vld [vmem:[%s0 + $0x1c0] sm:$0xff]
  %v71 = vld [vmem:[%s0 + $0x1c8] sm:$0xff]
  %v72 = vld [vmem:[%s0 + $0x1d0] sm:$0xff]
  %v73 = vld [vmem:[%s0 + $0x1d8] sm:$0xff]
  %v74 = vld [vmem:[%s0 + $0x1e0] sm:$0xff]
  %v75 = vld [vmem:[%s0 + $0x1e8] sm:$0xff]
  %v76 = vld [vmem:[%s0 + $0x1f0] sm:$0xff]
  %v77 = vld [vmem:[%s0 + $0x1f8] sm:$0xff]
  %v78 = vld [vmem:[%s0 + $0x200] sm:$0xff]
  %v79 = vld [vmem:[%s0 + $0x208] sm:$0xff]
  %v80 = vld [vmem:[%s0 + $0x210] sm:$0xff]
  %v81 = vld [vmem:[%s0 + $0x218] sm:$0xff]
  %v82 = vld [vmem:[%s0 + $0x220] sm:$0xff]
  %v83 = vld [vmem:[%s0 + $0x228] sm:$0xff]
  %v84 = vld [vmem:[%s0 + $0x230] sm:$0xff]
  %v85 = vld [vmem:[%s0 + $0x238] sm:$0xff]
  %v86 = vld [vmem:[%s0 + $0x240] sm:$0xff]
  %v87 = vld [vmem:[%s0 + $0x248] sm:$0xff]
  %v88 = vld [vmem:[%s0 + $0x250] sm:$0xff]
  %v89 = vld [vmem:[%s0 + $0x258] sm:$0xff]
  %v90 = vld [vmem:[%s0 + $0x260] sm:$0xff]
  %v91 = vld [vmem:[%s0 + $0x268] sm:$0xff]
  %v92 = vld [vmem:[%s0 + $0x270] sm:$0xff]
  %v93 = vld [vmem:[%s0 + $0x278] sm:$0xff]
  %v94 = vld [vmem:[%s0 + $0x280] sm:$0xff]
  %v95 = vld [vmem:[%s0 + $0x288] sm:$0xff]
  %v96 = vld [vmem:[%s0 + $0x290] sm:$0xff]
  %v97 = vld [vmem:[%s0 + $0x298] sm:$0xff]
  %v98 = vld [vmem:[%s0 + $0x2a0] sm:$0xff]
  %v99 = vld [vmem:[%s0 + $0x2a8] sm:$0xff]
  %v100 = vld [vmem:[%s0 + $0x2b0] sm:$0xff]
  %v101 = vld [vmem:[%s0 + $0x2b8] sm:$0xff]
  %v102 = vld [vmem:[%s0 + $0x2c0] sm:$0xff]
  %v103 = vld [vmem:[%s0 + $0x2c8] sm:$0xff]
  %v104 = vld [vmem:[%s0 + $0x2d0] sm:$0xff]
  %v105 = vld [vmem:[%s0 + $0x2d8] sm:$0xff]
  %v106 = vld [vmem:[%s0 + $0x2e0] sm:$0xff]
  %v107 = vld [vmem:[%s0 + $0x2e8] sm:$0xff]
  %v108 = vld [vmem:[%s0 + $0x2f0] sm:$0xff]
  %v109 = vld [vmem:[%s0 + $0x2f8] sm:$0xff]
  %v110 = vld [vmem:[%s0 + $0x300] sm:$0xff]
  %v111 = vld [vmem:[%s0 + $0x308] sm:$0xff]
  %v112 = vld [vmem:[%s0 + $0x310] sm:$0xff]
  %v113 = vld [vmem:[%s0 + $0x318] sm:$0xff]
  %v114 = vld [vmem:[%s0 + $0x320] sm:$0xff]
  %v115 = vld [vmem:[%s0 + $0x328] sm:$0xff]
  %v116 = vld [vmem:[%s0 + $0x330] sm:$0xff]
  %v117 = vld [vmem:[%s0 + $0x338] sm:$0xff]
  %v118 = vld [vmem:[%s0 + $0x340] sm:$0xff]
  %v119 = vld [vmem:[%s0 + $0x348] sm:$0xff]
  %v120 = vld [vmem:[%s0 + $0x350] sm:$0xff]
  %v121 = vld [vmem:[%s0 + $0x358] sm:$0xff]
  %v122 = vld [vmem:[%s0 + $0x360] sm:$0xff]
  %v123 = vld [vmem:[%s0 + $0x368] sm:$0xff]
  %v124 = vld [vmem:[%s0 + $0x370] sm:$0xff]
  %v125 = vld [vmem:[%s0 + $0x378] sm:$0xff]
  %v126 = vld [vmem:[%s0 + $0x380] sm:$0xff]
  %v127 = vld [vmem:[%s0 + $0x388] sm:$0xff]
  %v128 = vld [vmem:[%s0 + $0x390] sm:$0xff]
  %v129 = vld [vmem:[%s0 + $0x398] sm:$0xff]
  %v130 = vld [vmem:[%s0 + $0x3a0] sm:$0xff]
  %v131 = vld [vmem:[%s0 + $0x3a8] sm:$0xff]
  %v132 = vld [vmem:[%s0 + $0x3b0] sm:$0xff]
  %v133 = vld [vmem:[%s0 + $0x3b8] sm:$0xff]
  %v134 = vld [vmem:[%s0 + $0x3c0] sm:$0xff]
  %v135 = vld [vmem:[%s0 + $0x3c8] sm:$0xff]
  %v136 = vld [vmem:[%s0 + $0x3d0] sm:$0xff]
  %v137 = vld [vmem:[%s0 + $0x3d8] sm:$0xff]
  %v138 = vld [vmem:[%s0 + $0x3e0] sm:$0xff]
  %v139 = vld [vmem:[%s0 + $0x3e8] sm:$0xff]
  %v140 = vld [vmem:[%s0 + $0x3f0] sm:$0xff]
  %v141 = vld [vmem:[%s0 + $0x3f8] sm:$0xff]
  %v142 = vunpack.c.l.bf16 %v14
  %v143 = vunpack.c.h.bf16 %v14
  %v144 = vunpack.c.l.bf16 %v15
  %v145 = vunpack.c.h.bf16 %v15
  %v146 = vunpack.c.l.bf16 %v16
  %v147 = vunpack.c.h.bf16 %v16
  %v148 = vunpack.c.l.bf16 %v17
  %v149 = vunpack.c.h.bf16 %v17
  %v150 = vunpack.c.l.bf16 %v18
  %v151 = vunpack.c.h.bf16 %v18
  %v152 = vunpack.c.l.bf16 %v19
  %v153 = vunpack.c.h.bf16 %v19
  %v154 = vunpack.c.l.bf16 %v20
  %v155 = vunpack.c.h.bf16 %v20
  %v156 = vunpack.c.l.bf16 %v21
  %v157 = vunpack.c.h.bf16 %v21
  %v158 = vunpack.c.l.bf16 %v22
  %v159 = vunpack.c.h.bf16 %v22
  %v160 = vunpack.c.l.bf16 %v23
  %v161 = vunpack.c.h.bf16 %v23
  %v162 = vunpack.c.l.bf16 %v24
  %v163 = vunpack.c.h.bf16 %v24
  %v164 = vunpack.c.l.bf16 %v25
  %v165 = vunpack.c.h.bf16 %v25
  %v166 = vunpack.c.l.bf16 %v26
  %v167 = vunpack.c.h.bf16 %v26
  %v168 = vunpack.c.l.bf16 %v27
  %v169 = vunpack.c.h.bf16 %v27
  %v170 = vunpack.c.l.bf16 %v28
  %v171 = vunpack.c.h.bf16 %v28
  %v172 = vunpack.c.l.bf16 %v29
  %v173 = vunpack.c.h.bf16 %v29
  %v174 = vunpack.c.l.bf16 %v30
  %v175 = vunpack.c.h.bf16 %v30
  %v176 = vunpack.c.l.bf16 %v31
  %v177 = vunpack.c.h.bf16 %v31
  %v178 = vunpack.c.l.bf16 %v32
  %v179 = vunpack.c.h.bf16 %v32
  %v180 = vunpack.c.l.bf16 %v33
  %v181 = vunpack.c.h.bf16 %v33
  %v182 = vunpack.c.l.bf16 %v34
  %v183 = vunpack.c.h.bf16 %v34
  %v184 = vunpack.c.l.bf16 %v35
  %v185 = vunpack.c.h.bf16 %v35
  %v186 = vunpack.c.l.bf16 %v36
  %v187 = vunpack.c.h.bf16 %v36
  %v188 = vunpack.c.l.bf16 %v37
  %v189 = vunpack.c.h.bf16 %v37
  %v190 = vunpack.c.l.bf16 %v38
  %v191 = vunpack.c.h.bf16 %v38
  %v192 = vunpack.c.l.bf16 %v39
  %v193 = vunpack.c.h.bf16 %v39
  %v194 = vunpack.c.l.bf16 %v40
  %v195 = vunpack.c.h.bf16 %v40
  %v196 = vunpack.c.l.bf16 %v41
  %v197 = vunpack.c.h.bf16 %v41
  %v198 = vunpack.c.l.bf16 %v42
  %v199 = vunpack.c.h.bf16 %v42
  %v200 = vunpack.c.l.bf16 %v43
  %v201 = vunpack.c.h.bf16 %v43
  %v202 = vunpack.c.l.bf16 %v44
  %v203 = vunpack.c.h.bf16 %v44
  %v204 = vunpack.c.l.bf16 %v45
  %v205 = vunpack.c.h.bf16 %v45
  %v206 = vunpack.c.l.bf16 %v46
  %v207 = vunpack.c.h.bf16 %v46
  %v208 = vunpack.c.l.bf16 %v47
  %v209 = vunpack.c.h.bf16 %v47
  %v210 = vunpack.c.l.bf16 %v48
  %v211 = vunpack.c.h.bf16 %v48
  %v212 = vunpack.c.l.bf16 %v49
  %v213 = vunpack.c.h.bf16 %v49
  %v214 = vunpack.c.l.bf16 %v50
  %v215 = vunpack.c.h.bf16 %v50
  %v216 = vunpack.c.l.bf16 %v51
  %v217 = vunpack.c.h.bf16 %v51
  %v218 = vunpack.c.l.bf16 %v52
  %v219 = vunpack.c.h.bf16 %v52
  %v220 = vunpack.c.l.bf16 %v53
  %v221 = vunpack.c.h.bf16 %v53
  %v222 = vunpack.c.l.bf16 %v54
  %v223 = vunpack.c.h.bf16 %v54
  %v224 = vunpack.c.l.bf16 %v55
  %v225 = vunpack.c.h.bf16 %v55
  %v226 = vunpack.c.l.bf16 %v56
  %v227 = vunpack.c.h.bf16 %v56
  %v228 = vunpack.c.l.bf16 %v57
  %v229 = vunpack.c.h.bf16 %v57
  %v230 = vunpack.c.l.bf16 %v58
  %v231 = vunpack.c.h.bf16 %v58
  %v232 = vunpack.c.l.bf16 %v59
  %v233 = vunpack.c.h.bf16 %v59
  %v234 = vunpack.c.l.bf16 %v60
  %v235 = vunpack.c.h.bf16 %v60
  %v236 = vunpack.c.l.bf16 %v61
  %v237 = vunpack.c.h.bf16 %v61
  %v238 = vunpack.c.l.bf16 %v62
  %v239 = vunpack.c.h.bf16 %v62
  %v240 = vunpack.c.l.bf16 %v63
  %v241 = vunpack.c.h.bf16 %v63
  %v242 = vunpack.c.l.bf16 %v64
  %v243 = vunpack.c.h.bf16 %v64
  %v244 = vunpack.c.l.bf16 %v65
  %v245 = vunpack.c.h.bf16 %v65
  %v246 = vunpack.c.l.bf16 %v66
  %v247 = vunpack.c.h.bf16 %v66
  %v248 = vunpack.c.l.bf16 %v67
  %v249 = vunpack.c.h.bf16 %v67
  %v250 = vunpack.c.l.bf16 %v68
  %v251 = vunpack.c.h.bf16 %v68
  %v252 = vunpack.c.l.bf16 %v69
  %v253 = vunpack.c.h.bf16 %v69
  %v254 = vunpack.c.l.bf16 %v70
  %v255 = vunpack.c.h.bf16 %v70
  %v256 = vunpack.c.l.bf16 %v71
  %v257 = vunpack.c.h.bf16 %v71
  %v258 = vunpack.c.l.bf16 %v72
  %v259 = vunpack.c.h.bf16 %v72
  %v260 = vunpack.c.l.bf16 %v73
  %v261 = vunpack.c.h.bf16 %v73
  %v262 = vunpack.c.l.bf16 %v74
  %v263 = vunpack.c.h.bf16 %v74
  %v264 = vunpack.c.l.bf16 %v75
  %v265 = vunpack.c.h.bf16 %v75
  %v266 = vunpack.c.l.bf16 %v76
  %v267 = vunpack.c.h.bf16 %v76
  %v268 = vunpack.c.l.bf16 %v77
  %v269 = vunpack.c.h.bf16 %v77
  %v270 = vunpack.c.l.bf16 %v78
  %v271 = vunpack.c.h.bf16 %v78
  %v272 = vunpack.c.l.bf16 %v79
  %v273 = vunpack.c.h.bf16 %v79
  %v274 = vunpack.c.l.bf16 %v80
  %v275 = vunpack.c.h.bf16 %v80
  %v276 = vunpack.c.l.bf16 %v81
  %v277 = vunpack.c.h.bf16 %v81
  %v278 = vunpack.c.l.bf16 %v82
  %v279 = vunpack.c.h.bf16 %v82
  %v280 = vunpack.c.l.bf16 %v83
  %v281 = vunpack.c.h.bf16 %v83
  %v282 = vunpack.c.l.bf16 %v84
  %v283 = vunpack.c.h.bf16 %v84
  %v284 = vunpack.c.l.bf16 %v85
  %v285 = vunpack.c.h.bf16 %v85
  %v286 = vunpack.c.l.bf16 %v86
  %v287 = vunpack.c.h.bf16 %v86
  %v288 = vunpack.c.l.bf16 %v87
  %v289 = vunpack.c.h.bf16 %v87
  %v290 = vunpack.c.l.bf16 %v88
  %v291 = vunpack.c.h.bf16 %v88
  %v292 = vunpack.c.l.bf16 %v89
  %v293 = vunpack.c.h.bf16 %v89
  %v294 = vunpack.c.l.bf16 %v90
  %v295 = vunpack.c.h.bf16 %v90
  %v296 = vunpack.c.l.bf16 %v91
  %v297 = vunpack.c.h.bf16 %v91
  %v298 = vunpack.c.l.bf16 %v92
  %v299 = vunpack.c.h.bf16 %v92
  %v300 = vunpack.c.l.bf16 %v93
  %v301 = vunpack.c.h.bf16 %v93
  %v302 = vunpack.c.l.bf16 %v94
  %v303 = vunpack.c.h.bf16 %v94
  %v304 = vunpack.c.l.bf16 %v95
  %v305 = vunpack.c.h.bf16 %v95
  %v306 = vunpack.c.l.bf16 %v96
  %v307 = vunpack.c.h.bf16 %v96
  %v308 = vunpack.c.l.bf16 %v97
  %v309 = vunpack.c.h.bf16 %v97
  %v310 = vunpack.c.l.bf16 %v98
  %v311 = vunpack.c.h.bf16 %v98
  %v312 = vunpack.c.l.bf16 %v99
  %v313 = vunpack.c.h.bf16 %v99
  %v314 = vunpack.c.l.bf16 %v100
  %v315 = vunpack.c.h.bf16 %v100
  %v316 = vunpack.c.l.bf16 %v101
  %v317 = vunpack.c.h.bf16 %v101
  %v318 = vunpack.c.l.bf16 %v102
  %v319 = vunpack.c.h.bf16 %v102
  %v320 = vunpack.c.l.bf16 %v103
  %v321 = vunpack.c.h.bf16 %v103
  %v322 = vunpack.c.l.bf16 %v104
  %v323 = vunpack.c.h.bf16 %v104
  %v324 = vunpack.c.l.bf16 %v105
  %v325 = vunpack.c.h.bf16 %v105
  %v326 = vunpack.c.l.bf16 %v106
  %v327 = vunpack.c.h.bf16 %v106
  %v328 = vunpack.c.l.bf16 %v107
  %v329 = vunpack.c.h.bf16 %v107
  %v330 = vunpack.c.l.bf16 %v108
  %v331 = vunpack.c.h.bf16 %v108
  %v332 = vunpack.c.l.bf16 %v109
  %v333 = vunpack.c.h.bf16 %v109
  %v334 = vunpack.c.l.bf16 %v110
  %v335 = vunpack.c.h.bf16 %v110
  %v336 = vunpack.c.l.bf16 %v111
  %v337 = vunpack.c.h.bf16 %v111
  %v338 = vunpack.c.l.bf16 %v112
  %v339 = vunpack.c.h.bf16 %v112
  %v340 = vunpack.c.l.bf16 %v113
  %v341 = vunpack.c.h.bf16 %v113
  %v342 = vunpack.c.l.bf16 %v114
  %v343 = vunpack.c.h.bf16 %v114
  %v344 = vunpack.c.l.bf16 %v115
  %v345 = vunpack.c.h.bf16 %v115
  %v346 = vunpack.c.l.bf16 %v116
  %v347 = vunpack.c.h.bf16 %v116
  %v348 = vunpack.c.l.bf16 %v117
  %v349 = vunpack.c.h.bf16 %v117
  %v350 = vunpack.c.l.bf16 %v118
  %v351 = vunpack.c.h.bf16 %v118
  %v352 = vunpack.c.l.bf16 %v119
  %v353 = vunpack.c.h.bf16 %v119
  %v354 = vunpack.c.l.bf16 %v120
  %v355 = vunpack.c.h.bf16 %v120
  %v356 = vunpack.c.l.bf16 %v121
  %v357 = vunpack.c.h.bf16 %v121
  %v358 = vunpack.c.l.bf16 %v122
  %v359 = vunpack.c.h.bf16 %v122
  %v360 = vunpack.c.l.bf16 %v123
  %v361 = vunpack.c.h.bf16 %v123
  %v362 = vunpack.c.l.bf16 %v124
  %v363 = vunpack.c.h.bf16 %v124
  %v364 = vunpack.c.l.bf16 %v125
  %v365 = vunpack.c.h.bf16 %v125
  %v366 = vunpack.c.l.bf16 %v126
  %v367 = vunpack.c.h.bf16 %v126
  %v368 = vunpack.c.l.bf16 %v127
  %v369 = vunpack.c.h.bf16 %v127
  %v370 = vunpack.c.l.bf16 %v128
  %v371 = vunpack.c.h.bf16 %v128
  %v372 = vunpack.c.l.bf16 %v129
  %v373 = vunpack.c.h.bf16 %v129
  %v374 = vunpack.c.l.bf16 %v130
  %v375 = vunpack.c.h.bf16 %v130
  %v376 = vunpack.c.l.bf16 %v131
  %v377 = vunpack.c.h.bf16 %v131
  %v378 = vunpack.c.l.bf16 %v132
  %v379 = vunpack.c.h.bf16 %v132
  %v380 = vunpack.c.l.bf16 %v133
  %v381 = vunpack.c.h.bf16 %v133
  %v382 = vunpack.c.l.bf16 %v134
  %v383 = vunpack.c.h.bf16 %v134
  %v384 = vunpack.c.l.bf16 %v135
  %v385 = vunpack.c.h.bf16 %v135
  %v386 = vunpack.c.l.bf16 %v136
  %v387 = vunpack.c.h.bf16 %v136
  %v388 = vunpack.c.l.bf16 %v137
  %v389 = vunpack.c.h.bf16 %v137
  %v390 = vunpack.c.l.bf16 %v138
  %v391 = vunpack.c.h.bf16 %v138
  %v392 = vunpack.c.l.bf16 %v139
  %v393 = vunpack.c.h.bf16 %v139
  %v394 = vunpack.c.l.bf16 %v140
  %v395 = vunpack.c.h.bf16 %v140
  %v396 = vunpack.c.l.bf16 %v141
  %v397 = vunpack.c.h.bf16 %v141
  %v398 = vld [vmem:[%s1] sm:$0xff]
  %v399 = vld [vmem:[%s1 + $0x8] sm:$0xff]
  %v402 = vperm.slane %v398, 0
  %v403 = vperm.slane %v398, 1
  %v404 = vperm.slane %v398, 2
  %v405 = vperm.slane %v398, 3
  %v406 = vperm.slane %v398, 4
  %v407 = vperm.slane %v398, 5
  %v408 = vperm.slane %v398, 6
  %v409 = vperm.slane %v398, 7
  %v410 = vperm.slane %v399, 0
  %v411 = vperm.slane %v399, 1
  %v412 = vperm.slane %v399, 2
  %v413 = vperm.slane %v399, 3
  %v414 = vperm.slane %v399, 4
  %v415 = vperm.slane %v399, 5
  %v416 = vperm.slane %v399, 6
  %v417 = vperm.slane %v399, 7
  %v434 = vmul.f32 %v142, %v402
  %v435 = vmul.f32 %v143, %v403
  %v436 = vmul.f32 %v144, %v404
  %v437 = vmul.f32 %v145, %v405
  %v438 = vmul.f32 %v146, %v406
  %v439 = vmul.f32 %v147, %v407
  %v440 = vmul.f32 %v148, %v408
  %v441 = vmul.f32 %v149, %v409
  %v442 = vmul.f32 %v150, %v410
  %v443 = vmul.f32 %v151, %v411
  %v444 = vmul.f32 %v152, %v412
  %v445 = vmul.f32 %v153, %v413
  %v446 = vmul.f32 %v154, %v414
  %v447 = vmul.f32 %v155, %v415
  %v448 = vmul.f32 %v156, %v416
  %v449 = vmul.f32 %v157, %v417
  %v450 = vmul.f32 %v158, %v402
  %v451 = vmul.f32 %v159, %v403
  %v452 = vmul.f32 %v160, %v404
  %v453 = vmul.f32 %v161, %v405
  %v454 = vmul.f32 %v162, %v406
  %v455 = vmul.f32 %v163, %v407
  %v456 = vmul.f32 %v164, %v408
  %v457 = vmul.f32 %v165, %v409
  %v458 = vmul.f32 %v166, %v410
  %v459 = vmul.f32 %v167, %v411
  %v460 = vmul.f32 %v168, %v412
  %v461 = vmul.f32 %v169, %v413
  %v462 = vmul.f32 %v170, %v414
  %v463 = vmul.f32 %v171, %v415
  %v464 = vmul.f32 %v172, %v416
  %v465 = vmul.f32 %v173, %v417
  %v466 = vmul.f32 %v174, %v402
  %v467 = vmul.f32 %v175, %v403
  %v468 = vmul.f32 %v176, %v404
  %v469 = vmul.f32 %v177, %v405
  %v470 = vmul.f32 %v178, %v406
  %v471 = vmul.f32 %v179, %v407
  %v472 = vmul.f32 %v180, %v408
  %v473 = vmul.f32 %v181, %v409
  %v474 = vmul.f32 %v182, %v410
  %v475 = vmul.f32 %v183, %v411
  %v476 = vmul.f32 %v184, %v412
  %v477 = vmul.f32 %v185, %v413
  %v478 = vmul.f32 %v186, %v414
  %v479 = vmul.f32 %v187, %v415
  %v480 = vmul.f32 %v188, %v416
  %v481 = vmul.f32 %v189, %v417
  %v482 = vmul.f32 %v190, %v402
  %v483 = vmul.f32 %v191, %v403
  %v484 = vmul.f32 %v192, %v404
  %v485 = vmul.f32 %v193, %v405
  %v486 = vmul.f32 %v194, %v406
  %v487 = vmul.f32 %v195, %v407
  %v488 = vmul.f32 %v196, %v408
  %v489 = vmul.f32 %v197, %v409
  %v490 = vmul.f32 %v198, %v410
  %v491 = vmul.f32 %v199, %v411
  %v492 = vmul.f32 %v200, %v412
  %v493 = vmul.f32 %v201, %v413
  %v494 = vmul.f32 %v202, %v414
  %v495 = vmul.f32 %v203, %v415
  %v496 = vmul.f32 %v204, %v416
  %v497 = vmul.f32 %v205, %v417
  %v498 = vmul.f32 %v206, %v402
  %v499 = vmul.f32 %v207, %v403
  %v500 = vmul.f32 %v208, %v404
  %v501 = vmul.f32 %v209, %v405
  %v502 = vmul.f32 %v210, %v406
  %v503 = vmul.f32 %v211, %v407
  %v504 = vmul.f32 %v212, %v408
  %v505 = vmul.f32 %v213, %v409
  %v506 = vmul.f32 %v214, %v410
  %v507 = vmul.f32 %v215, %v411
  %v508 = vmul.f32 %v216, %v412
  %v509 = vmul.f32 %v217, %v413
  %v510 = vmul.f32 %v218, %v414
  %v511 = vmul.f32 %v219, %v415
  %v512 = vmul.f32 %v220, %v416
  %v513 = vmul.f32 %v221, %v417
  %v514 = vmul.f32 %v222, %v402
  %v515 = vmul.f32 %v223, %v403
  %v516 = vmul.f32 %v224, %v404
  %v517 = vmul.f32 %v225, %v405
  %v518 = vmul.f32 %v226, %v406
  %v519 = vmul.f32 %v227, %v407
  %v520 = vmul.f32 %v228, %v408
  %v521 = vmul.f32 %v229, %v409
  %v522 = vmul.f32 %v230, %v410
  %v523 = vmul.f32 %v231, %v411
  %v524 = vmul.f32 %v232, %v412
  %v525 = vmul.f32 %v233, %v413
  %v526 = vmul.f32 %v234, %v414
  %v527 = vmul.f32 %v235, %v415
  %v528 = vmul.f32 %v236, %v416
  %v529 = vmul.f32 %v237, %v417
  %v530 = vmul.f32 %v238, %v402
  %v531 = vmul.f32 %v239, %v403
  %v532 = vmul.f32 %v240, %v404
  %v533 = vmul.f32 %v241, %v405
  %v534 = vmul.f32 %v242, %v406
  %v535 = vmul.f32 %v243, %v407
  %v536 = vmul.f32 %v244, %v408
  %v537 = vmul.f32 %v245, %v409
  %v538 = vmul.f32 %v246, %v410
  %v539 = vmul.f32 %v247, %v411
  %v540 = vmul.f32 %v248, %v412
  %v541 = vmul.f32 %v249, %v413
  %v542 = vmul.f32 %v250, %v414
  %v543 = vmul.f32 %v251, %v415
  %v544 = vmul.f32 %v252, %v416
  %v545 = vmul.f32 %v253, %v417
  %v546 = vmul.f32 %v254, %v402
  %v547 = vmul.f32 %v255, %v403
  %v548 = vmul.f32 %v256, %v404
  %v549 = vmul.f32 %v257, %v405
  %v550 = vmul.f32 %v258, %v406
  %v551 = vmul.f32 %v259, %v407
  %v552 = vmul.f32 %v260, %v408
  %v553 = vmul.f32 %v261, %v409
  %v554 = vmul.f32 %v262, %v410
  %v555 = vmul.f32 %v263, %v411
  %v556 = vmul.f32 %v264, %v412
  %v557 = vmul.f32 %v265, %v413
  %v558 = vmul.f32 %v266, %v414
  %v559 = vmul.f32 %v267, %v415
  %v560 = vmul.f32 %v268, %v416
  %v561 = vmul.f32 %v269, %v417
  %v562 = vmul.f32 %v270, %v402
  %v563 = vmul.f32 %v271, %v403
  %v564 = vmul.f32 %v272, %v404
  %v565 = vmul.f32 %v273, %v405
  %v566 = vmul.f32 %v274, %v406
  %v567 = vmul.f32 %v275, %v407
  %v568 = vmul.f32 %v276, %v408
  %v569 = vmul.f32 %v277, %v409
  %v570 = vmul.f32 %v278, %v410
  %v571 = vmul.f32 %v279, %v411
  %v572 = vmul.f32 %v280, %v412
  %v573 = vmul.f32 %v281, %v413
  %v574 = vmul.f32 %v282, %v414
  %v575 = vmul.f32 %v283, %v415
  %v576 = vmul.f32 %v284, %v416
  %v577 = vmul.f32 %v285, %v417
  %v578 = vmul.f32 %v286, %v402
  %v579 = vmul.f32 %v287, %v403
  %v580 = vmul.f32 %v288, %v404
  %v581 = vmul.f32 %v289, %v405
  %v582 = vmul.f32 %v290, %v406
  %v583 = vmul.f32 %v291, %v407
  %v584 = vmul.f32 %v292, %v408
  %v585 = vmul.f32 %v293, %v409
  %v586 = vmul.f32 %v294, %v410
  %v587 = vmul.f32 %v295, %v411
  %v588 = vmul.f32 %v296, %v412
  %v589 = vmul.f32 %v297, %v413
  %v590 = vmul.f32 %v298, %v414
  %v591 = vmul.f32 %v299, %v415
  %v592 = vmul.f32 %v300, %v416
  %v593 = vmul.f32 %v301, %v417
  %v594 = vmul.f32 %v302, %v402
  %v595 = vmul.f32 %v303, %v403
  %v596 = vmul.f32 %v304, %v404
  %v597 = vmul.f32 %v305, %v405
  %v598 = vmul.f32 %v306, %v406
  %v599 = vmul.f32 %v307, %v407
  %v600 = vmul.f32 %v308, %v408
  %v601 = vmul.f32 %v309, %v409
  %v602 = vmul.f32 %v310, %v410
  %v603 = vmul.f32 %v311, %v411
  %v604 = vmul.f32 %v312, %v412
  %v605 = vmul.f32 %v313, %v413
  %v606 = vmul.f32 %v314, %v414
  %v607 = vmul.f32 %v315, %v415
  %v608 = vmul.f32 %v316, %v416
  %v609 = vmul.f32 %v317, %v417
  %v610 = vmul.f32 %v318, %v402
  %v611 = vmul.f32 %v319, %v403
  %v612 = vmul.f32 %v320, %v404
  %v613 = vmul.f32 %v321, %v405
  %v614 = vmul.f32 %v322, %v406
  %v615 = vmul.f32 %v323, %v407
  %v616 = vmul.f32 %v324, %v408
  %v617 = vmul.f32 %v325, %v409
  %v618 = vmul.f32 %v326, %v410
  %v619 = vmul.f32 %v327, %v411
  %v620 = vmul.f32 %v328, %v412
  %v621 = vmul.f32 %v329, %v413
  %v622 = vmul.f32 %v330, %v414
  %v623 = vmul.f32 %v331, %v415
  %v624 = vmul.f32 %v332, %v416
  %v625 = vmul.f32 %v333, %v417
  %v626 = vmul.f32 %v334, %v402
  %v627 = vmul.f32 %v335, %v403
  %v628 = vmul.f32 %v336, %v404
  %v629 = vmul.f32 %v337, %v405
  %v630 = vmul.f32 %v338, %v406
  %v631 = vmul.f32 %v339, %v407
  %v632 = vmul.f32 %v340, %v408
  %v633 = vmul.f32 %v341, %v409
  %v634 = vmul.f32 %v342, %v410
  %v635 = vmul.f32 %v343, %v411
  %v636 = vmul.f32 %v344, %v412
  %v637 = vmul.f32 %v345, %v413
  %v638 = vmul.f32 %v346, %v414
  %v639 = vmul.f32 %v347, %v415
  %v640 = vmul.f32 %v348, %v416
  %v641 = vmul.f32 %v349, %v417
  %v642 = vmul.f32 %v350, %v402
  %v643 = vmul.f32 %v351, %v403
  %v644 = vmul.f32 %v352, %v404
  %v645 = vmul.f32 %v353, %v405
  %v646 = vmul.f32 %v354, %v406
  %v647 = vmul.f32 %v355, %v407
  %v648 = vmul.f32 %v356, %v408
  %v649 = vmul.f32 %v357, %v409
  %v650 = vmul.f32 %v358, %v410
  %v651 = vmul.f32 %v359, %v411
  %v652 = vmul.f32 %v360, %v412
  %v653 = vmul.f32 %v361, %v413
  %v654 = vmul.f32 %v362, %v414
  %v655 = vmul.f32 %v363, %v415
  %v656 = vmul.f32 %v364, %v416
  %v657 = vmul.f32 %v365, %v417
  %v658 = vmul.f32 %v366, %v402
  %v659 = vmul.f32 %v367, %v403
  %v660 = vmul.f32 %v368, %v404
  %v661 = vmul.f32 %v369, %v405
  %v662 = vmul.f32 %v370, %v406
  %v663 = vmul.f32 %v371, %v407
  %v664 = vmul.f32 %v372, %v408
  %v665 = vmul.f32 %v373, %v409
  %v666 = vmul.f32 %v374, %v410
  %v667 = vmul.f32 %v375, %v411
  %v668 = vmul.f32 %v376, %v412
  %v669 = vmul.f32 %v377, %v413
  %v670 = vmul.f32 %v378, %v414
  %v671 = vmul.f32 %v379, %v415
  %v672 = vmul.f32 %v380, %v416
  %v673 = vmul.f32 %v381, %v417
  %v674 = vmul.f32 %v382, %v402
  %v675 = vmul.f32 %v383, %v403
  %v676 = vmul.f32 %v384, %v404
  %v677 = vmul.f32 %v385, %v405
  %v678 = vmul.f32 %v386, %v406
  %v679 = vmul.f32 %v387, %v407
  %v680 = vmul.f32 %v388, %v408
  %v681 = vmul.f32 %v389, %v409
  %v682 = vmul.f32 %v390, %v410
  %v683 = vmul.f32 %v391, %v411
  %v684 = vmul.f32 %v392, %v412
  %v685 = vmul.f32 %v393, %v413
  %v686 = vmul.f32 %v394, %v414
  %v687 = vmul.f32 %v395, %v415
  %v688 = vmul.f32 %v396, %v416
  %v689 = vmul.f32 %v397, %v417
  %v690 = vld [vmem:[%s2] sm:$0xff]
  %v691 = vld [vmem:[%s2 + $0x8] sm:$0xff]
  %v694 = vperm.slane %v690, 0
  %v695 = vperm.slane %v690, 1
  %v696 = vperm.slane %v690, 2
  %v697 = vperm.slane %v690, 3
  %v698 = vperm.slane %v690, 4
  %v699 = vperm.slane %v690, 5
  %v700 = vperm.slane %v690, 6
  %v701 = vperm.slane %v690, 7
  %v702 = vperm.slane %v691, 0
  %v703 = vperm.slane %v691, 1
  %v704 = vperm.slane %v691, 2
  %v705 = vperm.slane %v691, 3
  %v706 = vperm.slane %v691, 4
  %v707 = vperm.slane %v691, 5
  %v708 = vperm.slane %v691, 6
  %v709 = vperm.slane %v691, 7
  %v726 = vadd.f32 %v434, %v694
  %v727 = vadd.f32 %v435, %v695
  %v728 = vadd.f32 %v436, %v696
  %v729 = vadd.f32 %v437, %v697
  %v730 = vadd.f32 %v438, %v698
  %v731 = vadd.f32 %v439, %v699
  %v732 = vadd.f32 %v440, %v700
  %v733 = vadd.f32 %v441, %v701
  %v734 = vadd.f32 %v442, %v702
  %v735 = vadd.f32 %v443, %v703
  %v736 = vadd.f32 %v444, %v704
  %v737 = vadd.f32 %v445, %v705
  %v738 = vadd.f32 %v446, %v706
  %v739 = vadd.f32 %v447, %v707
  %v740 = vadd.f32 %v448, %v708
  %v741 = vadd.f32 %v449, %v709
  %v742 = vadd.f32 %v450, %v694
  %v743 = vadd.f32 %v451, %v695
  %v744 = vadd.f32 %v452, %v696
  %v745 = vadd.f32 %v453, %v697
  %v746 = vadd.f32 %v454, %v698
  %v747 = vadd.f32 %v455, %v699
  %v748 = vadd.f32 %v456, %v700
  %v749 = vadd.f32 %v457, %v701
  %v750 = vadd.f32 %v458, %v702
  %v751 = vadd.f32 %v459, %v703
  %v752 = vadd.f32 %v460, %v704
  %v753 = vadd.f32 %v461, %v705
  %v754 = vadd.f32 %v462, %v706
  %v755 = vadd.f32 %v463, %v707
  %v756 = vadd.f32 %v464, %v708
  %v757 = vadd.f32 %v465, %v709
  %v758 = vadd.f32 %v466, %v694
  %v759 = vadd.f32 %v467, %v695
  %v760 = vadd.f32 %v468, %v696
  %v761 = vadd.f32 %v469, %v697
  %v762 = vadd.f32 %v470, %v698
  %v763 = vadd.f32 %v471, %v699
  %v764 = vadd.f32 %v472, %v700
  %v765 = vadd.f32 %v473, %v701
  %v766 = vadd.f32 %v474, %v702
  %v767 = vadd.f32 %v475, %v703
  %v768 = vadd.f32 %v476, %v704
  %v769 = vadd.f32 %v477, %v705
  %v770 = vadd.f32 %v478, %v706
  %v771 = vadd.f32 %v479, %v707
  %v772 = vadd.f32 %v480, %v708
  %v773 = vadd.f32 %v481, %v709
  %v774 = vadd.f32 %v482, %v694
  %v775 = vadd.f32 %v483, %v695
  %v776 = vadd.f32 %v484, %v696
  %v777 = vadd.f32 %v485, %v697
  %v778 = vadd.f32 %v486, %v698
  %v779 = vadd.f32 %v487, %v699
  %v780 = vadd.f32 %v488, %v700
  %v781 = vadd.f32 %v489, %v701
  %v782 = vadd.f32 %v490, %v702
  %v783 = vadd.f32 %v491, %v703
  %v784 = vadd.f32 %v492, %v704
  %v785 = vadd.f32 %v493, %v705
  %v786 = vadd.f32 %v494, %v706
  %v787 = vadd.f32 %v495, %v707
  %v788 = vadd.f32 %v496, %v708
  %v789 = vadd.f32 %v497, %v709
  %v790 = vadd.f32 %v498, %v694
  %v791 = vadd.f32 %v499, %v695
  %v792 = vadd.f32 %v500, %v696
  %v793 = vadd.f32 %v501, %v697
  %v794 = vadd.f32 %v502, %v698
  %v795 = vadd.f32 %v503, %v699
  %v796 = vadd.f32 %v504, %v700
  %v797 = vadd.f32 %v505, %v701
  %v798 = vadd.f32 %v506, %v702
  %v799 = vadd.f32 %v507, %v703
  %v800 = vadd.f32 %v508, %v704
  %v801 = vadd.f32 %v509, %v705
  %v802 = vadd.f32 %v510, %v706
  %v803 = vadd.f32 %v511, %v707
  %v804 = vadd.f32 %v512, %v708
  %v805 = vadd.f32 %v513, %v709
  %v806 = vadd.f32 %v514, %v694
  %v807 = vadd.f32 %v515, %v695
  %v808 = vadd.f32 %v516, %v696
  %v809 = vadd.f32 %v517, %v697
  %v810 = vadd.f32 %v518, %v698
  %v811 = vadd.f32 %v519, %v699
  %v812 = vadd.f32 %v520, %v700
  %v813 = vadd.f32 %v521, %v701
  %v814 = vadd.f32 %v522, %v702
  %v815 = vadd.f32 %v523, %v703
  %v816 = vadd.f32 %v524, %v704
  %v817 = vadd.f32 %v525, %v705
  %v818 = vadd.f32 %v526, %v706
  %v819 = vadd.f32 %v527, %v707
  %v820 = vadd.f32 %v528, %v708
  %v821 = vadd.f32 %v529, %v709
  %v822 = vadd.f32 %v530, %v694
  %v823 = vadd.f32 %v531, %v695
  %v824 = vadd.f32 %v532, %v696
  %v825 = vadd.f32 %v533, %v697
  %v826 = vadd.f32 %v534, %v698
  %v827 = vadd.f32 %v535, %v699
  %v828 = vadd.f32 %v536, %v700
  %v829 = vadd.f32 %v537, %v701
  %v830 = vadd.f32 %v538, %v702
  %v831 = vadd.f32 %v539, %v703
  %v832 = vadd.f32 %v540, %v704
  %v833 = vadd.f32 %v541, %v705
  %v834 = vadd.f32 %v542, %v706
  %v835 = vadd.f32 %v543, %v707
  %v836 = vadd.f32 %v544, %v708
  %v837 = vadd.f32 %v545, %v709
  %v838 = vadd.f32 %v546, %v694
  %v839 = vadd.f32 %v547, %v695
  %v840 = vadd.f32 %v548, %v696
  %v841 = vadd.f32 %v549, %v697
  %v842 = vadd.f32 %v550, %v698
  %v843 = vadd.f32 %v551, %v699
  %v844 = vadd.f32 %v552, %v700
  %v845 = vadd.f32 %v553, %v701
  %v846 = vadd.f32 %v554, %v702
  %v847 = vadd.f32 %v555, %v703
  %v848 = vadd.f32 %v556, %v704
  %v849 = vadd.f32 %v557, %v705
  %v850 = vadd.f32 %v558, %v706
  %v851 = vadd.f32 %v559, %v707
  %v852 = vadd.f32 %v560, %v708
  %v853 = vadd.f32 %v561, %v709
  %v854 = vadd.f32 %v562, %v694
  %v855 = vadd.f32 %v563, %v695
  %v856 = vadd.f32 %v564, %v696
  %v857 = vadd.f32 %v565, %v697
  %v858 = vadd.f32 %v566, %v698
  %v859 = vadd.f32 %v567, %v699
  %v860 = vadd.f32 %v568, %v700
  %v861 = vadd.f32 %v569, %v701
  %v862 = vadd.f32 %v570, %v702
  %v863 = vadd.f32 %v571, %v703
  %v864 = vadd.f32 %v572, %v704
  %v865 = vadd.f32 %v573, %v705
  %v866 = vadd.f32 %v574, %v706
  %v867 = vadd.f32 %v575, %v707
  %v868 = vadd.f32 %v576, %v708
  %v869 = vadd.f32 %v577, %v709
  %v870 = vadd.f32 %v578, %v694
  %v871 = vadd.f32 %v579, %v695
  %v872 = vadd.f32 %v580, %v696
  %v873 = vadd.f32 %v581, %v697
  %v874 = vadd.f32 %v582, %v698
  %v875 = vadd.f32 %v583, %v699
  %v876 = vadd.f32 %v584, %v700
  %v877 = vadd.f32 %v585, %v701
  %v878 = vadd.f32 %v586, %v702
  %v879 = vadd.f32 %v587, %v703
  %v880 = vadd.f32 %v588, %v704
  %v881 = vadd.f32 %v589, %v705
  %v882 = vadd.f32 %v590, %v706
  %v883 = vadd.f32 %v591, %v707
  %v884 = vadd.f32 %v592, %v708
  %v885 = vadd.f32 %v593, %v709
  %v886 = vadd.f32 %v594, %v694
  %v887 = vadd.f32 %v595, %v695
  %v888 = vadd.f32 %v596, %v696
  %v889 = vadd.f32 %v597, %v697
  %v890 = vadd.f32 %v598, %v698
  %v891 = vadd.f32 %v599, %v699
  %v892 = vadd.f32 %v600, %v700
  %v893 = vadd.f32 %v601, %v701
  %v894 = vadd.f32 %v602, %v702
  %v895 = vadd.f32 %v603, %v703
  %v896 = vadd.f32 %v604, %v704
  %v897 = vadd.f32 %v605, %v705
  %v898 = vadd.f32 %v606, %v706
  %v899 = vadd.f32 %v607, %v707
  %v900 = vadd.f32 %v608, %v708
  %v901 = vadd.f32 %v609, %v709
  %v902 = vadd.f32 %v610, %v694
  %v903 = vadd.f32 %v611, %v695
  %v904 = vadd.f32 %v612, %v696
  %v905 = vadd.f32 %v613, %v697
  %v906 = vadd.f32 %v614, %v698
  %v907 = vadd.f32 %v615, %v699
  %v908 = vadd.f32 %v616, %v700
  %v909 = vadd.f32 %v617, %v701
  %v910 = vadd.f32 %v618, %v702
  %v911 = vadd.f32 %v619, %v703
  %v912 = vadd.f32 %v620, %v704
  %v913 = vadd.f32 %v621, %v705
  %v914 = vadd.f32 %v622, %v706
  %v915 = vadd.f32 %v623, %v707
  %v916 = vadd.f32 %v624, %v708
  %v917 = vadd.f32 %v625, %v709
  %v918 = vadd.f32 %v626, %v694
  %v919 = vadd.f32 %v627, %v695
  %v920 = vadd.f32 %v628, %v696
  %v921 = vadd.f32 %v629, %v697
  %v922 = vadd.f32 %v630, %v698
  %v923 = vadd.f32 %v631, %v699
  %v924 = vadd.f32 %v632, %v700
  %v925 = vadd.f32 %v633, %v701
  %v926 = vadd.f32 %v634, %v702
  %v927 = vadd.f32 %v635, %v703
  %v928 = vadd.f32 %v636, %v704
  %v929 = vadd.f32 %v637, %v705
  %v930 = vadd.f32 %v638, %v706
  %v931 = vadd.f32 %v639, %v707
  %v932 = vadd.f32 %v640, %v708
  %v933 = vadd.f32 %v641, %v709
  %v934 = vadd.f32 %v642, %v694
  %v935 = vadd.f32 %v643, %v695
  %v936 = vadd.f32 %v644, %v696
  %v937 = vadd.f32 %v645, %v697
  %v938 = vadd.f32 %v646, %v698
  %v939 = vadd.f32 %v647, %v699
  %v940 = vadd.f32 %v648, %v700
  %v941 = vadd.f32 %v649, %v701
  %v942 = vadd.f32 %v650, %v702
  %v943 = vadd.f32 %v651, %v703
  %v944 = vadd.f32 %v652, %v704
  %v945 = vadd.f32 %v653, %v705
  %v946 = vadd.f32 %v654, %v706
  %v947 = vadd.f32 %v655, %v707
  %v948 = vadd.f32 %v656, %v708
  %v949 = vadd.f32 %v657, %v709
  %v950 = vadd.f32 %v658, %v694
  %v951 = vadd.f32 %v659, %v695
  %v952 = vadd.f32 %v660, %v696
  %v953 = vadd.f32 %v661, %v697
  %v954 = vadd.f32 %v662, %v698
  %v955 = vadd.f32 %v663, %v699
  %v956 = vadd.f32 %v664, %v700
  %v957 = vadd.f32 %v665, %v701
  %v958 = vadd.f32 %v666, %v702
  %v959 = vadd.f32 %v667, %v703
  %v960 = vadd.f32 %v668, %v704
  %v961 = vadd.f32 %v669, %v705
  %v962 = vadd.f32 %v670, %v706
  %v963 = vadd.f32 %v671, %v707
  %v964 = vadd.f32 %v672, %v708
  %v965 = vadd.f32 %v673, %v709
  %v966 = vadd.f32 %v674, %v694
  %v967 = vadd.f32 %v675, %v695
  %v968 = vadd.f32 %v676, %v696
  %v969 = vadd.f32 %v677, %v697
  %v970 = vadd.f32 %v678, %v698
  %v971 = vadd.f32 %v679, %v699
  %v972 = vadd.f32 %v680, %v700
  %v973 = vadd.f32 %v681, %v701
  %v974 = vadd.f32 %v682, %v702
  %v975 = vadd.f32 %v683, %v703
  %v976 = vadd.f32 %v684, %v704
  %v977 = vadd.f32 %v685, %v705
  %v978 = vadd.f32 %v686, %v706
  %v979 = vadd.f32 %v687, %v707
  %v980 = vadd.f32 %v688, %v708
  %v981 = vadd.f32 %v689, %v709
  %v982 = vmax.f32 %v726, 0.0
  %v983 = vmax.f32 %v727, 0.0
  %v984 = vmax.f32 %v728, 0.0
  %v985 = vmax.f32 %v729, 0.0
  %v986 = vmax.f32 %v730, 0.0
  %v987 = vmax.f32 %v731, 0.0
  %v988 = vmax.f32 %v732, 0.0
  %v989 = vmax.f32 %v733, 0.0
  %v990 = vmax.f32 %v734, 0.0
  %v991 = vmax.f32 %v735, 0.0
  %v992 = vmax.f32 %v736, 0.0
  %v993 = vmax.f32 %v737, 0.0
  %v994 = vmax.f32 %v738, 0.0
  %v995 = vmax.f32 %v739, 0.0
  %v996 = vmax.f32 %v740, 0.0
  %v997 = vmax.f32 %v741, 0.0
  %v998 = vmax.f32 %v742, 0.0
  %v999 = vmax.f32 %v743, 0.0
  %v1000 = vmax.f32 %v744, 0.0
  %v1001 = vmax.f32 %v745, 0.0
  %v1002 = vmax.f32 %v746, 0.0
  %v1003 = vmax.f32 %v747, 0.0
  %v1004 = vmax.f32 %v748, 0.0
  %v1005 = vmax.f32 %v749, 0.0
  %v1006 = vmax.f32 %v750, 0.0
  %v1007 = vmax.f32 %v751, 0.0
  %v1008 = vmax.f32 %v752, 0.0
  %v1009 = vmax.f32 %v753, 0.0
  %v1010 = vmax.f32 %v754, 0.0
  %v1011 = vmax.f32 %v755, 0.0
  %v1012 = vmax.f32 %v756, 0.0
  %v1013 = vmax.f32 %v757, 0.0
  %v1014 = vmax.f32 %v758, 0.0
  %v1015 = vmax.f32 %v759, 0.0
  %v1016 = vmax.f32 %v760, 0.0
  %v1017 = vmax.f32 %v761, 0.0
  %v1018 = vmax.f32 %v762, 0.0
  %v1019 = vmax.f32 %v763, 0.0
  %v1020 = vmax.f32 %v764, 0.0
  %v1021 = vmax.f32 %v765, 0.0
  %v1022 = vmax.f32 %v766, 0.0
  %v1023 = vmax.f32 %v767, 0.0
  %v1024 = vmax.f32 %v768, 0.0
  %v1025 = vmax.f32 %v769, 0.0
  %v1026 = vmax.f32 %v770, 0.0
  %v1027 = vmax.f32 %v771, 0.0
  %v1028 = vmax.f32 %v772, 0.0
  %v1029 = vmax.f32 %v773, 0.0
  %v1030 = vmax.f32 %v774, 0.0
  %v1031 = vmax.f32 %v775, 0.0
  %v1032 = vmax.f32 %v776, 0.0
  %v1033 = vmax.f32 %v777, 0.0
  %v1034 = vmax.f32 %v778, 0.0
  %v1035 = vmax.f32 %v779, 0.0
  %v1036 = vmax.f32 %v780, 0.0
  %v1037 = vmax.f32 %v781, 0.0
  %v1038 = vmax.f32 %v782, 0.0
  %v1039 = vmax.f32 %v783, 0.0
  %v1040 = vmax.f32 %v784, 0.0
  %v1041 = vmax.f32 %v785, 0.0
  %v1042 = vmax.f32 %v786, 0.0
  %v1043 = vmax.f32 %v787, 0.0
  %v1044 = vmax.f32 %v788, 0.0
  %v1045 = vmax.f32 %v789, 0.0
  %v1046 = vmax.f32 %v790, 0.0
  %v1047 = vmax.f32 %v791, 0.0
  %v1048 = vmax.f32 %v792, 0.0
  %v1049 = vmax.f32 %v793, 0.0
  %v1050 = vmax.f32 %v794, 0.0
  %v1051 = vmax.f32 %v795, 0.0
  %v1052 = vmax.f32 %v796, 0.0
  %v1053 = vmax.f32 %v797, 0.0
  %v1054 = vmax.f32 %v798, 0.0
  %v1055 = vmax.f32 %v799, 0.0
  %v1056 = vmax.f32 %v800, 0.0
  %v1057 = vmax.f32 %v801, 0.0
  %v1058 = vmax.f32 %v802, 0.0
  %v1059 = vmax.f32 %v803, 0.0
  %v1060 = vmax.f32 %v804, 0.0
  %v1061 = vmax.f32 %v805, 0.0
  %v1062 = vmax.f32 %v806, 0.0
  %v1063 = vmax.f32 %v807, 0.0
  %v1064 = vmax.f32 %v808, 0.0
  %v1065 = vmax.f32 %v809, 0.0
  %v1066 = vmax.f32 %v810, 0.0
  %v1067 = vmax.f32 %v811, 0.0
  %v1068 = vmax.f32 %v812, 0.0
  %v1069 = vmax.f32 %v813, 0.0
  %v1070 = vmax.f32 %v814, 0.0
  %v1071 = vmax.f32 %v815, 0.0
  %v1072 = vmax.f32 %v816, 0.0
  %v1073 = vmax.f32 %v817, 0.0
  %v1074 = vmax.f32 %v818, 0.0
  %v1075 = vmax.f32 %v819, 0.0
  %v1076 = vmax.f32 %v820, 0.0
  %v1077 = vmax.f32 %v821, 0.0
  %v1078 = vmax.f32 %v822, 0.0
  %v1079 = vmax.f32 %v823, 0.0
  %v1080 = vmax.f32 %v824, 0.0
  %v1081 = vmax.f32 %v825, 0.0
  %v1082 = vmax.f32 %v826, 0.0
  %v1083 = vmax.f32 %v827, 0.0
  %v1084 = vmax.f32 %v828, 0.0
  %v1085 = vmax.f32 %v829, 0.0
  %v1086 = vmax.f32 %v830, 0.0
  %v1087 = vmax.f32 %v831, 0.0
  %v1088 = vmax.f32 %v832, 0.0
  %v1089 = vmax.f32 %v833, 0.0
  %v1090 = vmax.f32 %v834, 0.0
  %v1091 = vmax.f32 %v835, 0.0
  %v1092 = vmax.f32 %v836, 0.0
  %v1093 = vmax.f32 %v837, 0.0
  %v1094 = vmax.f32 %v838, 0.0
  %v1095 = vmax.f32 %v839, 0.0
  %v1096 = vmax.f32 %v840, 0.0
  %v1097 = vmax.f32 %v841, 0.0
  %v1098 = vmax.f32 %v842, 0.0
  %v1099 = vmax.f32 %v843, 0.0
  %v1100 = vmax.f32 %v844, 0.0
  %v1101 = vmax.f32 %v845, 0.0
  %v1102 = vmax.f32 %v846, 0.0
  %v1103 = vmax.f32 %v847, 0.0
  %v1104 = vmax.f32 %v848, 0.0
  %v1105 = vmax.f32 %v849, 0.0
  %v1106 = vmax.f32 %v850, 0.0
  %v1107 = vmax.f32 %v851, 0.0
  %v1108 = vmax.f32 %v852, 0.0
  %v1109 = vmax.f32 %v853, 0.0
  %v1110 = vmax.f32 %v854, 0.0
  %v1111 = vmax.f32 %v855, 0.0
  %v1112 = vmax.f32 %v856, 0.0
  %v1113 = vmax.f32 %v857, 0.0
  %v1114 = vmax.f32 %v858, 0.0
  %v1115 = vmax.f32 %v859, 0.0
  %v1116 = vmax.f32 %v860, 0.0
  %v1117 = vmax.f32 %v861, 0.0
  %v1118 = vmax.f32 %v862, 0.0
  %v1119 = vmax.f32 %v863, 0.0
  %v1120 = vmax.f32 %v864, 0.0
  %v1121 = vmax.f32 %v865, 0.0
  %v1122 = vmax.f32 %v866, 0.0
  %v1123 = vmax.f32 %v867, 0.0
  %v1124 = vmax.f32 %v868, 0.0
  %v1125 = vmax.f32 %v869, 0.0
  %v1126 = vmax.f32 %v870, 0.0
  %v1127 = vmax.f32 %v871, 0.0
  %v1128 = vmax.f32 %v872, 0.0
  %v1129 = vmax.f32 %v873, 0.0
  %v1130 = vmax.f32 %v874, 0.0
  %v1131 = vmax.f32 %v875, 0.0
  %v1132 = vmax.f32 %v876, 0.0
  %v1133 = vmax.f32 %v877, 0.0
  %v1134 = vmax.f32 %v878, 0.0
  %v1135 = vmax.f32 %v879, 0.0
  %v1136 = vmax.f32 %v880, 0.0
  %v1137 = vmax.f32 %v881, 0.0
  %v1138 = vmax.f32 %v882, 0.0
  %v1139 = vmax.f32 %v883, 0.0
  %v1140 = vmax.f32 %v884, 0.0
  %v1141 = vmax.f32 %v885, 0.0
  %v1142 = vmax.f32 %v886, 0.0
  %v1143 = vmax.f32 %v887, 0.0
  %v1144 = vmax.f32 %v888, 0.0
  %v1145 = vmax.f32 %v889, 0.0
  %v1146 = vmax.f32 %v890, 0.0
  %v1147 = vmax.f32 %v891, 0.0
  %v1148 = vmax.f32 %v892, 0.0
  %v1149 = vmax.f32 %v893, 0.0
  %v1150 = vmax.f32 %v894, 0.0
  %v1151 = vmax.f32 %v895, 0.0
  %v1152 = vmax.f32 %v896, 0.0
  %v1153 = vmax.f32 %v897, 0.0
  %v1154 = vmax.f32 %v898, 0.0
  %v1155 = vmax.f32 %v899, 0.0
  %v1156 = vmax.f32 %v900, 0.0
  %v1157 = vmax.f32 %v901, 0.0
  %v1158 = vmax.f32 %v902, 0.0
  %v1159 = vmax.f32 %v903, 0.0
  %v1160 = vmax.f32 %v904, 0.0
  %v1161 = vmax.f32 %v905, 0.0
  %v1162 = vmax.f32 %v906, 0.0
  %v1163 = vmax.f32 %v907, 0.0
  %v1164 = vmax.f32 %v908, 0.0
  %v1165 = vmax.f32 %v909, 0.0
  %v1166 = vmax.f32 %v910, 0.0
  %v1167 = vmax.f32 %v911, 0.0
  %v1168 = vmax.f32 %v912, 0.0
  %v1169 = vmax.f32 %v913, 0.0
  %v1170 = vmax.f32 %v914, 0.0
  %v1171 = vmax.f32 %v915, 0.0
  %v1172 = vmax.f32 %v916, 0.0
  %v1173 = vmax.f32 %v917, 0.0
  %v1174 = vmax.f32 %v918, 0.0
  %v1175 = vmax.f32 %v919, 0.0
  %v1176 = vmax.f32 %v920, 0.0
  %v1177 = vmax.f32 %v921, 0.0
  %v1178 = vmax.f32 %v922, 0.0
  %v1179 = vmax.f32 %v923, 0.0
  %v1180 = vmax.f32 %v924, 0.0
  %v1181 = vmax.f32 %v925, 0.0
  %v1182 = vmax.f32 %v926, 0.0
  %v1183 = vmax.f32 %v927, 0.0
  %v1184 = vmax.f32 %v928, 0.0
  %v1185 = vmax.f32 %v929, 0.0
  %v1186 = vmax.f32 %v930, 0.0
  %v1187 = vmax.f32 %v931, 0.0
  %v1188 = vmax.f32 %v932, 0.0
  %v1189 = vmax.f32 %v933, 0.0
  %v1190 = vmax.f32 %v934, 0.0
  %v1191 = vmax.f32 %v935, 0.0
  %v1192 = vmax.f32 %v936, 0.0
  %v1193 = vmax.f32 %v937, 0.0
  %v1194 = vmax.f32 %v938, 0.0
  %v1195 = vmax.f32 %v939, 0.0
  %v1196 = vmax.f32 %v940, 0.0
  %v1197 = vmax.f32 %v941, 0.0
  %v1198 = vmax.f32 %v942, 0.0
  %v1199 = vmax.f32 %v943, 0.0
  %v1200 = vmax.f32 %v944, 0.0
  %v1201 = vmax.f32 %v945, 0.0
  %v1202 = vmax.f32 %v946, 0.0
  %v1203 = vmax.f32 %v947, 0.0
  %v1204 = vmax.f32 %v948, 0.0
  %v1205 = vmax.f32 %v949, 0.0
  %v1206 = vmax.f32 %v950, 0.0
  %v1207 = vmax.f32 %v951, 0.0
  %v1208 = vmax.f32 %v952, 0.0
  %v1209 = vmax.f32 %v953, 0.0
  %v1210 = vmax.f32 %v954, 0.0
  %v1211 = vmax.f32 %v955, 0.0
  %v1212 = vmax.f32 %v956, 0.0
  %v1213 = vmax.f32 %v957, 0.0
  %v1214 = vmax.f32 %v958, 0.0
  %v1215 = vmax.f32 %v959, 0.0
  %v1216 = vmax.f32 %v960, 0.0
  %v1217 = vmax.f32 %v961, 0.0
  %v1218 = vmax.f32 %v962, 0.0
  %v1219 = vmax.f32 %v963, 0.0
  %v1220 = vmax.f32 %v964, 0.0
  %v1221 = vmax.f32 %v965, 0.0
  %v1222 = vmax.f32 %v966, 0.0
  %v1223 = vmax.f32 %v967, 0.0
  %v1224 = vmax.f32 %v968, 0.0
  %v1225 = vmax.f32 %v969, 0.0
  %v1226 = vmax.f32 %v970, 0.0
  %v1227 = vmax.f32 %v971, 0.0
  %v1228 = vmax.f32 %v972, 0.0
  %v1229 = vmax.f32 %v973, 0.0
  %v1230 = vmax.f32 %v974, 0.0
  %v1231 = vmax.f32 %v975, 0.0
  %v1232 = vmax.f32 %v976, 0.0
  %v1233 = vmax.f32 %v977, 0.0
  %v1234 = vmax.f32 %v978, 0.0
  %v1235 = vmax.f32 %v979, 0.0
  %v1236 = vmax.f32 %v980, 0.0
  %v1237 = vmax.f32 %v981, 0.0
  %v1238 = vpack.c.bf16 %v983, %v982
  %v1239 = vpack.c.bf16 %v985, %v984
  %v1240 = vpack.c.bf16 %v987, %v986
  %v1241 = vpack.c.bf16 %v989, %v988
  %v1242 = vpack.c.bf16 %v991, %v990
  %v1243 = vpack.c.bf16 %v993, %v992
  %v1244 = vpack.c.bf16 %v995, %v994
  %v1245 = vpack.c.bf16 %v997, %v996
  %v1246 = vpack.c.bf16 %v999, %v998
  %v1247 = vpack.c.bf16 %v1001, %v1000
  %v1248 = vpack.c.bf16 %v1003, %v1002
  %v1249 = vpack.c.bf16 %v1005, %v1004
  %v1250 = vpack.c.bf16 %v1007, %v1006
  %v1251 = vpack.c.bf16 %v1009, %v1008
  %v1252 = vpack.c.bf16 %v1011, %v1010
  %v1253 = vpack.c.bf16 %v1013, %v1012
  %v1254 = vpack.c.bf16 %v1015, %v1014
  %v1255 = vpack.c.bf16 %v1017, %v1016
  %v1256 = vpack.c.bf16 %v1019, %v1018
  %v1257 = vpack.c.bf16 %v1021, %v1020
  %v1258 = vpack.c.bf16 %v1023, %v1022
  %v1259 = vpack.c.bf16 %v1025, %v1024
  %v1260 = vpack.c.bf16 %v1027, %v1026
  %v1261 = vpack.c.bf16 %v1029, %v1028
  %v1262 = vpack.c.bf16 %v1031, %v1030
  %v1263 = vpack.c.bf16 %v1033, %v1032
  %v1264 = vpack.c.bf16 %v1035, %v1034
  %v1265 = vpack.c.bf16 %v1037, %v1036
  %v1266 = vpack.c.bf16 %v1039, %v1038
  %v1267 = vpack.c.bf16 %v1041, %v1040
  %v1268 = vpack.c.bf16 %v1043, %v1042
  %v1269 = vpack.c.bf16 %v1045, %v1044
  %v1270 = vpack.c.bf16 %v1047, %v1046
  %v1271 = vpack.c.bf16 %v1049, %v1048
  %v1272 = vpack.c.bf16 %v1051, %v1050
  %v1273 = vpack.c.bf16 %v1053, %v1052
  %v1274 = vpack.c.bf16 %v1055, %v1054
  %v1275 = vpack.c.bf16 %v1057, %v1056
  %v1276 = vpack.c.bf16 %v1059, %v1058
  %v1277 = vpack.c.bf16 %v1061, %v1060
  %v1278 = vpack.c.bf16 %v1063, %v1062
  %v1279 = vpack.c.bf16 %v1065, %v1064
  %v1280 = vpack.c.bf16 %v1067, %v1066
  %v1281 = vpack.c.bf16 %v1069, %v1068
  %v1282 = vpack.c.bf16 %v1071, %v1070
  %v1283 = vpack.c.bf16 %v1073, %v1072
  %v1284 = vpack.c.bf16 %v1075, %v1074
  %v1285 = vpack.c.bf16 %v1077, %v1076
  %v1286 = vpack.c.bf16 %v1079, %v1078
  %v1287 = vpack.c.bf16 %v1081, %v1080
  %v1288 = vpack.c.bf16 %v1083, %v1082
  %v1289 = vpack.c.bf16 %v1085, %v1084
  %v1290 = vpack.c.bf16 %v1087, %v1086
  %v1291 = vpack.c.bf16 %v1089, %v1088
  %v1292 = vpack.c.bf16 %v1091, %v1090
  %v1293 = vpack.c.bf16 %v1093, %v1092
  %v1294 = vpack.c.bf16 %v1095, %v1094
  %v1295 = vpack.c.bf16 %v1097, %v1096
  %v1296 = vpack.c.bf16 %v1099, %v1098
  %v1297 = vpack.c.bf16 %v1101, %v1100
  %v1298 = vpack.c.bf16 %v1103, %v1102
  %v1299 = vpack.c.bf16 %v1105, %v1104
  %v1300 = vpack.c.bf16 %v1107, %v1106
  %v1301 = vpack.c.bf16 %v1109, %v1108
  %v1302 = vpack.c.bf16 %v1111, %v1110
  %v1303 = vpack.c.bf16 %v1113, %v1112
  %v1304 = vpack.c.bf16 %v1115, %v1114
  %v1305 = vpack.c.bf16 %v1117, %v1116
  %v1306 = vpack.c.bf16 %v1119, %v1118
  %v1307 = vpack.c.bf16 %v1121, %v1120
  %v1308 = vpack.c.bf16 %v1123, %v1122
  %v1309 = vpack.c.bf16 %v1125, %v1124
  %v1310 = vpack.c.bf16 %v1127, %v1126
  %v1311 = vpack.c.bf16 %v1129, %v1128
  %v1312 = vpack.c.bf16 %v1131, %v1130
  %v1313 = vpack.c.bf16 %v1133, %v1132
  %v1314 = vpack.c.bf16 %v1135, %v1134
  %v1315 = vpack.c.bf16 %v1137, %v1136
  %v1316 = vpack.c.bf16 %v1139, %v1138
  %v1317 = vpack.c.bf16 %v1141, %v1140
  %v1318 = vpack.c.bf16 %v1143, %v1142
  %v1319 = vpack.c.bf16 %v1145, %v1144
  %v1320 = vpack.c.bf16 %v1147, %v1146
  %v1321 = vpack.c.bf16 %v1149, %v1148
  %v1322 = vpack.c.bf16 %v1151, %v1150
  %v1323 = vpack.c.bf16 %v1153, %v1152
  %v1324 = vpack.c.bf16 %v1155, %v1154
  %v1325 = vpack.c.bf16 %v1157, %v1156
  %v1326 = vpack.c.bf16 %v1159, %v1158
  %v1327 = vpack.c.bf16 %v1161, %v1160
  %v1328 = vpack.c.bf16 %v1163, %v1162
  %v1329 = vpack.c.bf16 %v1165, %v1164
  %v1330 = vpack.c.bf16 %v1167, %v1166
  %v1331 = vpack.c.bf16 %v1169, %v1168
  %v1332 = vpack.c.bf16 %v1171, %v1170
  %v1333 = vpack.c.bf16 %v1173, %v1172
  %v1334 = vpack.c.bf16 %v1175, %v1174
  %v1335 = vpack.c.bf16 %v1177, %v1176
  %v1336 = vpack.c.bf16 %v1179, %v1178
  %v1337 = vpack.c.bf16 %v1181, %v1180
  %v1338 = vpack.c.bf16 %v1183, %v1182
  %v1339 = vpack.c.bf16 %v1185, %v1184
  %v1340 = vpack.c.bf16 %v1187, %v1186
  %v1341 = vpack.c.bf16 %v1189, %v1188
  %v1342 = vpack.c.bf16 %v1191, %v1190
  %v1343 = vpack.c.bf16 %v1193, %v1192
  %v1344 = vpack.c.bf16 %v1195, %v1194
  %v1345 = vpack.c.bf16 %v1197, %v1196
  %v1346 = vpack.c.bf16 %v1199, %v1198
  %v1347 = vpack.c.bf16 %v1201, %v1200
  %v1348 = vpack.c.bf16 %v1203, %v1202
  %v1349 = vpack.c.bf16 %v1205, %v1204
  %v1350 = vpack.c.bf16 %v1207, %v1206
  %v1351 = vpack.c.bf16 %v1209, %v1208
  %v1352 = vpack.c.bf16 %v1211, %v1210
  %v1353 = vpack.c.bf16 %v1213, %v1212
  %v1354 = vpack.c.bf16 %v1215, %v1214
  %v1355 = vpack.c.bf16 %v1217, %v1216
  %v1356 = vpack.c.bf16 %v1219, %v1218
  %v1357 = vpack.c.bf16 %v1221, %v1220
  %v1358 = vpack.c.bf16 %v1223, %v1222
  %v1359 = vpack.c.bf16 %v1225, %v1224
  %v1360 = vpack.c.bf16 %v1227, %v1226
  %v1361 = vpack.c.bf16 %v1229, %v1228
  %v1362 = vpack.c.bf16 %v1231, %v1230
  %v1363 = vpack.c.bf16 %v1233, %v1232
  %v1364 = vpack.c.bf16 %v1235, %v1234
  %v1365 = vpack.c.bf16 %v1237, %v1236
  %1366 = vst [vmem:[%s3] sm:$0xff] %v1238
  %1367 = vst [vmem:[%s3 + $0x8] sm:$0xff] %v1239
  %1368 = vst [vmem:[%s3 + $0x10] sm:$0xff] %v1240
  %1369 = vst [vmem:[%s3 + $0x18] sm:$0xff] %v1241
  %1370 = vst [vmem:[%s3 + $0x20] sm:$0xff] %v1242
  %1371 = vst [vmem:[%s3 + $0x28] sm:$0xff] %v1243
  %1372 = vst [vmem:[%s3 + $0x30] sm:$0xff] %v1244
  %1373 = vst [vmem:[%s3 + $0x38] sm:$0xff] %v1245
  %1374 = vst [vmem:[%s3 + $0x40] sm:$0xff] %v1246
  %1375 = vst [vmem:[%s3 + $0x48] sm:$0xff] %v1247
  %1376 = vst [vmem:[%s3 + $0x50] sm:$0xff] %v1248
  %1377 = vst [vmem:[%s3 + $0x58] sm:$0xff] %v1249
  %1378 = vst [vmem:[%s3 + $0x60] sm:$0xff] %v1250
  %1379 = vst [vmem:[%s3 + $0x68] sm:$0xff] %v1251
  %1380 = vst [vmem:[%s3 + $0x70] sm:$0xff] %v1252
  %1381 = vst [vmem:[%s3 + $0x78] sm:$0xff] %v1253
  %1382 = vst [vmem:[%s3 + $0x80] sm:$0xff] %v1254
  %1383 = vst [vmem:[%s3 + $0x88] sm:$0xff] %v1255
  %1384 = vst [vmem:[%s3 + $0x90] sm:$0xff] %v1256
  %1385 = vst [vmem:[%s3 + $0x98] sm:$0xff] %v1257
  %1386 = vst [vmem:[%s3 + $0xa0] sm:$0xff] %v1258
  %1387 = vst [vmem:[%s3 + $0xa8] sm:$0xff] %v1259
  %1388 = vst [vmem:[%s3 + $0xb0] sm:$0xff] %v1260
  %1389 = vst [vmem:[%s3 + $0xb8] sm:$0xff] %v1261
  %1390 = vst [vmem:[%s3 + $0xc0] sm:$0xff] %v1262
  %1391 = vst [vmem:[%s3 + $0xc8] sm:$0xff] %v1263
  %1392 = vst [vmem:[%s3 + $0xd0] sm:$0xff] %v1264
  %1393 = vst [vmem:[%s3 + $0xd8] sm:$0xff] %v1265
  %1394 = vst [vmem:[%s3 + $0xe0] sm:$0xff] %v1266
  %1395 = vst [vmem:[%s3 + $0xe8] sm:$0xff] %v1267
  %1396 = vst [vmem:[%s3 + $0xf0] sm:$0xff] %v1268
  %1397 = vst [vmem:[%s3 + $0xf8] sm:$0xff] %v1269
  %1398 = vst [vmem:[%s3 + $0x100] sm:$0xff] %v1270
  %1399 = vst [vmem:[%s3 + $0x108] sm:$0xff] %v1271
  %1400 = vst [vmem:[%s3 + $0x110] sm:$0xff] %v1272
  %1401 = vst [vmem:[%s3 + $0x118] sm:$0xff] %v1273
  %1402 = vst [vmem:[%s3 + $0x120] sm:$0xff] %v1274
  %1403 = vst [vmem:[%s3 + $0x128] sm:$0xff] %v1275
  %1404 = vst [vmem:[%s3 + $0x130] sm:$0xff] %v1276
  %1405 = vst [vmem:[%s3 + $0x138] sm:$0xff] %v1277
  %1406 = vst [vmem:[%s3 + $0x140] sm:$0xff] %v1278
  %1407 = vst [vmem:[%s3 + $0x148] sm:$0xff] %v1279
  %1408 = vst [vmem:[%s3 + $0x150] sm:$0xff] %v1280
  %1409 = vst [vmem:[%s3 + $0x158] sm:$0xff] %v1281
  %1410 = vst [vmem:[%s3 + $0x160] sm:$0xff] %v1282
  %1411 = vst [vmem:[%s3 + $0x168] sm:$0xff] %v1283
  %1412 = vst [vmem:[%s3 + $0x170] sm:$0xff] %v1284
  %1413 = vst [vmem:[%s3 + $0x178] sm:$0xff] %v1285
  %1414 = vst [vmem:[%s3 + $0x180] sm:$0xff] %v1286
  %1415 = vst [vmem:[%s3 + $0x188] sm:$0xff] %v1287
  %1416 = vst [vmem:[%s3 + $0x190] sm:$0xff] %v1288
  %1417 = vst [vmem:[%s3 + $0x198] sm:$0xff] %v1289
  %1418 = vst [vmem:[%s3 + $0x1a0] sm:$0xff] %v1290
  %1419 = vst [vmem:[%s3 + $0x1a8] sm:$0xff] %v1291
  %1420 = vst [vmem:[%s3 + $0x1b0] sm:$0xff] %v1292
  %1421 = vst [vmem:[%s3 + $0x1b8] sm:$0xff] %v1293
  %1422 = vst [vmem:[%s3 + $0x1c0] sm:$0xff] %v1294
  %1423 = vst [vmem:[%s3 + $0x1c8] sm:$0xff] %v1295
  %1424 = vst [vmem:[%s3 + $0x1d0] sm:$0xff] %v1296
  %1425 = vst [vmem:[%s3 + $0x1d8] sm:$0xff] %v1297
  %1426 = vst [vmem:[%s3 + $0x1e0] sm:$0xff] %v1298
  %1427 = vst [vmem:[%s3 + $0x1e8] sm:$0xff] %v1299
  %1428 = vst [vmem:[%s3 + $0x1f0] sm:$0xff] %v1300
  %1429 = vst [vmem:[%s3 + $0x1f8] sm:$0xff] %v1301
  %1430 = vst [vmem:[%s3 + $0x200] sm:$0xff] %v1302
  %1431 = vst [vmem:[%s3 + $0x208] sm:$0xff] %v1303
  %1432 = vst [vmem:[%s3 + $0x210] sm:$0xff] %v1304
  %1433 = vst [vmem:[%s3 + $0x218] sm:$0xff] %v1305
  %1434 = vst [vmem:[%s3 + $0x220] sm:$0xff] %v1306
  %1435 = vst [vmem:[%s3 + $0x228] sm:$0xff] %v1307
  %1436 = vst [vmem:[%s3 + $0x230] sm:$0xff] %v1308
  %1437 = vst [vmem:[%s3 + $0x238] sm:$0xff] %v1309
  %1438 = vst [vmem:[%s3 + $0x240] sm:$0xff] %v1310
  %1439 = vst [vmem:[%s3 + $0x248] sm:$0xff] %v1311
  %1440 = vst [vmem:[%s3 + $0x250] sm:$0xff] %v1312
  %1441 = vst [vmem:[%s3 + $0x258] sm:$0xff] %v1313
  %1442 = vst [vmem:[%s3 + $0x260] sm:$0xff] %v1314
  %1443 = vst [vmem:[%s3 + $0x268] sm:$0xff] %v1315
  %1444 = vst [vmem:[%s3 + $0x270] sm:$0xff] %v1316
  %1445 = vst [vmem:[%s3 + $0x278] sm:$0xff] %v1317
  %1446 = vst [vmem:[%s3 + $0x280] sm:$0xff] %v1318
  %1447 = vst [vmem:[%s3 + $0x288] sm:$0xff] %v1319
  %1448 = vst [vmem:[%s3 + $0x290] sm:$0xff] %v1320
  %1449 = vst [vmem:[%s3 + $0x298] sm:$0xff] %v1321
  %1450 = vst [vmem:[%s3 + $0x2a0] sm:$0xff] %v1322
  %1451 = vst [vmem:[%s3 + $0x2a8] sm:$0xff] %v1323
  %1452 = vst [vmem:[%s3 + $0x2b0] sm:$0xff] %v1324
  %1453 = vst [vmem:[%s3 + $0x2b8] sm:$0xff] %v1325
  %1454 = vst [vmem:[%s3 + $0x2c0] sm:$0xff] %v1326
  %1455 = vst [vmem:[%s3 + $0x2c8] sm:$0xff] %v1327
  %1456 = vst [vmem:[%s3 + $0x2d0] sm:$0xff] %v1328
  %1457 = vst [vmem:[%s3 + $0x2d8] sm:$0xff] %v1329
  %1458 = vst [vmem:[%s3 + $0x2e0] sm:$0xff] %v1330
  %1459 = vst [vmem:[%s3 + $0x2e8] sm:$0xff] %v1331
  %1460 = vst [vmem:[%s3 + $0x2f0] sm:$0xff] %v1332
  %1461 = vst [vmem:[%s3 + $0x2f8] sm:$0xff] %v1333
  %1462 = vst [vmem:[%s3 + $0x300] sm:$0xff] %v1334
  %1463 = vst [vmem:[%s3 + $0x308] sm:$0xff] %v1335
  %1464 = vst [vmem:[%s3 + $0x310] sm:$0xff] %v1336
  %1465 = vst [vmem:[%s3 + $0x318] sm:$0xff] %v1337
  %1466 = vst [vmem:[%s3 + $0x320] sm:$0xff] %v1338
  %1467 = vst [vmem:[%s3 + $0x328] sm:$0xff] %v1339
  %1468 = vst [vmem:[%s3 + $0x330] sm:$0xff] %v1340
  %1469 = vst [vmem:[%s3 + $0x338] sm:$0xff] %v1341
  %1470 = vst [vmem:[%s3 + $0x340] sm:$0xff] %v1342
  %1471 = vst [vmem:[%s3 + $0x348] sm:$0xff] %v1343
  %1472 = vst [vmem:[%s3 + $0x350] sm:$0xff] %v1344
  %1473 = vst [vmem:[%s3 + $0x358] sm:$0xff] %v1345
  %1474 = vst [vmem:[%s3 + $0x360] sm:$0xff] %v1346
  %1475 = vst [vmem:[%s3 + $0x368] sm:$0xff] %v1347
  %1476 = vst [vmem:[%s3 + $0x370] sm:$0xff] %v1348
  %1477 = vst [vmem:[%s3 + $0x378] sm:$0xff] %v1349
  %1478 = vst [vmem:[%s3 + $0x380] sm:$0xff] %v1350
  %1479 = vst [vmem:[%s3 + $0x388] sm:$0xff] %v1351
  %1480 = vst [vmem:[%s3 + $0x390] sm:$0xff] %v1352
  %1481 = vst [vmem:[%s3 + $0x398] sm:$0xff] %v1353
  %1482 = vst [vmem:[%s3 + $0x3a0] sm:$0xff] %v1354
  %1483 = vst [vmem:[%s3 + $0x3a8] sm:$0xff] %v1355
  %1484 = vst [vmem:[%s3 + $0x3b0] sm:$0xff] %v1356
  %1485 = vst [vmem:[%s3 + $0x3b8] sm:$0xff] %v1357
  %1486 = vst [vmem:[%s3 + $0x3c0] sm:$0xff] %v1358
  %1487 = vst [vmem:[%s3 + $0x3c8] sm:$0xff] %v1359
  %1488 = vst [vmem:[%s3 + $0x3d0] sm:$0xff] %v1360
  %1489 = vst [vmem:[%s3 + $0x3d8] sm:$0xff] %v1361
  %1490 = vst [vmem:[%s3 + $0x3e0] sm:$0xff] %v1362
  %1491 = vst [vmem:[%s3 + $0x3e8] sm:$0xff] %v1363
  %1492 = vst [vmem:[%s3 + $0x3f0] sm:$0xff] %v1364
  %1493 = vst [vmem:[%s3 + $0x3f8] sm:$0xff] %v1365
  // Predicated region
  $region14: #{generator_forward.12} parent=0 // pred_check
    _
  $region15: #{generator_forward.12} parent=0 // pred_check_branch
    %1495 = sbr.rel (0) target = $region17
  $region16: #{generator_forward.12} parent=0 // pred_region
    _
  $region17: #{generator_forward.12} parent=0 // pred_fallthru
    _
  // Predicated region
  $region18: #{generator_forward.12} parent=0 // pred_check
    _
  $region19: #{generator_forward.12} parent=0 // pred_check_branch
    %1497 = sbr.rel (0) target = $region21
  $region20: #{generator_forward.12} parent=0 // pred_region
    _
  $region21: #{generator_forward.12} parent=0 // pred_fallthru
    _

// kernel: generator_forward.11
$region0: #{generator_forward.11}
  #allocation0 [shape = 'u32[]', space=smem, size = 0x4, offset = 0x4, fixed_abs, tag = 'smem constant byte address 0x4 - core index']
  #allocation1 [shape = 'u32[72,128]{1,0:T(1,128)}', space=vmem, size = 0x9000, scoped, tag = 'internal scratch']
  %s0 = inlined_call_operand.vmem [shape: bf16[1,128,16], index: 0, kind: input, shape index: {}]
  %s1 = inlined_call_operand.vmem [shape: bf16[1,16,2048], index: 1, kind: input, shape index: {}]
  %s2 = inlined_call_operand.vmem [shape: bf16[1,128,2048], index: 2, kind: output, shape index: {0}]
  %s3 = inlined_call_operand.vmem [shape: f32[1,1,8,2048], index: 3, kind: output, shape index: {1}]
  %4 = xla_tuple %s2, %s3
  %s5 = sld [smem:[#allocation0]]
  $region26: #{generator_forward.11} parent=0
    _
  %s7 = ssub.s32 1, %s5
  %s8 = scalar_select 0, %s7, %s5
  // Predicated region
  $region2: #{generator_forward.11} parent=0 // pred_check
    _
  $region3: #{generator_forward.11} parent=0 // pred_check_branch
    %10 = sbr.rel (0) target = $region5
  $region4: #{generator_forward.11} parent=0 // pred_region
    _
  $region5: #{generator_forward.11} parent=0 // pred_fallthru
    _
  // Predicated region
  $region6: #{generator_forward.11} parent=0 // pred_check
    _
  $region7: #{generator_forward.11} parent=0 // pred_check_branch
    %12 = sbr.rel (0) target = $region9
  $region8: #{generator_forward.11} parent=0 // pred_region
    _
  $region9: #{generator_forward.11} parent=0 // pred_fallthru
    _
  %v14 = vld [vmem:[%s0] sm:$0xf]
  %v15 = vld [vmem:[%s0 + $0x4] sm:$0xf]
  %v16 = vld [vmem:[%s0 + $0x8] sm:$0xf]
  %v17 = vld [vmem:[%s0 + $0xc] sm:$0xf]
  %v18 = vld [vmem:[%s0 + $0x10] sm:$0xf]
  %v19 = vld [vmem:[%s0 + $0x14] sm:$0xf]
  %v20 = vld [vmem:[%s0 + $0x18] sm:$0xf]
  %v21 = vld [vmem:[%s0 + $0x1c] sm:$0xf]
  %v22 = vld [vmem:[%s0 + $0x20] sm:$0xf]
  %v23 = vld [vmem:[%s0 + $0x24] sm:$0xf]
  %v24 = vld [vmem:[%s0 + $0x28] sm:$0xf]
  %v25 = vld [vmem:[%s0 + $0x2c] sm:$0xf]
  %v26 = vld [vmem:[%s0 + $0x30] sm:$0xf]
  %v27 = vld [vmem:[%s0 + $0x34] sm:$0xf]
  %v28 = vld [vmem:[%s0 + $0x38] sm:$0xf]
  %v29 = vld [vmem:[%s0 + $0x3c] sm:$0xf]
  %v30 = vld [vmem:[%s1] sm:$0xff]
  %v31 = vld [vmem:[%s1 + $0x8] sm:$0xff]
  %v32 = vld [vmem:[%s1 + $0x10] sm:$0xff]
  %v33 = vld [vmem:[%s1 + $0x18] sm:$0xff]
  %v34 = vld [vmem:[%s1 + $0x20] sm:$0xff]
  %v35 = vld [vmem:[%s1 + $0x28] sm:$0xff]
  %v36 = vld [vmem:[%s1 + $0x30] sm:$0xff]
  %v37 = vld [vmem:[%s1 + $0x38] sm:$0xff]
  %v38 = vld [vmem:[%s1 + $0x40] sm:$0xff]
  %v39 = vld [vmem:[%s1 + $0x48] sm:$0xff]
  %v40 = vld [vmem:[%s1 + $0x50] sm:$0xff]
  %v41 = vld [vmem:[%s1 + $0x58] sm:$0xff]
  %v42 = vld [vmem:[%s1 + $0x60] sm:$0xff]
  %v43 = vld [vmem:[%s1 + $0x68] sm:$0xff]
  %v44 = vld [vmem:[%s1 + $0x70] sm:$0xff]
  %v45 = vld [vmem:[%s1 + $0x78] sm:$0xff]
  %v62 = vunpack.c.l.b16 %v14
  %v63 = vunpack.c.l.b16 %v15
  %v64 = vunpack.c.l.b16 %v16
  %v65 = vunpack.c.l.b16 %v17
  %v66 = vunpack.c.l.b16 %v18
  %v67 = vunpack.c.l.b16 %v19
  %v68 = vunpack.c.l.b16 %v20
  %v69 = vunpack.c.l.b16 %v21
  %v70 = vunpack.c.l.b16 %v22
  %v71 = vunpack.c.l.b16 %v23
  %v72 = vunpack.c.l.b16 %v24
  %v73 = vunpack.c.l.b16 %v25
  %v74 = vunpack.c.l.b16 %v26
  %v75 = vunpack.c.l.b16 %v27
  %v76 = vunpack.c.l.b16 %v28
  %v77 = vunpack.c.l.b16 %v29
  %v78 = vpack.c.b16 %v63, %v62
  %v79 = vpack.c.b16 %v65, %v64
  %v80 = vpack.c.b16 %v67, %v66
  %v81 = vpack.c.b16 %v69, %v68
  %v82 = vpack.c.b16 %v71, %v70
  %v83 = vpack.c.b16 %v73, %v72
  %v84 = vpack.c.b16 %v75, %v74
  %v85 = vpack.c.b16 %v77, %v76
  %v102 = vunpack.c.l.b16 %v30
  %v103 = vunpack.c.h.b16 %v30
  %v104 = vunpack.c.l.b16 %v31
  %v105 = vunpack.c.h.b16 %v31
  %v106 = vunpack.c.l.b16 %v32
  %v107 = vunpack.c.h.b16 %v32
  %v108 = vunpack.c.l.b16 %v33
  %v109 = vunpack.c.h.b16 %v33
  %v110 = vunpack.c.l.b16 %v34
  %v111 = vunpack.c.h.b16 %v34
  %v112 = vunpack.c.l.b16 %v35
  %v113 = vunpack.c.h.b16 %v35
  %v114 = vunpack.c.l.b16 %v36
  %v115 = vunpack.c.h.b16 %v36
  %v116 = vunpack.c.l.b16 %v37
  %v117 = vunpack.c.h.b16 %v37
  %v118 = vunpack.c.l.b16 %v38
  %v119 = vunpack.c.h.b16 %v38
  %v120 = vunpack.c.l.b16 %v39
  %v121 = vunpack.c.h.b16 %v39
  %v122 = vunpack.c.l.b16 %v40
  %v123 = vunpack.c.h.b16 %v40
  %v124 = vunpack.c.l.b16 %v41
  %v125 = vunpack.c.h.b16 %v41
  %v126 = vunpack.c.l.b16 %v42
  %v127 = vunpack.c.h.b16 %v42
  %v128 = vunpack.c.l.b16 %v43
  %v129 = vunpack.c.h.b16 %v43
  %v130 = vunpack.c.l.b16 %v44
  %v131 = vunpack.c.h.b16 %v44
  %v132 = vunpack.c.l.b16 %v45
  %v133 = vunpack.c.h.b16 %v45
  %v134 = vpack.c.b16 %v118, %v102
  %v135 = vpack.c.b16 %v119, %v103
  %v136 = vpack.c.b16 %v120, %v104
  %v137 = vpack.c.b16 %v121, %v105
  %v138 = vpack.c.b16 %v122, %v106
  %v139 = vpack.c.b16 %v123, %v107
  %v140 = vpack.c.b16 %v124, %v108
  %v141 = vpack.c.b16 %v125, %v109
  %v142 = vpack.c.b16 %v126, %v110
  %v143 = vpack.c.b16 %v127, %v111
  %v144 = vpack.c.b16 %v128, %v112
  %v145 = vpack.c.b16 %v129, %v113
  %v146 = vpack.c.b16 %v130, %v114
  %v147 = vpack.c.b16 %v131, %v115
  %v148 = vpack.c.b16 %v132, %v116
  %v149 = vpack.c.b16 %v133, %v117
  %vm166 = vcmask 130048
  %v168 = vsel %vm166, %v78, 0
  %v171 = vsel %vm166, %v79, 0
  %v174 = vsel %vm166, %v80, 0
  %v177 = vsel %vm166, %v81, 0
  %v180 = vsel %vm166, %v82, 0
  %v183 = vsel %vm166, %v83, 0
  %v186 = vsel %vm166, %v84, 0
  %v189 = vsel %vm166, %v85, 0
  %191 = vmatpush.bf16.msra.mxu0 0
  %192 = vmatpush.bf16.msra.mxu0 0
  %193 = vmatpush.bf16.msra.mxu0 0
  %194 = vmatpush.bf16.msra.mxu0 0
  %195 = vmatpush.bf16.msra.mxu0 0
  %196 = vmatpush.bf16.msra.mxu0 0
  %197 = vmatpush.bf16.msra.mxu0 0
  %198 = vmatpush.bf16.msra.mxu0 %v134
  %199 = vmatmul.bf16.gmra.mxu0 %v168
  %v200 = vpop.f32.mrf.mxu0
  %v201 = vadd.f32 0.0, %v200
  %v202 = vpop.f32.mrf.mxu0
  %v203 = vadd.f32 0.0, %v202
  %204 = vmatmul.bf16.gmra.mxu0 %v171
  %v205 = vpop.f32.mrf.mxu0
  %v206 = vadd.f32 0.0, %v205
  %v207 = vpop.f32.mrf.mxu0
  %v208 = vadd.f32 0.0, %v207
  %209 = vmatmul.bf16.gmra.mxu0 %v174
  %v210 = vpop.f32.mrf.mxu0
  %v211 = vadd.f32 0.0, %v210
  %v212 = vpop.f32.mrf.mxu0
  %v213 = vadd.f32 0.0, %v212
  %214 = vmatmul.bf16.gmra.mxu0 %v177
  %v215 = vpop.f32.mrf.mxu0
  %v216 = vadd.f32 0.0, %v215
  %v217 = vpop.f32.mrf.mxu0
  %v218 = vadd.f32 0.0, %v217
  %219 = vmatmul.bf16.gmra.mxu0 %v180
  %v220 = vpop.f32.mrf.mxu0
  %v221 = vadd.f32 0.0, %v220
  %v222 = vpop.f32.mrf.mxu0
  %v223 = vadd.f32 0.0, %v222
  %224 = vmatmul.bf16.gmra.mxu0 %v183
  %v225 = vpop.f32.mrf.mxu0
  %v226 = vadd.f32 0.0, %v225
  %v227 = vpop.f32.mrf.mxu0
  %v228 = vadd.f32 0.0, %v227
  %229 = vmatmul.bf16.gmra.mxu0 %v186
  %v230 = vpop.f32.mrf.mxu0
  %v231 = vadd.f32 0.0, %v230
  %v232 = vpop.f32.mrf.mxu0
  %v233 = vadd.f32 0.0, %v232
  %234 = vmatmul.bf16.gmra.mxu0 %v189
  %v235 = vpop.f32.mrf.mxu0
  %v236 = vadd.f32 0.0, %v235
  %v237 = vpop.f32.mrf.mxu0
  %v238 = vadd.f32 0.0, %v237
  %239 = vdwg.mxu0
  %240 = vmatpush.bf16.msra.mxu0 0
  %241 = vmatpush.bf16.msra.mxu0 0
  %242 = vmatpush.bf16.msra.mxu0 0
  %243 = vmatpush.bf16.msra.mxu0 0
  %244 = vmatpush.bf16.msra.mxu0 0
  %245 = vmatpush.bf16.msra.mxu0 0
  %246 = vmatpush.bf16.msra.mxu0 0
  %247 = vmatpush.bf16.msra.mxu0 %v135
  %248 = vmatmul.bf16.gmra.mxu0 %v168
  %v249 = vpop.f32.mrf.mxu0
  %v250 = vadd.f32 0.0, %v249
  %v251 = vpop.f32.mrf.mxu0
  %v252 = vadd.f32 0.0, %v251
  %253 = vmatmul.bf16.gmra.mxu0 %v171
  %v254 = vpop.f32.mrf.mxu0
  %v255 = vadd.f32 0.0, %v254
  %v256 = vpop.f32.mrf.mxu0
  %v257 = vadd.f32 0.0, %v256
  %258 = vmatmul.bf16.gmra.mxu0 %v174
  %v259 = vpop.f32.mrf.mxu0
  %v260 = vadd.f32 0.0, %v259
  %v261 = vpop.f32.mrf.mxu0
  %v262 = vadd.f32 0.0, %v261
  %263 = vmatmul.bf16.gmra.mxu0 %v177
  %v264 = vpop.f32.mrf.mxu0
  %v265 = vadd.f32 0.0, %v264
  %v266 = vpop.f32.mrf.mxu0
  %v267 = vadd.f32 0.0, %v266
  %268 = vmatmul.bf16.gmra.mxu0 %v180
  %v269 = vpop.f32.mrf.mxu0
  %v270 = vadd.f32 0.0, %v269
  %v271 = vpop.f32.mrf.mxu0
  %v272 = vadd.f32 0.0, %v271
  %273 = vmatmul.bf16.gmra.mxu0 %v183
  %v274 = vpop.f32.mrf.mxu0
  %v275 = vadd.f32 0.0, %v274
  %v276 = vpop.f32.mrf.mxu0
  %v277 = vadd.f32 0.0, %v276
  %278 = vmatmul.bf16.gmra.mxu0 %v186
  %v279 = vpop.f32.mrf.mxu0
  %v280 = vadd.f32 0.0, %v279
  %v281 = vpop.f32.mrf.mxu0
  %v282 = vadd.f32 0.0, %v281
  %283 = vmatmul.bf16.gmra.mxu0 %v189
  %v284 = vpop.f32.mrf.mxu0
  %v285 = vadd.f32 0.0, %v284
  %v286 = vpop.f32.mrf.mxu0
  %v287 = vadd.f32 0.0, %v286
  %288 = vdwg.mxu0
  %289 = vmatpush.bf16.msra.mxu0 0
  %290 = vmatpush.bf16.msra.mxu0 0
  %291 = vmatpush.bf16.msra.mxu0 0
  %292 = vmatpush.bf16.msra.mxu0 0
  %293 = vmatpush.bf16.msra.mxu0 0
  %294 = vmatpush.bf16.msra.mxu0 0
  %295 = vmatpush.bf16.msra.mxu0 0
  %296 = vmatpush.bf16.msra.mxu0 %v136
  %297 = vmatmul.bf16.gmra.mxu0 %v168
  %v298 = vpop.f32.mrf.mxu0
  %v299 = vadd.f32 0.0, %v298
  %v300 = vpop.f32.mrf.mxu0
  %v301 = vadd.f32 0.0, %v300
  %302 = vmatmul.bf16.gmra.mxu0 %v171
  %v303 = vpop.f32.mrf.mxu0
  %v304 = vadd.f32 0.0, %v303
  %v305 = vpop.f32.mrf.mxu0
  %v306 = vadd.f32 0.0, %v305
  %307 = vmatmul.bf16.gmra.mxu0 %v174
  %v308 = vpop.f32.mrf.mxu0
  %v309 = vadd.f32 0.0, %v308
  %v310 = vpop.f32.mrf.mxu0
  %v311 = vadd.f32 0.0, %v310
  %312 = vmatmul.bf16.gmra.mxu0 %v177
  %v313 = vpop.f32.mrf.mxu0
  %v314 = vadd.f32 0.0, %v313
  %v315 = vpop.f32.mrf.mxu0
  %v316 = vadd.f32 0.0, %v315
  %317 = vmatmul.bf16.gmra.mxu0 %v180
  %v318 = vpop.f32.mrf.mxu0
  %v319 = vadd.f32 0.0, %v318
  %v320 = vpop.f32.mrf.mxu0
  %v321 = vadd.f32 0.0, %v320
  %322 = vmatmul.bf16.gmra.mxu0 %v183
  %v323 = vpop.f32.mrf.mxu0
  %v324 = vadd.f32 0.0, %v323
  %v325 = vpop.f32.mrf.mxu0
  %v326 = vadd.f32 0.0, %v325
  %327 = vmatmul.bf16.gmra.mxu0 %v186
  %v328 = vpop.f32.mrf.mxu0
  %v329 = vadd.f32 0.0, %v328
  %v330 = vpop.f32.mrf.mxu0
  %v331 = vadd.f32 0.0, %v330
  %332 = vmatmul.bf16.gmra.mxu0 %v189
  %v333 = vpop.f32.mrf.mxu0
  %v334 = vadd.f32 0.0, %v333
  %v335 = vpop.f32.mrf.mxu0
  %v336 = vadd.f32 0.0, %v335
  %337 = vdwg.mxu0
  %338 = vmatpush.bf16.msra.mxu0 0
  %339 = vmatpush.bf16.msra.mxu0 0
  %340 = vmatpush.bf16.msra.mxu0 0
  %341 = vmatpush.bf16.msra.mxu0 0
  %342 = vmatpush.bf16.msra.mxu0 0
  %343 = vmatpush.bf16.msra.mxu0 0
  %344 = vmatpush.bf16.msra.mxu0 0
  %345 = vmatpush.bf16.msra.mxu0 %v137
  %346 = vmatmul.bf16.gmra.mxu0 %v168
  %v347 = vpop.f32.mrf.mxu0
  %v348 = vadd.f32 0.0, %v347
  %v349 = vpop.f32.mrf.mxu0
  %v350 = vadd.f32 0.0, %v349
  %351 = vmatmul.bf16.gmra.mxu0 %v171
  %v352 = vpop.f32.mrf.mxu0
  %v353 = vadd.f32 0.0, %v352
  %v354 = vpop.f32.mrf.mxu0
  %v355 = vadd.f32 0.0, %v354
  %356 = vmatmul.bf16.gmra.mxu0 %v174
  %v357 = vpop.f32.mrf.mxu0
  %v358 = vadd.f32 0.0, %v357
  %v359 = vpop.f32.mrf.mxu0
  %v360 = vadd.f32 0.0, %v359
  %361 = vmatmul.bf16.gmra.mxu0 %v177
  %v362 = vpop.f32.mrf.mxu0
  %v363 = vadd.f32 0.0, %v362
  %v364 = vpop.f32.mrf.mxu0
  %v365 = vadd.f32 0.0, %v364
  %366 = vmatmul.bf16.gmra.mxu0 %v180
  %v367 = vpop.f32.mrf.mxu0
  %v368 = vadd.f32 0.0, %v367
  %v369 = vpop.f32.mrf.mxu0
  %v370 = vadd.f32 0.0, %v369
  %371 = vmatmul.bf16.gmra.mxu0 %v183
  %v372 = vpop.f32.mrf.mxu0
  %v373 = vadd.f32 0.0, %v372
  %v374 = vpop.f32.mrf.mxu0
  %v375 = vadd.f32 0.0, %v374
  %376 = vmatmul.bf16.gmra.mxu0 %v186
  %v377 = vpop.f32.mrf.mxu0
  %v378 = vadd.f32 0.0, %v377
  %v379 = vpop.f32.mrf.mxu0
  %v380 = vadd.f32 0.0, %v379
  %381 = vmatmul.bf16.gmra.mxu0 %v189
  %v382 = vpop.f32.mrf.mxu0
  %v383 = vadd.f32 0.0, %v382
  %v384 = vpop.f32.mrf.mxu0
  %v385 = vadd.f32 0.0, %v384
  %386 = vdwg.mxu0
  %387 = vmatpush.bf16.msra.mxu0 0
  %388 = vmatpush.bf16.msra.mxu0 0
  %389 = vmatpush.bf16.msra.mxu0 0
  %390 = vmatpush.bf16.msra.mxu0 0
  %391 = vmatpush.bf16.msra.mxu0 0
  %392 = vmatpush.bf16.msra.mxu0 0
  %393 = vmatpush.bf16.msra.mxu0 0
  %394 = vmatpush.bf16.msra.mxu0 %v138
  %395 = vmatmul.bf16.gmra.mxu0 %v168
  %v396 = vpop.f32.mrf.mxu0
  %v397 = vadd.f32 0.0, %v396
  %v398 = vpop.f32.mrf.mxu0
  %v399 = vadd.f32 0.0, %v398
  %400 = vmatmul.bf16.gmra.mxu0 %v171
  %v401 = vpop.f32.mrf.mxu0
  %v402 = vadd.f32 0.0, %v401
  %v403 = vpop.f32.mrf.mxu0
  %v404 = vadd.f32 0.0, %v403
  %405 = vmatmul.bf16.gmra.mxu0 %v174
  %v406 = vpop.f32.mrf.mxu0
  %v407 = vadd.f32 0.0, %v406
  %v408 = vpop.f32.mrf.mxu0
  %v409 = vadd.f32 0.0, %v408
  %410 = vmatmul.bf16.gmra.mxu0 %v177
  %v411 = vpop.f32.mrf.mxu0
  %v412 = vadd.f32 0.0, %v411
  %v413 = vpop.f32.mrf.mxu0
  %v414 = vadd.f32 0.0, %v413
  %415 = vmatmul.bf16.gmra.mxu0 %v180
  %v416 = vpop.f32.mrf.mxu0
  %v417 = vadd.f32 0.0, %v416
  %v418 = vpop.f32.mrf.mxu0
  %v419 = vadd.f32 0.0, %v418
  %420 = vmatmul.bf16.gmra.mxu0 %v183
  %v421 = vpop.f32.mrf.mxu0
  %v422 = vadd.f32 0.0, %v421
  %v423 = vpop.f32.mrf.mxu0
  %v424 = vadd.f32 0.0, %v423
  %425 = vmatmul.bf16.gmra.mxu0 %v186
  %v426 = vpop.f32.mrf.mxu0
  %v427 = vadd.f32 0.0, %v426
  %v428 = vpop.f32.mrf.mxu0
  %v429 = vadd.f32 0.0, %v428
  %430 = vmatmul.bf16.gmra.mxu0 %v189
  %v431 = vpop.f32.mrf.mxu0
  %v432 = vadd.f32 0.0, %v431
  %v433 = vpop.f32.mrf.mxu0
  %v434 = vadd.f32 0.0, %v433
  %435 = vdwg.mxu0
  %436 = vmatpush.bf16.msra.mxu0 0
  %437 = vmatpush.bf16.msra.mxu0 0
  %438 = vmatpush.bf16.msra.mxu0 0
  %439 = vmatpush.bf16.msra.mxu0 0
  %440 = vmatpush.bf16.msra.mxu0 0
  %441 = vmatpush.bf16.msra.mxu0 0
  %442 = vmatpush.bf16.msra.mxu0 0
  %443 = vmatpush.bf16.msra.mxu0 %v139
  %444 = vmatmul.bf16.gmra.mxu0 %v168
  %v445 = vpop.f32.mrf.mxu0
  %v446 = vadd.f32 0.0, %v445
  %v447 = vpop.f32.mrf.mxu0
  %v448 = vadd.f32 0.0, %v447
  %449 = vmatmul.bf16.gmra.mxu0 %v171
  %v450 = vpop.f32.mrf.mxu0
  %v451 = vadd.f32 0.0, %v450
  %v452 = vpop.f32.mrf.mxu0
  %v453 = vadd.f32 0.0, %v452
  %454 = vmatmul.bf16.gmra.mxu0 %v174
  %v455 = vpop.f32.mrf.mxu0
  %v456 = vadd.f32 0.0, %v455
  %v457 = vpop.f32.mrf.mxu0
  %v458 = vadd.f32 0.0, %v457
  %459 = vmatmul.bf16.gmra.mxu0 %v177
  %v460 = vpop.f32.mrf.mxu0
  %v461 = vadd.f32 0.0, %v460
  %v462 = vpop.f32.mrf.mxu0
  %v463 = vadd.f32 0.0, %v462
  %464 = vmatmul.bf16.gmra.mxu0 %v180
  %v465 = vpop.f32.mrf.mxu0
  %v466 = vadd.f32 0.0, %v465
  %v467 = vpop.f32.mrf.mxu0
  %v468 = vadd.f32 0.0, %v467
  %469 = vmatmul.bf16.gmra.mxu0 %v183
  %v470 = vpop.f32.mrf.mxu0
  %v471 = vadd.f32 0.0, %v470
  %v472 = vpop.f32.mrf.mxu0
  %v473 = vadd.f32 0.0, %v472
  %474 = vmatmul.bf16.gmra.mxu0 %v186
  %v475 = vpop.f32.mrf.mxu0
  %v476 = vadd.f32 0.0, %v475
  %v477 = vpop.f32.mrf.mxu0
  %v478 = vadd.f32 0.0, %v477
  %479 = vmatmul.bf16.gmra.mxu0 %v189
  %v480 = vpop.f32.mrf.mxu0
  %v481 = vadd.f32 0.0, %v480
  %v482 = vpop.f32.mrf.mxu0
  %v483 = vadd.f32 0.0, %v482
  %484 = vdwg.mxu0
  %485 = vmatpush.bf16.msra.mxu0 0
  %486 = vmatpush.bf16.msra.mxu0 0
  %487 = vmatpush.bf16.msra.mxu0 0
  %488 = vmatpush.bf16.msra.mxu0 0
  %489 = vmatpush.bf16.msra.mxu0 0
  %490 = vmatpush.bf16.msra.mxu0 0
  %491 = vmatpush.bf16.msra.mxu0 0
  %492 = vmatpush.bf16.msra.mxu0 %v140
  %493 = vmatmul.bf16.gmra.mxu0 %v168
  %v494 = vpop.f32.mrf.mxu0
  %v495 = vadd.f32 0.0, %v494
  %v496 = vpop.f32.mrf.mxu0
  %v497 = vadd.f32 0.0, %v496
  %498 = vmatmul.bf16.gmra.mxu0 %v171
  %v499 = vpop.f32.mrf.mxu0
  %v500 = vadd.f32 0.0, %v499
  %v501 = vpop.f32.mrf.mxu0
  %v502 = vadd.f32 0.0, %v501
  %503 = vmatmul.bf16.gmra.mxu0 %v174
  %v504 = vpop.f32.mrf.mxu0
  %v505 = vadd.f32 0.0, %v504
  %v506 = vpop.f32.mrf.mxu0
  %v507 = vadd.f32 0.0, %v506
  %508 = vmatmul.bf16.gmra.mxu0 %v177
  %v509 = vpop.f32.mrf.mxu0
  %v510 = vadd.f32 0.0, %v509
  %v511 = vpop.f32.mrf.mxu0
  %v512 = vadd.f32 0.0, %v511
  %513 = vmatmul.bf16.gmra.mxu0 %v180
  %v514 = vpop.f32.mrf.mxu0
  %v515 = vadd.f32 0.0, %v514
  %v516 = vpop.f32.mrf.mxu0
  %v517 = vadd.f32 0.0, %v516
  %518 = vmatmul.bf16.gmra.mxu0 %v183
  %v519 = vpop.f32.mrf.mxu0
  %v520 = vadd.f32 0.0, %v519
  %v521 = vpop.f32.mrf.mxu0
  %v522 = vadd.f32 0.0, %v521
  %523 = vmatmul.bf16.gmra.mxu0 %v186
  %v524 = vpop.f32.mrf.mxu0
  %v525 = vadd.f32 0.0, %v524
  %v526 = vpop.f32.mrf.mxu0
  %v527 = vadd.f32 0.0, %v526
  %528 = vmatmul.bf16.gmra.mxu0 %v189
  %v529 = vpop.f32.mrf.mxu0
  %v530 = vadd.f32 0.0, %v529
  %v531 = vpop.f32.mrf.mxu0
  %v532 = vadd.f32 0.0, %v531
  %533 = vdwg.mxu0
  %534 = vmatpush.bf16.msra.mxu0 0
  %535 = vmatpush.bf16.msra.mxu0 0
  %536 = vmatpush.bf16.msra.mxu0 0
  %537 = vmatpush.bf16.msra.mxu0 0
  %538 = vmatpush.bf16.msra.mxu0 0
  %539 = vmatpush.bf16.msra.mxu0 0
  %540 = vmatpush.bf16.msra.mxu0 0
  %541 = vmatpush.bf16.msra.mxu0 %v141
  %542 = vmatmul.bf16.gmra.mxu0 %v168
  %v543 = vpop.f32.mrf.mxu0
  %v544 = vadd.f32 0.0, %v543
  %v545 = vpop.f32.mrf.mxu0
  %v546 = vadd.f32 0.0, %v545
  %547 = vmatmul.bf16.gmra.mxu0 %v171
  %v548 = vpop.f32.mrf.mxu0
  %v549 = vadd.f32 0.0, %v548
  %v550 = vpop.f32.mrf.mxu0
  %v551 = vadd.f32 0.0, %v550
  %552 = vmatmul.bf16.gmra.mxu0 %v174
  %v553 = vpop.f32.mrf.mxu0
  %v554 = vadd.f32 0.0, %v553
  %v555 = vpop.f32.mrf.mxu0
  %v556 = vadd.f32 0.0, %v555
  %557 = vmatmul.bf16.gmra.mxu0 %v177
  %v558 = vpop.f32.mrf.mxu0
  %v559 = vadd.f32 0.0, %v558
  %v560 = vpop.f32.mrf.mxu0
  %v561 = vadd.f32 0.0, %v560
  %562 = vmatmul.bf16.gmra.mxu0 %v180
  %v563 = vpop.f32.mrf.mxu0
  %v564 = vadd.f32 0.0, %v563
  %v565 = vpop.f32.mrf.mxu0
  %v566 = vadd.f32 0.0, %v565
  %567 = vmatmul.bf16.gmra.mxu0 %v183
  %v568 = vpop.f32.mrf.mxu0
  %v569 = vadd.f32 0.0, %v568
  %v570 = vpop.f32.mrf.mxu0
  %v571 = vadd.f32 0.0, %v570
  %572 = vmatmul.bf16.gmra.mxu0 %v186
  %v573 = vpop.f32.mrf.mxu0
  %v574 = vadd.f32 0.0, %v573
  %v575 = vpop.f32.mrf.mxu0
  %v576 = vadd.f32 0.0, %v575
  %577 = vmatmul.bf16.gmra.mxu0 %v189
  %v578 = vpop.f32.mrf.mxu0
  %v579 = vadd.f32 0.0, %v578
  %v580 = vpop.f32.mrf.mxu0
  %v581 = vadd.f32 0.0, %v580
  %582 = vdwg.mxu0
  %583 = vmatpush.bf16.msra.mxu0 0
  %584 = vmatpush.bf16.msra.mxu0 0
  %585 = vmatpush.bf16.msra.mxu0 0
  %586 = vmatpush.bf16.msra.mxu0 0
  %587 = vmatpush.bf16.msra.mxu0 0
  %588 = vmatpush.bf16.msra.mxu0 0
  %589 = vmatpush.bf16.msra.mxu0 0
  %590 = vmatpush.bf16.msra.mxu0 %v142
  %591 = vmatmul.bf16.gmra.mxu0 %v168
  %v592 = vpop.f32.mrf.mxu0
  %v593 = vadd.f32 0.0, %v592
  %v594 = vpop.f32.mrf.mxu0
  %v595 = vadd.f32 0.0, %v594
  %596 = vmatmul.bf16.gmra.mxu0 %v171
  %v597 = vpop.f32.mrf.mxu0
  %v598 = vadd.f32 0.0, %v597
  %v599 = vpop.f32.mrf.mxu0
  %v600 = vadd.f32 0.0, %v599
  %601 = vmatmul.bf16.gmra.mxu0 %v174
  %v602 = vpop.f32.mrf.mxu0
  %v603 = vadd.f32 0.0, %v602
  %v604 = vpop.f32.mrf.mxu0
  %v605 = vadd.f32 0.0, %v604
  %606 = vmatmul.bf16.gmra.mxu0 %v177
  %v607 = vpop.f32.mrf.mxu0
  %v608 = vadd.f32 0.0, %v607
  %v609 = vpop.f32.mrf.mxu0
  %v610 = vadd.f32 0.0, %v609
  %611 = vmatmul.bf16.gmra.mxu0 %v180
  %v612 = vpop.f32.mrf.mxu0
  %v613 = vadd.f32 0.0, %v612
  %v614 = vpop.f32.mrf.mxu0
  %v615 = vadd.f32 0.0, %v614
  %616 = vmatmul.bf16.gmra.mxu0 %v183
  %v617 = vpop.f32.mrf.mxu0
  %v618 = vadd.f32 0.0, %v617
  %v619 = vpop.f32.mrf.mxu0
  %v620 = vadd.f32 0.0, %v619
  %621 = vmatmul.bf16.gmra.mxu0 %v186
  %v622 = vpop.f32.mrf.mxu0
  %v623 = vadd.f32 0.0, %v622
  %v624 = vpop.f32.mrf.mxu0
  %v625 = vadd.f32 0.0, %v624
  %626 = vmatmul.bf16.gmra.mxu0 %v189
  %v627 = vpop.f32.mrf.mxu0
  %v628 = vadd.f32 0.0, %v627
  %v629 = vpop.f32.mrf.mxu0
  %v630 = vadd.f32 0.0, %v629
  %631 = vdwg.mxu0
  %632 = vmatpush.bf16.msra.mxu0 0
  %633 = vmatpush.bf16.msra.mxu0 0
  %634 = vmatpush.bf16.msra.mxu0 0
  %635 = vmatpush.bf16.msra.mxu0 0
  %636 = vmatpush.bf16.msra.mxu0 0
  %637 = vmatpush.bf16.msra.mxu0 0
  %638 = vmatpush.bf16.msra.mxu0 0
  %639 = vmatpush.bf16.msra.mxu0 %v143
  %640 = vmatmul.bf16.gmra.mxu0 %v168
  %v641 = vpop.f32.mrf.mxu0
  %v642 = vadd.f32 0.0, %v641
  %v643 = vpop.f32.mrf.mxu0
  %v644 = vadd.f32 0.0, %v643
  %645 = vmatmul.bf16.gmra.mxu0 %v171
  %v646 = vpop.f32.mrf.mxu0
  %v647 = vadd.f32 0.0, %v646
  %v648 = vpop.f32.mrf.mxu0
  %v649 = vadd.f32 0.0, %v648
  %650 = vmatmul.bf16.gmra.mxu0 %v174
  %v651 = vpop.f32.mrf.mxu0
  %v652 = vadd.f32 0.0, %v651
  %v653 = vpop.f32.mrf.mxu0
  %v654 = vadd.f32 0.0, %v653
  %655 = vmatmul.bf16.gmra.mxu0 %v177
  %v656 = vpop.f32.mrf.mxu0
  %v657 = vadd.f32 0.0, %v656
  %v658 = vpop.f32.mrf.mxu0
  %v659 = vadd.f32 0.0, %v658
  %660 = vmatmul.bf16.gmra.mxu0 %v180
  %v661 = vpop.f32.mrf.mxu0
  %v662 = vadd.f32 0.0, %v661
  %v663 = vpop.f32.mrf.mxu0
  %v664 = vadd.f32 0.0, %v663
  %665 = vmatmul.bf16.gmra.mxu0 %v183
  %v666 = vpop.f32.mrf.mxu0
  %v667 = vadd.f32 0.0, %v666
  %v668 = vpop.f32.mrf.mxu0
  %v669 = vadd.f32 0.0, %v668
  %670 = vmatmul.bf16.gmra.mxu0 %v186
  %v671 = vpop.f32.mrf.mxu0
  %v672 = vadd.f32 0.0, %v671
  %v673 = vpop.f32.mrf.mxu0
  %v674 = vadd.f32 0.0, %v673
  %675 = vmatmul.bf16.gmra.mxu0 %v189
  %v676 = vpop.f32.mrf.mxu0
  %v677 = vadd.f32 0.0, %v676
  %v678 = vpop.f32.mrf.mxu0
  %v679 = vadd.f32 0.0, %v678
  %680 = vdwg.mxu0
  %681 = vmatpush.bf16.msra.mxu0 0
  %682 = vmatpush.bf16.msra.mxu0 0
  %683 = vmatpush.bf16.msra.mxu0 0
  %684 = vmatpush.bf16.msra.mxu0 0
  %685 = vmatpush.bf16.msra.mxu0 0
  %686 = vmatpush.bf16.msra.mxu0 0
  %687 = vmatpush.bf16.msra.mxu0 0
  %688 = vmatpush.bf16.msra.mxu0 %v144
  %689 = vmatmul.bf16.gmra.mxu0 %v168
  %v690 = vpop.f32.mrf.mxu0
  %v691 = vadd.f32 0.0, %v690
  %v692 = vpop.f32.mrf.mxu0
  %v693 = vadd.f32 0.0, %v692
  %694 = vmatmul.bf16.gmra.mxu0 %v171
  %v695 = vpop.f32.mrf.mxu0
  %v696 = vadd.f32 0.0, %v695
  %v697 = vpop.f32.mrf.mxu0
  %v698 = vadd.f32 0.0, %v697
  %699 = vmatmul.bf16.gmra.mxu0 %v174
  %v700 = vpop.f32.mrf.mxu0
  %v701 = vadd.f32 0.0, %v700
  %v702 = vpop.f32.mrf.mxu0
  %v703 = vadd.f32 0.0, %v702
  %704 = vmatmul.bf16.gmra.mxu0 %v177
  %v705 = vpop.f32.mrf.mxu0
  %v706 = vadd.f32 0.0, %v705
  %v707 = vpop.f32.mrf.mxu0
  %v708 = vadd.f32 0.0, %v707
  %709 = vmatmul.bf16.gmra.mxu0 %v180
  %v710 = vpop.f32.mrf.mxu0
  %v711 = vadd.f32 0.0, %v710
  %v712 = vpop.f32.mrf.mxu0
  %v713 = vadd.f32 0.0, %v712
  %714 = vmatmul.bf16.gmra.mxu0 %v183
  %v715 = vpop.f32.mrf.mxu0
  %v716 = vadd.f32 0.0, %v715
  %v717 = vpop.f32.mrf.mxu0
  %v718 = vadd.f32 0.0, %v717
  %719 = vmatmul.bf16.gmra.mxu0 %v186
  %v720 = vpop.f32.mrf.mxu0
  %v721 = vadd.f32 0.0, %v720
  %v722 = vpop.f32.mrf.mxu0
  %v723 = vadd.f32 0.0, %v722
  %724 = vmatmul.bf16.gmra.mxu0 %v189
  %v725 = vpop.f32.mrf.mxu0
  %v726 = vadd.f32 0.0, %v725
  %v727 = vpop.f32.mrf.mxu0
  %v728 = vadd.f32 0.0, %v727
  %729 = vdwg.mxu0
  %730 = vmatpush.bf16.msra.mxu0 0
  %731 = vmatpush.bf16.msra.mxu0 0
  %732 = vmatpush.bf16.msra.mxu0 0
  %733 = vmatpush.bf16.msra.mxu0 0
  %734 = vmatpush.bf16.msra.mxu0 0
  %735 = vmatpush.bf16.msra.mxu0 0
  %736 = vmatpush.bf16.msra.mxu0 0
  %737 = vmatpush.bf16.msra.mxu0 %v145
  %738 = vmatmul.bf16.gmra.mxu0 %v168
  %v739 = vpop.f32.mrf.mxu0
  %v740 = vadd.f32 0.0, %v739
  %v741 = vpop.f32.mrf.mxu0
  %v742 = vadd.f32 0.0, %v741
  %743 = vmatmul.bf16.gmra.mxu0 %v171
  %v744 = vpop.f32.mrf.mxu0
  %v745 = vadd.f32 0.0, %v744
  %v746 = vpop.f32.mrf.mxu0
  %v747 = vadd.f32 0.0, %v746
  %748 = vmatmul.bf16.gmra.mxu0 %v174
  %v749 = vpop.f32.mrf.mxu0
  %v750 = vadd.f32 0.0, %v749
  %v751 = vpop.f32.mrf.mxu0
  %v752 = vadd.f32 0.0, %v751
  %753 = vmatmul.bf16.gmra.mxu0 %v177
  %v754 = vpop.f32.mrf.mxu0
  %v755 = vadd.f32 0.0, %v754
  %v756 = vpop.f32.mrf.mxu0
  %v757 = vadd.f32 0.0, %v756
  %758 = vmatmul.bf16.gmra.mxu0 %v180
  %v759 = vpop.f32.mrf.mxu0
  %v760 = vadd.f32 0.0, %v759
  %v761 = vpop.f32.mrf.mxu0
  %v762 = vadd.f32 0.0, %v761
  %763 = vmatmul.bf16.gmra.mxu0 %v183
  %v764 = vpop.f32.mrf.mxu0
  %v765 = vadd.f32 0.0, %v764
  %v766 = vpop.f32.mrf.mxu0
  %v767 = vadd.f32 0.0, %v766
  %768 = vmatmul.bf16.gmra.mxu0 %v186
  %v769 = vpop.f32.mrf.mxu0
  %v770 = vadd.f32 0.0, %v769
  %v771 = vpop.f32.mrf.mxu0
  %v772 = vadd.f32 0.0, %v771
  %773 = vmatmul.bf16.gmra.mxu0 %v189
  %v774 = vpop.f32.mrf.mxu0
  %v775 = vadd.f32 0.0, %v774
  %v776 = vpop.f32.mrf.mxu0
  %v777 = vadd.f32 0.0, %v776
  %778 = vdwg.mxu0
  %779 = vmatpush.bf16.msra.mxu0 0
  %780 = vmatpush.bf16.msra.mxu0 0
  %781 = vmatpush.bf16.msra.mxu0 0
  %782 = vmatpush.bf16.msra.mxu0 0
  %783 = vmatpush.bf16.msra.mxu0 0
  %784 = vmatpush.bf16.msra.mxu0 0
  %785 = vmatpush.bf16.msra.mxu0 0
  %786 = vmatpush.bf16.msra.mxu0 %v146
  %787 = vmatmul.bf16.gmra.mxu0 %v168
  %v788 = vpop.f32.mrf.mxu0
  %v789 = vadd.f32 0.0, %v788
  %v790 = vpop.f32.mrf.mxu0
  %v791 = vadd.f32 0.0, %v790
  %792 = vmatmul.bf16.gmra.mxu0 %v171
  %v793 = vpop.f32.mrf.mxu0
  %v794 = vadd.f32 0.0, %v793
  %v795 = vpop.f32.mrf.mxu0
  %v796 = vadd.f32 0.0, %v795
  %797 = vmatmul.bf16.gmra.mxu0 %v174
  %v798 = vpop.f32.mrf.mxu0
  %v799 = vadd.f32 0.0, %v798
  %v800 = vpop.f32.mrf.mxu0
  %v801 = vadd.f32 0.0, %v800
  %802 = vmatmul.bf16.gmra.mxu0 %v177
  %v803 = vpop.f32.mrf.mxu0
  %v804 = vadd.f32 0.0, %v803
  %v805 = vpop.f32.mrf.mxu0
  %v806 = vadd.f32 0.0, %v805
  %807 = vmatmul.bf16.gmra.mxu0 %v180
  %v808 = vpop.f32.mrf.mxu0
  %v809 = vadd.f32 0.0, %v808
  %v810 = vpop.f32.mrf.mxu0
  %v811 = vadd.f32 0.0, %v810
  %812 = vmatmul.bf16.gmra.mxu0 %v183
  %v813 = vpop.f32.mrf.mxu0
  %v814 = vadd.f32 0.0, %v813
  %v815 = vpop.f32.mrf.mxu0
  %v816 = vadd.f32 0.0, %v815
  %817 = vmatmul.bf16.gmra.mxu0 %v186
  %v818 = vpop.f32.mrf.mxu0
  %v819 = vadd.f32 0.0, %v818
  %v820 = vpop.f32.mrf.mxu0
  %v821 = vadd.f32 0.0, %v820
  %822 = vmatmul.bf16.gmra.mxu0 %v189
  %v823 = vpop.f32.mrf.mxu0
  %v824 = vadd.f32 0.0, %v823
  %v825 = vpop.f32.mrf.mxu0
  %v826 = vadd.f32 0.0, %v825
  %827 = vdwg.mxu0
  %828 = vmatpush.bf16.msra.mxu0 0
  %829 = vmatpush.bf16.msra.mxu0 0
  %830 = vmatpush.bf16.msra.mxu0 0
  %831 = vmatpush.bf16.msra.mxu0 0
  %832 = vmatpush.bf16.msra.mxu0 0
  %833 = vmatpush.bf16.msra.mxu0 0
  %834 = vmatpush.bf16.msra.mxu0 0
  %835 = vmatpush.bf16.msra.mxu0 %v147
  %836 = vmatmul.bf16.gmra.mxu0 %v168
  %v837 = vpop.f32.mrf.mxu0
  %v838 = vadd.f32 0.0, %v837
  %v839 = vpop.f32.mrf.mxu0
  %v840 = vadd.f32 0.0, %v839
  %841 = vmatmul.bf16.gmra.mxu0 %v171
  %v842 = vpop.f32.mrf.mxu0
  %v843 = vadd.f32 0.0, %v842
  %v844 = vpop.f32.mrf.mxu0
  %v845 = vadd.f32 0.0, %v844
  %846 = vmatmul.bf16.gmra.mxu0 %v174
  %v847 = vpop.f32.mrf.mxu0
  %v848 = vadd.f32 0.0, %v847
  %v849 = vpop.f32.mrf.mxu0
  %v850 = vadd.f32 0.0, %v849
  %851 = vmatmul.bf16.gmra.mxu0 %v177
  %v852 = vpop.f32.mrf.mxu0
  %v853 = vadd.f32 0.0, %v852
  %v854 = vpop.f32.mrf.mxu0
  %v855 = vadd.f32 0.0, %v854
  %856 = vmatmul.bf16.gmra.mxu0 %v180
  %v857 = vpop.f32.mrf.mxu0
  %v858 = vadd.f32 0.0, %v857
  %v859 = vpop.f32.mrf.mxu0
  %v860 = vadd.f32 0.0, %v859
  %861 = vmatmul.bf16.gmra.mxu0 %v183
  %v862 = vpop.f32.mrf.mxu0
  %v863 = vadd.f32 0.0, %v862
  %v864 = vpop.f32.mrf.mxu0
  %v865 = vadd.f32 0.0, %v864
  %866 = vmatmul.bf16.gmra.mxu0 %v186
  %v867 = vpop.f32.mrf.mxu0
  %v868 = vadd.f32 0.0, %v867
  %v869 = vpop.f32.mrf.mxu0
  %v870 = vadd.f32 0.0, %v869
  %871 = vmatmul.bf16.gmra.mxu0 %v189
  %v872 = vpop.f32.mrf.mxu0
  %v873 = vadd.f32 0.0, %v872
  %v874 = vpop.f32.mrf.mxu0
  %v875 = vadd.f32 0.0, %v874
  %876 = vdwg.mxu0
  %877 = vmatpush.bf16.msra.mxu0 0
  %878 = vmatpush.bf16.msra.mxu0 0
  %879 = vmatpush.bf16.msra.mxu0 0
  %880 = vmatpush.bf16.msra.mxu0 0
  %881 = vmatpush.bf16.msra.mxu0 0
  %882 = vmatpush.bf16.msra.mxu0 0
  %883 = vmatpush.bf16.msra.mxu0 0
  %884 = vmatpush.bf16.msra.mxu0 %v148
  %885 = vmatmul.bf16.gmra.mxu0 %v168
  %v886 = vpop.f32.mrf.mxu0
  %v887 = vadd.f32 0.0, %v886
  %v888 = vpop.f32.mrf.mxu0
  %v889 = vadd.f32 0.0, %v888
  %890 = vmatmul.bf16.gmra.mxu0 %v171
  %v891 = vpop.f32.mrf.mxu0
  %v892 = vadd.f32 0.0, %v891
  %v893 = vpop.f32.mrf.mxu0
  %v894 = vadd.f32 0.0, %v893
  %895 = vmatmul.bf16.gmra.mxu0 %v174
  %v896 = vpop.f32.mrf.mxu0
  %v897 = vadd.f32 0.0, %v896
  %v898 = vpop.f32.mrf.mxu0
  %v899 = vadd.f32 0.0, %v898
  %900 = vmatmul.bf16.gmra.mxu0 %v177
  %v901 = vpop.f32.mrf.mxu0
  %v902 = vadd.f32 0.0, %v901
  %v903 = vpop.f32.mrf.mxu0
  %v904 = vadd.f32 0.0, %v903
  %905 = vmatmul.bf16.gmra.mxu0 %v180
  %v906 = vpop.f32.mrf.mxu0
  %v907 = vadd.f32 0.0, %v906
  %v908 = vpop.f32.mrf.mxu0
  %v909 = vadd.f32 0.0, %v908
  %910 = vmatmul.bf16.gmra.mxu0 %v183
  %v911 = vpop.f32.mrf.mxu0
  %v912 = vadd.f32 0.0, %v911
  %v913 = vpop.f32.mrf.mxu0
  %v914 = vadd.f32 0.0, %v913
  %915 = vmatmul.bf16.gmra.mxu0 %v186
  %v916 = vpop.f32.mrf.mxu0
  %v917 = vadd.f32 0.0, %v916
  %v918 = vpop.f32.mrf.mxu0
  %v919 = vadd.f32 0.0, %v918
  %920 = vmatmul.bf16.gmra.mxu0 %v189
  %v921 = vpop.f32.mrf.mxu0
  %v922 = vadd.f32 0.0, %v921
  %v923 = vpop.f32.mrf.mxu0
  %v924 = vadd.f32 0.0, %v923
  %925 = vdwg.mxu0
  %926 = vmatpush.bf16.msra.mxu0 0
  %927 = vmatpush.bf16.msra.mxu0 0
  %928 = vmatpush.bf16.msra.mxu0 0
  %929 = vmatpush.bf16.msra.mxu0 0
  %930 = vmatpush.bf16.msra.mxu0 0
  %931 = vmatpush.bf16.msra.mxu0 0
  %932 = vmatpush.bf16.msra.mxu0 0
  %933 = vmatpush.bf16.msra.mxu0 %v149
  %934 = vmatmul.bf16.gmra.mxu0 %v168
  %v935 = vpop.f32.mrf.mxu0
  %v936 = vadd.f32 0.0, %v935
  %v937 = vpop.f32.mrf.mxu0
  %v938 = vadd.f32 0.0, %v937
  %939 = vmatmul.bf16.gmra.mxu0 %v171
  %v940 = vpop.f32.mrf.mxu0
  %v941 = vadd.f32 0.0, %v940
  %v942 = vpop.f32.mrf.mxu0
  %v943 = vadd.f32 0.0, %v942
  %944 = vmatmul.bf16.gmra.mxu0 %v174
  %v945 = vpop.f32.mrf.mxu0
  %v946 = vadd.f32 0.0, %v945
  %v947 = vpop.f32.mrf.mxu0
  %v948 = vadd.f32 0.0, %v947
  %949 = vmatmul.bf16.gmra.mxu0 %v177
  %v950 = vpop.f32.mrf.mxu0
  %v951 = vadd.f32 0.0, %v950
  %v952 = vpop.f32.mrf.mxu0
  %v953 = vadd.f32 0.0, %v952
  %954 = vmatmul.bf16.gmra.mxu0 %v180
  %v955 = vpop.f32.mrf.mxu0
  %v956 = vadd.f32 0.0, %v955
  %v957 = vpop.f32.mrf.mxu0
  %v958 = vadd.f32 0.0, %v957
  %959 = vmatmul.bf16.gmra.mxu0 %v183
  %v960 = vpop.f32.mrf.mxu0
  %v961 = vadd.f32 0.0, %v960
  %v962 = vpop.f32.mrf.mxu0
  %v963 = vadd.f32 0.0, %v962
  %964 = vmatmul.bf16.gmra.mxu0 %v186
  %v965 = vpop.f32.mrf.mxu0
  %v966 = vadd.f32 0.0, %v965
  %v967 = vpop.f32.mrf.mxu0
  %v968 = vadd.f32 0.0, %v967
  %969 = vmatmul.bf16.gmra.mxu0 %v189
  %v970 = vpop.f32.mrf.mxu0
  %v971 = vadd.f32 0.0, %v970
  %v972 = vpop.f32.mrf.mxu0
  %v973 = vadd.f32 0.0, %v972
  %974 = vdwg.mxu0
  %v975 = vpack.c.bf16 %v250, %v201
  %v976 = vpack.c.bf16 %v348, %v299
  %v977 = vpack.c.bf16 %v446, %v397
  %v978 = vpack.c.bf16 %v544, %v495
  %v979 = vpack.c.bf16 %v642, %v593
  %v980 = vpack.c.bf16 %v740, %v691
  %v981 = vpack.c.bf16 %v838, %v789
  %v982 = vpack.c.bf16 %v936, %v887
  %v983 = vpack.c.bf16 %v252, %v203
  %v984 = vpack.c.bf16 %v350, %v301
  %v985 = vpack.c.bf16 %v448, %v399
  %v986 = vpack.c.bf16 %v546, %v497
  %v987 = vpack.c.bf16 %v644, %v595
  %v988 = vpack.c.bf16 %v742, %v693
  %v989 = vpack.c.bf16 %v840, %v791
  %v990 = vpack.c.bf16 %v938, %v889
  %v991 = vpack.c.bf16 %v255, %v206
  %v992 = vpack.c.bf16 %v353, %v304
  %v993 = vpack.c.bf16 %v451, %v402
  %v994 = vpack.c.bf16 %v549, %v500
  %v995 = vpack.c.bf16 %v647, %v598
  %v996 = vpack.c.bf16 %v745, %v696
  %v997 = vpack.c.bf16 %v843, %v794
  %v998 = vpack.c.bf16 %v941, %v892
  %v999 = vpack.c.bf16 %v257, %v208
  %v1000 = vpack.c.bf16 %v355, %v306
  %v1001 = vpack.c.bf16 %v453, %v404
  %v1002 = vpack.c.bf16 %v551, %v502
  %v1003 = vpack.c.bf16 %v649, %v600
  %v1004 = vpack.c.bf16 %v747, %v698
  %v1005 = vpack.c.bf16 %v845, %v796
  %v1006 = vpack.c.bf16 %v943, %v894
  %v1007 = vpack.c.bf16 %v260, %v211
  %v1008 = vpack.c.bf16 %v358, %v309
  %v1009 = vpack.c.bf16 %v456, %v407
  %v1010 = vpack.c.bf16 %v554, %v505
  %v1011 = vpack.c.bf16 %v652, %v603
  %v1012 = vpack.c.bf16 %v750, %v701
  %v1013 = vpack.c.bf16 %v848, %v799
  %v1014 = vpack.c.bf16 %v946, %v897
  %v1015 = vpack.c.bf16 %v262, %v213
  %v1016 = vpack.c.bf16 %v360, %v311
  %v1017 = vpack.c.bf16 %v458, %v409
  %v1018 = vpack.c.bf16 %v556, %v507
  %v1019 = vpack.c.bf16 %v654, %v605
  %v1020 = vpack.c.bf16 %v752, %v703
  %v1021 = vpack.c.bf16 %v850, %v801
  %v1022 = vpack.c.bf16 %v948, %v899
  %v1023 = vpack.c.bf16 %v265, %v216
  %v1024 = vpack.c.bf16 %v363, %v314
  %v1025 = vpack.c.bf16 %v461, %v412
  %v1026 = vpack.c.bf16 %v559, %v510
  %v1027 = vpack.c.bf16 %v657, %v608
  %v1028 = vpack.c.bf16 %v755, %v706
  %v1029 = vpack.c.bf16 %v853, %v804
  %v1030 = vpack.c.bf16 %v951, %v902
  %v1031 = vpack.c.bf16 %v267, %v218
  %v1032 = vpack.c.bf16 %v365, %v316
  %v1033 = vpack.c.bf16 %v463, %v414
  %v1034 = vpack.c.bf16 %v561, %v512
  %v1035 = vpack.c.bf16 %v659, %v610
  %v1036 = vpack.c.bf16 %v757, %v708
  %v1037 = vpack.c.bf16 %v855, %v806
  %v1038 = vpack.c.bf16 %v953, %v904
  %v1039 = vpack.c.bf16 %v270, %v221
  %v1040 = vpack.c.bf16 %v368, %v319
  %v1041 = vpack.c.bf16 %v466, %v417
  %v1042 = vpack.c.bf16 %v564, %v515
  %v1043 = vpack.c.bf16 %v662, %v613
  %v1044 = vpack.c.bf16 %v760, %v711
  %v1045 = vpack.c.bf16 %v858, %v809
  %v1046 = vpack.c.bf16 %v956, %v907
  %v1047 = vpack.c.bf16 %v272, %v223
  %v1048 = vpack.c.bf16 %v370, %v321
  %v1049 = vpack.c.bf16 %v468, %v419
  %v1050 = vpack.c.bf16 %v566, %v517
  %v1051 = vpack.c.bf16 %v664, %v615
  %v1052 = vpack.c.bf16 %v762, %v713
  %v1053 = vpack.c.bf16 %v860, %v811
  %v1054 = vpack.c.bf16 %v958, %v909
  %v1055 = vpack.c.bf16 %v275, %v226
  %v1056 = vpack.c.bf16 %v373, %v324
  %v1057 = vpack.c.bf16 %v471, %v422
  %v1058 = vpack.c.bf16 %v569, %v520
  %v1059 = vpack.c.bf16 %v667, %v618
  %v1060 = vpack.c.bf16 %v765, %v716
  %v1061 = vpack.c.bf16 %v863, %v814
  %v1062 = vpack.c.bf16 %v961, %v912
  %v1063 = vpack.c.bf16 %v277, %v228
  %v1064 = vpack.c.bf16 %v375, %v326
  %v1065 = vpack.c.bf16 %v473, %v424
  %v1066 = vpack.c.bf16 %v571, %v522
  %v1067 = vpack.c.bf16 %v669, %v620
  %v1068 = vpack.c.bf16 %v767, %v718
  %v1069 = vpack.c.bf16 %v865, %v816
  %v1070 = vpack.c.bf16 %v963, %v914
  %v1071 = vpack.c.bf16 %v280, %v231
  %v1072 = vpack.c.bf16 %v378, %v329
  %v1073 = vpack.c.bf16 %v476, %v427
  %v1074 = vpack.c.bf16 %v574, %v525
  %v1075 = vpack.c.bf16 %v672, %v623
  %v1076 = vpack.c.bf16 %v770, %v721
  %v1077 = vpack.c.bf16 %v868, %v819
  %v1078 = vpack.c.bf16 %v966, %v917
  %v1079 = vpack.c.bf16 %v282, %v233
  %v1080 = vpack.c.bf16 %v380, %v331
  %v1081 = vpack.c.bf16 %v478, %v429
  %v1082 = vpack.c.bf16 %v576, %v527
  %v1083 = vpack.c.bf16 %v674, %v625
  %v1084 = vpack.c.bf16 %v772, %v723
  %v1085 = vpack.c.bf16 %v870, %v821
  %v1086 = vpack.c.bf16 %v968, %v919
  %v1087 = vpack.c.bf16 %v285, %v236
  %v1088 = vpack.c.bf16 %v383, %v334
  %v1089 = vpack.c.bf16 %v481, %v432
  %v1090 = vpack.c.bf16 %v579, %v530
  %v1091 = vpack.c.bf16 %v677, %v628
  %v1092 = vpack.c.bf16 %v775, %v726
  %v1093 = vpack.c.bf16 %v873, %v824
  %v1094 = vpack.c.bf16 %v971, %v922
  %v1095 = vpack.c.bf16 %v287, %v238
  %v1096 = vpack.c.bf16 %v385, %v336
  %v1097 = vpack.c.bf16 %v483, %v434
  %v1098 = vpack.c.bf16 %v581, %v532
  %v1099 = vpack.c.bf16 %v679, %v630
  %v1100 = vpack.c.bf16 %v777, %v728
  %v1101 = vpack.c.bf16 %v875, %v826
  %v1102 = vpack.c.bf16 %v973, %v924
  %1103 = vst [vmem:[%s2] sm:$0xff] %v975
  %1104 = vst [vmem:[%s2 + $0x8] sm:$0xff] %v976
  %1105 = vst [vmem:[%s2 + $0x10] sm:$0xff] %v977
  %1106 = vst [vmem:[%s2 + $0x18] sm:$0xff] %v978
  %1107 = vst [vmem:[%s2 + $0x20] sm:$0xff] %v979
  %1108 = vst [vmem:[%s2 + $0x28] sm:$0xff] %v980
  %1109 = vst [vmem:[%s2 + $0x30] sm:$0xff] %v981
  %1110 = vst [vmem:[%s2 + $0x38] sm:$0xff] %v982
  %1111 = vst [vmem:[%s2 + $0x40] sm:$0xff] %v983
  %1112 = vst [vmem:[%s2 + $0x48] sm:$0xff] %v984
  %1113 = vst [vmem:[%s2 + $0x50] sm:$0xff] %v985
  %1114 = vst [vmem:[%s2 + $0x58] sm:$0xff] %v986
  %1115 = vst [vmem:[%s2 + $0x60] sm:$0xff] %v987
  %1116 = vst [vmem:[%s2 + $0x68] sm:$0xff] %v988
  %1117 = vst [vmem:[%s2 + $0x70] sm:$0xff] %v989
  %1118 = vst [vmem:[%s2 + $0x78] sm:$0xff] %v990
  %1119 = vst [vmem:[%s2 + $0x80] sm:$0xff] %v991
  %1120 = vst [vmem:[%s2 + $0x88] sm:$0xff] %v992
  %1121 = vst [vmem:[%s2 + $0x90] sm:$0xff] %v993
  %1122 = vst [vmem:[%s2 + $0x98] sm:$0xff] %v994
  %1123 = vst [vmem:[%s2 + $0xa0] sm:$0xff] %v995
  %1124 = vst [vmem:[%s2 + $0xa8] sm:$0xff] %v996
  %1125 = vst [vmem:[%s2 + $0xb0] sm:$0xff] %v997
  %1126 = vst [vmem:[%s2 + $0xb8] sm:$0xff] %v998
  %1127 = vst [vmem:[%s2 + $0xc0] sm:$0xff] %v999
  %1128 = vst [vmem:[%s2 + $0xc8] sm:$0xff] %v1000
  %1129 = vst [vmem:[%s2 + $0xd0] sm:$0xff] %v1001
  %1130 = vst [vmem:[%s2 + $0xd8] sm:$0xff] %v1002
  %1131 = vst [vmem:[%s2 + $0xe0] sm:$0xff] %v1003
  %1132 = vst [vmem:[%s2 + $0xe8] sm:$0xff] %v1004
  %1133 = vst [vmem:[%s2 + $0xf0] sm:$0xff] %v1005
  %1134 = vst [vmem:[%s2 + $0xf8] sm:$0xff] %v1006
  %1135 = vst [vmem:[%s2 + $0x100] sm:$0xff] %v1007
  %1136 = vst [vmem:[%s2 + $0x108] sm:$0xff] %v1008
  %1137 = vst [vmem:[%s2 + $0x110] sm:$0xff] %v1009
  %1138 = vst [vmem:[%s2 + $0x118] sm:$0xff] %v1010
  %1139 = vst [vmem:[%s2 + $0x120] sm:$0xff] %v1011
  %1140 = vst [vmem:[%s2 + $0x128] sm:$0xff] %v1012
  %1141 = vst [vmem:[%s2 + $0x130] sm:$0xff] %v1013
  %1142 = vst [vmem:[%s2 + $0x138] sm:$0xff] %v1014
  %1143 = vst [vmem:[%s2 + $0x140] sm:$0xff] %v1015
  %1144 = vst [vmem:[%s2 + $0x148] sm:$0xff] %v1016
  %1145 = vst [vmem:[%s2 + $0x150] sm:$0xff] %v1017
  %1146 = vst [vmem:[%s2 + $0x158] sm:$0xff] %v1018
  %1147 = vst [vmem:[%s2 + $0x160] sm:$0xff] %v1019
  %1148 = vst [vmem:[%s2 + $0x168] sm:$0xff] %v1020
  %1149 = vst [vmem:[%s2 + $0x170] sm:$0xff] %v1021
  %1150 = vst [vmem:[%s2 + $0x178] sm:$0xff] %v1022
  %1151 = vst [vmem:[%s2 + $0x180] sm:$0xff] %v1023
  %1152 = vst [vmem:[%s2 + $0x188] sm:$0xff] %v1024
  %1153 = vst [vmem:[%s2 + $0x190] sm:$0xff] %v1025
  %1154 = vst [vmem:[%s2 + $0x198] sm:$0xff] %v1026
  %1155 = vst [vmem:[%s2 + $0x1a0] sm:$0xff] %v1027
  %1156 = vst [vmem:[%s2 + $0x1a8] sm:$0xff] %v1028
  %1157 = vst [vmem:[%s2 + $0x1b0] sm:$0xff] %v1029
  %1158 = vst [vmem:[%s2 + $0x1b8] sm:$0xff] %v1030
  %1159 = vst [vmem:[%s2 + $0x1c0] sm:$0xff] %v1031
  %1160 = vst [vmem:[%s2 + $0x1c8] sm:$0xff] %v1032
  %1161 = vst [vmem:[%s2 + $0x1d0] sm:$0xff] %v1033
  %1162 = vst [vmem:[%s2 + $0x1d8] sm:$0xff] %v1034
  %1163 = vst [vmem:[%s2 + $0x1e0] sm:$0xff] %v1035
  %1164 = vst [vmem:[%s2 + $0x1e8] sm:$0xff] %v1036
  %1165 = vst [vmem:[%s2 + $0x1f0] sm:$0xff] %v1037
  %1166 = vst [vmem:[%s2 + $0x1f8] sm:$0xff] %v1038
  %1167 = vst [vmem:[%s2 + $0x200] sm:$0xff] %v1039
  %1168 = vst [vmem:[%s2 + $0x208] sm:$0xff] %v1040
  %1169 = vst [vmem:[%s2 + $0x210] sm:$0xff] %v1041
  %1170 = vst [vmem:[%s2 + $0x218] sm:$0xff] %v1042
  %1171 = vst [vmem:[%s2 + $0x220] sm:$0xff] %v1043
  %1172 = vst [vmem:[%s2 + $0x228] sm:$0xff] %v1044
  %1173 = vst [vmem:[%s2 + $0x230] sm:$0xff] %v1045
  %1174 = vst [vmem:[%s2 + $0x238] sm:$0xff] %v1046
  %1175 = vst [vmem:[%s2 + $0x240] sm:$0xff] %v1047
  %1176 = vst [vmem:[%s2 + $0x248] sm:$0xff] %v1048
  %1177 = vst [vmem:[%s2 + $0x250] sm:$0xff] %v1049
  %1178 = vst [vmem:[%s2 + $0x258] sm:$0xff] %v1050
  %1179 = vst [vmem:[%s2 + $0x260] sm:$0xff] %v1051
  %1180 = vst [vmem:[%s2 + $0x268] sm:$0xff] %v1052
  %1181 = vst [vmem:[%s2 + $0x270] sm:$0xff] %v1053
  %1182 = vst [vmem:[%s2 + $0x278] sm:$0xff] %v1054
  %1183 = vst [vmem:[%s2 + $0x280] sm:$0xff] %v1055
  %1184 = vst [vmem:[%s2 + $0x288] sm:$0xff] %v1056
  %1185 = vst [vmem:[%s2 + $0x290] sm:$0xff] %v1057
  %1186 = vst [vmem:[%s2 + $0x298] sm:$0xff] %v1058
  %1187 = vst [vmem:[%s2 + $0x2a0] sm:$0xff] %v1059
  %1188 = vst [vmem:[%s2 + $0x2a8] sm:$0xff] %v1060
  %1189 = vst [vmem:[%s2 + $0x2b0] sm:$0xff] %v1061
  %1190 = vst [vmem:[%s2 + $0x2b8] sm:$0xff] %v1062
  %1191 = vst [vmem:[%s2 + $0x2c0] sm:$0xff] %v1063
  %1192 = vst [vmem:[%s2 + $0x2c8] sm:$0xff] %v1064
  %1193 = vst [vmem:[%s2 + $0x2d0] sm:$0xff] %v1065
  %1194 = vst [vmem:[%s2 + $0x2d8] sm:$0xff] %v1066
  %1195 = vst [vmem:[%s2 + $0x2e0] sm:$0xff] %v1067
  %1196 = vst [vmem:[%s2 + $0x2e8] sm:$0xff] %v1068
  %1197 = vst [vmem:[%s2 + $0x2f0] sm:$0xff] %v1069
  %1198 = vst [vmem:[%s2 + $0x2f8] sm:$0xff] %v1070
  %1199 = vst [vmem:[%s2 + $0x300] sm:$0xff] %v1071
  %1200 = vst [vmem:[%s2 + $0x308] sm:$0xff] %v1072
  %1201 = vst [vmem:[%s2 + $0x310] sm:$0xff] %v1073
  %1202 = vst [vmem:[%s2 + $0x318] sm:$0xff] %v1074
  %1203 = vst [vmem:[%s2 + $0x320] sm:$0xff] %v1075
  %1204 = vst [vmem:[%s2 + $0x328] sm:$0xff] %v1076
  %1205 = vst [vmem:[%s2 + $0x330] sm:$0xff] %v1077
  %1206 = vst [vmem:[%s2 + $0x338] sm:$0xff] %v1078
  %1207 = vst [vmem:[%s2 + $0x340] sm:$0xff] %v1079
  %1208 = vst [vmem:[%s2 + $0x348] sm:$0xff] %v1080
  %1209 = vst [vmem:[%s2 + $0x350] sm:$0xff] %v1081
  %1210 = vst [vmem:[%s2 + $0x358] sm:$0xff] %v1082
  %1211 = vst [vmem:[%s2 + $0x360] sm:$0xff] %v1083
  %1212 = vst [vmem:[%s2 + $0x368] sm:$0xff] %v1084
  %1213 = vst [vmem:[%s2 + $0x370] sm:$0xff] %v1085
  %1214 = vst [vmem:[%s2 + $0x378] sm:$0xff] %v1086
  %1215 = vst [vmem:[%s2 + $0x380] sm:$0xff] %v1087
  %1216 = vst [vmem:[%s2 + $0x388] sm:$0xff] %v1088
  %1217 = vst [vmem:[%s2 + $0x390] sm:$0xff] %v1089
  %1218 = vst [vmem:[%s2 + $0x398] sm:$0xff] %v1090
  %1219 = vst [vmem:[%s2 + $0x3a0] sm:$0xff] %v1091
  %1220 = vst [vmem:[%s2 + $0x3a8] sm:$0xff] %v1092
  %1221 = vst [vmem:[%s2 + $0x3b0] sm:$0xff] %v1093
  %1222 = vst [vmem:[%s2 + $0x3b8] sm:$0xff] %v1094
  %1223 = vst [vmem:[%s2 + $0x3c0] sm:$0xff] %v1095
  %1224 = vst [vmem:[%s2 + $0x3c8] sm:$0xff] %v1096
  %1225 = vst [vmem:[%s2 + $0x3d0] sm:$0xff] %v1097
  %1226 = vst [vmem:[%s2 + $0x3d8] sm:$0xff] %v1098
  %1227 = vst [vmem:[%s2 + $0x3e0] sm:$0xff] %v1099
  %1228 = vst [vmem:[%s2 + $0x3e8] sm:$0xff] %v1100
  %1229 = vst [vmem:[%s2 + $0x3f0] sm:$0xff] %v1101
  %1230 = vst [vmem:[%s2 + $0x3f8] sm:$0xff] %v1102
  %v1231 = vadd.f32 %v201, %v203
  %v1232 = vadd.f32 %v1231, %v206
  %v1233 = vadd.f32 %v1232, %v208
  %v1234 = vadd.f32 %v1233, %v211
  %v1235 = vadd.f32 %v1234, %v213
  %v1236 = vadd.f32 %v1235, %v216
  %v1237 = vadd.f32 %v1236, %v218
  %v1238 = vadd.f32 %v1237, %v221
  %v1239 = vadd.f32 %v1238, %v223
  %v1240 = vadd.f32 %v1239, %v226
  %v1241 = vadd.f32 %v1240, %v228
  %v1242 = vadd.f32 %v1241, %v231
  %v1243 = vadd.f32 %v1242, %v233
  %v1244 = vadd.f32 %v1243, %v236
  %v1245 = vadd.f32 %v1244, %v238
  %v1246 = vrot.slane %v1245, 4
  %v1247 = vadd.f32 %v1245, %v1246
  %v1248 = vrot.slane %v1247, 2
  %v1249 = vadd.f32 %v1247, %v1248
  %v1250 = vrot.slane %v1249, 1
  %v1251 = vadd.f32 %v1249, %v1250
  %v1252 = vadd.f32 %v250, %v252
  %v1253 = vadd.f32 %v1252, %v255
  %v1254 = vadd.f32 %v1253, %v257
  %v1255 = vadd.f32 %v1254, %v260
  %v1256 = vadd.f32 %v1255, %v262
  %v1257 = vadd.f32 %v1256, %v265
  %v1258 = vadd.f32 %v1257, %v267
  %v1259 = vadd.f32 %v1258, %v270
  %v1260 = vadd.f32 %v1259, %v272
  %v1261 = vadd.f32 %v1260, %v275
  %v1262 = vadd.f32 %v1261, %v277
  %v1263 = vadd.f32 %v1262, %v280
  %v1264 = vadd.f32 %v1263, %v282
  %v1265 = vadd.f32 %v1264, %v285
  %v1266 = vadd.f32 %v1265, %v287
  %v1267 = vrot.slane %v1266, 4
  %v1268 = vadd.f32 %v1266, %v1267
  %v1269 = vrot.slane %v1268, 2
  %v1270 = vadd.f32 %v1268, %v1269
  %v1271 = vrot.slane %v1270, 1
  %v1272 = vadd.f32 %v1270, %v1271
  %v1273 = vadd.f32 %v299, %v301
  %v1274 = vadd.f32 %v1273, %v304
  %v1275 = vadd.f32 %v1274, %v306
  %v1276 = vadd.f32 %v1275, %v309
  %v1277 = vadd.f32 %v1276, %v311
  %v1278 = vadd.f32 %v1277, %v314
  %v1279 = vadd.f32 %v1278, %v316
  %v1280 = vadd.f32 %v1279, %v319
  %v1281 = vadd.f32 %v1280, %v321
  %v1282 = vadd.f32 %v1281, %v324
  %v1283 = vadd.f32 %v1282, %v326
  %v1284 = vadd.f32 %v1283, %v329
  %v1285 = vadd.f32 %v1284, %v331
  %v1286 = vadd.f32 %v1285, %v334
  %v1287 = vadd.f32 %v1286, %v336
  %v1288 = vrot.slane %v1287, 4
  %v1289 = vadd.f32 %v1287, %v1288
  %v1290 = vrot.slane %v1289, 2
  %v1291 = vadd.f32 %v1289, %v1290
  %v1292 = vrot.slane %v1291, 1
  %v1293 = vadd.f32 %v1291, %v1292
  %v1294 = vadd.f32 %v348, %v350
  %v1295 = vadd.f32 %v1294, %v353
  %v1296 = vadd.f32 %v1295, %v355
  %v1297 = vadd.f32 %v1296, %v358
  %v1298 = vadd.f32 %v1297, %v360
  %v1299 = vadd.f32 %v1298, %v363
  %v1300 = vadd.f32 %v1299, %v365
  %v1301 = vadd.f32 %v1300, %v368
  %v1302 = vadd.f32 %v1301, %v370
  %v1303 = vadd.f32 %v1302, %v373
  %v1304 = vadd.f32 %v1303, %v375
  %v1305 = vadd.f32 %v1304, %v378
  %v1306 = vadd.f32 %v1305, %v380
  %v1307 = vadd.f32 %v1306, %v383
  %v1308 = vadd.f32 %v1307, %v385
  %v1309 = vrot.slane %v1308, 4
  %v1310 = vadd.f32 %v1308, %v1309
  %v1311 = vrot.slane %v1310, 2
  %v1312 = vadd.f32 %v1310, %v1311
  %v1313 = vrot.slane %v1312, 1
  %v1314 = vadd.f32 %v1312, %v1313
  %v1315 = vadd.f32 %v397, %v399
  %v1316 = vadd.f32 %v1315, %v402
  %v1317 = vadd.f32 %v1316, %v404
  %v1318 = vadd.f32 %v1317, %v407
  %v1319 = vadd.f32 %v1318, %v409
  %v1320 = vadd.f32 %v1319, %v412
  %v1321 = vadd.f32 %v1320, %v414
  %v1322 = vadd.f32 %v1321, %v417
  %v1323 = vadd.f32 %v1322, %v419
  %v1324 = vadd.f32 %v1323, %v422
  %v1325 = vadd.f32 %v1324, %v424
  %v1326 = vadd.f32 %v1325, %v427
  %v1327 = vadd.f32 %v1326, %v429
  %v1328 = vadd.f32 %v1327, %v432
  %v1329 = vadd.f32 %v1328, %v434
  %v1330 = vrot.slane %v1329, 4
  %v1331 = vadd.f32 %v1329, %v1330
  %v1332 = vrot.slane %v1331, 2
  %v1333 = vadd.f32 %v1331, %v1332
  %v1334 = vrot.slane %v1333, 1
  %v1335 = vadd.f32 %v1333, %v1334
  %v1336 = vadd.f32 %v446, %v448
  %v1337 = vadd.f32 %v1336, %v451
  %v1338 = vadd.f32 %v1337, %v453
  %v1339 = vadd.f32 %v1338, %v456
  %v1340 = vadd.f32 %v1339, %v458
  %v1341 = vadd.f32 %v1340, %v461
  %v1342 = vadd.f32 %v1341, %v463
  %v1343 = vadd.f32 %v1342, %v466
  %v1344 = vadd.f32 %v1343, %v468
  %v1345 = vadd.f32 %v1344, %v471
  %v1346 = vadd.f32 %v1345, %v473
  %v1347 = vadd.f32 %v1346, %v476
  %v1348 = vadd.f32 %v1347, %v478
  %v1349 = vadd.f32 %v1348, %v481
  %v1350 = vadd.f32 %v1349, %v483
  %v1351 = vrot.slane %v1350, 4
  %v1352 = vadd.f32 %v1350, %v1351
  %v1353 = vrot.slane %v1352, 2
  %v1354 = vadd.f32 %v1352, %v1353
  %v1355 = vrot.slane %v1354, 1
  %v1356 = vadd.f32 %v1354, %v1355
  %v1357 = vadd.f32 %v495, %v497
  %v1358 = vadd.f32 %v1357, %v500
  %v1359 = vadd.f32 %v1358, %v502
  %v1360 = vadd.f32 %v1359, %v505
  %v1361 = vadd.f32 %v1360, %v507
  %v1362 = vadd.f32 %v1361, %v510
  %v1363 = vadd.f32 %v1362, %v512
  %v1364 = vadd.f32 %v1363, %v515
  %v1365 = vadd.f32 %v1364, %v517
  %v1366 = vadd.f32 %v1365, %v520
  %v1367 = vadd.f32 %v1366, %v522
  %v1368 = vadd.f32 %v1367, %v525
  %v1369 = vadd.f32 %v1368, %v527
  %v1370 = vadd.f32 %v1369, %v530
  %v1371 = vadd.f32 %v1370, %v532
  %v1372 = vrot.slane %v1371, 4
  %v1373 = vadd.f32 %v1371, %v1372
  %v1374 = vrot.slane %v1373, 2
  %v1375 = vadd.f32 %v1373, %v1374
  %v1376 = vrot.slane %v1375, 1
  %v1377 = vadd.f32 %v1375, %v1376
  %v1378 = vadd.f32 %v544, %v546
  %v1379 = vadd.f32 %v1378, %v549
  %v1380 = vadd.f32 %v1379, %v551
  %v1381 = vadd.f32 %v1380, %v554
  %v1382 = vadd.f32 %v1381, %v556
  %v1383 = vadd.f32 %v1382, %v559
  %v1384 = vadd.f32 %v1383, %v561
  %v1385 = vadd.f32 %v1384, %v564
  %v1386 = vadd.f32 %v1385, %v566
  %v1387 = vadd.f32 %v1386, %v569
  %v1388 = vadd.f32 %v1387, %v571
  %v1389 = vadd.f32 %v1388, %v574
  %v1390 = vadd.f32 %v1389, %v576
  %v1391 = vadd.f32 %v1390, %v579
  %v1392 = vadd.f32 %v1391, %v581
  %v1393 = vrot.slane %v1392, 4
  %v1394 = vadd.f32 %v1392, %v1393
  %v1395 = vrot.slane %v1394, 2
  %v1396 = vadd.f32 %v1394, %v1395
  %v1397 = vrot.slane %v1396, 1
  %v1398 = vadd.f32 %v1396, %v1397
  %v1399 = vadd.f32 %v593, %v595
  %v1400 = vadd.f32 %v1399, %v598
  %v1401 = vadd.f32 %v1400, %v600
  %v1402 = vadd.f32 %v1401, %v603
  %v1403 = vadd.f32 %v1402, %v605
  %v1404 = vadd.f32 %v1403, %v608
  %v1405 = vadd.f32 %v1404, %v610
  %v1406 = vadd.f32 %v1405, %v613
  %v1407 = vadd.f32 %v1406, %v615
  %v1408 = vadd.f32 %v1407, %v618
  %v1409 = vadd.f32 %v1408, %v620
  %v1410 = vadd.f32 %v1409, %v623
  %v1411 = vadd.f32 %v1410, %v625
  %v1412 = vadd.f32 %v1411, %v628
  %v1413 = vadd.f32 %v1412, %v630
  %v1414 = vrot.slane %v1413, 4
  %v1415 = vadd.f32 %v1413, %v1414
  %v1416 = vrot.slane %v1415, 2
  %v1417 = vadd.f32 %v1415, %v1416
  %v1418 = vrot.slane %v1417, 1
  %v1419 = vadd.f32 %v1417, %v1418
  %v1420 = vadd.f32 %v642, %v644
  %v1421 = vadd.f32 %v1420, %v647
  %v1422 = vadd.f32 %v1421, %v649
  %v1423 = vadd.f32 %v1422, %v652
  %v1424 = vadd.f32 %v1423, %v654
  %v1425 = vadd.f32 %v1424, %v657
  %v1426 = vadd.f32 %v1425, %v659
  %v1427 = vadd.f32 %v1426, %v662
  %v1428 = vadd.f32 %v1427, %v664
  %v1429 = vadd.f32 %v1428, %v667
  %v1430 = vadd.f32 %v1429, %v669
  %v1431 = vadd.f32 %v1430, %v672
  %v1432 = vadd.f32 %v1431, %v674
  %v1433 = vadd.f32 %v1432, %v677
  %v1434 = vadd.f32 %v1433, %v679
  %v1435 = vrot.slane %v1434, 4
  %v1436 = vadd.f32 %v1434, %v1435
  %v1437 = vrot.slane %v1436, 2
  %v1438 = vadd.f32 %v1436, %v1437
  %v1439 = vrot.slane %v1438, 1
  %v1440 = vadd.f32 %v1438, %v1439
  %v1441 = vadd.f32 %v691, %v693
  %v1442 = vadd.f32 %v1441, %v696
  %v1443 = vadd.f32 %v1442, %v698
  %v1444 = vadd.f32 %v1443, %v701
  %v1445 = vadd.f32 %v1444, %v703
  %v1446 = vadd.f32 %v1445, %v706
  %v1447 = vadd.f32 %v1446, %v708
  %v1448 = vadd.f32 %v1447, %v711
  %v1449 = vadd.f32 %v1448, %v713
  %v1450 = vadd.f32 %v1449, %v716
  %v1451 = vadd.f32 %v1450, %v718
  %v1452 = vadd.f32 %v1451, %v721
  %v1453 = vadd.f32 %v1452, %v723
  %v1454 = vadd.f32 %v1453, %v726
  %v1455 = vadd.f32 %v1454, %v728
  %v1456 = vrot.slane %v1455, 4
  %v1457 = vadd.f32 %v1455, %v1456
  %v1458 = vrot.slane %v1457, 2
  %v1459 = vadd.f32 %v1457, %v1458
  %v1460 = vrot.slane %v1459, 1
  %v1461 = vadd.f32 %v1459, %v1460
  %v1462 = vadd.f32 %v740, %v742
  %v1463 = vadd.f32 %v1462, %v745
  %v1464 = vadd.f32 %v1463, %v747
  %v1465 = vadd.f32 %v1464, %v750
  %v1466 = vadd.f32 %v1465, %v752
  %v1467 = vadd.f32 %v1466, %v755
  %v1468 = vadd.f32 %v1467, %v757
  %v1469 = vadd.f32 %v1468, %v760
  %v1470 = vadd.f32 %v1469, %v762
  %v1471 = vadd.f32 %v1470, %v765
  %v1472 = vadd.f32 %v1471, %v767
  %v1473 = vadd.f32 %v1472, %v770
  %v1474 = vadd.f32 %v1473, %v772
  %v1475 = vadd.f32 %v1474, %v775
  %v1476 = vadd.f32 %v1475, %v777
  %v1477 = vrot.slane %v1476, 4
  %v1478 = vadd.f32 %v1476, %v1477
  %v1479 = vrot.slane %v1478, 2
  %v1480 = vadd.f32 %v1478, %v1479
  %v1481 = vrot.slane %v1480, 1
  %v1482 = vadd.f32 %v1480, %v1481
  %v1483 = vadd.f32 %v789, %v791
  %v1484 = vadd.f32 %v1483, %v794
  %v1485 = vadd.f32 %v1484, %v796
  %v1486 = vadd.f32 %v1485, %v799
  %v1487 = vadd.f32 %v1486, %v801
  %v1488 = vadd.f32 %v1487, %v804
  %v1489 = vadd.f32 %v1488, %v806
  %v1490 = vadd.f32 %v1489, %v809
  %v1491 = vadd.f32 %v1490, %v811
  %v1492 = vadd.f32 %v1491, %v814
  %v1493 = vadd.f32 %v1492, %v816
  %v1494 = vadd.f32 %v1493, %v819
  %v1495 = vadd.f32 %v1494, %v821
  %v1496 = vadd.f32 %v1495, %v824
  %v1497 = vadd.f32 %v1496, %v826
  %v1498 = vrot.slane %v1497, 4
  %v1499 = vadd.f32 %v1497, %v1498
  %v1500 = vrot.slane %v1499, 2
  %v1501 = vadd.f32 %v1499, %v1500
  %v1502 = vrot.slane %v1501, 1
  %v1503 = vadd.f32 %v1501, %v1502
  %v1504 = vadd.f32 %v838, %v840
  %v1505 = vadd.f32 %v1504, %v843
  %v1506 = vadd.f32 %v1505, %v845
  %v1507 = vadd.f32 %v1506, %v848
  %v1508 = vadd.f32 %v1507, %v850
  %v1509 = vadd.f32 %v1508, %v853
  %v1510 = vadd.f32 %v1509, %v855
  %v1511 = vadd.f32 %v1510, %v858
  %v1512 = vadd.f32 %v1511, %v860
  %v1513 = vadd.f32 %v1512, %v863
  %v1514 = vadd.f32 %v1513, %v865
  %v1515 = vadd.f32 %v1514, %v868
  %v1516 = vadd.f32 %v1515, %v870
  %v1517 = vadd.f32 %v1516, %v873
  %v1518 = vadd.f32 %v1517, %v875
  %v1519 = vrot.slane %v1518, 4
  %v1520 = vadd.f32 %v1518, %v1519
  %v1521 = vrot.slane %v1520, 2
  %v1522 = vadd.f32 %v1520, %v1521
  %v1523 = vrot.slane %v1522, 1
  %v1524 = vadd.f32 %v1522, %v1523
  %v1525 = vadd.f32 %v887, %v889
  %v1526 = vadd.f32 %v1525, %v892
  %v1527 = vadd.f32 %v1526, %v894
  %v1528 = vadd.f32 %v1527, %v897
  %v1529 = vadd.f32 %v1528, %v899
  %v1530 = vadd.f32 %v1529, %v902
  %v1531 = vadd.f32 %v1530, %v904
  %v1532 = vadd.f32 %v1531, %v907
  %v1533 = vadd.f32 %v1532, %v909
  %v1534 = vadd.f32 %v1533, %v912
  %v1535 = vadd.f32 %v1534, %v914
  %v1536 = vadd.f32 %v1535, %v917
  %v1537 = vadd.f32 %v1536, %v919
  %v1538 = vadd.f32 %v1537, %v922
  %v1539 = vadd.f32 %v1538, %v924
  %v1540 = vrot.slane %v1539, 4
  %v1541 = vadd.f32 %v1539, %v1540
  %v1542 = vrot.slane %v1541, 2
  %v1543 = vadd.f32 %v1541, %v1542
  %v1544 = vrot.slane %v1543, 1
  %v1545 = vadd.f32 %v1543, %v1544
  %v1546 = vadd.f32 %v936, %v938
  %v1547 = vadd.f32 %v1546, %v941
  %v1548 = vadd.f32 %v1547, %v943
  %v1549 = vadd.f32 %v1548, %v946
  %v1550 = vadd.f32 %v1549, %v948
  %v1551 = vadd.f32 %v1550, %v951
  %v1552 = vadd.f32 %v1551, %v953
  %v1553 = vadd.f32 %v1552, %v956
  %v1554 = vadd.f32 %v1553, %v958
  %v1555 = vadd.f32 %v1554, %v961
  %v1556 = vadd.f32 %v1555, %v963
  %v1557 = vadd.f32 %v1556, %v966
  %v1558 = vadd.f32 %v1557, %v968
  %v1559 = vadd.f32 %v1558, %v971
  %v1560 = vadd.f32 %v1559, %v973
  %v1561 = vrot.slane %v1560, 4
  %v1562 = vadd.f32 %v1560, %v1561
  %v1563 = vrot.slane %v1562, 2
  %v1564 = vadd.f32 %v1562, %v1563
  %v1565 = vrot.slane %v1564, 1
  %v1566 = vadd.f32 %v1564, %v1565
  %v1567 = vmul.f32 %v201, %v201
  %v1568 = vmul.f32 %v250, %v250
  %v1569 = vmul.f32 %v299, %v299
  %v1570 = vmul.f32 %v348, %v348
  %v1571 = vmul.f32 %v397, %v397
  %v1572 = vmul.f32 %v446, %v446
  %v1573 = vmul.f32 %v495, %v495
  %v1574 = vmul.f32 %v544, %v544
  %v1575 = vmul.f32 %v593, %v593
  %v1576 = vmul.f32 %v642, %v642
  %v1577 = vmul.f32 %v691, %v691
  %v1578 = vmul.f32 %v740, %v740
  %v1579 = vmul.f32 %v789, %v789
  %v1580 = vmul.f32 %v838, %v838
  %v1581 = vmul.f32 %v887, %v887
  %v1582 = vmul.f32 %v936, %v936
  %v1583 = vmul.f32 %v203, %v203
  %v1584 = vmul.f32 %v252, %v252
  %v1585 = vmul.f32 %v301, %v301
  %v1586 = vmul.f32 %v350, %v350
  %v1587 = vmul.f32 %v399, %v399
  %v1588 = vmul.f32 %v448, %v448
  %v1589 = vmul.f32 %v497, %v497
  %v1590 = vmul.f32 %v546, %v546
  %v1591 = vmul.f32 %v595, %v595
  %v1592 = vmul.f32 %v644, %v644
  %v1593 = vmul.f32 %v693, %v693
  %v1594 = vmul.f32 %v742, %v742
  %v1595 = vmul.f32 %v791, %v791
  %v1596 = vmul.f32 %v840, %v840
  %v1597 = vmul.f32 %v889, %v889
  %v1598 = vmul.f32 %v938, %v938
  %v1599 = vmul.f32 %v206, %v206
  %v1600 = vmul.f32 %v255, %v255
  %v1601 = vmul.f32 %v304, %v304
  %v1602 = vmul.f32 %v353, %v353
  %v1603 = vmul.f32 %v402, %v402
  %v1604 = vmul.f32 %v451, %v451
  %v1605 = vmul.f32 %v500, %v500
  %v1606 = vmul.f32 %v549, %v549
  %v1607 = vmul.f32 %v598, %v598
  %v1608 = vmul.f32 %v647, %v647
  %v1609 = vmul.f32 %v696, %v696
  %v1610 = vmul.f32 %v745, %v745
  %v1611 = vmul.f32 %v794, %v794
  %v1612 = vmul.f32 %v843, %v843
  %v1613 = vmul.f32 %v892, %v892
  %v1614 = vmul.f32 %v941, %v941
  %v1615 = vmul.f32 %v208, %v208
  %v1616 = vmul.f32 %v257, %v257
  %v1617 = vmul.f32 %v306, %v306
  %v1618 = vmul.f32 %v355, %v355
  %v1619 = vmul.f32 %v404, %v404
  %v1620 = vmul.f32 %v453, %v453
  %v1621 = vmul.f32 %v502, %v502
  %v1622 = vmul.f32 %v551, %v551
  %v1623 = vmul.f32 %v600, %v600
  %v1624 = vmul.f32 %v649, %v649
  %v1625 = vmul.f32 %v698, %v698
  %v1626 = vmul.f32 %v747, %v747
  %v1627 = vmul.f32 %v796, %v796
  %v1628 = vmul.f32 %v845, %v845
  %v1629 = vmul.f32 %v894, %v894
  %v1630 = vmul.f32 %v943, %v943
  %v1631 = vmul.f32 %v211, %v211
  %v1632 = vmul.f32 %v260, %v260
  %v1633 = vmul.f32 %v309, %v309
  %v1634 = vmul.f32 %v358, %v358
  %v1635 = vmul.f32 %v407, %v407
  %v1636 = vmul.f32 %v456, %v456
  %v1637 = vmul.f32 %v505, %v505
  %v1638 = vmul.f32 %v554, %v554
  %v1639 = vmul.f32 %v603, %v603
  %v1640 = vmul.f32 %v652, %v652
  %v1641 = vmul.f32 %v701, %v701
  %v1642 = vmul.f32 %v750, %v750
  %v1643 = vmul.f32 %v799, %v799
  %v1644 = vmul.f32 %v848, %v848
  %v1645 = vmul.f32 %v897, %v897
  %v1646 = vmul.f32 %v946, %v946
  %v1647 = vmul.f32 %v213, %v213
  %v1648 = vmul.f32 %v262, %v262
  %v1649 = vmul.f32 %v311, %v311
  %v1650 = vmul.f32 %v360, %v360
  %v1651 = vmul.f32 %v409, %v409
  %v1652 = vmul.f32 %v458, %v458
  %v1653 = vmul.f32 %v507, %v507
  %v1654 = vmul.f32 %v556, %v556
  %v1655 = vmul.f32 %v605, %v605
  %v1656 = vmul.f32 %v654, %v654
  %v1657 = vmul.f32 %v703, %v703
  %v1658 = vmul.f32 %v752, %v752
  %v1659 = vmul.f32 %v801, %v801
  %v1660 = vmul.f32 %v850, %v850
  %v1661 = vmul.f32 %v899, %v899
  %v1662 = vmul.f32 %v948, %v948
  %v1663 = vmul.f32 %v216, %v216
  %v1664 = vmul.f32 %v265, %v265
  %v1665 = vmul.f32 %v314, %v314
  %v1666 = vmul.f32 %v363, %v363
  %v1667 = vmul.f32 %v412, %v412
  %v1668 = vmul.f32 %v461, %v461
  %v1669 = vmul.f32 %v510, %v510
  %v1670 = vmul.f32 %v559, %v559
  %v1671 = vmul.f32 %v608, %v608
  %v1672 = vmul.f32 %v657, %v657
  %v1673 = vmul.f32 %v706, %v706
  %v1674 = vmul.f32 %v755, %v755
  %v1675 = vmul.f32 %v804, %v804
  %v1676 = vmul.f32 %v853, %v853
  %v1677 = vmul.f32 %v902, %v902
  %v1678 = vmul.f32 %v951, %v951
  %v1679 = vmul.f32 %v218, %v218
  %v1680 = vmul.f32 %v267, %v267
  %v1681 = vmul.f32 %v316, %v316
  %v1682 = vmul.f32 %v365, %v365
  %v1683 = vmul.f32 %v414, %v414
  %v1684 = vmul.f32 %v463, %v463
  %v1685 = vmul.f32 %v512, %v512
  %v1686 = vmul.f32 %v561, %v561
  %v1687 = vmul.f32 %v610, %v610
  %v1688 = vmul.f32 %v659, %v659
  %v1689 = vmul.f32 %v708, %v708
  %v1690 = vmul.f32 %v757, %v757
  %v1691 = vmul.f32 %v806, %v806
  %v1692 = vmul.f32 %v855, %v855
  %v1693 = vmul.f32 %v904, %v904
  %v1694 = vmul.f32 %v953, %v953
  %v1695 = vmul.f32 %v221, %v221
  %v1696 = vmul.f32 %v270, %v270
  %v1697 = vmul.f32 %v319, %v319
  %v1698 = vmul.f32 %v368, %v368
  %v1699 = vmul.f32 %v417, %v417
  %v1700 = vmul.f32 %v466, %v466
  %v1701 = vmul.f32 %v515, %v515
  %v1702 = vmul.f32 %v564, %v564
  %v1703 = vmul.f32 %v613, %v613
  %v1704 = vmul.f32 %v662, %v662
  %v1705 = vmul.f32 %v711, %v711
  %v1706 = vmul.f32 %v760, %v760
  %v1707 = vmul.f32 %v809, %v809
  %v1708 = vmul.f32 %v858, %v858
  %v1709 = vmul.f32 %v907, %v907
  %v1710 = vmul.f32 %v956, %v956
  %v1711 = vmul.f32 %v223, %v223
  %v1712 = vmul.f32 %v272, %v272
  %v1713 = vmul.f32 %v321, %v321
  %v1714 = vmul.f32 %v370, %v370
  %v1715 = vmul.f32 %v419, %v419
  %v1716 = vmul.f32 %v468, %v468
  %v1717 = vmul.f32 %v517, %v517
  %v1718 = vmul.f32 %v566, %v566
  %v1719 = vmul.f32 %v615, %v615
  %v1720 = vmul.f32 %v664, %v664
  %v1721 = vmul.f32 %v713, %v713
  %v1722 = vmul.f32 %v762, %v762
  %v1723 = vmul.f32 %v811, %v811
  %v1724 = vmul.f32 %v860, %v860
  %v1725 = vmul.f32 %v909, %v909
  %v1726 = vmul.f32 %v958, %v958
  %v1727 = vmul.f32 %v226, %v226
  %v1728 = vmul.f32 %v275, %v275
  %v1729 = vmul.f32 %v324, %v324
  %v1730 = vmul.f32 %v373, %v373
  %v1731 = vmul.f32 %v422, %v422
  %v1732 = vmul.f32 %v471, %v471
  %v1733 = vmul.f32 %v520, %v520
  %v1734 = vmul.f32 %v569, %v569
  %v1735 = vmul.f32 %v618, %v618
  %v1736 = vmul.f32 %v667, %v667
  %v1737 = vmul.f32 %v716, %v716
  %v1738 = vmul.f32 %v765, %v765
  %v1739 = vmul.f32 %v814, %v814
  %v1740 = vmul.f32 %v863, %v863
  %v1741 = vmul.f32 %v912, %v912
  %v1742 = vmul.f32 %v961, %v961
  %v1743 = vmul.f32 %v228, %v228
  %v1744 = vmul.f32 %v277, %v277
  %v1745 = vmul.f32 %v326, %v326
  %v1746 = vmul.f32 %v375, %v375
  %v1747 = vmul.f32 %v424, %v424
  %v1748 = vmul.f32 %v473, %v473
  %v1749 = vmul.f32 %v522, %v522
  %v1750 = vmul.f32 %v571, %v571
  %v1751 = vmul.f32 %v620, %v620
  %v1752 = vmul.f32 %v669, %v669
  %v1753 = vmul.f32 %v718, %v718
  %v1754 = vmul.f32 %v767, %v767
  %v1755 = vmul.f32 %v816, %v816
  %v1756 = vmul.f32 %v865, %v865
  %v1757 = vmul.f32 %v914, %v914
  %v1758 = vmul.f32 %v963, %v963
  %v1759 = vmul.f32 %v231, %v231
  %v1760 = vmul.f32 %v280, %v280
  %v1761 = vmul.f32 %v329, %v329
  %v1762 = vmul.f32 %v378, %v378
  %v1763 = vmul.f32 %v427, %v427
  %v1764 = vmul.f32 %v476, %v476
  %v1765 = vmul.f32 %v525, %v525
  %v1766 = vmul.f32 %v574, %v574
  %v1767 = vmul.f32 %v623, %v623
  %v1768 = vmul.f32 %v672, %v672
  %v1769 = vmul.f32 %v721, %v721
  %v1770 = vmul.f32 %v770, %v770
  %v1771 = vmul.f32 %v819, %v819
  %v1772 = vmul.f32 %v868, %v868
  %v1773 = vmul.f32 %v917, %v917
  %v1774 = vmul.f32 %v966, %v966
  %v1775 = vmul.f32 %v233, %v233
  %v1776 = vmul.f32 %v282, %v282
  %v1777 = vmul.f32 %v331, %v331
  %v1778 = vmul.f32 %v380, %v380
  %v1779 = vmul.f32 %v429, %v429
  %v1780 = vmul.f32 %v478, %v478
  %v1781 = vmul.f32 %v527, %v527
  %v1782 = vmul.f32 %v576, %v576
  %v1783 = vmul.f32 %v625, %v625
  %v1784 = vmul.f32 %v674, %v674
  %v1785 = vmul.f32 %v723, %v723
  %v1786 = vmul.f32 %v772, %v772
  %v1787 = vmul.f32 %v821, %v821
  %v1788 = vmul.f32 %v870, %v870
  %v1789 = vmul.f32 %v919, %v919
  %v1790 = vmul.f32 %v968, %v968
  %v1791 = vmul.f32 %v236, %v236
  %v1792 = vmul.f32 %v285, %v285
  %v1793 = vmul.f32 %v334, %v334
  %v1794 = vmul.f32 %v383, %v383
  %v1795 = vmul.f32 %v432, %v432
  %v1796 = vmul.f32 %v481, %v481
  %v1797 = vmul.f32 %v530, %v530
  %v1798 = vmul.f32 %v579, %v579
  %v1799 = vmul.f32 %v628, %v628
  %v1800 = vmul.f32 %v677, %v677
  %v1801 = vmul.f32 %v726, %v726
  %v1802 = vmul.f32 %v775, %v775
  %v1803 = vmul.f32 %v824, %v824
  %v1804 = vmul.f32 %v873, %v873
  %v1805 = vmul.f32 %v922, %v922
  %v1806 = vmul.f32 %v971, %v971
  %v1807 = vmul.f32 %v238, %v238
  %v1808 = vmul.f32 %v287, %v287
  %v1809 = vmul.f32 %v336, %v336
  %v1810 = vmul.f32 %v385, %v385
  %v1811 = vmul.f32 %v434, %v434
  %v1812 = vmul.f32 %v483, %v483
  %v1813 = vmul.f32 %v532, %v532
  %v1814 = vmul.f32 %v581, %v581
  %v1815 = vmul.f32 %v630, %v630
  %v1816 = vmul.f32 %v679, %v679
  %v1817 = vmul.f32 %v728, %v728
  %v1818 = vmul.f32 %v777, %v777
  %v1819 = vmul.f32 %v826, %v826
  %v1820 = vmul.f32 %v875, %v875
  %v1821 = vmul.f32 %v924, %v924
  %v1822 = vmul.f32 %v973, %v973
  %v1823 = vadd.f32 %v1567, %v1583
  %v1824 = vadd.f32 %v1823, %v1599
  %v1825 = vadd.f32 %v1824, %v1615
  %v1826 = vadd.f32 %v1825, %v1631
  %v1827 = vadd.f32 %v1826, %v1647
  %v1828 = vadd.f32 %v1827, %v1663
  %v1829 = vadd.f32 %v1828, %v1679
  %v1830 = vadd.f32 %v1829, %v1695
  %v1831 = vadd.f32 %v1830, %v1711
  %v1832 = vadd.f32 %v1831, %v1727
  %v1833 = vadd.f32 %v1832, %v1743
  %v1834 = vadd.f32 %v1833, %v1759
  %v1835 = vadd.f32 %v1834, %v1775
  %v1836 = vadd.f32 %v1835, %v1791
  %v1837 = vadd.f32 %v1836, %v1807
  %v1838 = vrot.slane %v1837, 4
  %v1839 = vadd.f32 %v1837, %v1838
  %v1840 = vrot.slane %v1839, 2
  %v1841 = vadd.f32 %v1839, %v1840
  %v1842 = vrot.slane %v1841, 1
  %v1843 = vadd.f32 %v1841, %v1842
  %v1844 = vadd.f32 %v1568, %v1584
  %v1845 = vadd.f32 %v1844, %v1600
  %v1846 = vadd.f32 %v1845, %v1616
  %v1847 = vadd.f32 %v1846, %v1632
  %v1848 = vadd.f32 %v1847, %v1648
  %v1849 = vadd.f32 %v1848, %v1664
  %v1850 = vadd.f32 %v1849, %v1680
  %v1851 = vadd.f32 %v1850, %v1696
  %v1852 = vadd.f32 %v1851, %v1712
  %v1853 = vadd.f32 %v1852, %v1728
  %v1854 = vadd.f32 %v1853, %v1744
  %v1855 = vadd.f32 %v1854, %v1760
  %v1856 = vadd.f32 %v1855, %v1776
  %v1857 = vadd.f32 %v1856, %v1792
  %v1858 = vadd.f32 %v1857, %v1808
  %v1859 = vrot.slane %v1858, 4
  %v1860 = vadd.f32 %v1858, %v1859
  %v1861 = vrot.slane %v1860, 2
  %v1862 = vadd.f32 %v1860, %v1861
  %v1863 = vrot.slane %v1862, 1
  %v1864 = vadd.f32 %v1862, %v1863
  %v1865 = vadd.f32 %v1569, %v1585
  %v1866 = vadd.f32 %v1865, %v1601
  %v1867 = vadd.f32 %v1866, %v1617
  %v1868 = vadd.f32 %v1867, %v1633
  %v1869 = vadd.f32 %v1868, %v1649
  %v1870 = vadd.f32 %v1869, %v1665
  %v1871 = vadd.f32 %v1870, %v1681
  %v1872 = vadd.f32 %v1871, %v1697
  %v1873 = vadd.f32 %v1872, %v1713
  %v1874 = vadd.f32 %v1873, %v1729
  %v1875 = vadd.f32 %v1874, %v1745
  %v1876 = vadd.f32 %v1875, %v1761
  %v1877 = vadd.f32 %v1876, %v1777
  %v1878 = vadd.f32 %v1877, %v1793
  %v1879 = vadd.f32 %v1878, %v1809
  %v1880 = vrot.slane %v1879, 4
  %v1881 = vadd.f32 %v1879, %v1880
  %v1882 = vrot.slane %v1881, 2
  %v1883 = vadd.f32 %v1881, %v1882
  %v1884 = vrot.slane %v1883, 1
  %v1885 = vadd.f32 %v1883, %v1884
  %v1886 = vadd.f32 %v1570, %v1586
  %v1887 = vadd.f32 %v1886, %v1602
  %v1888 = vadd.f32 %v1887, %v1618
  %v1889 = vadd.f32 %v1888, %v1634
  %v1890 = vadd.f32 %v1889, %v1650
  %v1891 = vadd.f32 %v1890, %v1666
  %v1892 = vadd.f32 %v1891, %v1682
  %v1893 = vadd.f32 %v1892, %v1698
  %v1894 = vadd.f32 %v1893, %v1714
  %v1895 = vadd.f32 %v1894, %v1730
  %v1896 = vadd.f32 %v1895, %v1746
  %v1897 = vadd.f32 %v1896, %v1762
  %v1898 = vadd.f32 %v1897, %v1778
  %v1899 = vadd.f32 %v1898, %v1794
  %v1900 = vadd.f32 %v1899, %v1810
  %v1901 = vrot.slane %v1900, 4
  %v1902 = vadd.f32 %v1900, %v1901
  %v1903 = vrot.slane %v1902, 2
  %v1904 = vadd.f32 %v1902, %v1903
  %v1905 = vrot.slane %v1904, 1
  %v1906 = vadd.f32 %v1904, %v1905
  %v1907 = vadd.f32 %v1571, %v1587
  %v1908 = vadd.f32 %v1907, %v1603
  %v1909 = vadd.f32 %v1908, %v1619
  %v1910 = vadd.f32 %v1909, %v1635
  %v1911 = vadd.f32 %v1910, %v1651
  %v1912 = vadd.f32 %v1911, %v1667
  %v1913 = vadd.f32 %v1912, %v1683
  %v1914 = vadd.f32 %v1913, %v1699
  %v1915 = vadd.f32 %v1914, %v1715
  %v1916 = vadd.f32 %v1915, %v1731
  %v1917 = vadd.f32 %v1916, %v1747
  %v1918 = vadd.f32 %v1917, %v1763
  %v1919 = vadd.f32 %v1918, %v1779
  %v1920 = vadd.f32 %v1919, %v1795
  %v1921 = vadd.f32 %v1920, %v1811
  %v1922 = vrot.slane %v1921, 4
  %v1923 = vadd.f32 %v1921, %v1922
  %v1924 = vrot.slane %v1923, 2
  %v1925 = vadd.f32 %v1923, %v1924
  %v1926 = vrot.slane %v1925, 1
  %v1927 = vadd.f32 %v1925, %v1926
  %v1928 = vadd.f32 %v1572, %v1588
  %v1929 = vadd.f32 %v1928, %v1604
  %v1930 = vadd.f32 %v1929, %v1620
  %v1931 = vadd.f32 %v1930, %v1636
  %v1932 = vadd.f32 %v1931, %v1652
  %v1933 = vadd.f32 %v1932, %v1668
  %v1934 = vadd.f32 %v1933, %v1684
  %v1935 = vadd.f32 %v1934, %v1700
  %v1936 = vadd.f32 %v1935, %v1716
  %v1937 = vadd.f32 %v1936, %v1732
  %v1938 = vadd.f32 %v1937, %v1748
  %v1939 = vadd.f32 %v1938, %v1764
  %v1940 = vadd.f32 %v1939, %v1780
  %v1941 = vadd.f32 %v1940, %v1796
  %v1942 = vadd.f32 %v1941, %v1812
  %v1943 = vrot.slane %v1942, 4
  %v1944 = vadd.f32 %v1942, %v1943
  %v1945 = vrot.slane %v1944, 2
  %v1946 = vadd.f32 %v1944, %v1945
  %v1947 = vrot.slane %v1946, 1
  %v1948 = vadd.f32 %v1946, %v1947
  %v1949 = vadd.f32 %v1573, %v1589
  %v1950 = vadd.f32 %v1949, %v1605
  %v1951 = vadd.f32 %v1950, %v1621
  %v1952 = vadd.f32 %v1951, %v1637
  %v1953 = vadd.f32 %v1952, %v1653
  %v1954 = vadd.f32 %v1953, %v1669
  %v1955 = vadd.f32 %v1954, %v1685
  %v1956 = vadd.f32 %v1955, %v1701
  %v1957 = vadd.f32 %v1956, %v1717
  %v1958 = vadd.f32 %v1957, %v1733
  %v1959 = vadd.f32 %v1958, %v1749
  %v1960 = vadd.f32 %v1959, %v1765
  %v1961 = vadd.f32 %v1960, %v1781
  %v1962 = vadd.f32 %v1961, %v1797
  %v1963 = vadd.f32 %v1962, %v1813
  %v1964 = vrot.slane %v1963, 4
  %v1965 = vadd.f32 %v1963, %v1964
  %v1966 = vrot.slane %v1965, 2
  %v1967 = vadd.f32 %v1965, %v1966
  %v1968 = vrot.slane %v1967, 1
  %v1969 = vadd.f32 %v1967, %v1968
  %v1970 = vadd.f32 %v1574, %v1590
  %v1971 = vadd.f32 %v1970, %v1606
  %v1972 = vadd.f32 %v1971, %v1622
  %v1973 = vadd.f32 %v1972, %v1638
  %v1974 = vadd.f32 %v1973, %v1654
  %v1975 = vadd.f32 %v1974, %v1670
  %v1976 = vadd.f32 %v1975, %v1686
  %v1977 = vadd.f32 %v1976, %v1702
  %v1978 = vadd.f32 %v1977, %v1718
  %v1979 = vadd.f32 %v1978, %v1734
  %v1980 = vadd.f32 %v1979, %v1750
  %v1981 = vadd.f32 %v1980, %v1766
  %v1982 = vadd.f32 %v1981, %v1782
  %v1983 = vadd.f32 %v1982, %v1798
  %v1984 = vadd.f32 %v1983, %v1814
  %v1985 = vrot.slane %v1984, 4
  %v1986 = vadd.f32 %v1984, %v1985
  %v1987 = vrot.slane %v1986, 2
  %v1988 = vadd.f32 %v1986, %v1987
  %v1989 = vrot.slane %v1988, 1
  %v1990 = vadd.f32 %v1988, %v1989
  %v1991 = vadd.f32 %v1575, %v1591
  %v1992 = vadd.f32 %v1991, %v1607
  %v1993 = vadd.f32 %v1992, %v1623
  %v1994 = vadd.f32 %v1993, %v1639
  %v1995 = vadd.f32 %v1994, %v1655
  %v1996 = vadd.f32 %v1995, %v1671
  %v1997 = vadd.f32 %v1996, %v1687
  %v1998 = vadd.f32 %v1997, %v1703
  %v1999 = vadd.f32 %v1998, %v1719
  %v2000 = vadd.f32 %v1999, %v1735
  %v2001 = vadd.f32 %v2000, %v1751
  %v2002 = vadd.f32 %v2001, %v1767
  %v2003 = vadd.f32 %v2002, %v1783
  %v2004 = vadd.f32 %v2003, %v1799
  %v2005 = vadd.f32 %v2004, %v1815
  %v2006 = vrot.slane %v2005, 4
  %v2007 = vadd.f32 %v2005, %v2006
  %v2008 = vrot.slane %v2007, 2
  %v2009 = vadd.f32 %v2007, %v2008
  %v2010 = vrot.slane %v2009, 1
  %v2011 = vadd.f32 %v2009, %v2010
  %v2012 = vadd.f32 %v1576, %v1592
  %v2013 = vadd.f32 %v2012, %v1608
  %v2014 = vadd.f32 %v2013, %v1624
  %v2015 = vadd.f32 %v2014, %v1640
  %v2016 = vadd.f32 %v2015, %v1656
  %v2017 = vadd.f32 %v2016, %v1672
  %v2018 = vadd.f32 %v2017, %v1688
  %v2019 = vadd.f32 %v2018, %v1704
  %v2020 = vadd.f32 %v2019, %v1720
  %v2021 = vadd.f32 %v2020, %v1736
  %v2022 = vadd.f32 %v2021, %v1752
  %v2023 = vadd.f32 %v2022, %v1768
  %v2024 = vadd.f32 %v2023, %v1784
  %v2025 = vadd.f32 %v2024, %v1800
  %v2026 = vadd.f32 %v2025, %v1816
  %v2027 = vrot.slane %v2026, 4
  %v2028 = vadd.f32 %v2026, %v2027
  %v2029 = vrot.slane %v2028, 2
  %v2030 = vadd.f32 %v2028, %v2029
  %v2031 = vrot.slane %v2030, 1
  %v2032 = vadd.f32 %v2030, %v2031
  %v2033 = vadd.f32 %v1577, %v1593
  %v2034 = vadd.f32 %v2033, %v1609
  %v2035 = vadd.f32 %v2034, %v1625
  %v2036 = vadd.f32 %v2035, %v1641
  %v2037 = vadd.f32 %v2036, %v1657
  %v2038 = vadd.f32 %v2037, %v1673
  %v2039 = vadd.f32 %v2038, %v1689
  %v2040 = vadd.f32 %v2039, %v1705
  %v2041 = vadd.f32 %v2040, %v1721
  %v2042 = vadd.f32 %v2041, %v1737
  %v2043 = vadd.f32 %v2042, %v1753
  %v2044 = vadd.f32 %v2043, %v1769
  %v2045 = vadd.f32 %v2044, %v1785
  %v2046 = vadd.f32 %v2045, %v1801
  %v2047 = vadd.f32 %v2046, %v1817
  %v2048 = vrot.slane %v2047, 4
  %v2049 = vadd.f32 %v2047, %v2048
  %v2050 = vrot.slane %v2049, 2
  %v2051 = vadd.f32 %v2049, %v2050
  %v2052 = vrot.slane %v2051, 1
  %v2053 = vadd.f32 %v2051, %v2052
  %v2054 = vadd.f32 %v1578, %v1594
  %v2055 = vadd.f32 %v2054, %v1610
  %v2056 = vadd.f32 %v2055, %v1626
  %v2057 = vadd.f32 %v2056, %v1642
  %v2058 = vadd.f32 %v2057, %v1658
  %v2059 = vadd.f32 %v2058, %v1674
  %v2060 = vadd.f32 %v2059, %v1690
  %v2061 = vadd.f32 %v2060, %v1706
  %v2062 = vadd.f32 %v2061, %v1722
  %v2063 = vadd.f32 %v2062, %v1738
  %v2064 = vadd.f32 %v2063, %v1754
  %v2065 = vadd.f32 %v2064, %v1770
  %v2066 = vadd.f32 %v2065, %v1786
  %v2067 = vadd.f32 %v2066, %v1802
  %v2068 = vadd.f32 %v2067, %v1818
  %v2069 = vrot.slane %v2068, 4
  %v2070 = vadd.f32 %v2068, %v2069
  %v2071 = vrot.slane %v2070, 2
  %v2072 = vadd.f32 %v2070, %v2071
  %v2073 = vrot.slane %v2072, 1
  %v2074 = vadd.f32 %v2072, %v2073
  %v2075 = vadd.f32 %v1579, %v1595
  %v2076 = vadd.f32 %v2075, %v1611
  %v2077 = vadd.f32 %v2076, %v1627
  %v2078 = vadd.f32 %v2077, %v1643
  %v2079 = vadd.f32 %v2078, %v1659
  %v2080 = vadd.f32 %v2079, %v1675
  %v2081 = vadd.f32 %v2080, %v1691
  %v2082 = vadd.f32 %v2081, %v1707
  %v2083 = vadd.f32 %v2082, %v1723
  %v2084 = vadd.f32 %v2083, %v1739
  %v2085 = vadd.f32 %v2084, %v1755
  %v2086 = vadd.f32 %v2085, %v1771
  %v2087 = vadd.f32 %v2086, %v1787
  %v2088 = vadd.f32 %v2087, %v1803
  %v2089 = vadd.f32 %v2088, %v1819
  %v2090 = vrot.slane %v2089, 4
  %v2091 = vadd.f32 %v2089, %v2090
  %v2092 = vrot.slane %v2091, 2
  %v2093 = vadd.f32 %v2091, %v2092
  %v2094 = vrot.slane %v2093, 1
  %v2095 = vadd.f32 %v2093, %v2094
  %v2096 = vadd.f32 %v1580, %v1596
  %v2097 = vadd.f32 %v2096, %v1612
  %v2098 = vadd.f32 %v2097, %v1628
  %v2099 = vadd.f32 %v2098, %v1644
  %v2100 = vadd.f32 %v2099, %v1660
  %v2101 = vadd.f32 %v2100, %v1676
  %v2102 = vadd.f32 %v2101, %v1692
  %v2103 = vadd.f32 %v2102, %v1708
  %v2104 = vadd.f32 %v2103, %v1724
  %v2105 = vadd.f32 %v2104, %v1740
  %v2106 = vadd.f32 %v2105, %v1756
  %v2107 = vadd.f32 %v2106, %v1772
  %v2108 = vadd.f32 %v2107, %v1788
  %v2109 = vadd.f32 %v2108, %v1804
  %v2110 = vadd.f32 %v2109, %v1820
  %v2111 = vrot.slane %v2110, 4
  %v2112 = vadd.f32 %v2110, %v2111
  %v2113 = vrot.slane %v2112, 2
  %v2114 = vadd.f32 %v2112, %v2113
  %v2115 = vrot.slane %v2114, 1
  %v2116 = vadd.f32 %v2114, %v2115
  %v2117 = vadd.f32 %v1581, %v1597
  %v2118 = vadd.f32 %v2117, %v1613
  %v2119 = vadd.f32 %v2118, %v1629
  %v2120 = vadd.f32 %v2119, %v1645
  %v2121 = vadd.f32 %v2120, %v1661
  %v2122 = vadd.f32 %v2121, %v1677
  %v2123 = vadd.f32 %v2122, %v1693
  %v2124 = vadd.f32 %v2123, %v1709
  %v2125 = vadd.f32 %v2124, %v1725
  %v2126 = vadd.f32 %v2125, %v1741
  %v2127 = vadd.f32 %v2126, %v1757
  %v2128 = vadd.f32 %v2127, %v1773
  %v2129 = vadd.f32 %v2128, %v1789
  %v2130 = vadd.f32 %v2129, %v1805
  %v2131 = vadd.f32 %v2130, %v1821
  %v2132 = vrot.slane %v2131, 4
  %v2133 = vadd.f32 %v2131, %v2132
  %v2134 = vrot.slane %v2133, 2
  %v2135 = vadd.f32 %v2133, %v2134
  %v2136 = vrot.slane %v2135, 1
  %v2137 = vadd.f32 %v2135, %v2136
  %v2138 = vadd.f32 %v1582, %v1598
  %v2139 = vadd.f32 %v2138, %v1614
  %v2140 = vadd.f32 %v2139, %v1630
  %v2141 = vadd.f32 %v2140, %v1646
  %v2142 = vadd.f32 %v2141, %v1662
  %v2143 = vadd.f32 %v2142, %v1678
  %v2144 = vadd.f32 %v2143, %v1694
  %v2145 = vadd.f32 %v2144, %v1710
  %v2146 = vadd.f32 %v2145, %v1726
  %v2147 = vadd.f32 %v2146, %v1742
  %v2148 = vadd.f32 %v2147, %v1758
  %v2149 = vadd.f32 %v2148, %v1774
  %v2150 = vadd.f32 %v2149, %v1790
  %v2151 = vadd.f32 %v2150, %v1806
  %v2152 = vadd.f32 %v2151, %v1822
  %v2153 = vrot.slane %v2152, 4
  %v2154 = vadd.f32 %v2152, %v2153
  %v2155 = vrot.slane %v2154, 2
  %v2156 = vadd.f32 %v2154, %v2155
  %v2157 = vrot.slane %v2156, 1
  %v2158 = vadd.f32 %v2156, %v2157
  %vm2159 = vcmask 1040384
  %v2160 = vsel %vm2159, %v1251, %v1843
  %v2161 = vsel %vm2159, %v1272, %v1864
  %v2162 = vsel %vm2159, %v1293, %v1885
  %v2163 = vsel %vm2159, %v1314, %v1906
  %v2164 = vsel %vm2159, %v1335, %v1927
  %v2165 = vsel %vm2159, %v1356, %v1948
  %v2166 = vsel %vm2159, %v1377, %v1969
  %v2167 = vsel %vm2159, %v1398, %v1990
  %v2168 = vsel %vm2159, %v1419, %v2011
  %v2169 = vsel %vm2159, %v1440, %v2032
  %v2170 = vsel %vm2159, %v1461, %v2053
  %v2171 = vsel %vm2159, %v1482, %v2074
  %v2172 = vsel %vm2159, %v1503, %v2095
  %v2173 = vsel %vm2159, %v1524, %v2116
  %v2174 = vsel %vm2159, %v1545, %v2137
  %v2175 = vsel %vm2159, %v1566, %v2158
  %vm2176 = vcmask 1041408
  %v2177 = vsel %vm2176, %v2160, 0.0
  %v2178 = vsel %vm2176, %v2161, 0.0
  %v2179 = vsel %vm2176, %v2162, 0.0
  %v2180 = vsel %vm2176, %v2163, 0.0
  %v2181 = vsel %vm2176, %v2164, 0.0
  %v2182 = vsel %vm2176, %v2165, 0.0
  %v2183 = vsel %vm2176, %v2166, 0.0
  %v2184 = vsel %vm2176, %v2167, 0.0
  %v2185 = vsel %vm2176, %v2168, 0.0
  %v2186 = vsel %vm2176, %v2169, 0.0
  %v2187 = vsel %vm2176, %v2170, 0.0
  %v2188 = vsel %vm2176, %v2171, 0.0
  %v2189 = vsel %vm2176, %v2172, 0.0
  %v2190 = vsel %vm2176, %v2173, 0.0
  %v2191 = vsel %vm2176, %v2174, 0.0
  %v2192 = vsel %vm2176, %v2175, 0.0
  %2193 = vst [vmem:[%s3] sm:$0xff] %v2177
  %2194 = vst [vmem:[%s3 + $0x8] sm:$0xff] %v2178
  %2195 = vst [vmem:[%s3 + $0x10] sm:$0xff] %v2179
  %2196 = vst [vmem:[%s3 + $0x18] sm:$0xff] %v2180
  %2197 = vst [vmem:[%s3 + $0x20] sm:$0xff] %v2181
  %2198 = vst [vmem:[%s3 + $0x28] sm:$0xff] %v2182
  %2199 = vst [vmem:[%s3 + $0x30] sm:$0xff] %v2183
  %2200 = vst [vmem:[%s3 + $0x38] sm:$0xff] %v2184
  %2201 = vst [vmem:[%s3 + $0x40] sm:$0xff] %v2185
  %2202 = vst [vmem:[%s3 + $0x48] sm:$0xff] %v2186
  %2203 = vst [vmem:[%s3 + $0x50] sm:$0xff] %v2187
  %2204 = vst [vmem:[%s3 + $0x58] sm:$0xff] %v2188
  %2205 = vst [vmem:[%s3 + $0x60] sm:$0xff] %v2189
  %2206 = vst [vmem:[%s3 + $0x68] sm:$0xff] %v2190
  %2207 = vst [vmem:[%s3 + $0x70] sm:$0xff] %v2191
  %2208 = vst [vmem:[%s3 + $0x78] sm:$0xff] %v2192
  // Predicated region
  $region10: #{generator_forward.11} parent=0 // pred_check
    _
  $region11: #{generator_forward.11} parent=0 // pred_check_branch
    %2210 = sbr.rel (0) target = $region13
  $region12: #{generator_forward.11} parent=0 // pred_region
    _
  $region13: #{generator_forward.11} parent=0 // pred_fallthru
    _
  // Predicated region
  $region14: #{generator_forward.11} parent=0 // pred_check
    _
  $region15: #{generator_forward.11} parent=0 // pred_check_branch
    %2212 = sbr.rel (0) target = $region17
  $region16: #{generator_forward.11} parent=0 // pred_region
    _
  $region17: #{generator_forward.11} parent=0 // pred_fallthru
    _
  // Predicated region
  $region18: #{generator_forward.11} parent=0 // pred_check
    _
  $region19: #{generator_forward.11} parent=0 // pred_check_branch
    %2214 = sbr.rel (0) target = $region21
  $region20: #{generator_forward.11} parent=0 // pred_region
    _
  $region21: #{generator_forward.11} parent=0 // pred_fallthru
    _
  // Predicated region
  $region22: #{generator_forward.11} parent=0 // pred_check
    _
  $region23: #{generator_forward.11} parent=0 // pred_check_branch
    %2216 = sbr.rel (0) target = $region25
  $region24: #{generator_forward.11} parent=0 // pred_region
    _
  $region25: #{generator_forward.11} parent=0 // pred_fallthru
    _

// kernel: tile.63
$region0: #{tile.63}
  #allocation0 [shape = 's32[1]{0}', space=sflag, size = 0x4, scoped, tag = 'scoped memory for tile.63']
  %s0 = inlined_call_operand.vmem [shape: f32[64], index: 0, kind: input, shape index: {}]
  %s1 = inlined_call_operand.vmem [shape: f32[2,64], index: 1, kind: output, shape index: {}]
  // Predicated region
  $region2: #{tile.63} parent=0 // pred_check
    _
  $region3: #{tile.63} parent=0 // pred_check_branch
    %3 = sbr.rel (0) target = $region5
  $region4: #{tile.63} parent=0 // pred_region
    _
  $region5: #{tile.63} parent=0 // pred_fallthru
    _
  %v4 = vld [vmem:[%s0] ss:$0 sm:$0xff]
  %5 = vst [vmem:[%s1] sm:$0x3] %v4

// kernel: tile.68
$region0: #{tile.68}
  %s0 = inlined_call_operand.vmem [shape: f32[2,64], index: 0, kind: input, shape index: {}]
  %s1 = inlined_call_operand.vmem [shape: f32[1,128], index: 1, kind: output, shape index: {}]
  $region1: #{tile.68} parent=0
    #allocation0 [shape = 'u8[4096]{0}', space=vmem, size = 0x1000, scoped, tag = 'scoped mem for output reshape']
    #allocation1 [shape = 'u8[4096]{0}', space=vmem, size = 0x1000, scoped, tag = 'scoped mem for input reshape']
    %s3 = ssub.s32 4, 1
    %v4 = vld [vmem:[%s0] sm:%s3]
    %5 = vst [vmem:[#allocation1] sm:%s3] %v4
    %v6 = vld [vmem:[#allocation1] sm:$0x1]
    %vm7 = vcmask 523264
    %8 = vst.msk [vmem:[#allocation0] sm:$0x1] %vm7, %v6
    %s9 = scalar_lea.vmem [#allocation1], 1
    %v10 = vld [vmem:[%s9] sm:$0x1]
    %11 = vrot.lane.b32.xlu0 %v10, 64
    %v12 = vpop.permute.xlu0 %11
    %vm13 = vcmask 1048064
    %14 = vst.msk [vmem:[#allocation0] sm:$0x1] %vm13, %v12
    %s16 = ssub.s32 2, 1
    %v17 = vld [vmem:[#allocation0] sm:%s16]
    %s19 = ssub.s32 2, 1
    %20 = vst [vmem:[%s1] sm:%s19] %v17

// kernel: generator_forward.13
$region0: #{generator_forward.13}
  #allocation0 [shape = 'u32[]', space=smem, size = 0x4, offset = 0x4, fixed_abs, tag = 'smem constant byte address 0x4 - core index']
  #allocation1 [shape = 'u32[72,128]{1,0:T(1,128)}', space=vmem, size = 0x9000, scoped, tag = 'internal scratch']
  %s0 = inlined_call_operand.vmem [shape: bf16[4,128,512], index: 0, kind: input, shape index: {}]
  %s1 = inlined_call_operand.vmem [shape: bf16[4,512,64], index: 1, kind: input, shape index: {}]
  %s2 = inlined_call_operand.vmem [shape: bf16[4,128,64], index: 2, kind: output, shape index: {0}]
  %s3 = inlined_call_operand.vmem [shape: f32[4,1,8,64], index: 3, kind: output, shape index: {1}]
  %4 = xla_tuple %s2, %s3
  %s5 = sld [smem:[#allocation0]]
  $region49: #{generator_forward.13} parent=0
    _
  %s7 = ssub.s32 1, %s5
  %s8 = scalar_select 0, %s7, %s5
  loop: start=0, step=1, limit=6
  $region2: #{generator_forward.13} parent=0 // loop_pre_header
    _
  $region3: #{generator_forward.13} parent=0 // loop_header
    %s10 = sphi 0, %s14
    %p11 = scmp.ge.s32.totalorder %s10, 6
    %s17 = sphi 0, %s29
    %s18 = sphi 0, %s25
    %s19 = sphi 0, %s17
    %s20 = sphi 0, %s18
    %s21 = sphi 0, %s19
    %s22 = sphi 0, %s20
    %s34 = sphi 0, %s36
    %s37 = sphi 0, %s34
    %s38 = sphi 0, %s37
    %s54 = sphi 0, %s38
    %s60 = sphi 0, %s62
    %s63 = sphi 0, %s60
    %s64 = sphi 0, %s63
    %s80 = sphi 0, %s64
    %s88 = sphi 0, %s90
    %s91 = sphi 0, %s88
    %s92 = sphi 0, %s91
    %s108 = sphi 0, %s92
    %s116 = sphi 0, %s118
    %s119 = sphi 0, %s116
    %s120 = sphi 0, %s119
    %s136 = sphi 0, %s120
  $region4: #{generator_forward.13} parent=0 // loop_header_branch
    %13 = sbr.rel (%p11) target = $region8
  $region5: #{generator_forward.13} parent=0 // loop_body
    %s15 = ssub.s32 %s10, 1
    %s16 = ssub.s32 %s10, 2
    %s23 = sadd.s32 1, %s18
    %p24 = scmp.ge.s32.totalorder %s23, 1
    %s25 = scalar_select %p24, 0, %s23
    %s26 = sadd.s32 1, %s17
    %s27 = scalar_select %p24, %s26, %s17
    %p28 = scmp.ge.s32.totalorder %s27, 4
    %s29 = scalar_select %p28, 0, %s27
    %s30 = ssub.s32 %s17, %s29
    %s31 = ssub.s32 %s18, %s25
    %s32 = sor.u32 %s30, %s31
    %p33 = scmp.eq.s32.totalorder %s32, 0
    %s35 = sadd.s32 %s34, 1
    %s36 = scalar_select %p33, %s34, %s35
    %p39 = pneg %p33
    %p40 = scmp.eq.s32.totalorder %s10, 3
    %p41 = por %p39, %p40
    %p42 = scmp.ne.s32.totalorder %s34, %s37
    %p43 = scmp.eq.s32.totalorder %s10, 0
    %p44 = por %p42, %p43
    %p45 = scmp.ne.s32.totalorder %s34, %s37
    %p46 = scmp.eq.s32.totalorder %s15, 3
    %p47 = por %p45, %p46
    %p48 = scmp.ne.s32.totalorder %s37, %s38
    %p49 = scmp.eq.s32.totalorder %s15, 0
    %p50 = por %p48, %p49
    %p51 = scmp.ne.s32.totalorder %s37, %s38
    %p52 = scmp.eq.s32.totalorder %s16, 3
    %p53 = por %p51, %p52
    %p55 = scmp.ne.s32.totalorder %s38, %s54
    %p56 = scmp.eq.s32.totalorder %s16, 0
    %p57 = por %p55, %p56
    %s58 = ssub.s32 %s17, %s29
    %p59 = scmp.eq.s32.totalorder %s58, 0
    %s61 = sadd.s32 %s60, 1
    %s62 = scalar_select %p59, %s60, %s61
    %p65 = pneg %p59
    %p66 = scmp.eq.s32.totalorder %s10, 3
    %p67 = por %p65, %p66
    %p68 = scmp.ne.s32.totalorder %s60, %s63
    %p69 = scmp.eq.s32.totalorder %s10, 0
    %p70 = por %p68, %p69
    %p71 = scmp.ne.s32.totalorder %s60, %s63
    %p72 = scmp.eq.s32.totalorder %s15, 3
    %p73 = por %p71, %p72
    %p74 = scmp.ne.s32.totalorder %s63, %s64
    %p75 = scmp.eq.s32.totalorder %s15, 0
    %p76 = por %p74, %p75
    %p77 = scmp.ne.s32.totalorder %s63, %s64
    %p78 = scmp.eq.s32.totalorder %s16, 3
    %p79 = por %p77, %p78
    %p81 = scmp.ne.s32.totalorder %s64, %s80
    %p82 = scmp.eq.s32.totalorder %s16, 0
    %p83 = por %p81, %p82
    %s84 = ssub.s32 %s17, %s29
    %s85 = ssub.s32 %s18, %s25
    %s86 = sor.u32 %s84, %s85
    %p87 = scmp.eq.s32.totalorder %s86, 0
    %s89 = sadd.s32 %s88, 1
    %s90 = scalar_select %p87, %s88, %s89
    %p93 = pneg %p87
    %p94 = scmp.eq.s32.totalorder %s10, 3
    %p95 = por %p93, %p94
    %p96 = scmp.ne.s32.totalorder %s88, %s91
    %p97 = scmp.eq.s32.totalorder %s10, 0
    %p98 = por %p96, %p97
    %p99 = scmp.ne.s32.totalorder %s88, %s91
    %p100 = scmp.eq.s32.totalorder %s15, 3
    %p101 = por %p99, %p100
    %p102 = scmp.ne.s32.totalorder %s91, %s92
    %p103 = scmp.eq.s32.totalorder %s15, 0
    %p104 = por %p102, %p103
    %p105 = scmp.ne.s32.totalorder %s91, %s92
    %p106 = scmp.eq.s32.totalorder %s16, 3
    %p107 = por %p105, %p106
    %p109 = scmp.ne.s32.totalorder %s92, %s108
    %p110 = scmp.eq.s32.totalorder %s16, 0
    %p111 = por %p109, %p110
    %s112 = ssub.s32 %s17, %s29
    %s113 = ssub.s32 %s18, %s25
    %s114 = sor.u32 %s112, %s113
    %p115 = scmp.eq.s32.totalorder %s114, 0
    %s117 = sadd.s32 %s116, 1
    %s118 = scalar_select %p115, %s116, %s117
    %p121 = pneg %p115
    %p122 = scmp.eq.s32.totalorder %s10, 3
    %p123 = por %p121, %p122
    %p124 = scmp.ne.s32.totalorder %s116, %s119
    %p125 = scmp.eq.s32.totalorder %s10, 0
    %p126 = por %p124, %p125
    %p127 = scmp.ne.s32.totalorder %s116, %s119
    %p128 = scmp.eq.s32.totalorder %s15, 3
    %p129 = por %p127, %p128
    %p130 = scmp.ne.s32.totalorder %s119, %s120
    %p131 = scmp.eq.s32.totalorder %s15, 0
    %p132 = por %p130, %p131
    %p133 = scmp.ne.s32.totalorder %s119, %s120
    %p134 = scmp.eq.s32.totalorder %s16, 3
    %p135 = por %p133, %p134
    %p137 = scmp.ne.s32.totalorder %s120, %s136
    %p138 = scmp.eq.s32.totalorder %s16, 0
    %p139 = por %p137, %p138
    %p140 = scmp.le.s32.totalorder 1, %s10
    %p141 = scmp.lt.s32.totalorder %s10, 5
    %p142 = pnand %p140, %p141
    %p143 = pneg %p142
    // Predicated region
    $region9: #{generator_forward.13} parent=5 // pred_check
      _
    $region10: #{generator_forward.13} parent=5 // pred_check_branch
      %145 = sbr.rel (%p142) target = $region12
    $region11: #{generator_forward.13} parent=5 // pred_region
      %s146 = ssub.s32 %s10, 1
    $region12: #{generator_forward.13} parent=5 // pred_fallthru
      _
    %p147 = scmp.lt.s32.totalorder %s10, 4
    // Predicated region
    $region13: #{generator_forward.13} parent=5 // pred_check
      %p148 = pneg %p147
    $region14: #{generator_forward.13} parent=5 // pred_check_branch
      %150 = sbr.rel (%p148) target = $region16
    $region15: #{generator_forward.13} parent=5 // pred_region
      // Predicated region
      $region17: #{generator_forward.13} parent=15 // pred_check
        %p151 = pneg %p44
      $region18: #{generator_forward.13} parent=15 // pred_check_branch
        %153 = sbr.rel (%p151) target = $region20
      $region19: #{generator_forward.13} parent=15 // pred_region
        %s154 = smul.u32 16, %s18
        %p155 = scmp.lt.s32.totalorder %s17, 3
        %s156 = scalar_select %p155, %s17, 3
        %p157 = scmp.lt.s32.totalorder %s154, 15
        %s158 = scalar_select %p157, %s154, 15
        %s159 = smul.addr %s158, 4
        %s160 = smul.addr %s156, 64
        %s161 = sadd.s32 %s159, %s160
        %s162 = smul.addr %s161, 4
        %s163 = scalar_lea.vmem %s0, %s162
        %s164 = smul.u32 16, %s18
      $region20: #{generator_forward.13} parent=15 // pred_fallthru
        _
      // Predicated region
      $region21: #{generator_forward.13} parent=15 // pred_check
        %p165 = pneg %p70
      $region22: #{generator_forward.13} parent=15 // pred_check_branch
        %167 = sbr.rel (%p165) target = $region24
      $region23: #{generator_forward.13} parent=15 // pred_region
        %p168 = scmp.lt.s32.totalorder %s17, 3
        %s169 = scalar_select %p168, %s17, 3
        %s170 = smul.addr %s169, 64
        %s171 = smul.addr %s170, 4
        %s172 = scalar_lea.vmem %s1, %s171
      $region24: #{generator_forward.13} parent=15 // pred_fallthru
        _
    $region16: #{generator_forward.13} parent=5 // pred_fallthru
      _
    %p173 = scmp.le.s32.totalorder 1, %s10
    %p174 = scmp.lt.s32.totalorder %s10, 5
    %p175 = pnand %p173, %p174
    %p176 = pneg %p175
    // Predicated region
    $region25: #{generator_forward.13} parent=5 // pred_check
      _
    $region26: #{generator_forward.13} parent=5 // pred_check_branch
      %178 = sbr.rel (%p175) target = $region28
    $region27: #{generator_forward.13} parent=5 // pred_region
      %s179 = ssub.s32 %s10, 1
      %s180 = smul.u32 16, %s20
      %p181 = scmp.lt.s32.totalorder %s19, 3
      %s182 = scalar_select %p181, %s19, 3
      %p183 = scmp.lt.s32.totalorder %s180, 15
      %s184 = scalar_select %p183, %s180, 15
      %s185 = smul.addr %s184, 4
      %s186 = smul.addr %s182, 64
      %s187 = sadd.s32 %s185, %s186
      %s188 = smul.addr %s187, 4
      %s189 = scalar_lea.vmem %s0, %s188
      %p190 = pneg %p50
      %p191 = pneg %p47
      %p192 = scmp.lt.s32.totalorder %s19, 3
      %s193 = scalar_select %p192, %s19, 3
      %s194 = smul.addr %s193, 64
      %s195 = smul.addr %s194, 4
      %s196 = scalar_lea.vmem %s1, %s195
      %p197 = pneg %p76
      %p198 = pneg %p73
      %p199 = pneg %p104
      %p200 = pneg %p101
      %s201 = smul.u32 16, %s20
      %p202 = scmp.lt.s32.totalorder %s19, 3
      %s203 = scalar_select %p202, %s19, 3
      %p204 = scmp.lt.s32.totalorder %s201, 15
      %s205 = scalar_select %p204, %s201, 15
      %s206 = smul.addr %s203, 16
      %s207 = sadd.s32 %s205, %s206
      %s208 = smul.addr %s207, 4
      %s209 = scalar_lea.vmem %s2, %s208
      %p210 = pneg %p132
      %p211 = pneg %p129
      %p212 = scmp.lt.s32.totalorder %s19, 3
      %s213 = scalar_select %p212, %s19, 3
      %p214 = scmp.lt.s32.totalorder %s20, 0
      %s215 = scalar_select %p214, %s20, 0
      %s216 = sadd.s32 %s215, %s213
      %s217 = smul.addr %s216, 8
      %s218 = scalar_lea.vmem %s3, %s217
      %s219 = smul.u32 16, %s20
      %p220 = scmp.lt.s32.totalorder %s19, 3
      %s221 = scalar_select %p220, %s19, 3
      %p222 = scmp.lt.s32.totalorder %s219, 15
      %s223 = scalar_select %p222, %s219, 15
      %s224 = smul.addr %s223, 4
      %s225 = smul.addr %s221, 64
      %s226 = sadd.s32 %s224, %s225
      %s227 = smul.addr %s226, 4
      %s228 = scalar_lea.vmem %s0, %s227
      %s229 = smul.u32 16, %s20
      %p230 = scmp.lt.s32.totalorder %s19, 3
      %s231 = scalar_select %p230, %s19, 3
      %s232 = smul.addr %s231, 64
      %s233 = smul.addr %s232, 4
      %s234 = scalar_lea.vmem %s1, %s233
      %s235 = smul.u32 16, %s20
      %p236 = scmp.lt.s32.totalorder %s19, 3
      %s237 = scalar_select %p236, %s19, 3
      %p238 = scmp.lt.s32.totalorder %s235, 15
      %s239 = scalar_select %p238, %s235, 15
      %s240 = smul.addr %s237, 16
      %s241 = sadd.s32 %s239, %s240
      %s242 = smul.addr %s241, 4
      %s243 = scalar_lea.vmem %s2, %s242
      %s244 = smul.u32 16, %s20
      %p245 = scmp.lt.s32.totalorder %s19, 3
      %s246 = scalar_select %p245, %s19, 3
      %p247 = scmp.lt.s32.totalorder %s20, 0
      %s248 = scalar_select %p247, %s20, 0
      %s249 = sadd.s32 %s248, %s246
      %s250 = smul.addr %s249, 8
      %s251 = scalar_lea.vmem %s3, %s250
      %v252 = vld [vmem:[%s228] sm:$0xff]
      %v253 = vld [vmem:[%s228 + $0x8] sm:$0xff]
      %v254 = vld [vmem:[%s228 + $0x10] sm:$0xff]
      %v255 = vld [vmem:[%s228 + $0x18] sm:$0xff]
      %v256 = vld [vmem:[%s228 + $0x20] sm:$0xff]
      %v257 = vld [vmem:[%s228 + $0x28] sm:$0xff]
      %v258 = vld [vmem:[%s228 + $0x30] sm:$0xff]
      %v259 = vld [vmem:[%s228 + $0x38] sm:$0xff]
      %v260 = vld [vmem:[%s228 + $0x40] sm:$0xff]
      %v261 = vld [vmem:[%s228 + $0x48] sm:$0xff]
      %v262 = vld [vmem:[%s228 + $0x50] sm:$0xff]
      %v263 = vld [vmem:[%s228 + $0x58] sm:$0xff]
      %v264 = vld [vmem:[%s228 + $0x60] sm:$0xff]
      %v265 = vld [vmem:[%s228 + $0x68] sm:$0xff]
      %v266 = vld [vmem:[%s228 + $0x70] sm:$0xff]
      %v267 = vld [vmem:[%s228 + $0x78] sm:$0xff]
      %v268 = vld [vmem:[%s228 + $0x80] sm:$0xff]
      %v269 = vld [vmem:[%s228 + $0x88] sm:$0xff]
      %v270 = vld [vmem:[%s228 + $0x90] sm:$0xff]
      %v271 = vld [vmem:[%s228 + $0x98] sm:$0xff]
      %v272 = vld [vmem:[%s228 + $0xa0] sm:$0xff]
      %v273 = vld [vmem:[%s228 + $0xa8] sm:$0xff]
      %v274 = vld [vmem:[%s228 + $0xb0] sm:$0xff]
      %v275 = vld [vmem:[%s228 + $0xb8] sm:$0xff]
      %v276 = vld [vmem:[%s228 + $0xc0] sm:$0xff]
      %v277 = vld [vmem:[%s228 + $0xc8] sm:$0xff]
      %v278 = vld [vmem:[%s228 + $0xd0] sm:$0xff]
      %v279 = vld [vmem:[%s228 + $0xd8] sm:$0xff]
      %v280 = vld [vmem:[%s228 + $0xe0] sm:$0xff]
      %v281 = vld [vmem:[%s228 + $0xe8] sm:$0xff]
      %v282 = vld [vmem:[%s228 + $0xf0] sm:$0xff]
      %v283 = vld [vmem:[%s228 + $0xf8] sm:$0xff]
      %v284 = vld [vmem:[%s234] sm:$0xf]
      %v285 = vld [vmem:[%s234 + $0x4] sm:$0xf]
      %v286 = vld [vmem:[%s234 + $0x8] sm:$0xf]
      %v287 = vld [vmem:[%s234 + $0xc] sm:$0xf]
      %v288 = vld [vmem:[%s234 + $0x10] sm:$0xf]
      %v289 = vld [vmem:[%s234 + $0x14] sm:$0xf]
      %v290 = vld [vmem:[%s234 + $0x18] sm:$0xf]
      %v291 = vld [vmem:[%s234 + $0x1c] sm:$0xf]
      %v292 = vld [vmem:[%s234 + $0x20] sm:$0xf]
      %v293 = vld [vmem:[%s234 + $0x24] sm:$0xf]
      %v294 = vld [vmem:[%s234 + $0x28] sm:$0xf]
      %v295 = vld [vmem:[%s234 + $0x2c] sm:$0xf]
      %v296 = vld [vmem:[%s234 + $0x30] sm:$0xf]
      %v297 = vld [vmem:[%s234 + $0x34] sm:$0xf]
      %v298 = vld [vmem:[%s234 + $0x38] sm:$0xf]
      %v299 = vld [vmem:[%s234 + $0x3c] sm:$0xf]
      %v300 = vld [vmem:[%s234 + $0x40] sm:$0xf]
      %v301 = vld [vmem:[%s234 + $0x44] sm:$0xf]
      %v302 = vld [vmem:[%s234 + $0x48] sm:$0xf]
      %v303 = vld [vmem:[%s234 + $0x4c] sm:$0xf]
      %v304 = vld [vmem:[%s234 + $0x50] sm:$0xf]
      %v305 = vld [vmem:[%s234 + $0x54] sm:$0xf]
      %v306 = vld [vmem:[%s234 + $0x58] sm:$0xf]
      %v307 = vld [vmem:[%s234 + $0x5c] sm:$0xf]
      %v308 = vld [vmem:[%s234 + $0x60] sm:$0xf]
      %v309 = vld [vmem:[%s234 + $0x64] sm:$0xf]
      %v310 = vld [vmem:[%s234 + $0x68] sm:$0xf]
      %v311 = vld [vmem:[%s234 + $0x6c] sm:$0xf]
      %v312 = vld [vmem:[%s234 + $0x70] sm:$0xf]
      %v313 = vld [vmem:[%s234 + $0x74] sm:$0xf]
      %v314 = vld [vmem:[%s234 + $0x78] sm:$0xf]
      %v315 = vld [vmem:[%s234 + $0x7c] sm:$0xf]
      %v316 = vld [vmem:[%s234 + $0x80] sm:$0xf]
      %v317 = vld [vmem:[%s234 + $0x84] sm:$0xf]
      %v318 = vld [vmem:[%s234 + $0x88] sm:$0xf]
      %v319 = vld [vmem:[%s234 + $0x8c] sm:$0xf]
      %v320 = vld [vmem:[%s234 + $0x90] sm:$0xf]
      %v321 = vld [vmem:[%s234 + $0x94] sm:$0xf]
      %v322 = vld [vmem:[%s234 + $0x98] sm:$0xf]
      %v323 = vld [vmem:[%s234 + $0x9c] sm:$0xf]
      %v324 = vld [vmem:[%s234 + $0xa0] sm:$0xf]
      %v325 = vld [vmem:[%s234 + $0xa4] sm:$0xf]
      %v326 = vld [vmem:[%s234 + $0xa8] sm:$0xf]
      %v327 = vld [vmem:[%s234 + $0xac] sm:$0xf]
      %v328 = vld [vmem:[%s234 + $0xb0] sm:$0xf]
      %v329 = vld [vmem:[%s234 + $0xb4] sm:$0xf]
      %v330 = vld [vmem:[%s234 + $0xb8] sm:$0xf]
      %v331 = vld [vmem:[%s234 + $0xbc] sm:$0xf]
      %v332 = vld [vmem:[%s234 + $0xc0] sm:$0xf]
      %v333 = vld [vmem:[%s234 + $0xc4] sm:$0xf]
      %v334 = vld [vmem:[%s234 + $0xc8] sm:$0xf]
      %v335 = vld [vmem:[%s234 + $0xcc] sm:$0xf]
      %v336 = vld [vmem:[%s234 + $0xd0] sm:$0xf]
      %v337 = vld [vmem:[%s234 + $0xd4] sm:$0xf]
      %v338 = vld [vmem:[%s234 + $0xd8] sm:$0xf]
      %v339 = vld [vmem:[%s234 + $0xdc] sm:$0xf]
      %v340 = vld [vmem:[%s234 + $0xe0] sm:$0xf]
      %v341 = vld [vmem:[%s234 + $0xe4] sm:$0xf]
      %v342 = vld [vmem:[%s234 + $0xe8] sm:$0xf]
      %v343 = vld [vmem:[%s234 + $0xec] sm:$0xf]
      %v344 = vld [vmem:[%s234 + $0xf0] sm:$0xf]
      %v345 = vld [vmem:[%s234 + $0xf4] sm:$0xf]
      %v346 = vld [vmem:[%s234 + $0xf8] sm:$0xf]
      %v347 = vld [vmem:[%s234 + $0xfc] sm:$0xf]
      %v380 = vunpack.c.l.b16 %v252
      %v381 = vunpack.c.h.b16 %v252
      %v382 = vunpack.c.l.b16 %v253
      %v383 = vunpack.c.h.b16 %v253
      %v384 = vunpack.c.l.b16 %v254
      %v385 = vunpack.c.h.b16 %v254
      %v386 = vunpack.c.l.b16 %v255
      %v387 = vunpack.c.h.b16 %v255
      %v388 = vunpack.c.l.b16 %v256
      %v389 = vunpack.c.h.b16 %v256
      %v390 = vunpack.c.l.b16 %v257
      %v391 = vunpack.c.h.b16 %v257
      %v392 = vunpack.c.l.b16 %v258
      %v393 = vunpack.c.h.b16 %v258
      %v394 = vunpack.c.l.b16 %v259
      %v395 = vunpack.c.h.b16 %v259
      %v396 = vunpack.c.l.b16 %v260
      %v397 = vunpack.c.h.b16 %v260
      %v398 = vunpack.c.l.b16 %v261
      %v399 = vunpack.c.h.b16 %v261
      %v400 = vunpack.c.l.b16 %v262
      %v401 = vunpack.c.h.b16 %v262
      %v402 = vunpack.c.l.b16 %v263
      %v403 = vunpack.c.h.b16 %v263
      %v404 = vunpack.c.l.b16 %v264
      %v405 = vunpack.c.h.b16 %v264
      %v406 = vunpack.c.l.b16 %v265
      %v407 = vunpack.c.h.b16 %v265
      %v408 = vunpack.c.l.b16 %v266
      %v409 = vunpack.c.h.b16 %v266
      %v410 = vunpack.c.l.b16 %v267
      %v411 = vunpack.c.h.b16 %v267
      %v412 = vunpack.c.l.b16 %v268
      %v413 = vunpack.c.h.b16 %v268
      %v414 = vunpack.c.l.b16 %v269
      %v415 = vunpack.c.h.b16 %v269
      %v416 = vunpack.c.l.b16 %v270
      %v417 = vunpack.c.h.b16 %v270
      %v418 = vunpack.c.l.b16 %v271
      %v419 = vunpack.c.h.b16 %v271
      %v420 = vunpack.c.l.b16 %v272
      %v421 = vunpack.c.h.b16 %v272
      %v422 = vunpack.c.l.b16 %v273
      %v423 = vunpack.c.h.b16 %v273
      %v424 = vunpack.c.l.b16 %v274
      %v425 = vunpack.c.h.b16 %v274
      %v426 = vunpack.c.l.b16 %v275
      %v427 = vunpack.c.h.b16 %v275
      %v428 = vunpack.c.l.b16 %v276
      %v429 = vunpack.c.h.b16 %v276
      %v430 = vunpack.c.l.b16 %v277
      %v431 = vunpack.c.h.b16 %v277
      %v432 = vunpack.c.l.b16 %v278
      %v433 = vunpack.c.h.b16 %v278
      %v434 = vunpack.c.l.b16 %v279
      %v435 = vunpack.c.h.b16 %v279
      %v436 = vunpack.c.l.b16 %v280
      %v437 = vunpack.c.h.b16 %v280
      %v438 = vunpack.c.l.b16 %v281
      %v439 = vunpack.c.h.b16 %v281
      %v440 = vunpack.c.l.b16 %v282
      %v441 = vunpack.c.h.b16 %v282
      %v442 = vunpack.c.l.b16 %v283
      %v443 = vunpack.c.h.b16 %v283
      %v444 = vpack.c.b16 %v384, %v380
      %v445 = vpack.c.b16 %v385, %v381
      %v446 = vpack.c.b16 %v386, %v382
      %v447 = vpack.c.b16 %v387, %v383
      %v448 = vpack.c.b16 %v392, %v388
      %v449 = vpack.c.b16 %v393, %v389
      %v450 = vpack.c.b16 %v394, %v390
      %v451 = vpack.c.b16 %v395, %v391
      %v452 = vpack.c.b16 %v400, %v396
      %v453 = vpack.c.b16 %v401, %v397
      %v454 = vpack.c.b16 %v402, %v398
      %v455 = vpack.c.b16 %v403, %v399
      %v456 = vpack.c.b16 %v408, %v404
      %v457 = vpack.c.b16 %v409, %v405
      %v458 = vpack.c.b16 %v410, %v406
      %v459 = vpack.c.b16 %v411, %v407
      %v460 = vpack.c.b16 %v416, %v412
      %v461 = vpack.c.b16 %v417, %v413
      %v462 = vpack.c.b16 %v418, %v414
      %v463 = vpack.c.b16 %v419, %v415
      %v464 = vpack.c.b16 %v424, %v420
      %v465 = vpack.c.b16 %v425, %v421
      %v466 = vpack.c.b16 %v426, %v422
      %v467 = vpack.c.b16 %v427, %v423
      %v468 = vpack.c.b16 %v432, %v428
      %v469 = vpack.c.b16 %v433, %v429
      %v470 = vpack.c.b16 %v434, %v430
      %v471 = vpack.c.b16 %v435, %v431
      %v472 = vpack.c.b16 %v440, %v436
      %v473 = vpack.c.b16 %v441, %v437
      %v474 = vpack.c.b16 %v442, %v438
      %v475 = vpack.c.b16 %v443, %v439
      %v572 = vunpack.c.l.b16 %v284
      %v573 = vunpack.c.l.b16 %v285
      %v574 = vunpack.c.l.b16 %v286
      %v575 = vunpack.c.l.b16 %v287
      %v576 = vunpack.c.l.b16 %v288
      %v577 = vunpack.c.l.b16 %v289
      %v578 = vunpack.c.l.b16 %v290
      %v579 = vunpack.c.l.b16 %v291
      %v580 = vunpack.c.l.b16 %v292
      %v581 = vunpack.c.l.b16 %v293
      %v582 = vunpack.c.l.b16 %v294
      %v583 = vunpack.c.l.b16 %v295
      %v584 = vunpack.c.l.b16 %v296
      %v585 = vunpack.c.l.b16 %v297
      %v586 = vunpack.c.l.b16 %v298
      %v587 = vunpack.c.l.b16 %v299
      %v588 = vunpack.c.l.b16 %v300
      %v589 = vunpack.c.l.b16 %v301
      %v590 = vunpack.c.l.b16 %v302
      %v591 = vunpack.c.l.b16 %v303
      %v592 = vunpack.c.l.b16 %v304
      %v593 = vunpack.c.l.b16 %v305
      %v594 = vunpack.c.l.b16 %v306
      %v595 = vunpack.c.l.b16 %v307
      %v596 = vunpack.c.l.b16 %v308
      %v597 = vunpack.c.l.b16 %v309
      %v598 = vunpack.c.l.b16 %v310
      %v599 = vunpack.c.l.b16 %v311
      %v600 = vunpack.c.l.b16 %v312
      %v601 = vunpack.c.l.b16 %v313
      %v602 = vunpack.c.l.b16 %v314
      %v603 = vunpack.c.l.b16 %v315
      %v604 = vunpack.c.l.b16 %v316
      %v605 = vunpack.c.l.b16 %v317
      %v606 = vunpack.c.l.b16 %v318
      %v607 = vunpack.c.l.b16 %v319
      %v608 = vunpack.c.l.b16 %v320
      %v609 = vunpack.c.l.b16 %v321
      %v610 = vunpack.c.l.b16 %v322
      %v611 = vunpack.c.l.b16 %v323
      %v612 = vunpack.c.l.b16 %v324
      %v613 = vunpack.c.l.b16 %v325
      %v614 = vunpack.c.l.b16 %v326
      %v615 = vunpack.c.l.b16 %v327
      %v616 = vunpack.c.l.b16 %v328
      %v617 = vunpack.c.l.b16 %v329
      %v618 = vunpack.c.l.b16 %v330
      %v619 = vunpack.c.l.b16 %v331
      %v620 = vunpack.c.l.b16 %v332
      %v621 = vunpack.c.l.b16 %v333
      %v622 = vunpack.c.l.b16 %v334
      %v623 = vunpack.c.l.b16 %v335
      %v624 = vunpack.c.l.b16 %v336
      %v625 = vunpack.c.l.b16 %v337
      %v626 = vunpack.c.l.b16 %v338
      %v627 = vunpack.c.l.b16 %v339
      %v628 = vunpack.c.l.b16 %v340
      %v629 = vunpack.c.l.b16 %v341
      %v630 = vunpack.c.l.b16 %v342
      %v631 = vunpack.c.l.b16 %v343
      %v632 = vunpack.c.l.b16 %v344
      %v633 = vunpack.c.l.b16 %v345
      %v634 = vunpack.c.l.b16 %v346
      %v635 = vunpack.c.l.b16 %v347
      %v636 = vpack.c.b16 %v573, %v572
      %v637 = vpack.c.b16 %v575, %v574
      %v638 = vpack.c.b16 %v577, %v576
      %v639 = vpack.c.b16 %v579, %v578
      %v640 = vpack.c.b16 %v581, %v580
      %v641 = vpack.c.b16 %v583, %v582
      %v642 = vpack.c.b16 %v585, %v584
      %v643 = vpack.c.b16 %v587, %v586
      %v644 = vpack.c.b16 %v589, %v588
      %v645 = vpack.c.b16 %v591, %v590
      %v646 = vpack.c.b16 %v593, %v592
      %v647 = vpack.c.b16 %v595, %v594
      %v648 = vpack.c.b16 %v597, %v596
      %v649 = vpack.c.b16 %v599, %v598
      %v650 = vpack.c.b16 %v601, %v600
      %v651 = vpack.c.b16 %v603, %v602
      %v652 = vpack.c.b16 %v605, %v604
      %v653 = vpack.c.b16 %v607, %v606
      %v654 = vpack.c.b16 %v609, %v608
      %v655 = vpack.c.b16 %v611, %v610
      %v656 = vpack.c.b16 %v613, %v612
      %v657 = vpack.c.b16 %v615, %v614
      %v658 = vpack.c.b16 %v617, %v616
      %v659 = vpack.c.b16 %v619, %v618
      %v660 = vpack.c.b16 %v621, %v620
      %v661 = vpack.c.b16 %v623, %v622
      %v662 = vpack.c.b16 %v625, %v624
      %v663 = vpack.c.b16 %v627, %v626
      %v664 = vpack.c.b16 %v629, %v628
      %v665 = vpack.c.b16 %v631, %v630
      %v666 = vpack.c.b16 %v633, %v632
      %v667 = vpack.c.b16 %v635, %v634
      %700 = vmatpush.bf16.msra.mxu0 %v643
      %701 = vmatpush.bf16.msra.mxu0 %v642
      %702 = vmatpush.bf16.msra.mxu0 %v641
      %703 = vmatpush.bf16.msra.mxu0 %v640
      %704 = vmatpush.bf16.msra.mxu0 %v639
      %705 = vmatpush.bf16.msra.mxu0 %v638
      %706 = vmatpush.bf16.msra.mxu0 %v637
      %707 = vmatpush.bf16.msra.mxu0 %v636
      %708 = vmatmul.bf16.gmra.mxu0 %v444
      %v709 = vpop.f32.mrf.mxu0
      %v710 = vadd.f32 0.0, %v709
      %v711 = vpop.f32.mrf.mxu0
      %v712 = vadd.f32 0.0, %v711
      %713 = vmatmul.bf16.gmra.mxu0 %v448
      %v714 = vpop.f32.mrf.mxu0
      %v715 = vadd.f32 0.0, %v714
      %v716 = vpop.f32.mrf.mxu0
      %v717 = vadd.f32 0.0, %v716
      %718 = vmatmul.bf16.gmra.mxu0 %v452
      %v719 = vpop.f32.mrf.mxu0
      %v720 = vadd.f32 0.0, %v719
      %v721 = vpop.f32.mrf.mxu0
      %v722 = vadd.f32 0.0, %v721
      %723 = vmatmul.bf16.gmra.mxu0 %v456
      %v724 = vpop.f32.mrf.mxu0
      %v725 = vadd.f32 0.0, %v724
      %v726 = vpop.f32.mrf.mxu0
      %v727 = vadd.f32 0.0, %v726
      %728 = vmatmul.bf16.gmra.mxu0 %v460
      %v729 = vpop.f32.mrf.mxu0
      %v730 = vadd.f32 0.0, %v729
      %v731 = vpop.f32.mrf.mxu0
      %v732 = vadd.f32 0.0, %v731
      %733 = vmatmul.bf16.gmra.mxu0 %v464
      %v734 = vpop.f32.mrf.mxu0
      %v735 = vadd.f32 0.0, %v734
      %v736 = vpop.f32.mrf.mxu0
      %v737 = vadd.f32 0.0, %v736
      %738 = vmatmul.bf16.gmra.mxu0 %v468
      %v739 = vpop.f32.mrf.mxu0
      %v740 = vadd.f32 0.0, %v739
      %v741 = vpop.f32.mrf.mxu0
      %v742 = vadd.f32 0.0, %v741
      %743 = vmatmul.bf16.gmra.mxu0 %v472
      %v744 = vpop.f32.mrf.mxu0
      %v745 = vadd.f32 0.0, %v744
      %v746 = vpop.f32.mrf.mxu0
      %v747 = vadd.f32 0.0, %v746
      %748 = vdwg.mxu0
      %749 = vmatpush.bf16.msra.mxu0 %v651
      %750 = vmatpush.bf16.msra.mxu0 %v650
      %751 = vmatpush.bf16.msra.mxu0 %v649
      %752 = vmatpush.bf16.msra.mxu0 %v648
      %753 = vmatpush.bf16.msra.mxu0 %v647
      %754 = vmatpush.bf16.msra.mxu0 %v646
      %755 = vmatpush.bf16.msra.mxu0 %v645
      %756 = vmatpush.bf16.msra.mxu0 %v644
      %757 = vmatmul.bf16.gmra.mxu0 %v445
      %v758 = vpop.f32.mrf.mxu0
      %v759 = vadd.f32 %v710, %v758
      %v760 = vpop.f32.mrf.mxu0
      %v761 = vadd.f32 %v712, %v760
      %762 = vmatmul.bf16.gmra.mxu0 %v449
      %v763 = vpop.f32.mrf.mxu0
      %v764 = vadd.f32 %v715, %v763
      %v765 = vpop.f32.mrf.mxu0
      %v766 = vadd.f32 %v717, %v765
      %767 = vmatmul.bf16.gmra.mxu0 %v453
      %v768 = vpop.f32.mrf.mxu0
      %v769 = vadd.f32 %v720, %v768
      %v770 = vpop.f32.mrf.mxu0
      %v771 = vadd.f32 %v722, %v770
      %772 = vmatmul.bf16.gmra.mxu0 %v457
      %v773 = vpop.f32.mrf.mxu0
      %v774 = vadd.f32 %v725, %v773
      %v775 = vpop.f32.mrf.mxu0
      %v776 = vadd.f32 %v727, %v775
      %777 = vmatmul.bf16.gmra.mxu0 %v461
      %v778 = vpop.f32.mrf.mxu0
      %v779 = vadd.f32 %v730, %v778
      %v780 = vpop.f32.mrf.mxu0
      %v781 = vadd.f32 %v732, %v780
      %782 = vmatmul.bf16.gmra.mxu0 %v465
      %v783 = vpop.f32.mrf.mxu0
      %v784 = vadd.f32 %v735, %v783
      %v785 = vpop.f32.mrf.mxu0
      %v786 = vadd.f32 %v737, %v785
      %787 = vmatmul.bf16.gmra.mxu0 %v469
      %v788 = vpop.f32.mrf.mxu0
      %v789 = vadd.f32 %v740, %v788
      %v790 = vpop.f32.mrf.mxu0
      %v791 = vadd.f32 %v742, %v790
      %792 = vmatmul.bf16.gmra.mxu0 %v473
      %v793 = vpop.f32.mrf.mxu0
      %v794 = vadd.f32 %v745, %v793
      %v795 = vpop.f32.mrf.mxu0
      %v796 = vadd.f32 %v747, %v795
      %797 = vdwg.mxu0
      %798 = vmatpush.bf16.msra.mxu0 %v659
      %799 = vmatpush.bf16.msra.mxu0 %v658
      %800 = vmatpush.bf16.msra.mxu0 %v657
      %801 = vmatpush.bf16.msra.mxu0 %v656
      %802 = vmatpush.bf16.msra.mxu0 %v655
      %803 = vmatpush.bf16.msra.mxu0 %v654
      %804 = vmatpush.bf16.msra.mxu0 %v653
      %805 = vmatpush.bf16.msra.mxu0 %v652
      %806 = vmatmul.bf16.gmra.mxu0 %v446
      %v807 = vpop.f32.mrf.mxu0
      %v808 = vadd.f32 %v759, %v807
      %v809 = vpop.f32.mrf.mxu0
      %v810 = vadd.f32 %v761, %v809
      %811 = vmatmul.bf16.gmra.mxu0 %v450
      %v812 = vpop.f32.mrf.mxu0
      %v813 = vadd.f32 %v764, %v812
      %v814 = vpop.f32.mrf.mxu0
      %v815 = vadd.f32 %v766, %v814
      %816 = vmatmul.bf16.gmra.mxu0 %v454
      %v817 = vpop.f32.mrf.mxu0
      %v818 = vadd.f32 %v769, %v817
      %v819 = vpop.f32.mrf.mxu0
      %v820 = vadd.f32 %v771, %v819
      %821 = vmatmul.bf16.gmra.mxu0 %v458
      %v822 = vpop.f32.mrf.mxu0
      %v823 = vadd.f32 %v774, %v822
      %v824 = vpop.f32.mrf.mxu0
      %v825 = vadd.f32 %v776, %v824
      %826 = vmatmul.bf16.gmra.mxu0 %v462
      %v827 = vpop.f32.mrf.mxu0
      %v828 = vadd.f32 %v779, %v827
      %v829 = vpop.f32.mrf.mxu0
      %v830 = vadd.f32 %v781, %v829
      %831 = vmatmul.bf16.gmra.mxu0 %v466
      %v832 = vpop.f32.mrf.mxu0
      %v833 = vadd.f32 %v784, %v832
      %v834 = vpop.f32.mrf.mxu0
      %v835 = vadd.f32 %v786, %v834
      %836 = vmatmul.bf16.gmra.mxu0 %v470
      %v837 = vpop.f32.mrf.mxu0
      %v838 = vadd.f32 %v789, %v837
      %v839 = vpop.f32.mrf.mxu0
      %v840 = vadd.f32 %v791, %v839
      %841 = vmatmul.bf16.gmra.mxu0 %v474
      %v842 = vpop.f32.mrf.mxu0
      %v843 = vadd.f32 %v794, %v842
      %v844 = vpop.f32.mrf.mxu0
      %v845 = vadd.f32 %v796, %v844
      %846 = vdwg.mxu0
      %847 = vmatpush.bf16.msra.mxu0 %v667
      %848 = vmatpush.bf16.msra.mxu0 %v666
      %849 = vmatpush.bf16.msra.mxu0 %v665
      %850 = vmatpush.bf16.msra.mxu0 %v664
      %851 = vmatpush.bf16.msra.mxu0 %v663
      %852 = vmatpush.bf16.msra.mxu0 %v662
      %853 = vmatpush.bf16.msra.mxu0 %v661
      %854 = vmatpush.bf16.msra.mxu0 %v660
      %855 = vmatmul.bf16.gmra.mxu0 %v447
      %v856 = vpop.f32.mrf.mxu0
      %v857 = vadd.f32 %v808, %v856
      %v858 = vpop.f32.mrf.mxu0
      %v859 = vadd.f32 %v810, %v858
      %860 = vmatmul.bf16.gmra.mxu0 %v451
      %v861 = vpop.f32.mrf.mxu0
      %v862 = vadd.f32 %v813, %v861
      %v863 = vpop.f32.mrf.mxu0
      %v864 = vadd.f32 %v815, %v863
      %865 = vmatmul.bf16.gmra.mxu0 %v455
      %v866 = vpop.f32.mrf.mxu0
      %v867 = vadd.f32 %v818, %v866
      %v868 = vpop.f32.mrf.mxu0
      %v869 = vadd.f32 %v820, %v868
      %870 = vmatmul.bf16.gmra.mxu0 %v459
      %v871 = vpop.f32.mrf.mxu0
      %v872 = vadd.f32 %v823, %v871
      %v873 = vpop.f32.mrf.mxu0
      %v874 = vadd.f32 %v825, %v873
      %875 = vmatmul.bf16.gmra.mxu0 %v463
      %v876 = vpop.f32.mrf.mxu0
      %v877 = vadd.f32 %v828, %v876
      %v878 = vpop.f32.mrf.mxu0
      %v879 = vadd.f32 %v830, %v878
      %880 = vmatmul.bf16.gmra.mxu0 %v467
      %v881 = vpop.f32.mrf.mxu0
      %v882 = vadd.f32 %v833, %v881
      %v883 = vpop.f32.mrf.mxu0
      %v884 = vadd.f32 %v835, %v883
      %885 = vmatmul.bf16.gmra.mxu0 %v471
      %v886 = vpop.f32.mrf.mxu0
      %v887 = vadd.f32 %v838, %v886
      %v888 = vpop.f32.mrf.mxu0
      %v889 = vadd.f32 %v840, %v888
      %890 = vmatmul.bf16.gmra.mxu0 %v475
      %v891 = vpop.f32.mrf.mxu0
      %v892 = vadd.f32 %v843, %v891
      %v893 = vpop.f32.mrf.mxu0
      %v894 = vadd.f32 %v845, %v893
      %895 = vdwg.mxu0
      %v896 = vpack.c.bf16 %v857, %v857
      %v897 = vpack.c.bf16 %v859, %v859
      %v898 = vpack.c.bf16 %v862, %v862
      %v899 = vpack.c.bf16 %v864, %v864
      %v900 = vpack.c.bf16 %v867, %v867
      %v901 = vpack.c.bf16 %v869, %v869
      %v902 = vpack.c.bf16 %v872, %v872
      %v903 = vpack.c.bf16 %v874, %v874
      %v904 = vpack.c.bf16 %v877, %v877
      %v905 = vpack.c.bf16 %v879, %v879
      %v906 = vpack.c.bf16 %v882, %v882
      %v907 = vpack.c.bf16 %v884, %v884
      %v908 = vpack.c.bf16 %v887, %v887
      %v909 = vpack.c.bf16 %v889, %v889
      %v910 = vpack.c.bf16 %v892, %v892
      %v911 = vpack.c.bf16 %v894, %v894
      %vm912 = vcmask 519168
      %913 = vst.msk [vmem:[%s243] sm:$0xf] %vm912, %v896
      %914 = vst.msk [vmem:[%s243 + $0x4] sm:$0xf] %vm912, %v897
      %915 = vst.msk [vmem:[%s243 + $0x8] sm:$0xf] %vm912, %v898
      %916 = vst.msk [vmem:[%s243 + $0xc] sm:$0xf] %vm912, %v899
      %917 = vst.msk [vmem:[%s243 + $0x10] sm:$0xf] %vm912, %v900
      %918 = vst.msk [vmem:[%s243 + $0x14] sm:$0xf] %vm912, %v901
      %919 = vst.msk [vmem:[%s243 + $0x18] sm:$0xf] %vm912, %v902
      %920 = vst.msk [vmem:[%s243 + $0x1c] sm:$0xf] %vm912, %v903
      %921 = vst.msk [vmem:[%s243 + $0x20] sm:$0xf] %vm912, %v904
      %922 = vst.msk [vmem:[%s243 + $0x24] sm:$0xf] %vm912, %v905
      %923 = vst.msk [vmem:[%s243 + $0x28] sm:$0xf] %vm912, %v906
      %924 = vst.msk [vmem:[%s243 + $0x2c] sm:$0xf] %vm912, %v907
      %925 = vst.msk [vmem:[%s243 + $0x30] sm:$0xf] %vm912, %v908
      %926 = vst.msk [vmem:[%s243 + $0x34] sm:$0xf] %vm912, %v909
      %927 = vst.msk [vmem:[%s243 + $0x38] sm:$0xf] %vm912, %v910
      %928 = vst.msk [vmem:[%s243 + $0x3c] sm:$0xf] %vm912, %v911
      %vm929 = vcmask 523264
      %v930 = vsel %vm929, %v857, 0.0
      %v931 = vsel %vm929, %v859, 0.0
      %v932 = vadd.f32 %v930, %v931
      %v933 = vsel %vm929, %v862, 0.0
      %v934 = vadd.f32 %v932, %v933
      %v935 = vsel %vm929, %v864, 0.0
      %v936 = vadd.f32 %v934, %v935
      %v937 = vsel %vm929, %v867, 0.0
      %v938 = vadd.f32 %v936, %v937
      %v939 = vsel %vm929, %v869, 0.0
      %v940 = vadd.f32 %v938, %v939
      %v941 = vsel %vm929, %v872, 0.0
      %v942 = vadd.f32 %v940, %v941
      %v943 = vsel %vm929, %v874, 0.0
      %v944 = vadd.f32 %v942, %v943
      %v945 = vsel %vm929, %v877, 0.0
      %v946 = vadd.f32 %v944, %v945
      %v947 = vsel %vm929, %v879, 0.0
      %v948 = vadd.f32 %v946, %v947
      %v949 = vsel %vm929, %v882, 0.0
      %v950 = vadd.f32 %v948, %v949
      %v951 = vsel %vm929, %v884, 0.0
      %v952 = vadd.f32 %v950, %v951
      %v953 = vsel %vm929, %v887, 0.0
      %v954 = vadd.f32 %v952, %v953
      %v955 = vsel %vm929, %v889, 0.0
      %v956 = vadd.f32 %v954, %v955
      %v957 = vsel %vm929, %v892, 0.0
      %v958 = vadd.f32 %v956, %v957
      %v959 = vsel %vm929, %v894, 0.0
      %v960 = vadd.f32 %v958, %v959
      %v961 = vrot.slane %v960, 4
      %v962 = vadd.f32 %v960, %v961
      %v963 = vrot.slane %v962, 2
      %v964 = vadd.f32 %v962, %v963
      %v965 = vrot.slane %v964, 1
      %v966 = vadd.f32 %v964, %v965
      %v967 = vmul.f32 %v857, %v857
      %v968 = vmul.f32 %v859, %v859
      %v969 = vmul.f32 %v862, %v862
      %v970 = vmul.f32 %v864, %v864
      %v971 = vmul.f32 %v867, %v867
      %v972 = vmul.f32 %v869, %v869
      %v973 = vmul.f32 %v872, %v872
      %v974 = vmul.f32 %v874, %v874
      %v975 = vmul.f32 %v877, %v877
      %v976 = vmul.f32 %v879, %v879
      %v977 = vmul.f32 %v882, %v882
      %v978 = vmul.f32 %v884, %v884
      %v979 = vmul.f32 %v887, %v887
      %v980 = vmul.f32 %v889, %v889
      %v981 = vmul.f32 %v892, %v892
      %v982 = vmul.f32 %v894, %v894
      %v983 = vsel %vm929, %v967, 0.0
      %v984 = vsel %vm929, %v968, 0.0
      %v985 = vadd.f32 %v983, %v984
      %v986 = vsel %vm929, %v969, 0.0
      %v987 = vadd.f32 %v985, %v986
      %v988 = vsel %vm929, %v970, 0.0
      %v989 = vadd.f32 %v987, %v988
      %v990 = vsel %vm929, %v971, 0.0
      %v991 = vadd.f32 %v989, %v990
      %v992 = vsel %vm929, %v972, 0.0
      %v993 = vadd.f32 %v991, %v992
      %v994 = vsel %vm929, %v973, 0.0
      %v995 = vadd.f32 %v993, %v994
      %v996 = vsel %vm929, %v974, 0.0
      %v997 = vadd.f32 %v995, %v996
      %v998 = vsel %vm929, %v975, 0.0
      %v999 = vadd.f32 %v997, %v998
      %v1000 = vsel %vm929, %v976, 0.0
      %v1001 = vadd.f32 %v999, %v1000
      %v1002 = vsel %vm929, %v977, 0.0
      %v1003 = vadd.f32 %v1001, %v1002
      %v1004 = vsel %vm929, %v978, 0.0
      %v1005 = vadd.f32 %v1003, %v1004
      %v1006 = vsel %vm929, %v979, 0.0
      %v1007 = vadd.f32 %v1005, %v1006
      %v1008 = vsel %vm929, %v980, 0.0
      %v1009 = vadd.f32 %v1007, %v1008
      %v1010 = vsel %vm929, %v981, 0.0
      %v1011 = vadd.f32 %v1009, %v1010
      %v1012 = vsel %vm929, %v982, 0.0
      %v1013 = vadd.f32 %v1011, %v1012
      %v1014 = vrot.slane %v1013, 4
      %v1015 = vadd.f32 %v1013, %v1014
      %v1016 = vrot.slane %v1015, 2
      %v1017 = vadd.f32 %v1015, %v1016
      %v1018 = vrot.slane %v1017, 1
      %v1019 = vadd.f32 %v1017, %v1018
      %vm1020 = vcmask 1040384
      %v1021 = vsel %vm1020, %v966, %v1019
      %vm1022 = vcmask 1041408
      %v1023 = vsel %vm1022, %v1021, 0.0
      %1024 = vst.msk [vmem:[%s251] sm:$0xff] %vm929, %v1023
      %s1025 = smul.u32 16, %s20
      %p1026 = scmp.lt.s32.totalorder %s19, 3
      %s1027 = scalar_select %p1026, %s19, 3
      %p1028 = scmp.lt.s32.totalorder %s1025, 15
      %s1029 = scalar_select %p1028, %s1025, 15
      %s1030 = smul.addr %s1027, 16
      %s1031 = sadd.s32 %s1029, %s1030
      %s1032 = smul.addr %s1031, 4
      %s1033 = scalar_lea.vmem %s2, %s1032
      %p1034 = scmp.lt.s32.totalorder %s19, 3
      %s1035 = scalar_select %p1034, %s19, 3
      %p1036 = scmp.lt.s32.totalorder %s20, 0
      %s1037 = scalar_select %p1036, %s20, 0
      %s1038 = sadd.s32 %s1037, %s1035
      %s1039 = smul.addr %s1038, 8
      %s1040 = scalar_lea.vmem %s3, %s1039
      // Predicated region
      $region29: #{generator_forward.13} parent=27 // pred_check
        %p1041 = pneg %p101
      $region30: #{generator_forward.13} parent=27 // pred_check_branch
        %1043 = sbr.rel (%p1041) target = $region32
      $region31: #{generator_forward.13} parent=27 // pred_region
        %s1044 = smul.u32 16, %s20
      $region32: #{generator_forward.13} parent=27 // pred_fallthru
        _
      // Predicated region
      $region33: #{generator_forward.13} parent=27 // pred_check
        %p1045 = pneg %p129
      $region34: #{generator_forward.13} parent=27 // pred_check_branch
        %1047 = sbr.rel (%p1045) target = $region36
      $region35: #{generator_forward.13} parent=27 // pred_region
        _
      $region36: #{generator_forward.13} parent=27 // pred_fallthru
        _
    $region28: #{generator_forward.13} parent=5 // pred_fallthru
      _
    %p1048 = scmp.le.s32.totalorder 2, %s10
    // Predicated region
    $region37: #{generator_forward.13} parent=5 // pred_check
      %p1049 = pneg %p1048
    $region38: #{generator_forward.13} parent=5 // pred_check_branch
      %1051 = sbr.rel (%p1049) target = $region40
    $region39: #{generator_forward.13} parent=5 // pred_region
      %s1052 = ssub.s32 %s10, 2
      // Predicated region
      $region41: #{generator_forward.13} parent=39 // pred_check
        %p1053 = pneg %p107
      $region42: #{generator_forward.13} parent=39 // pred_check_branch
        %1055 = sbr.rel (%p1053) target = $region44
      $region43: #{generator_forward.13} parent=39 // pred_region
        %s1056 = smul.u32 16, %s22
        %p1057 = scmp.lt.s32.totalorder %s21, 3
        %s1058 = scalar_select %p1057, %s21, 3
        %p1059 = scmp.lt.s32.totalorder %s1056, 15
        %s1060 = scalar_select %p1059, %s1056, 15
        %s1061 = smul.addr %s1058, 16
        %s1062 = sadd.s32 %s1060, %s1061
        %s1063 = smul.addr %s1062, 4
        %s1064 = scalar_lea.vmem %s2, %s1063
      $region44: #{generator_forward.13} parent=39 // pred_fallthru
        _
      // Predicated region
      $region45: #{generator_forward.13} parent=39 // pred_check
        %p1065 = pneg %p135
      $region46: #{generator_forward.13} parent=39 // pred_check_branch
        %1067 = sbr.rel (%p1065) target = $region48
      $region47: #{generator_forward.13} parent=39 // pred_region
        %p1068 = scmp.lt.s32.totalorder %s21, 3
        %s1069 = scalar_select %p1068, %s21, 3
        %p1070 = scmp.lt.s32.totalorder %s22, 0
        %s1071 = scalar_select %p1070, %s22, 0
        %s1072 = sadd.s32 %s1071, %s1069
        %s1073 = smul.addr %s1072, 8
        %s1074 = scalar_lea.vmem %s3, %s1073
      $region48: #{generator_forward.13} parent=39 // pred_fallthru
        _
    $region40: #{generator_forward.13} parent=5 // pred_fallthru
      _
  $region6: #{generator_forward.13} parent=0 // loop_footer
    %s14 = sadd.s32 1, %s10
  $region7: #{generator_forward.13} parent=0 // loop_footer_branch
    %9 = sbr.rel target = $region3
  $region8: #{generator_forward.13} parent=0 // loop_exit
    _

// kernel: generator_forward.14
$region0: #{generator_forward.14}
  #allocation0 [shape = 'u32[]', space=smem, size = 0x4, offset = 0x4, fixed_abs, tag = 'smem constant byte address 0x4 - core index']
  #allocation1 [shape = 'u32[72,128]{1,0:T(1,128)}', space=vmem, size = 0x9000, scoped, tag = 'internal scratch']
  %s0 = inlined_call_operand.vmem [shape: bf16[256,128], index: 0, kind: input, shape index: {}]
  %s1 = inlined_call_operand.vmem [shape: f32[1,128], index: 1, kind: input, shape index: {}]
  %s2 = inlined_call_operand.vmem [shape: f32[1,128], index: 2, kind: input, shape index: {}]
  %s3 = inlined_call_operand.vmem [shape: bf16[256,128], index: 3, kind: output, shape index: {}]
  %s4 = sld [smem:[#allocation0]]
  $region22: #{generator_forward.14} parent=0
    _
  %s6 = ssub.s32 1, %s4
  %s7 = scalar_select 0, %s6, %s4
  // Predicated region
  $region2: #{generator_forward.14} parent=0 // pred_check
    _
  $region3: #{generator_forward.14} parent=0 // pred_check_branch
    %9 = sbr.rel (0) target = $region5
  $region4: #{generator_forward.14} parent=0 // pred_region
    _
  $region5: #{generator_forward.14} parent=0 // pred_fallthru
    _
  // Predicated region
  $region6: #{generator_forward.14} parent=0 // pred_check
    _
  $region7: #{generator_forward.14} parent=0 // pred_check_branch
    %11 = sbr.rel (0) target = $region9
  $region8: #{generator_forward.14} parent=0 // pred_region
    _
  $region9: #{generator_forward.14} parent=0 // pred_fallthru
    _
  // Predicated region
  $region10: #{generator_forward.14} parent=0 // pred_check
    _
  $region11: #{generator_forward.14} parent=0 // pred_check_branch
    %13 = sbr.rel (0) target = $region13
  $region12: #{generator_forward.14} parent=0 // pred_region
    _
  $region13: #{generator_forward.14} parent=0 // pred_fallthru
    _
  %v14 = vld [vmem:[%s0] sm:$0xf]
  %v15 = vld [vmem:[%s0 + $0x4] sm:$0xf]
  %v16 = vld [vmem:[%s0 + $0x8] sm:$0xf]
  %v17 = vld [vmem:[%s0 + $0xc] sm:$0xf]
  %v18 = vld [vmem:[%s0 + $0x10] sm:$0xf]
  %v19 = vld [vmem:[%s0 + $0x14] sm:$0xf]
  %v20 = vld [vmem:[%s0 + $0x18] sm:$0xf]
  %v21 = vld [vmem:[%s0 + $0x1c] sm:$0xf]
  %v22 = vld [vmem:[%s0 + $0x20] sm:$0xf]
  %v23 = vld [vmem:[%s0 + $0x24] sm:$0xf]
  %v24 = vld [vmem:[%s0 + $0x28] sm:$0xf]
  %v25 = vld [vmem:[%s0 + $0x2c] sm:$0xf]
  %v26 = vld [vmem:[%s0 + $0x30] sm:$0xf]
  %v27 = vld [vmem:[%s0 + $0x34] sm:$0xf]
  %v28 = vld [vmem:[%s0 + $0x38] sm:$0xf]
  %v29 = vld [vmem:[%s0 + $0x3c] sm:$0xf]
  %v30 = vld [vmem:[%s0 + $0x40] sm:$0xf]
  %v31 = vld [vmem:[%s0 + $0x44] sm:$0xf]
  %v32 = vld [vmem:[%s0 + $0x48] sm:$0xf]
  %v33 = vld [vmem:[%s0 + $0x4c] sm:$0xf]
  %v34 = vld [vmem:[%s0 + $0x50] sm:$0xf]
  %v35 = vld [vmem:[%s0 + $0x54] sm:$0xf]
  %v36 = vld [vmem:[%s0 + $0x58] sm:$0xf]
  %v37 = vld [vmem:[%s0 + $0x5c] sm:$0xf]
  %v38 = vld [vmem:[%s0 + $0x60] sm:$0xf]
  %v39 = vld [vmem:[%s0 + $0x64] sm:$0xf]
  %v40 = vld [vmem:[%s0 + $0x68] sm:$0xf]
  %v41 = vld [vmem:[%s0 + $0x6c] sm:$0xf]
  %v42 = vld [vmem:[%s0 + $0x70] sm:$0xf]
  %v43 = vld [vmem:[%s0 + $0x74] sm:$0xf]
  %v44 = vld [vmem:[%s0 + $0x78] sm:$0xf]
  %v45 = vld [vmem:[%s0 + $0x7c] sm:$0xf]
  %v46 = vunpack.c.l.bf16 %v14
  %v47 = vunpack.c.l.bf16 %v15
  %v48 = vunpack.c.l.bf16 %v16
  %v49 = vunpack.c.l.bf16 %v17
  %v50 = vunpack.c.l.bf16 %v18
  %v51 = vunpack.c.l.bf16 %v19
  %v52 = vunpack.c.l.bf16 %v20
  %v53 = vunpack.c.l.bf16 %v21
  %v54 = vunpack.c.l.bf16 %v22
  %v55 = vunpack.c.l.bf16 %v23
  %v56 = vunpack.c.l.bf16 %v24
  %v57 = vunpack.c.l.bf16 %v25
  %v58 = vunpack.c.l.bf16 %v26
  %v59 = vunpack.c.l.bf16 %v27
  %v60 = vunpack.c.l.bf16 %v28
  %v61 = vunpack.c.l.bf16 %v29
  %v62 = vunpack.c.l.bf16 %v30
  %v63 = vunpack.c.l.bf16 %v31
  %v64 = vunpack.c.l.bf16 %v32
  %v65 = vunpack.c.l.bf16 %v33
  %v66 = vunpack.c.l.bf16 %v34
  %v67 = vunpack.c.l.bf16 %v35
  %v68 = vunpack.c.l.bf16 %v36
  %v69 = vunpack.c.l.bf16 %v37
  %v70 = vunpack.c.l.bf16 %v38
  %v71 = vunpack.c.l.bf16 %v39
  %v72 = vunpack.c.l.bf16 %v40
  %v73 = vunpack.c.l.bf16 %v41
  %v74 = vunpack.c.l.bf16 %v42
  %v75 = vunpack.c.l.bf16 %v43
  %v76 = vunpack.c.l.bf16 %v44
  %v77 = vunpack.c.l.bf16 %v45
  %v78 = vld [vmem:[%s1] sm:$0x1]
  %v80 = vperm.slane %v78, 0
  %v82 = vmul.f32 %v46, %v80
  %v83 = vmul.f32 %v47, %v80
  %v84 = vmul.f32 %v48, %v80
  %v85 = vmul.f32 %v49, %v80
  %v86 = vmul.f32 %v50, %v80
  %v87 = vmul.f32 %v51, %v80
  %v88 = vmul.f32 %v52, %v80
  %v89 = vmul.f32 %v53, %v80
  %v90 = vmul.f32 %v54, %v80
  %v91 = vmul.f32 %v55, %v80
  %v92 = vmul.f32 %v56, %v80
  %v93 = vmul.f32 %v57, %v80
  %v94 = vmul.f32 %v58, %v80
  %v95 = vmul.f32 %v59, %v80
  %v96 = vmul.f32 %v60, %v80
  %v97 = vmul.f32 %v61, %v80
  %v98 = vmul.f32 %v62, %v80
  %v99 = vmul.f32 %v63, %v80
  %v100 = vmul.f32 %v64, %v80
  %v101 = vmul.f32 %v65, %v80
  %v102 = vmul.f32 %v66, %v80
  %v103 = vmul.f32 %v67, %v80
  %v104 = vmul.f32 %v68, %v80
  %v105 = vmul.f32 %v69, %v80
  %v106 = vmul.f32 %v70, %v80
  %v107 = vmul.f32 %v71, %v80
  %v108 = vmul.f32 %v72, %v80
  %v109 = vmul.f32 %v73, %v80
  %v110 = vmul.f32 %v74, %v80
  %v111 = vmul.f32 %v75, %v80
  %v112 = vmul.f32 %v76, %v80
  %v113 = vmul.f32 %v77, %v80
  %v114 = vld [vmem:[%s2] sm:$0x1]
  %v116 = vperm.slane %v114, 0
  %v118 = vadd.f32 %v82, %v116
  %v119 = vadd.f32 %v83, %v116
  %v120 = vadd.f32 %v84, %v116
  %v121 = vadd.f32 %v85, %v116
  %v122 = vadd.f32 %v86, %v116
  %v123 = vadd.f32 %v87, %v116
  %v124 = vadd.f32 %v88, %v116
  %v125 = vadd.f32 %v89, %v116
  %v126 = vadd.f32 %v90, %v116
  %v127 = vadd.f32 %v91, %v116
  %v128 = vadd.f32 %v92, %v116
  %v129 = vadd.f32 %v93, %v116
  %v130 = vadd.f32 %v94, %v116
  %v131 = vadd.f32 %v95, %v116
  %v132 = vadd.f32 %v96, %v116
  %v133 = vadd.f32 %v97, %v116
  %v134 = vadd.f32 %v98, %v116
  %v135 = vadd.f32 %v99, %v116
  %v136 = vadd.f32 %v100, %v116
  %v137 = vadd.f32 %v101, %v116
  %v138 = vadd.f32 %v102, %v116
  %v139 = vadd.f32 %v103, %v116
  %v140 = vadd.f32 %v104, %v116
  %v141 = vadd.f32 %v105, %v116
  %v142 = vadd.f32 %v106, %v116
  %v143 = vadd.f32 %v107, %v116
  %v144 = vadd.f32 %v108, %v116
  %v145 = vadd.f32 %v109, %v116
  %v146 = vadd.f32 %v110, %v116
  %v147 = vadd.f32 %v111, %v116
  %v148 = vadd.f32 %v112, %v116
  %v149 = vadd.f32 %v113, %v116
  %v150 = vmax.f32 %v118, 0.0
  %v151 = vmax.f32 %v119, 0.0
  %v152 = vmax.f32 %v120, 0.0
  %v153 = vmax.f32 %v121, 0.0
  %v154 = vmax.f32 %v122, 0.0
  %v155 = vmax.f32 %v123, 0.0
  %v156 = vmax.f32 %v124, 0.0
  %v157 = vmax.f32 %v125, 0.0
  %v158 = vmax.f32 %v126, 0.0
  %v159 = vmax.f32 %v127, 0.0
  %v160 = vmax.f32 %v128, 0.0
  %v161 = vmax.f32 %v129, 0.0
  %v162 = vmax.f32 %v130, 0.0
  %v163 = vmax.f32 %v131, 0.0
  %v164 = vmax.f32 %v132, 0.0
  %v165 = vmax.f32 %v133, 0.0
  %v166 = vmax.f32 %v134, 0.0
  %v167 = vmax.f32 %v135, 0.0
  %v168 = vmax.f32 %v136, 0.0
  %v169 = vmax.f32 %v137, 0.0
  %v170 = vmax.f32 %v138, 0.0
  %v171 = vmax.f32 %v139, 0.0
  %v172 = vmax.f32 %v140, 0.0
  %v173 = vmax.f32 %v141, 0.0
  %v174 = vmax.f32 %v142, 0.0
  %v175 = vmax.f32 %v143, 0.0
  %v176 = vmax.f32 %v144, 0.0
  %v177 = vmax.f32 %v145, 0.0
  %v178 = vmax.f32 %v146, 0.0
  %v179 = vmax.f32 %v147, 0.0
  %v180 = vmax.f32 %v148, 0.0
  %v181 = vmax.f32 %v149, 0.0
  %v182 = vpack.c.bf16 %v150, %v150
  %v183 = vpack.c.bf16 %v151, %v151
  %v184 = vpack.c.bf16 %v152, %v152
  %v185 = vpack.c.bf16 %v153, %v153
  %v186 = vpack.c.bf16 %v154, %v154
  %v187 = vpack.c.bf16 %v155, %v155
  %v188 = vpack.c.bf16 %v156, %v156
  %v189 = vpack.c.bf16 %v157, %v157
  %v190 = vpack.c.bf16 %v158, %v158
  %v191 = vpack.c.bf16 %v159, %v159
  %v192 = vpack.c.bf16 %v160, %v160
  %v193 = vpack.c.bf16 %v161, %v161
  %v194 = vpack.c.bf16 %v162, %v162
  %v195 = vpack.c.bf16 %v163, %v163
  %v196 = vpack.c.bf16 %v164, %v164
  %v197 = vpack.c.bf16 %v165, %v165
  %v198 = vpack.c.bf16 %v166, %v166
  %v199 = vpack.c.bf16 %v167, %v167
  %v200 = vpack.c.bf16 %v168, %v168
  %v201 = vpack.c.bf16 %v169, %v169
  %v202 = vpack.c.bf16 %v170, %v170
  %v203 = vpack.c.bf16 %v171, %v171
  %v204 = vpack.c.bf16 %v172, %v172
  %v205 = vpack.c.bf16 %v173, %v173
  %v206 = vpack.c.bf16 %v174, %v174
  %v207 = vpack.c.bf16 %v175, %v175
  %v208 = vpack.c.bf16 %v176, %v176
  %v209 = vpack.c.bf16 %v177, %v177
  %v210 = vpack.c.bf16 %v178, %v178
  %v211 = vpack.c.bf16 %v179, %v179
  %v212 = vpack.c.bf16 %v180, %v180
  %v213 = vpack.c.bf16 %v181, %v181
  %214 = vst [vmem:[%s3] sm:$0xf] %v182
  %215 = vst [vmem:[%s3 + $0x4] sm:$0xf] %v183
  %216 = vst [vmem:[%s3 + $0x8] sm:$0xf] %v184
  %217 = vst [vmem:[%s3 + $0xc] sm:$0xf] %v185
  %218 = vst [vmem:[%s3 + $0x10] sm:$0xf] %v186
  %219 = vst [vmem:[%s3 + $0x14] sm:$0xf] %v187
  %220 = vst [vmem:[%s3 + $0x18] sm:$0xf] %v188
  %221 = vst [vmem:[%s3 + $0x1c] sm:$0xf] %v189
  %222 = vst [vmem:[%s3 + $0x20] sm:$0xf] %v190
  %223 = vst [vmem:[%s3 + $0x24] sm:$0xf] %v191
  %224 = vst [vmem:[%s3 + $0x28] sm:$0xf] %v192
  %225 = vst [vmem:[%s3 + $0x2c] sm:$0xf] %v193
  %226 = vst [vmem:[%s3 + $0x30] sm:$0xf] %v194
  %227 = vst [vmem:[%s3 + $0x34] sm:$0xf] %v195
  %228 = vst [vmem:[%s3 + $0x38] sm:$0xf] %v196
  %229 = vst [vmem:[%s3 + $0x3c] sm:$0xf] %v197
  %230 = vst [vmem:[%s3 + $0x40] sm:$0xf] %v198
  %231 = vst [vmem:[%s3 + $0x44] sm:$0xf] %v199
  %232 = vst [vmem:[%s3 + $0x48] sm:$0xf] %v200
  %233 = vst [vmem:[%s3 + $0x4c] sm:$0xf] %v201
  %234 = vst [vmem:[%s3 + $0x50] sm:$0xf] %v202
  %235 = vst [vmem:[%s3 + $0x54] sm:$0xf] %v203
  %236 = vst [vmem:[%s3 + $0x58] sm:$0xf] %v204
  %237 = vst [vmem:[%s3 + $0x5c] sm:$0xf] %v205
  %238 = vst [vmem:[%s3 + $0x60] sm:$0xf] %v206
  %239 = vst [vmem:[%s3 + $0x64] sm:$0xf] %v207
  %240 = vst [vmem:[%s3 + $0x68] sm:$0xf] %v208
  %241 = vst [vmem:[%s3 + $0x6c] sm:$0xf] %v209
  %242 = vst [vmem:[%s3 + $0x70] sm:$0xf] %v210
  %243 = vst [vmem:[%s3 + $0x74] sm:$0xf] %v211
  %244 = vst [vmem:[%s3 + $0x78] sm:$0xf] %v212
  %245 = vst [vmem:[%s3 + $0x7c] sm:$0xf] %v213
  // Predicated region
  $region14: #{generator_forward.14} parent=0 // pred_check
    _
  $region15: #{generator_forward.14} parent=0 // pred_check_branch
    %247 = sbr.rel (0) target = $region17
  $region16: #{generator_forward.14} parent=0 // pred_region
    _
  $region17: #{generator_forward.14} parent=0 // pred_fallthru
    _
  // Predicated region
  $region18: #{generator_forward.14} parent=0 // pred_check
    _
  $region19: #{generator_forward.14} parent=0 // pred_check_branch
    %249 = sbr.rel (0) target = $region21
  $region20: #{generator_forward.14} parent=0 // pred_region
    _
  $region21: #{generator_forward.14} parent=0 // pred_fallthru
    _

// kernel: tile.73
$region0: #{tile.73}
  #allocation0 [shape = 's32[1]{0}', space=sflag, size = 0x4, scoped, tag = 'scoped memory for tile.73']
  %s0 = inlined_call_operand.vmem [shape: f32[32], index: 0, kind: input, shape index: {}]
  %s1 = inlined_call_operand.vmem [shape: f32[4,32], index: 1, kind: output, shape index: {}]
  // Predicated region
  $region2: #{tile.73} parent=0 // pred_check
    _
  $region3: #{tile.73} parent=0 // pred_check_branch
    %3 = sbr.rel (0) target = $region5
  $region4: #{tile.73} parent=0 // pred_region
    _
  $region5: #{tile.73} parent=0 // pred_fallthru
    _
  %v4 = vld [vmem:[%s0] ss:$0 sm:$0xff]
  %5 = vst [vmem:[%s1] sm:$0xf] %v4

// kernel: tile.78
$region0: #{tile.78}
  %s0 = inlined_call_operand.vmem [shape: f32[4,32], index: 0, kind: input, shape index: {}]
  %s1 = inlined_call_operand.vmem [shape: f32[1,128], index: 1, kind: output, shape index: {}]
  $region1: #{tile.78} parent=0
    #allocation0 [shape = 'u8[4096]{0}', space=vmem, size = 0x1000, scoped, tag = 'scoped mem for output reshape']
    #allocation1 [shape = 'u8[4096]{0}', space=vmem, size = 0x1000, scoped, tag = 'scoped mem for input reshape']
    %s3 = ssub.s32 16, 1
    %v4 = vld [vmem:[%s0] sm:%s3]
    %5 = vst [vmem:[#allocation1] sm:%s3] %v4
    %v6 = vld [vmem:[#allocation1] sm:$0x1]
    %vm7 = vcmask 261120
    %8 = vst.msk [vmem:[#allocation0] sm:$0x1] %vm7, %v6
    %s9 = scalar_lea.vmem [#allocation1], 3
    %v10 = vld [vmem:[%s9] sm:$0x1]
    %11 = vrot.lane.b32.xlu0 %v10, 96
    %v12 = vpop.permute.xlu0 %11
    %vm13 = vcmask 1048320
    %14 = vst.msk [vmem:[#allocation0] sm:$0x1] %vm13, %v12
    %s15 = scalar_lea.vmem [#allocation1], 2
    %v16 = vld [vmem:[%s15] sm:$0x1]
    %17 = vrot.lane.b32.xlu0 %v16, 64
    %v18 = vpop.permute.xlu0 %17
    %vm19 = vcmask 785920
    %20 = vst.msk [vmem:[#allocation0] sm:$0x1] %vm19, %v18
    %s21 = scalar_lea.vmem [#allocation1], 1
    %v22 = vld [vmem:[%s21] sm:$0x1]
    %23 = vrot.lane.b32.xlu0 %v22, 32
    %v24 = vpop.permute.xlu0 %23
    %vm25 = vcmask 523520
    %26 = vst.msk [vmem:[#allocation0] sm:$0x1] %vm25, %v24
    %s28 = ssub.s32 2, 1
    %v29 = vld [vmem:[#allocation0] sm:%s28]
    %s31 = ssub.s32 2, 1
    %32 = vst [vmem:[%s1] sm:%s31] %v29

// kernel: generator_forward.16
$region0: #{generator_forward.16}
  #allocation0 [shape = 'u32[]', space=smem, size = 0x4, offset = 0x4, fixed_abs, tag = 'smem constant byte address 0x4 - core index']
  #allocation1 [shape = 'u32[72,128]{1,0:T(1,128)}', space=vmem, size = 0x9000, scoped, tag = 'internal scratch']
  %s0 = inlined_call_operand.vmem [shape: bf16[128,128], index: 0, kind: input, shape index: {}]
  %s1 = inlined_call_operand.vmem [shape: f32[1,128], index: 1, kind: input, shape index: {}]
  %s2 = inlined_call_operand.vmem [shape: f32[1,128], index: 2, kind: input, shape index: {}]
  %s3 = inlined_call_operand.vmem [shape: bf16[128,128], index: 3, kind: output, shape index: {}]
  %s4 = sld [smem:[#allocation0]]
  $region22: #{generator_forward.16} parent=0
    _
  %s6 = ssub.s32 1, %s4
  %s7 = scalar_select 0, %s6, %s4
  // Predicated region
  $region2: #{generator_forward.16} parent=0 // pred_check
    _
  $region3: #{generator_forward.16} parent=0 // pred_check_branch
    %9 = sbr.rel (0) target = $region5
  $region4: #{generator_forward.16} parent=0 // pred_region
    _
  $region5: #{generator_forward.16} parent=0 // pred_fallthru
    _
  // Predicated region
  $region6: #{generator_forward.16} parent=0 // pred_check
    _
  $region7: #{generator_forward.16} parent=0 // pred_check_branch
    %11 = sbr.rel (0) target = $region9
  $region8: #{generator_forward.16} parent=0 // pred_region
    _
  $region9: #{generator_forward.16} parent=0 // pred_fallthru
    _
  // Predicated region
  $region10: #{generator_forward.16} parent=0 // pred_check
    _
  $region11: #{generator_forward.16} parent=0 // pred_check_branch
    %13 = sbr.rel (0) target = $region13
  $region12: #{generator_forward.16} parent=0 // pred_region
    _
  $region13: #{generator_forward.16} parent=0 // pred_fallthru
    _
  %v14 = vld [vmem:[%s0] sm:$0xf]
  %v15 = vld [vmem:[%s0 + $0x4] sm:$0xf]
  %v16 = vld [vmem:[%s0 + $0x8] sm:$0xf]
  %v17 = vld [vmem:[%s0 + $0xc] sm:$0xf]
  %v18 = vld [vmem:[%s0 + $0x10] sm:$0xf]
  %v19 = vld [vmem:[%s0 + $0x14] sm:$0xf]
  %v20 = vld [vmem:[%s0 + $0x18] sm:$0xf]
  %v21 = vld [vmem:[%s0 + $0x1c] sm:$0xf]
  %v22 = vld [vmem:[%s0 + $0x20] sm:$0xf]
  %v23 = vld [vmem:[%s0 + $0x24] sm:$0xf]
  %v24 = vld [vmem:[%s0 + $0x28] sm:$0xf]
  %v25 = vld [vmem:[%s0 + $0x2c] sm:$0xf]
  %v26 = vld [vmem:[%s0 + $0x30] sm:$0xf]
  %v27 = vld [vmem:[%s0 + $0x34] sm:$0xf]
  %v28 = vld [vmem:[%s0 + $0x38] sm:$0xf]
  %v29 = vld [vmem:[%s0 + $0x3c] sm:$0xf]
  %v30 = vunpack.c.l.bf16 %v14
  %v31 = vunpack.c.l.bf16 %v15
  %v32 = vunpack.c.l.bf16 %v16
  %v33 = vunpack.c.l.bf16 %v17
  %v34 = vunpack.c.l.bf16 %v18
  %v35 = vunpack.c.l.bf16 %v19
  %v36 = vunpack.c.l.bf16 %v20
  %v37 = vunpack.c.l.bf16 %v21
  %v38 = vunpack.c.l.bf16 %v22
  %v39 = vunpack.c.l.bf16 %v23
  %v40 = vunpack.c.l.bf16 %v24
  %v41 = vunpack.c.l.bf16 %v25
  %v42 = vunpack.c.l.bf16 %v26
  %v43 = vunpack.c.l.bf16 %v27
  %v44 = vunpack.c.l.bf16 %v28
  %v45 = vunpack.c.l.bf16 %v29
  %v46 = vld [vmem:[%s1] sm:$0x1]
  %v48 = vperm.slane %v46, 0
  %v50 = vmul.f32 %v30, %v48
  %v51 = vmul.f32 %v31, %v48
  %v52 = vmul.f32 %v32, %v48
  %v53 = vmul.f32 %v33, %v48
  %v54 = vmul.f32 %v34, %v48
  %v55 = vmul.f32 %v35, %v48
  %v56 = vmul.f32 %v36, %v48
  %v57 = vmul.f32 %v37, %v48
  %v58 = vmul.f32 %v38, %v48
  %v59 = vmul.f32 %v39, %v48
  %v60 = vmul.f32 %v40, %v48
  %v61 = vmul.f32 %v41, %v48
  %v62 = vmul.f32 %v42, %v48
  %v63 = vmul.f32 %v43, %v48
  %v64 = vmul.f32 %v44, %v48
  %v65 = vmul.f32 %v45, %v48
  %v66 = vld [vmem:[%s2] sm:$0x1]
  %v68 = vperm.slane %v66, 0
  %v70 = vadd.f32 %v50, %v68
  %v71 = vadd.f32 %v51, %v68
  %v72 = vadd.f32 %v52, %v68
  %v73 = vadd.f32 %v53, %v68
  %v74 = vadd.f32 %v54, %v68
  %v75 = vadd.f32 %v55, %v68
  %v76 = vadd.f32 %v56, %v68
  %v77 = vadd.f32 %v57, %v68
  %v78 = vadd.f32 %v58, %v68
  %v79 = vadd.f32 %v59, %v68
  %v80 = vadd.f32 %v60, %v68
  %v81 = vadd.f32 %v61, %v68
  %v82 = vadd.f32 %v62, %v68
  %v83 = vadd.f32 %v63, %v68
  %v84 = vadd.f32 %v64, %v68
  %v85 = vadd.f32 %v65, %v68
  %v86 = vmax.f32 %v70, 0.0
  %v87 = vmax.f32 %v71, 0.0
  %v88 = vmax.f32 %v72, 0.0
  %v89 = vmax.f32 %v73, 0.0
  %v90 = vmax.f32 %v74, 0.0
  %v91 = vmax.f32 %v75, 0.0
  %v92 = vmax.f32 %v76, 0.0
  %v93 = vmax.f32 %v77, 0.0
  %v94 = vmax.f32 %v78, 0.0
  %v95 = vmax.f32 %v79, 0.0
  %v96 = vmax.f32 %v80, 0.0
  %v97 = vmax.f32 %v81, 0.0
  %v98 = vmax.f32 %v82, 0.0
  %v99 = vmax.f32 %v83, 0.0
  %v100 = vmax.f32 %v84, 0.0
  %v101 = vmax.f32 %v85, 0.0
  %v102 = vpack.c.bf16 %v86, %v86
  %v103 = vpack.c.bf16 %v87, %v87
  %v104 = vpack.c.bf16 %v88, %v88
  %v105 = vpack.c.bf16 %v89, %v89
  %v106 = vpack.c.bf16 %v90, %v90
  %v107 = vpack.c.bf16 %v91, %v91
  %v108 = vpack.c.bf16 %v92, %v92
  %v109 = vpack.c.bf16 %v93, %v93
  %v110 = vpack.c.bf16 %v94, %v94
  %v111 = vpack.c.bf16 %v95, %v95
  %v112 = vpack.c.bf16 %v96, %v96
  %v113 = vpack.c.bf16 %v97, %v97
  %v114 = vpack.c.bf16 %v98, %v98
  %v115 = vpack.c.bf16 %v99, %v99
  %v116 = vpack.c.bf16 %v100, %v100
  %v117 = vpack.c.bf16 %v101, %v101
  %118 = vst [vmem:[%s3] sm:$0xf] %v102
  %119 = vst [vmem:[%s3 + $0x4] sm:$0xf] %v103
  %120 = vst [vmem:[%s3 + $0x8] sm:$0xf] %v104
  %121 = vst [vmem:[%s3 + $0xc] sm:$0xf] %v105
  %122 = vst [vmem:[%s3 + $0x10] sm:$0xf] %v106
  %123 = vst [vmem:[%s3 + $0x14] sm:$0xf] %v107
  %124 = vst [vmem:[%s3 + $0x18] sm:$0xf] %v108
  %125 = vst [vmem:[%s3 + $0x1c] sm:$0xf] %v109
  %126 = vst [vmem:[%s3 + $0x20] sm:$0xf] %v110
  %127 = vst [vmem:[%s3 + $0x24] sm:$0xf] %v111
  %128 = vst [vmem:[%s3 + $0x28] sm:$0xf] %v112
  %129 = vst [vmem:[%s3 + $0x2c] sm:$0xf] %v113
  %130 = vst [vmem:[%s3 + $0x30] sm:$0xf] %v114
  %131 = vst [vmem:[%s3 + $0x34] sm:$0xf] %v115
  %132 = vst [vmem:[%s3 + $0x38] sm:$0xf] %v116
  %133 = vst [vmem:[%s3 + $0x3c] sm:$0xf] %v117
  // Predicated region
  $region14: #{generator_forward.16} parent=0 // pred_check
    _
  $region15: #{generator_forward.16} parent=0 // pred_check_branch
    %135 = sbr.rel (0) target = $region17
  $region16: #{generator_forward.16} parent=0 // pred_region
    _
  $region17: #{generator_forward.16} parent=0 // pred_fallthru
    _
  // Predicated region
  $region18: #{generator_forward.16} parent=0 // pred_check
    _
  $region19: #{generator_forward.16} parent=0 // pred_check_branch
    %137 = sbr.rel (0) target = $region21
  $region20: #{generator_forward.16} parent=0 // pred_region
    _
  $region21: #{generator_forward.16} parent=0 // pred_fallthru
    _

// kernel: generator_forward.15
$region0: #{generator_forward.15}
  #allocation0 [shape = 'u32[]', space=smem, size = 0x4, offset = 0x4, fixed_abs, tag = 'smem constant byte address 0x4 - core index']
  #allocation1 [shape = 'u32[72,128]{1,0:T(1,128)}', space=vmem, size = 0x9000, scoped, tag = 'internal scratch']
  %s0 = inlined_call_operand.vmem [shape: bf16[4,128,256], index: 0, kind: input, shape index: {}]
  %s1 = inlined_call_operand.vmem [shape: bf16[4,256,32], index: 1, kind: input, shape index: {}]
  %s2 = inlined_call_operand.vmem [shape: bf16[4,128,32], index: 2, kind: output, shape index: {0}]
  %s3 = inlined_call_operand.vmem [shape: f32[4,1,8,32], index: 3, kind: output, shape index: {1}]
  %4 = xla_tuple %s2, %s3
  %s5 = sld [smem:[#allocation0]]
  $region49: #{generator_forward.15} parent=0
    _
  %s7 = ssub.s32 1, %s5
  %s8 = scalar_select 0, %s7, %s5
  loop: start=0, step=1, limit=6
  $region2: #{generator_forward.15} parent=0 // loop_pre_header
    _
  $region3: #{generator_forward.15} parent=0 // loop_header
    %s10 = sphi 0, %s14
    %p11 = scmp.ge.s32.totalorder %s10, 6
    %s17 = sphi 0, %s29
    %s18 = sphi 0, %s25
    %s19 = sphi 0, %s17
    %s20 = sphi 0, %s18
    %s21 = sphi 0, %s19
    %s22 = sphi 0, %s20
    %s34 = sphi 0, %s36
    %s37 = sphi 0, %s34
    %s38 = sphi 0, %s37
    %s54 = sphi 0, %s38
    %s60 = sphi 0, %s62
    %s63 = sphi 0, %s60
    %s64 = sphi 0, %s63
    %s80 = sphi 0, %s64
    %s88 = sphi 0, %s90
    %s91 = sphi 0, %s88
    %s92 = sphi 0, %s91
    %s108 = sphi 0, %s92
    %s116 = sphi 0, %s118
    %s119 = sphi 0, %s116
    %s120 = sphi 0, %s119
    %s136 = sphi 0, %s120
  $region4: #{generator_forward.15} parent=0 // loop_header_branch
    %13 = sbr.rel (%p11) target = $region8
  $region5: #{generator_forward.15} parent=0 // loop_body
    %s15 = ssub.s32 %s10, 1
    %s16 = ssub.s32 %s10, 2
    %s23 = sadd.s32 1, %s18
    %p24 = scmp.ge.s32.totalorder %s23, 1
    %s25 = scalar_select %p24, 0, %s23
    %s26 = sadd.s32 1, %s17
    %s27 = scalar_select %p24, %s26, %s17
    %p28 = scmp.ge.s32.totalorder %s27, 4
    %s29 = scalar_select %p28, 0, %s27
    %s30 = ssub.s32 %s17, %s29
    %s31 = ssub.s32 %s18, %s25
    %s32 = sor.u32 %s30, %s31
    %p33 = scmp.eq.s32.totalorder %s32, 0
    %s35 = sadd.s32 %s34, 1
    %s36 = scalar_select %p33, %s34, %s35
    %p39 = pneg %p33
    %p40 = scmp.eq.s32.totalorder %s10, 3
    %p41 = por %p39, %p40
    %p42 = scmp.ne.s32.totalorder %s34, %s37
    %p43 = scmp.eq.s32.totalorder %s10, 0
    %p44 = por %p42, %p43
    %p45 = scmp.ne.s32.totalorder %s34, %s37
    %p46 = scmp.eq.s32.totalorder %s15, 3
    %p47 = por %p45, %p46
    %p48 = scmp.ne.s32.totalorder %s37, %s38
    %p49 = scmp.eq.s32.totalorder %s15, 0
    %p50 = por %p48, %p49
    %p51 = scmp.ne.s32.totalorder %s37, %s38
    %p52 = scmp.eq.s32.totalorder %s16, 3
    %p53 = por %p51, %p52
    %p55 = scmp.ne.s32.totalorder %s38, %s54
    %p56 = scmp.eq.s32.totalorder %s16, 0
    %p57 = por %p55, %p56
    %s58 = ssub.s32 %s17, %s29
    %p59 = scmp.eq.s32.totalorder %s58, 0
    %s61 = sadd.s32 %s60, 1
    %s62 = scalar_select %p59, %s60, %s61
    %p65 = pneg %p59
    %p66 = scmp.eq.s32.totalorder %s10, 3
    %p67 = por %p65, %p66
    %p68 = scmp.ne.s32.totalorder %s60, %s63
    %p69 = scmp.eq.s32.totalorder %s10, 0
    %p70 = por %p68, %p69
    %p71 = scmp.ne.s32.totalorder %s60, %s63
    %p72 = scmp.eq.s32.totalorder %s15, 3
    %p73 = por %p71, %p72
    %p74 = scmp.ne.s32.totalorder %s63, %s64
    %p75 = scmp.eq.s32.totalorder %s15, 0
    %p76 = por %p74, %p75
    %p77 = scmp.ne.s32.totalorder %s63, %s64
    %p78 = scmp.eq.s32.totalorder %s16, 3
    %p79 = por %p77, %p78
    %p81 = scmp.ne.s32.totalorder %s64, %s80
    %p82 = scmp.eq.s32.totalorder %s16, 0
    %p83 = por %p81, %p82
    %s84 = ssub.s32 %s17, %s29
    %s85 = ssub.s32 %s18, %s25
    %s86 = sor.u32 %s84, %s85
    %p87 = scmp.eq.s32.totalorder %s86, 0
    %s89 = sadd.s32 %s88, 1
    %s90 = scalar_select %p87, %s88, %s89
    %p93 = pneg %p87
    %p94 = scmp.eq.s32.totalorder %s10, 3
    %p95 = por %p93, %p94
    %p96 = scmp.ne.s32.totalorder %s88, %s91
    %p97 = scmp.eq.s32.totalorder %s10, 0
    %p98 = por %p96, %p97
    %p99 = scmp.ne.s32.totalorder %s88, %s91
    %p100 = scmp.eq.s32.totalorder %s15, 3
    %p101 = por %p99, %p100
    %p102 = scmp.ne.s32.totalorder %s91, %s92
    %p103 = scmp.eq.s32.totalorder %s15, 0
    %p104 = por %p102, %p103
    %p105 = scmp.ne.s32.totalorder %s91, %s92
    %p106 = scmp.eq.s32.totalorder %s16, 3
    %p107 = por %p105, %p106
    %p109 = scmp.ne.s32.totalorder %s92, %s108
    %p110 = scmp.eq.s32.totalorder %s16, 0
    %p111 = por %p109, %p110
    %s112 = ssub.s32 %s17, %s29
    %s113 = ssub.s32 %s18, %s25
    %s114 = sor.u32 %s112, %s113
    %p115 = scmp.eq.s32.totalorder %s114, 0
    %s117 = sadd.s32 %s116, 1
    %s118 = scalar_select %p115, %s116, %s117
    %p121 = pneg %p115
    %p122 = scmp.eq.s32.totalorder %s10, 3
    %p123 = por %p121, %p122
    %p124 = scmp.ne.s32.totalorder %s116, %s119
    %p125 = scmp.eq.s32.totalorder %s10, 0
    %p126 = por %p124, %p125
    %p127 = scmp.ne.s32.totalorder %s116, %s119
    %p128 = scmp.eq.s32.totalorder %s15, 3
    %p129 = por %p127, %p128
    %p130 = scmp.ne.s32.totalorder %s119, %s120
    %p131 = scmp.eq.s32.totalorder %s15, 0
    %p132 = por %p130, %p131
    %p133 = scmp.ne.s32.totalorder %s119, %s120
    %p134 = scmp.eq.s32.totalorder %s16, 3
    %p135 = por %p133, %p134
    %p137 = scmp.ne.s32.totalorder %s120, %s136
    %p138 = scmp.eq.s32.totalorder %s16, 0
    %p139 = por %p137, %p138
    %p140 = scmp.le.s32.totalorder 1, %s10
    %p141 = scmp.lt.s32.totalorder %s10, 5
    %p142 = pnand %p140, %p141
    %p143 = pneg %p142
    // Predicated region
    $region9: #{generator_forward.15} parent=5 // pred_check
      _
    $region10: #{generator_forward.15} parent=5 // pred_check_branch
      %145 = sbr.rel (%p142) target = $region12
    $region11: #{generator_forward.15} parent=5 // pred_region
      %s146 = ssub.s32 %s10, 1
    $region12: #{generator_forward.15} parent=5 // pred_fallthru
      _
    %p147 = scmp.lt.s32.totalorder %s10, 4
    // Predicated region
    $region13: #{generator_forward.15} parent=5 // pred_check
      %p148 = pneg %p147
    $region14: #{generator_forward.15} parent=5 // pred_check_branch
      %150 = sbr.rel (%p148) target = $region16
    $region15: #{generator_forward.15} parent=5 // pred_region
      // Predicated region
      $region17: #{generator_forward.15} parent=15 // pred_check
        %p151 = pneg %p44
      $region18: #{generator_forward.15} parent=15 // pred_check_branch
        %153 = sbr.rel (%p151) target = $region20
      $region19: #{generator_forward.15} parent=15 // pred_region
        %s154 = smul.u32 16, %s18
        %p155 = scmp.lt.s32.totalorder %s17, 3
        %s156 = scalar_select %p155, %s17, 3
        %p157 = scmp.lt.s32.totalorder %s154, 15
        %s158 = scalar_select %p157, %s154, 15
        %s159 = smul.addr %s158, 2
        %s160 = smul.addr %s156, 32
        %s161 = sadd.s32 %s159, %s160
        %s162 = smul.addr %s161, 4
        %s163 = scalar_lea.vmem %s0, %s162
        %s164 = smul.u32 16, %s18
      $region20: #{generator_forward.15} parent=15 // pred_fallthru
        _
      // Predicated region
      $region21: #{generator_forward.15} parent=15 // pred_check
        %p165 = pneg %p70
      $region22: #{generator_forward.15} parent=15 // pred_check_branch
        %167 = sbr.rel (%p165) target = $region24
      $region23: #{generator_forward.15} parent=15 // pred_region
        %p168 = scmp.lt.s32.totalorder %s17, 3
        %s169 = scalar_select %p168, %s17, 3
        %s170 = smul.addr %s169, 32
        %s171 = smul.addr %s170, 4
        %s172 = scalar_lea.vmem %s1, %s171
      $region24: #{generator_forward.15} parent=15 // pred_fallthru
        _
    $region16: #{generator_forward.15} parent=5 // pred_fallthru
      _
    %p173 = scmp.le.s32.totalorder 1, %s10
    %p174 = scmp.lt.s32.totalorder %s10, 5
    %p175 = pnand %p173, %p174
    %p176 = pneg %p175
    // Predicated region
    $region25: #{generator_forward.15} parent=5 // pred_check
      _
    $region26: #{generator_forward.15} parent=5 // pred_check_branch
      %178 = sbr.rel (%p175) target = $region28
    $region27: #{generator_forward.15} parent=5 // pred_region
      %s179 = ssub.s32 %s10, 1
      %s180 = smul.u32 16, %s20
      %p181 = scmp.lt.s32.totalorder %s19, 3
      %s182 = scalar_select %p181, %s19, 3
      %p183 = scmp.lt.s32.totalorder %s180, 15
      %s184 = scalar_select %p183, %s180, 15
      %s185 = smul.addr %s184, 2
      %s186 = smul.addr %s182, 32
      %s187 = sadd.s32 %s185, %s186
      %s188 = smul.addr %s187, 4
      %s189 = scalar_lea.vmem %s0, %s188
      %p190 = pneg %p50
      %p191 = pneg %p47
      %p192 = scmp.lt.s32.totalorder %s19, 3
      %s193 = scalar_select %p192, %s19, 3
      %s194 = smul.addr %s193, 32
      %s195 = smul.addr %s194, 4
      %s196 = scalar_lea.vmem %s1, %s195
      %p197 = pneg %p76
      %p198 = pneg %p73
      %p199 = pneg %p104
      %p200 = pneg %p101
      %s201 = smul.u32 16, %s20
      %p202 = scmp.lt.s32.totalorder %s19, 3
      %s203 = scalar_select %p202, %s19, 3
      %p204 = scmp.lt.s32.totalorder %s201, 15
      %s205 = scalar_select %p204, %s201, 15
      %s206 = smul.addr %s203, 16
      %s207 = sadd.s32 %s205, %s206
      %s208 = smul.addr %s207, 4
      %s209 = scalar_lea.vmem %s2, %s208
      %p210 = pneg %p132
      %p211 = pneg %p129
      %p212 = scmp.lt.s32.totalorder %s19, 3
      %s213 = scalar_select %p212, %s19, 3
      %p214 = scmp.lt.s32.totalorder %s20, 0
      %s215 = scalar_select %p214, %s20, 0
      %s216 = sadd.s32 %s215, %s213
      %s217 = smul.addr %s216, 8
      %s218 = scalar_lea.vmem %s3, %s217
      %s219 = smul.u32 16, %s20
      %p220 = scmp.lt.s32.totalorder %s19, 3
      %s221 = scalar_select %p220, %s19, 3
      %p222 = scmp.lt.s32.totalorder %s219, 15
      %s223 = scalar_select %p222, %s219, 15
      %s224 = smul.addr %s223, 2
      %s225 = smul.addr %s221, 32
      %s226 = sadd.s32 %s224, %s225
      %s227 = smul.addr %s226, 4
      %s228 = scalar_lea.vmem %s0, %s227
      %s229 = smul.u32 16, %s20
      %p230 = scmp.lt.s32.totalorder %s19, 3
      %s231 = scalar_select %p230, %s19, 3
      %s232 = smul.addr %s231, 32
      %s233 = smul.addr %s232, 4
      %s234 = scalar_lea.vmem %s1, %s233
      %s235 = smul.u32 16, %s20
      %p236 = scmp.lt.s32.totalorder %s19, 3
      %s237 = scalar_select %p236, %s19, 3
      %p238 = scmp.lt.s32.totalorder %s235, 15
      %s239 = scalar_select %p238, %s235, 15
      %s240 = smul.addr %s237, 16
      %s241 = sadd.s32 %s239, %s240
      %s242 = smul.addr %s241, 4
      %s243 = scalar_lea.vmem %s2, %s242
      %s244 = smul.u32 16, %s20
      %p245 = scmp.lt.s32.totalorder %s19, 3
      %s246 = scalar_select %p245, %s19, 3
      %p247 = scmp.lt.s32.totalorder %s20, 0
      %s248 = scalar_select %p247, %s20, 0
      %s249 = sadd.s32 %s248, %s246
      %s250 = smul.addr %s249, 8
      %s251 = scalar_lea.vmem %s3, %s250
      %v252 = vld [vmem:[%s228] sm:$0xff]
      %v253 = vld [vmem:[%s228 + $0x8] sm:$0xff]
      %v254 = vld [vmem:[%s228 + $0x10] sm:$0xff]
      %v255 = vld [vmem:[%s228 + $0x18] sm:$0xff]
      %v256 = vld [vmem:[%s228 + $0x20] sm:$0xff]
      %v257 = vld [vmem:[%s228 + $0x28] sm:$0xff]
      %v258 = vld [vmem:[%s228 + $0x30] sm:$0xff]
      %v259 = vld [vmem:[%s228 + $0x38] sm:$0xff]
      %v260 = vld [vmem:[%s228 + $0x40] sm:$0xff]
      %v261 = vld [vmem:[%s228 + $0x48] sm:$0xff]
      %v262 = vld [vmem:[%s228 + $0x50] sm:$0xff]
      %v263 = vld [vmem:[%s228 + $0x58] sm:$0xff]
      %v264 = vld [vmem:[%s228 + $0x60] sm:$0xff]
      %v265 = vld [vmem:[%s228 + $0x68] sm:$0xff]
      %v266 = vld [vmem:[%s228 + $0x70] sm:$0xff]
      %v267 = vld [vmem:[%s228 + $0x78] sm:$0xff]
      %v268 = vld [vmem:[%s234] sm:$0xf]
      %v269 = vld [vmem:[%s234 + $0x4] sm:$0xf]
      %v270 = vld [vmem:[%s234 + $0x8] sm:$0xf]
      %v271 = vld [vmem:[%s234 + $0xc] sm:$0xf]
      %v272 = vld [vmem:[%s234 + $0x10] sm:$0xf]
      %v273 = vld [vmem:[%s234 + $0x14] sm:$0xf]
      %v274 = vld [vmem:[%s234 + $0x18] sm:$0xf]
      %v275 = vld [vmem:[%s234 + $0x1c] sm:$0xf]
      %v276 = vld [vmem:[%s234 + $0x20] sm:$0xf]
      %v277 = vld [vmem:[%s234 + $0x24] sm:$0xf]
      %v278 = vld [vmem:[%s234 + $0x28] sm:$0xf]
      %v279 = vld [vmem:[%s234 + $0x2c] sm:$0xf]
      %v280 = vld [vmem:[%s234 + $0x30] sm:$0xf]
      %v281 = vld [vmem:[%s234 + $0x34] sm:$0xf]
      %v282 = vld [vmem:[%s234 + $0x38] sm:$0xf]
      %v283 = vld [vmem:[%s234 + $0x3c] sm:$0xf]
      %v284 = vld [vmem:[%s234 + $0x40] sm:$0xf]
      %v285 = vld [vmem:[%s234 + $0x44] sm:$0xf]
      %v286 = vld [vmem:[%s234 + $0x48] sm:$0xf]
      %v287 = vld [vmem:[%s234 + $0x4c] sm:$0xf]
      %v288 = vld [vmem:[%s234 + $0x50] sm:$0xf]
      %v289 = vld [vmem:[%s234 + $0x54] sm:$0xf]
      %v290 = vld [vmem:[%s234 + $0x58] sm:$0xf]
      %v291 = vld [vmem:[%s234 + $0x5c] sm:$0xf]
      %v292 = vld [vmem:[%s234 + $0x60] sm:$0xf]
      %v293 = vld [vmem:[%s234 + $0x64] sm:$0xf]
      %v294 = vld [vmem:[%s234 + $0x68] sm:$0xf]
      %v295 = vld [vmem:[%s234 + $0x6c] sm:$0xf]
      %v296 = vld [vmem:[%s234 + $0x70] sm:$0xf]
      %v297 = vld [vmem:[%s234 + $0x74] sm:$0xf]
      %v298 = vld [vmem:[%s234 + $0x78] sm:$0xf]
      %v299 = vld [vmem:[%s234 + $0x7c] sm:$0xf]
      %v316 = vunpack.c.l.b16 %v252
      %v317 = vunpack.c.h.b16 %v252
      %v318 = vunpack.c.l.b16 %v253
      %v319 = vunpack.c.h.b16 %v253
      %v320 = vunpack.c.l.b16 %v254
      %v321 = vunpack.c.h.b16 %v254
      %v322 = vunpack.c.l.b16 %v255
      %v323 = vunpack.c.h.b16 %v255
      %v324 = vunpack.c.l.b16 %v256
      %v325 = vunpack.c.h.b16 %v256
      %v326 = vunpack.c.l.b16 %v257
      %v327 = vunpack.c.h.b16 %v257
      %v328 = vunpack.c.l.b16 %v258
      %v329 = vunpack.c.h.b16 %v258
      %v330 = vunpack.c.l.b16 %v259
      %v331 = vunpack.c.h.b16 %v259
      %v332 = vunpack.c.l.b16 %v260
      %v333 = vunpack.c.h.b16 %v260
      %v334 = vunpack.c.l.b16 %v261
      %v335 = vunpack.c.h.b16 %v261
      %v336 = vunpack.c.l.b16 %v262
      %v337 = vunpack.c.h.b16 %v262
      %v338 = vunpack.c.l.b16 %v263
      %v339 = vunpack.c.h.b16 %v263
      %v340 = vunpack.c.l.b16 %v264
      %v341 = vunpack.c.h.b16 %v264
      %v342 = vunpack.c.l.b16 %v265
      %v343 = vunpack.c.h.b16 %v265
      %v344 = vunpack.c.l.b16 %v266
      %v345 = vunpack.c.h.b16 %v266
      %v346 = vunpack.c.l.b16 %v267
      %v347 = vunpack.c.h.b16 %v267
      %v348 = vpack.c.b16 %v318, %v316
      %v349 = vpack.c.b16 %v319, %v317
      %v350 = vpack.c.b16 %v322, %v320
      %v351 = vpack.c.b16 %v323, %v321
      %v352 = vpack.c.b16 %v326, %v324
      %v353 = vpack.c.b16 %v327, %v325
      %v354 = vpack.c.b16 %v330, %v328
      %v355 = vpack.c.b16 %v331, %v329
      %v356 = vpack.c.b16 %v334, %v332
      %v357 = vpack.c.b16 %v335, %v333
      %v358 = vpack.c.b16 %v338, %v336
      %v359 = vpack.c.b16 %v339, %v337
      %v360 = vpack.c.b16 %v342, %v340
      %v361 = vpack.c.b16 %v343, %v341
      %v362 = vpack.c.b16 %v346, %v344
      %v363 = vpack.c.b16 %v347, %v345
      %v412 = vunpack.c.l.b16 %v268
      %v413 = vunpack.c.l.b16 %v269
      %v414 = vunpack.c.l.b16 %v270
      %v415 = vunpack.c.l.b16 %v271
      %v416 = vunpack.c.l.b16 %v272
      %v417 = vunpack.c.l.b16 %v273
      %v418 = vunpack.c.l.b16 %v274
      %v419 = vunpack.c.l.b16 %v275
      %v420 = vunpack.c.l.b16 %v276
      %v421 = vunpack.c.l.b16 %v277
      %v422 = vunpack.c.l.b16 %v278
      %v423 = vunpack.c.l.b16 %v279
      %v424 = vunpack.c.l.b16 %v280
      %v425 = vunpack.c.l.b16 %v281
      %v426 = vunpack.c.l.b16 %v282
      %v427 = vunpack.c.l.b16 %v283
      %v428 = vunpack.c.l.b16 %v284
      %v429 = vunpack.c.l.b16 %v285
      %v430 = vunpack.c.l.b16 %v286
      %v431 = vunpack.c.l.b16 %v287
      %v432 = vunpack.c.l.b16 %v288
      %v433 = vunpack.c.l.b16 %v289
      %v434 = vunpack.c.l.b16 %v290
      %v435 = vunpack.c.l.b16 %v291
      %v436 = vunpack.c.l.b16 %v292
      %v437 = vunpack.c.l.b16 %v293
      %v438 = vunpack.c.l.b16 %v294
      %v439 = vunpack.c.l.b16 %v295
      %v440 = vunpack.c.l.b16 %v296
      %v441 = vunpack.c.l.b16 %v297
      %v442 = vunpack.c.l.b16 %v298
      %v443 = vunpack.c.l.b16 %v299
      %v444 = vpack.c.b16 %v413, %v412
      %v445 = vpack.c.b16 %v415, %v414
      %v446 = vpack.c.b16 %v417, %v416
      %v447 = vpack.c.b16 %v419, %v418
      %v448 = vpack.c.b16 %v421, %v420
      %v449 = vpack.c.b16 %v423, %v422
      %v450 = vpack.c.b16 %v425, %v424
      %v451 = vpack.c.b16 %v427, %v426
      %v452 = vpack.c.b16 %v429, %v428
      %v453 = vpack.c.b16 %v431, %v430
      %v454 = vpack.c.b16 %v433, %v432
      %v455 = vpack.c.b16 %v435, %v434
      %v456 = vpack.c.b16 %v437, %v436
      %v457 = vpack.c.b16 %v439, %v438
      %v458 = vpack.c.b16 %v441, %v440
      %v459 = vpack.c.b16 %v443, %v442
      %476 = vmatpush.bf16.msra.mxu0 %v451
      %477 = vmatpush.bf16.msra.mxu0 %v450
      %478 = vmatpush.bf16.msra.mxu0 %v449
      %479 = vmatpush.bf16.msra.mxu0 %v448
      %480 = vmatpush.bf16.msra.mxu0 %v447
      %481 = vmatpush.bf16.msra.mxu0 %v446
      %482 = vmatpush.bf16.msra.mxu0 %v445
      %483 = vmatpush.bf16.msra.mxu0 %v444
      %484 = vmatmul.bf16.gmra.mxu0 %v348
      %v485 = vpop.f32.mrf.mxu0
      %v486 = vadd.f32 0.0, %v485
      %v487 = vpop.f32.mrf.mxu0
      %v488 = vadd.f32 0.0, %v487
      %489 = vmatmul.bf16.gmra.mxu0 %v350
      %v490 = vpop.f32.mrf.mxu0
      %v491 = vadd.f32 0.0, %v490
      %v492 = vpop.f32.mrf.mxu0
      %v493 = vadd.f32 0.0, %v492
      %494 = vmatmul.bf16.gmra.mxu0 %v352
      %v495 = vpop.f32.mrf.mxu0
      %v496 = vadd.f32 0.0, %v495
      %v497 = vpop.f32.mrf.mxu0
      %v498 = vadd.f32 0.0, %v497
      %499 = vmatmul.bf16.gmra.mxu0 %v354
      %v500 = vpop.f32.mrf.mxu0
      %v501 = vadd.f32 0.0, %v500
      %v502 = vpop.f32.mrf.mxu0
      %v503 = vadd.f32 0.0, %v502
      %504 = vmatmul.bf16.gmra.mxu0 %v356
      %v505 = vpop.f32.mrf.mxu0
      %v506 = vadd.f32 0.0, %v505
      %v507 = vpop.f32.mrf.mxu0
      %v508 = vadd.f32 0.0, %v507
      %509 = vmatmul.bf16.gmra.mxu0 %v358
      %v510 = vpop.f32.mrf.mxu0
      %v511 = vadd.f32 0.0, %v510
      %v512 = vpop.f32.mrf.mxu0
      %v513 = vadd.f32 0.0, %v512
      %514 = vmatmul.bf16.gmra.mxu0 %v360
      %v515 = vpop.f32.mrf.mxu0
      %v516 = vadd.f32 0.0, %v515
      %v517 = vpop.f32.mrf.mxu0
      %v518 = vadd.f32 0.0, %v517
      %519 = vmatmul.bf16.gmra.mxu0 %v362
      %v520 = vpop.f32.mrf.mxu0
      %v521 = vadd.f32 0.0, %v520
      %v522 = vpop.f32.mrf.mxu0
      %v523 = vadd.f32 0.0, %v522
      %524 = vdwg.mxu0
      %525 = vmatpush.bf16.msra.mxu0 %v459
      %526 = vmatpush.bf16.msra.mxu0 %v458
      %527 = vmatpush.bf16.msra.mxu0 %v457
      %528 = vmatpush.bf16.msra.mxu0 %v456
      %529 = vmatpush.bf16.msra.mxu0 %v455
      %530 = vmatpush.bf16.msra.mxu0 %v454
      %531 = vmatpush.bf16.msra.mxu0 %v453
      %532 = vmatpush.bf16.msra.mxu0 %v452
      %533 = vmatmul.bf16.gmra.mxu0 %v349
      %v534 = vpop.f32.mrf.mxu0
      %v535 = vadd.f32 %v486, %v534
      %v536 = vpop.f32.mrf.mxu0
      %v537 = vadd.f32 %v488, %v536
      %538 = vmatmul.bf16.gmra.mxu0 %v351
      %v539 = vpop.f32.mrf.mxu0
      %v540 = vadd.f32 %v491, %v539
      %v541 = vpop.f32.mrf.mxu0
      %v542 = vadd.f32 %v493, %v541
      %543 = vmatmul.bf16.gmra.mxu0 %v353
      %v544 = vpop.f32.mrf.mxu0
      %v545 = vadd.f32 %v496, %v544
      %v546 = vpop.f32.mrf.mxu0
      %v547 = vadd.f32 %v498, %v546
      %548 = vmatmul.bf16.gmra.mxu0 %v355
      %v549 = vpop.f32.mrf.mxu0
      %v550 = vadd.f32 %v501, %v549
      %v551 = vpop.f32.mrf.mxu0
      %v552 = vadd.f32 %v503, %v551
      %553 = vmatmul.bf16.gmra.mxu0 %v357
      %v554 = vpop.f32.mrf.mxu0
      %v555 = vadd.f32 %v506, %v554
      %v556 = vpop.f32.mrf.mxu0
      %v557 = vadd.f32 %v508, %v556
      %558 = vmatmul.bf16.gmra.mxu0 %v359
      %v559 = vpop.f32.mrf.mxu0
      %v560 = vadd.f32 %v511, %v559
      %v561 = vpop.f32.mrf.mxu0
      %v562 = vadd.f32 %v513, %v561
      %563 = vmatmul.bf16.gmra.mxu0 %v361
      %v564 = vpop.f32.mrf.mxu0
      %v565 = vadd.f32 %v516, %v564
      %v566 = vpop.f32.mrf.mxu0
      %v567 = vadd.f32 %v518, %v566
      %568 = vmatmul.bf16.gmra.mxu0 %v363
      %v569 = vpop.f32.mrf.mxu0
      %v570 = vadd.f32 %v521, %v569
      %v571 = vpop.f32.mrf.mxu0
      %v572 = vadd.f32 %v523, %v571
      %573 = vdwg.mxu0
      %v574 = vpack.c.bf16 %v535, %v535
      %v575 = vpack.c.bf16 %v537, %v537
      %v576 = vpack.c.bf16 %v540, %v540
      %v577 = vpack.c.bf16 %v542, %v542
      %v578 = vpack.c.bf16 %v545, %v545
      %v579 = vpack.c.bf16 %v547, %v547
      %v580 = vpack.c.bf16 %v550, %v550
      %v581 = vpack.c.bf16 %v552, %v552
      %v582 = vpack.c.bf16 %v555, %v555
      %v583 = vpack.c.bf16 %v557, %v557
      %v584 = vpack.c.bf16 %v560, %v560
      %v585 = vpack.c.bf16 %v562, %v562
      %v586 = vpack.c.bf16 %v565, %v565
      %v587 = vpack.c.bf16 %v567, %v567
      %v588 = vpack.c.bf16 %v570, %v570
      %v589 = vpack.c.bf16 %v572, %v572
      %vm590 = vcmask 257024
      %591 = vst.msk [vmem:[%s243] sm:$0xf] %vm590, %v574
      %592 = vst.msk [vmem:[%s243 + $0x4] sm:$0xf] %vm590, %v575
      %593 = vst.msk [vmem:[%s243 + $0x8] sm:$0xf] %vm590, %v576
      %594 = vst.msk [vmem:[%s243 + $0xc] sm:$0xf] %vm590, %v577
      %595 = vst.msk [vmem:[%s243 + $0x10] sm:$0xf] %vm590, %v578
      %596 = vst.msk [vmem:[%s243 + $0x14] sm:$0xf] %vm590, %v579
      %597 = vst.msk [vmem:[%s243 + $0x18] sm:$0xf] %vm590, %v580
      %598 = vst.msk [vmem:[%s243 + $0x1c] sm:$0xf] %vm590, %v581
      %599 = vst.msk [vmem:[%s243 + $0x20] sm:$0xf] %vm590, %v582
      %600 = vst.msk [vmem:[%s243 + $0x24] sm:$0xf] %vm590, %v583
      %601 = vst.msk [vmem:[%s243 + $0x28] sm:$0xf] %vm590, %v584
      %602 = vst.msk [vmem:[%s243 + $0x2c] sm:$0xf] %vm590, %v585
      %603 = vst.msk [vmem:[%s243 + $0x30] sm:$0xf] %vm590, %v586
      %604 = vst.msk [vmem:[%s243 + $0x34] sm:$0xf] %vm590, %v587
      %605 = vst.msk [vmem:[%s243 + $0x38] sm:$0xf] %vm590, %v588
      %606 = vst.msk [vmem:[%s243 + $0x3c] sm:$0xf] %vm590, %v589
      %vm607 = vcmask 261120
      %v608 = vsel %vm607, %v535, 0.0
      %v609 = vsel %vm607, %v537, 0.0
      %v610 = vadd.f32 %v608, %v609
      %v611 = vsel %vm607, %v540, 0.0
      %v612 = vadd.f32 %v610, %v611
      %v613 = vsel %vm607, %v542, 0.0
      %v614 = vadd.f32 %v612, %v613
      %v615 = vsel %vm607, %v545, 0.0
      %v616 = vadd.f32 %v614, %v615
      %v617 = vsel %vm607, %v547, 0.0
      %v618 = vadd.f32 %v616, %v617
      %v619 = vsel %vm607, %v550, 0.0
      %v620 = vadd.f32 %v618, %v619
      %v621 = vsel %vm607, %v552, 0.0
      %v622 = vadd.f32 %v620, %v621
      %v623 = vsel %vm607, %v555, 0.0
      %v624 = vadd.f32 %v622, %v623
      %v625 = vsel %vm607, %v557, 0.0
      %v626 = vadd.f32 %v624, %v625
      %v627 = vsel %vm607, %v560, 0.0
      %v628 = vadd.f32 %v626, %v627
      %v629 = vsel %vm607, %v562, 0.0
      %v630 = vadd.f32 %v628, %v629
      %v631 = vsel %vm607, %v565, 0.0
      %v632 = vadd.f32 %v630, %v631
      %v633 = vsel %vm607, %v567, 0.0
      %v634 = vadd.f32 %v632, %v633
      %v635 = vsel %vm607, %v570, 0.0
      %v636 = vadd.f32 %v634, %v635
      %v637 = vsel %vm607, %v572, 0.0
      %v638 = vadd.f32 %v636, %v637
      %v639 = vrot.slane %v638, 4
      %v640 = vadd.f32 %v638, %v639
      %v641 = vrot.slane %v640, 2
      %v642 = vadd.f32 %v640, %v641
      %v643 = vrot.slane %v642, 1
      %v644 = vadd.f32 %v642, %v643
      %v645 = vmul.f32 %v535, %v535
      %v646 = vmul.f32 %v537, %v537
      %v647 = vmul.f32 %v540, %v540
      %v648 = vmul.f32 %v542, %v542
      %v649 = vmul.f32 %v545, %v545
      %v650 = vmul.f32 %v547, %v547
      %v651 = vmul.f32 %v550, %v550
      %v652 = vmul.f32 %v552, %v552
      %v653 = vmul.f32 %v555, %v555
      %v654 = vmul.f32 %v557, %v557
      %v655 = vmul.f32 %v560, %v560
      %v656 = vmul.f32 %v562, %v562
      %v657 = vmul.f32 %v565, %v565
      %v658 = vmul.f32 %v567, %v567
      %v659 = vmul.f32 %v570, %v570
      %v660 = vmul.f32 %v572, %v572
      %v661 = vsel %vm607, %v645, 0.0
      %v662 = vsel %vm607, %v646, 0.0
      %v663 = vadd.f32 %v661, %v662
      %v664 = vsel %vm607, %v647, 0.0
      %v665 = vadd.f32 %v663, %v664
      %v666 = vsel %vm607, %v648, 0.0
      %v667 = vadd.f32 %v665, %v666
      %v668 = vsel %vm607, %v649, 0.0
      %v669 = vadd.f32 %v667, %v668
      %v670 = vsel %vm607, %v650, 0.0
      %v671 = vadd.f32 %v669, %v670
      %v672 = vsel %vm607, %v651, 0.0
      %v673 = vadd.f32 %v671, %v672
      %v674 = vsel %vm607, %v652, 0.0
      %v675 = vadd.f32 %v673, %v674
      %v676 = vsel %vm607, %v653, 0.0
      %v677 = vadd.f32 %v675, %v676
      %v678 = vsel %vm607, %v654, 0.0
      %v679 = vadd.f32 %v677, %v678
      %v680 = vsel %vm607, %v655, 0.0
      %v681 = vadd.f32 %v679, %v680
      %v682 = vsel %vm607, %v656, 0.0
      %v683 = vadd.f32 %v681, %v682
      %v684 = vsel %vm607, %v657, 0.0
      %v685 = vadd.f32 %v683, %v684
      %v686 = vsel %vm607, %v658, 0.0
      %v687 = vadd.f32 %v685, %v686
      %v688 = vsel %vm607, %v659, 0.0
      %v689 = vadd.f32 %v687, %v688
      %v690 = vsel %vm607, %v660, 0.0
      %v691 = vadd.f32 %v689, %v690
      %v692 = vrot.slane %v691, 4
      %v693 = vadd.f32 %v691, %v692
      %v694 = vrot.slane %v693, 2
      %v695 = vadd.f32 %v693, %v694
      %v696 = vrot.slane %v695, 1
      %v697 = vadd.f32 %v695, %v696
      %vm698 = vcmask 1040384
      %v699 = vsel %vm698, %v644, %v697
      %vm700 = vcmask 1041408
      %v701 = vsel %vm700, %v699, 0.0
      %702 = vst.msk [vmem:[%s251] sm:$0xff] %vm607, %v701
      %s703 = smul.u32 16, %s20
      %p704 = scmp.lt.s32.totalorder %s19, 3
      %s705 = scalar_select %p704, %s19, 3
      %p706 = scmp.lt.s32.totalorder %s703, 15
      %s707 = scalar_select %p706, %s703, 15
      %s708 = smul.addr %s705, 16
      %s709 = sadd.s32 %s707, %s708
      %s710 = smul.addr %s709, 4
      %s711 = scalar_lea.vmem %s2, %s710
      %p712 = scmp.lt.s32.totalorder %s19, 3
      %s713 = scalar_select %p712, %s19, 3
      %p714 = scmp.lt.s32.totalorder %s20, 0
      %s715 = scalar_select %p714, %s20, 0
      %s716 = sadd.s32 %s715, %s713
      %s717 = smul.addr %s716, 8
      %s718 = scalar_lea.vmem %s3, %s717
      // Predicated region
      $region29: #{generator_forward.15} parent=27 // pred_check
        %p719 = pneg %p101
      $region30: #{generator_forward.15} parent=27 // pred_check_branch
        %721 = sbr.rel (%p719) target = $region32
      $region31: #{generator_forward.15} parent=27 // pred_region
        %s722 = smul.u32 16, %s20
      $region32: #{generator_forward.15} parent=27 // pred_fallthru
        _
      // Predicated region
      $region33: #{generator_forward.15} parent=27 // pred_check
        %p723 = pneg %p129
      $region34: #{generator_forward.15} parent=27 // pred_check_branch
        %725 = sbr.rel (%p723) target = $region36
      $region35: #{generator_forward.15} parent=27 // pred_region
        _
      $region36: #{generator_forward.15} parent=27 // pred_fallthru
        _
    $region28: #{generator_forward.15} parent=5 // pred_fallthru
      _
    %p726 = scmp.le.s32.totalorder 2, %s10
    // Predicated region
    $region37: #{generator_forward.15} parent=5 // pred_check
      %p727 = pneg %p726
    $region38: #{generator_forward.15} parent=5 // pred_check_branch
      %729 = sbr.rel (%p727) target = $region40
    $region39: #{generator_forward.15} parent=5 // pred_region
      %s730 = ssub.s32 %s10, 2
      // Predicated region
      $region41: #{generator_forward.15} parent=39 // pred_check
        %p731 = pneg %p107
      $region42: #{generator_forward.15} parent=39 // pred_check_branch
        %733 = sbr.rel (%p731) target = $region44
      $region43: #{generator_forward.15} parent=39 // pred_region
        %s734 = smul.u32 16, %s22
        %p735 = scmp.lt.s32.totalorder %s21, 3
        %s736 = scalar_select %p735, %s21, 3
        %p737 = scmp.lt.s32.totalorder %s734, 15
        %s738 = scalar_select %p737, %s734, 15
        %s739 = smul.addr %s736, 16
        %s740 = sadd.s32 %s738, %s739
        %s741 = smul.addr %s740, 4
        %s742 = scalar_lea.vmem %s2, %s741
      $region44: #{generator_forward.15} parent=39 // pred_fallthru
        _
      // Predicated region
      $region45: #{generator_forward.15} parent=39 // pred_check
        %p743 = pneg %p135
      $region46: #{generator_forward.15} parent=39 // pred_check_branch
        %745 = sbr.rel (%p743) target = $region48
      $region47: #{generator_forward.15} parent=39 // pred_region
        %p746 = scmp.lt.s32.totalorder %s21, 3
        %s747 = scalar_select %p746, %s21, 3
        %p748 = scmp.lt.s32.totalorder %s22, 0
        %s749 = scalar_select %p748, %s22, 0
        %s750 = sadd.s32 %s749, %s747
        %s751 = smul.addr %s750, 8
        %s752 = scalar_lea.vmem %s3, %s751
      $region48: #{generator_forward.15} parent=39 // pred_fallthru
        _
    $region40: #{generator_forward.15} parent=5 // pred_fallthru
      _
  $region6: #{generator_forward.15} parent=0 // loop_footer
    %s14 = sadd.s32 1, %s10
  $region7: #{generator_forward.15} parent=0 // loop_footer_branch
    %9 = sbr.rel target = $region3
  $region8: #{generator_forward.15} parent=0 // loop_exit
    _

// kernel: tile.83
$region0: #{tile.83}
  #allocation0 [shape = 's32[1]{0}', space=sflag, size = 0x4, scoped, tag = 'scoped memory for tile.83']
  %s0 = inlined_call_operand.vmem [shape: f32[16], index: 0, kind: input, shape index: {}]
  %s1 = inlined_call_operand.vmem [shape: f32[8,16], index: 1, kind: output, shape index: {}]
  // Predicated region
  $region2: #{tile.83} parent=0 // pred_check
    _
  $region3: #{tile.83} parent=0 // pred_check_branch
    %3 = sbr.rel (0) target = $region5
  $region4: #{tile.83} parent=0 // pred_region
    _
  $region5: #{tile.83} parent=0 // pred_fallthru
    _
  %v4 = vld [vmem:[%s0] ss:$0 sm:$0xff]
  %5 = vst [vmem:[%s1] sm:$0xff] %v4

// kernel: tile.88
$region0: #{tile.88}
  %s0 = inlined_call_operand.vmem [shape: f32[8,16], index: 0, kind: input, shape index: {}]
  %s1 = inlined_call_operand.vmem [shape: f32[1,128], index: 1, kind: output, shape index: {}]
  $region1: #{tile.88} parent=0
    #allocation0 [shape = 'u8[4096]{0}', space=vmem, size = 0x1000, scoped, tag = 'scoped mem for output reshape']
    %v2 = vld [vmem:[%s0] sm:$0x1]
    %vm3 = vcmask 130048
    %4 = vst.msk [vmem:[#allocation0] sm:$0x1] %vm3, %v2
    %s5 = scalar_lea.vmem %s0, 7
    %v6 = vld [vmem:[%s5] sm:$0x1]
    %7 = vrot.lane.b32.xlu0 %v6, 112
    %v8 = vpop.permute.xlu0 %7
    %vm9 = vcmask 1048448
    %10 = vst.msk [vmem:[#allocation0] sm:$0x1] %vm9, %v8
    %s11 = scalar_lea.vmem %s0, 6
    %v12 = vld [vmem:[%s11] sm:$0x1]
    %13 = vrot.lane.b32.xlu0 %v12, 96
    %v14 = vpop.permute.xlu0 %13
    %vm15 = vcmask 917248
    %16 = vst.msk [vmem:[#allocation0] sm:$0x1] %vm15, %v14
    %s17 = scalar_lea.vmem %s0, 5
    %v18 = vld [vmem:[%s17] sm:$0x1]
    %19 = vrot.lane.b32.xlu0 %v18, 80
    %v20 = vpop.permute.xlu0 %19
    %vm21 = vcmask 786048
    %22 = vst.msk [vmem:[#allocation0] sm:$0x1] %vm21, %v20
    %s23 = scalar_lea.vmem %s0, 4
    %v24 = vld [vmem:[%s23] sm:$0x1]
    %25 = vrot.lane.b32.xlu0 %v24, 64
    %v26 = vpop.permute.xlu0 %25
    %vm27 = vcmask 654848
    %28 = vst.msk [vmem:[#allocation0] sm:$0x1] %vm27, %v26
    %s29 = scalar_lea.vmem %s0, 3
    %v30 = vld [vmem:[%s29] sm:$0x1]
    %31 = vrot.lane.b32.xlu0 %v30, 48
    %v32 = vpop.permute.xlu0 %31
    %vm33 = vcmask 523648
    %34 = vst.msk [vmem:[#allocation0] sm:$0x1] %vm33, %v32
    %s35 = scalar_lea.vmem %s0, 2
    %v36 = vld [vmem:[%s35] sm:$0x1]
    %37 = vrot.lane.b32.xlu0 %v36, 32
    %v38 = vpop.permute.xlu0 %37
    %vm39 = vcmask 392448
    %40 = vst.msk [vmem:[#allocation0] sm:$0x1] %vm39, %v38
    %s41 = scalar_lea.vmem %s0, 1
    %v42 = vld [vmem:[%s41] sm:$0x1]
    %43 = vrot.lane.b32.xlu0 %v42, 16
    %v44 = vpop.permute.xlu0 %43
    %vm45 = vcmask 261248
    %46 = vst.msk [vmem:[#allocation0] sm:$0x1] %vm45, %v44
    %s48 = ssub.s32 2, 1
    %v49 = vld [vmem:[#allocation0] sm:%s48]
    %s51 = ssub.s32 2, 1
    %52 = vst [vmem:[%s1] sm:%s51] %v49

// kernel: generator_forward.17
$region0: #{generator_forward.17}
  #allocation0 [shape = 'u32[]', space=smem, size = 0x4, offset = 0x4, fixed_abs, tag = 'smem constant byte address 0x4 - core index']
  #allocation1 [shape = 'u32[72,128]{1,0:T(1,128)}', space=vmem, size = 0x9000, scoped, tag = 'internal scratch']
  %s0 = inlined_call_operand.vmem [shape: bf16[4,512,128], index: 0, kind: input, shape index: {}]
  %s1 = inlined_call_operand.vmem [shape: bf16[4,128,16], index: 1, kind: input, shape index: {}]
  %s2 = inlined_call_operand.vmem [shape: bf16[4,512,16], index: 2, kind: output, shape index: {0}]
  %s3 = inlined_call_operand.vmem [shape: f32[4,1,8,16], index: 3, kind: output, shape index: {1}]
  %4 = xla_tuple %s2, %s3
  %s5 = sld [smem:[#allocation0]]
  $region49: #{generator_forward.17} parent=0
    _
  %s7 = ssub.s32 1, %s5
  %s8 = scalar_select 0, %s7, %s5
  loop: start=0, step=1, limit=6
  $region2: #{generator_forward.17} parent=0 // loop_pre_header
    _
  $region3: #{generator_forward.17} parent=0 // loop_header
    %s10 = sphi 0, %s14
    %p11 = scmp.ge.s32.totalorder %s10, 6
    %s17 = sphi 0, %s29
    %s18 = sphi 0, %s25
    %s19 = sphi 0, %s17
    %s20 = sphi 0, %s18
    %s21 = sphi 0, %s19
    %s22 = sphi 0, %s20
    %s34 = sphi 0, %s36
    %s37 = sphi 0, %s34
    %s38 = sphi 0, %s37
    %s54 = sphi 0, %s38
    %s60 = sphi 0, %s62
    %s63 = sphi 0, %s60
    %s64 = sphi 0, %s63
    %s80 = sphi 0, %s64
    %s88 = sphi 0, %s90
    %s91 = sphi 0, %s88
    %s92 = sphi 0, %s91
    %s108 = sphi 0, %s92
    %s116 = sphi 0, %s118
    %s119 = sphi 0, %s116
    %s120 = sphi 0, %s119
    %s136 = sphi 0, %s120
  $region4: #{generator_forward.17} parent=0 // loop_header_branch
    %13 = sbr.rel (%p11) target = $region8
  $region5: #{generator_forward.17} parent=0 // loop_body
    %s15 = ssub.s32 %s10, 1
    %s16 = ssub.s32 %s10, 2
    %s23 = sadd.s32 1, %s18
    %p24 = scmp.ge.s32.totalorder %s23, 1
    %s25 = scalar_select %p24, 0, %s23
    %s26 = sadd.s32 1, %s17
    %s27 = scalar_select %p24, %s26, %s17
    %p28 = scmp.ge.s32.totalorder %s27, 4
    %s29 = scalar_select %p28, 0, %s27
    %s30 = ssub.s32 %s17, %s29
    %s31 = ssub.s32 %s18, %s25
    %s32 = sor.u32 %s30, %s31
    %p33 = scmp.eq.s32.totalorder %s32, 0
    %s35 = sadd.s32 %s34, 1
    %s36 = scalar_select %p33, %s34, %s35
    %p39 = pneg %p33
    %p40 = scmp.eq.s32.totalorder %s10, 3
    %p41 = por %p39, %p40
    %p42 = scmp.ne.s32.totalorder %s34, %s37
    %p43 = scmp.eq.s32.totalorder %s10, 0
    %p44 = por %p42, %p43
    %p45 = scmp.ne.s32.totalorder %s34, %s37
    %p46 = scmp.eq.s32.totalorder %s15, 3
    %p47 = por %p45, %p46
    %p48 = scmp.ne.s32.totalorder %s37, %s38
    %p49 = scmp.eq.s32.totalorder %s15, 0
    %p50 = por %p48, %p49
    %p51 = scmp.ne.s32.totalorder %s37, %s38
    %p52 = scmp.eq.s32.totalorder %s16, 3
    %p53 = por %p51, %p52
    %p55 = scmp.ne.s32.totalorder %s38, %s54
    %p56 = scmp.eq.s32.totalorder %s16, 0
    %p57 = por %p55, %p56
    %s58 = ssub.s32 %s17, %s29
    %p59 = scmp.eq.s32.totalorder %s58, 0
    %s61 = sadd.s32 %s60, 1
    %s62 = scalar_select %p59, %s60, %s61
    %p65 = pneg %p59
    %p66 = scmp.eq.s32.totalorder %s10, 3
    %p67 = por %p65, %p66
    %p68 = scmp.ne.s32.totalorder %s60, %s63
    %p69 = scmp.eq.s32.totalorder %s10, 0
    %p70 = por %p68, %p69
    %p71 = scmp.ne.s32.totalorder %s60, %s63
    %p72 = scmp.eq.s32.totalorder %s15, 3
    %p73 = por %p71, %p72
    %p74 = scmp.ne.s32.totalorder %s63, %s64
    %p75 = scmp.eq.s32.totalorder %s15, 0
    %p76 = por %p74, %p75
    %p77 = scmp.ne.s32.totalorder %s63, %s64
    %p78 = scmp.eq.s32.totalorder %s16, 3
    %p79 = por %p77, %p78
    %p81 = scmp.ne.s32.totalorder %s64, %s80
    %p82 = scmp.eq.s32.totalorder %s16, 0
    %p83 = por %p81, %p82
    %s84 = ssub.s32 %s17, %s29
    %s85 = ssub.s32 %s18, %s25
    %s86 = sor.u32 %s84, %s85
    %p87 = scmp.eq.s32.totalorder %s86, 0
    %s89 = sadd.s32 %s88, 1
    %s90 = scalar_select %p87, %s88, %s89
    %p93 = pneg %p87
    %p94 = scmp.eq.s32.totalorder %s10, 3
    %p95 = por %p93, %p94
    %p96 = scmp.ne.s32.totalorder %s88, %s91
    %p97 = scmp.eq.s32.totalorder %s10, 0
    %p98 = por %p96, %p97
    %p99 = scmp.ne.s32.totalorder %s88, %s91
    %p100 = scmp.eq.s32.totalorder %s15, 3
    %p101 = por %p99, %p100
    %p102 = scmp.ne.s32.totalorder %s91, %s92
    %p103 = scmp.eq.s32.totalorder %s15, 0
    %p104 = por %p102, %p103
    %p105 = scmp.ne.s32.totalorder %s91, %s92
    %p106 = scmp.eq.s32.totalorder %s16, 3
    %p107 = por %p105, %p106
    %p109 = scmp.ne.s32.totalorder %s92, %s108
    %p110 = scmp.eq.s32.totalorder %s16, 0
    %p111 = por %p109, %p110
    %s112 = ssub.s32 %s17, %s29
    %s113 = ssub.s32 %s18, %s25
    %s114 = sor.u32 %s112, %s113
    %p115 = scmp.eq.s32.totalorder %s114, 0
    %s117 = sadd.s32 %s116, 1
    %s118 = scalar_select %p115, %s116, %s117
    %p121 = pneg %p115
    %p122 = scmp.eq.s32.totalorder %s10, 3
    %p123 = por %p121, %p122
    %p124 = scmp.ne.s32.totalorder %s116, %s119
    %p125 = scmp.eq.s32.totalorder %s10, 0
    %p126 = por %p124, %p125
    %p127 = scmp.ne.s32.totalorder %s116, %s119
    %p128 = scmp.eq.s32.totalorder %s15, 3
    %p129 = por %p127, %p128
    %p130 = scmp.ne.s32.totalorder %s119, %s120
    %p131 = scmp.eq.s32.totalorder %s15, 0
    %p132 = por %p130, %p131
    %p133 = scmp.ne.s32.totalorder %s119, %s120
    %p134 = scmp.eq.s32.totalorder %s16, 3
    %p135 = por %p133, %p134
    %p137 = scmp.ne.s32.totalorder %s120, %s136
    %p138 = scmp.eq.s32.totalorder %s16, 0
    %p139 = por %p137, %p138
    %p140 = scmp.le.s32.totalorder 1, %s10
    %p141 = scmp.lt.s32.totalorder %s10, 5
    %p142 = pnand %p140, %p141
    %p143 = pneg %p142
    // Predicated region
    $region9: #{generator_forward.17} parent=5 // pred_check
      _
    $region10: #{generator_forward.17} parent=5 // pred_check_branch
      %145 = sbr.rel (%p142) target = $region12
    $region11: #{generator_forward.17} parent=5 // pred_region
      %s146 = ssub.s32 %s10, 1
    $region12: #{generator_forward.17} parent=5 // pred_fallthru
      _
    %p147 = scmp.lt.s32.totalorder %s10, 4
    // Predicated region
    $region13: #{generator_forward.17} parent=5 // pred_check
      %p148 = pneg %p147
    $region14: #{generator_forward.17} parent=5 // pred_check_branch
      %150 = sbr.rel (%p148) target = $region16
    $region15: #{generator_forward.17} parent=5 // pred_region
      // Predicated region
      $region17: #{generator_forward.17} parent=15 // pred_check
        %p151 = pneg %p44
      $region18: #{generator_forward.17} parent=15 // pred_check_branch
        %153 = sbr.rel (%p151) target = $region20
      $region19: #{generator_forward.17} parent=15 // pred_region
        %s154 = smul.u32 64, %s18
        %p155 = scmp.lt.s32.totalorder %s17, 3
        %s156 = scalar_select %p155, %s17, 3
        %p157 = scmp.lt.s32.totalorder %s154, 63
        %s158 = scalar_select %p157, %s154, 63
        %s159 = smul.addr %s156, 64
        %s160 = sadd.s32 %s158, %s159
        %s161 = smul.addr %s160, 4
        %s162 = scalar_lea.vmem %s0, %s161
        %s163 = smul.u32 64, %s18
      $region20: #{generator_forward.17} parent=15 // pred_fallthru
        _
      // Predicated region
      $region21: #{generator_forward.17} parent=15 // pred_check
        %p164 = pneg %p70
      $region22: #{generator_forward.17} parent=15 // pred_check_branch
        %166 = sbr.rel (%p164) target = $region24
      $region23: #{generator_forward.17} parent=15 // pred_region
        %p167 = scmp.lt.s32.totalorder %s17, 3
        %s168 = scalar_select %p167, %s17, 3
        %s169 = smul.addr %s168, 16
        %s170 = smul.addr %s169, 4
        %s171 = scalar_lea.vmem %s1, %s170
      $region24: #{generator_forward.17} parent=15 // pred_fallthru
        _
    $region16: #{generator_forward.17} parent=5 // pred_fallthru
      _
    %p172 = scmp.le.s32.totalorder 1, %s10
    %p173 = scmp.lt.s32.totalorder %s10, 5
    %p174 = pnand %p172, %p173
    %p175 = pneg %p174
    // Predicated region
    $region25: #{generator_forward.17} parent=5 // pred_check
      _
    $region26: #{generator_forward.17} parent=5 // pred_check_branch
      %177 = sbr.rel (%p174) target = $region28
    $region27: #{generator_forward.17} parent=5 // pred_region
      %s178 = ssub.s32 %s10, 1
      %s179 = smul.u32 64, %s20
      %p180 = scmp.lt.s32.totalorder %s19, 3
      %s181 = scalar_select %p180, %s19, 3
      %p182 = scmp.lt.s32.totalorder %s179, 63
      %s183 = scalar_select %p182, %s179, 63
      %s184 = smul.addr %s181, 64
      %s185 = sadd.s32 %s183, %s184
      %s186 = smul.addr %s185, 4
      %s187 = scalar_lea.vmem %s0, %s186
      %p188 = pneg %p50
      %p189 = pneg %p47
      %p190 = scmp.lt.s32.totalorder %s19, 3
      %s191 = scalar_select %p190, %s19, 3
      %s192 = smul.addr %s191, 16
      %s193 = smul.addr %s192, 4
      %s194 = scalar_lea.vmem %s1, %s193
      %p195 = pneg %p76
      %p196 = pneg %p73
      %p197 = pneg %p104
      %p198 = pneg %p101
      %s199 = smul.u32 64, %s20
      %p200 = scmp.lt.s32.totalorder %s19, 3
      %s201 = scalar_select %p200, %s19, 3
      %p202 = scmp.lt.s32.totalorder %s199, 63
      %s203 = scalar_select %p202, %s199, 63
      %s204 = smul.addr %s201, 64
      %s205 = sadd.s32 %s203, %s204
      %s206 = smul.addr %s205, 4
      %s207 = scalar_lea.vmem %s2, %s206
      %p208 = pneg %p132
      %p209 = pneg %p129
      %p210 = scmp.lt.s32.totalorder %s19, 3
      %s211 = scalar_select %p210, %s19, 3
      %p212 = scmp.lt.s32.totalorder %s20, 0
      %s213 = scalar_select %p212, %s20, 0
      %s214 = sadd.s32 %s213, %s211
      %s215 = smul.addr %s214, 8
      %s216 = scalar_lea.vmem %s3, %s215
      %s217 = smul.u32 64, %s20
      %p218 = scmp.lt.s32.totalorder %s19, 3
      %s219 = scalar_select %p218, %s19, 3
      %p220 = scmp.lt.s32.totalorder %s217, 63
      %s221 = scalar_select %p220, %s217, 63
      %s222 = smul.addr %s219, 64
      %s223 = sadd.s32 %s221, %s222
      %s224 = smul.addr %s223, 4
      %s225 = scalar_lea.vmem %s0, %s224
      %s226 = smul.u32 64, %s20
      %p227 = scmp.lt.s32.totalorder %s19, 3
      %s228 = scalar_select %p227, %s19, 3
      %s229 = smul.addr %s228, 16
      %s230 = smul.addr %s229, 4
      %s231 = scalar_lea.vmem %s1, %s230
      %s232 = smul.u32 64, %s20
      %p233 = scmp.lt.s32.totalorder %s19, 3
      %s234 = scalar_select %p233, %s19, 3
      %p235 = scmp.lt.s32.totalorder %s232, 63
      %s236 = scalar_select %p235, %s232, 63
      %s237 = smul.addr %s234, 64
      %s238 = sadd.s32 %s236, %s237
      %s239 = smul.addr %s238, 4
      %s240 = scalar_lea.vmem %s2, %s239
      %s241 = smul.u32 64, %s20
      %p242 = scmp.lt.s32.totalorder %s19, 3
      %s243 = scalar_select %p242, %s19, 3
      %p244 = scmp.lt.s32.totalorder %s20, 0
      %s245 = scalar_select %p244, %s20, 0
      %s246 = sadd.s32 %s245, %s243
      %s247 = smul.addr %s246, 8
      %s248 = scalar_lea.vmem %s3, %s247
      %v249 = vld [vmem:[%s225] sm:$0xf]
      %v250 = vld [vmem:[%s225 + $0x4] sm:$0xf]
      %v251 = vld [vmem:[%s225 + $0x8] sm:$0xf]
      %v252 = vld [vmem:[%s225 + $0xc] sm:$0xf]
      %v253 = vld [vmem:[%s225 + $0x10] sm:$0xf]
      %v254 = vld [vmem:[%s225 + $0x14] sm:$0xf]
      %v255 = vld [vmem:[%s225 + $0x18] sm:$0xf]
      %v256 = vld [vmem:[%s225 + $0x1c] sm:$0xf]
      %v257 = vld [vmem:[%s225 + $0x20] sm:$0xf]
      %v258 = vld [vmem:[%s225 + $0x24] sm:$0xf]
      %v259 = vld [vmem:[%s225 + $0x28] sm:$0xf]
      %v260 = vld [vmem:[%s225 + $0x2c] sm:$0xf]
      %v261 = vld [vmem:[%s225 + $0x30] sm:$0xf]
      %v262 = vld [vmem:[%s225 + $0x34] sm:$0xf]
      %v263 = vld [vmem:[%s225 + $0x38] sm:$0xf]
      %v264 = vld [vmem:[%s225 + $0x3c] sm:$0xf]
      %v265 = vld [vmem:[%s225 + $0x40] sm:$0xf]
      %v266 = vld [vmem:[%s225 + $0x44] sm:$0xf]
      %v267 = vld [vmem:[%s225 + $0x48] sm:$0xf]
      %v268 = vld [vmem:[%s225 + $0x4c] sm:$0xf]
      %v269 = vld [vmem:[%s225 + $0x50] sm:$0xf]
      %v270 = vld [vmem:[%s225 + $0x54] sm:$0xf]
      %v271 = vld [vmem:[%s225 + $0x58] sm:$0xf]
      %v272 = vld [vmem:[%s225 + $0x5c] sm:$0xf]
      %v273 = vld [vmem:[%s225 + $0x60] sm:$0xf]
      %v274 = vld [vmem:[%s225 + $0x64] sm:$0xf]
      %v275 = vld [vmem:[%s225 + $0x68] sm:$0xf]
      %v276 = vld [vmem:[%s225 + $0x6c] sm:$0xf]
      %v277 = vld [vmem:[%s225 + $0x70] sm:$0xf]
      %v278 = vld [vmem:[%s225 + $0x74] sm:$0xf]
      %v279 = vld [vmem:[%s225 + $0x78] sm:$0xf]
      %v280 = vld [vmem:[%s225 + $0x7c] sm:$0xf]
      %v281 = vld [vmem:[%s225 + $0x80] sm:$0xf]
      %v282 = vld [vmem:[%s225 + $0x84] sm:$0xf]
      %v283 = vld [vmem:[%s225 + $0x88] sm:$0xf]
      %v284 = vld [vmem:[%s225 + $0x8c] sm:$0xf]
      %v285 = vld [vmem:[%s225 + $0x90] sm:$0xf]
      %v286 = vld [vmem:[%s225 + $0x94] sm:$0xf]
      %v287 = vld [vmem:[%s225 + $0x98] sm:$0xf]
      %v288 = vld [vmem:[%s225 + $0x9c] sm:$0xf]
      %v289 = vld [vmem:[%s225 + $0xa0] sm:$0xf]
      %v290 = vld [vmem:[%s225 + $0xa4] sm:$0xf]
      %v291 = vld [vmem:[%s225 + $0xa8] sm:$0xf]
      %v292 = vld [vmem:[%s225 + $0xac] sm:$0xf]
      %v293 = vld [vmem:[%s225 + $0xb0] sm:$0xf]
      %v294 = vld [vmem:[%s225 + $0xb4] sm:$0xf]
      %v295 = vld [vmem:[%s225 + $0xb8] sm:$0xf]
      %v296 = vld [vmem:[%s225 + $0xbc] sm:$0xf]
      %v297 = vld [vmem:[%s225 + $0xc0] sm:$0xf]
      %v298 = vld [vmem:[%s225 + $0xc4] sm:$0xf]
      %v299 = vld [vmem:[%s225 + $0xc8] sm:$0xf]
      %v300 = vld [vmem:[%s225 + $0xcc] sm:$0xf]
      %v301 = vld [vmem:[%s225 + $0xd0] sm:$0xf]
      %v302 = vld [vmem:[%s225 + $0xd4] sm:$0xf]
      %v303 = vld [vmem:[%s225 + $0xd8] sm:$0xf]
      %v304 = vld [vmem:[%s225 + $0xdc] sm:$0xf]
      %v305 = vld [vmem:[%s225 + $0xe0] sm:$0xf]
      %v306 = vld [vmem:[%s225 + $0xe4] sm:$0xf]
      %v307 = vld [vmem:[%s225 + $0xe8] sm:$0xf]
      %v308 = vld [vmem:[%s225 + $0xec] sm:$0xf]
      %v309 = vld [vmem:[%s225 + $0xf0] sm:$0xf]
      %v310 = vld [vmem:[%s225 + $0xf4] sm:$0xf]
      %v311 = vld [vmem:[%s225 + $0xf8] sm:$0xf]
      %v312 = vld [vmem:[%s225 + $0xfc] sm:$0xf]
      %v313 = vld [vmem:[%s231] sm:$0xf]
      %v314 = vld [vmem:[%s231 + $0x4] sm:$0xf]
      %v315 = vld [vmem:[%s231 + $0x8] sm:$0xf]
      %v316 = vld [vmem:[%s231 + $0xc] sm:$0xf]
      %v317 = vld [vmem:[%s231 + $0x10] sm:$0xf]
      %v318 = vld [vmem:[%s231 + $0x14] sm:$0xf]
      %v319 = vld [vmem:[%s231 + $0x18] sm:$0xf]
      %v320 = vld [vmem:[%s231 + $0x1c] sm:$0xf]
      %v321 = vld [vmem:[%s231 + $0x20] sm:$0xf]
      %v322 = vld [vmem:[%s231 + $0x24] sm:$0xf]
      %v323 = vld [vmem:[%s231 + $0x28] sm:$0xf]
      %v324 = vld [vmem:[%s231 + $0x2c] sm:$0xf]
      %v325 = vld [vmem:[%s231 + $0x30] sm:$0xf]
      %v326 = vld [vmem:[%s231 + $0x34] sm:$0xf]
      %v327 = vld [vmem:[%s231 + $0x38] sm:$0xf]
      %v328 = vld [vmem:[%s231 + $0x3c] sm:$0xf]
      %v393 = vunpack.c.l.b16 %v249
      %v394 = vunpack.c.l.b16 %v250
      %v395 = vunpack.c.l.b16 %v251
      %v396 = vunpack.c.l.b16 %v252
      %v397 = vunpack.c.l.b16 %v253
      %v398 = vunpack.c.l.b16 %v254
      %v399 = vunpack.c.l.b16 %v255
      %v400 = vunpack.c.l.b16 %v256
      %v401 = vunpack.c.l.b16 %v257
      %v402 = vunpack.c.l.b16 %v258
      %v403 = vunpack.c.l.b16 %v259
      %v404 = vunpack.c.l.b16 %v260
      %v405 = vunpack.c.l.b16 %v261
      %v406 = vunpack.c.l.b16 %v262
      %v407 = vunpack.c.l.b16 %v263
      %v408 = vunpack.c.l.b16 %v264
      %v409 = vunpack.c.l.b16 %v265
      %v410 = vunpack.c.l.b16 %v266
      %v411 = vunpack.c.l.b16 %v267
      %v412 = vunpack.c.l.b16 %v268
      %v413 = vunpack.c.l.b16 %v269
      %v414 = vunpack.c.l.b16 %v270
      %v415 = vunpack.c.l.b16 %v271
      %v416 = vunpack.c.l.b16 %v272
      %v417 = vunpack.c.l.b16 %v273
      %v418 = vunpack.c.l.b16 %v274
      %v419 = vunpack.c.l.b16 %v275
      %v420 = vunpack.c.l.b16 %v276
      %v421 = vunpack.c.l.b16 %v277
      %v422 = vunpack.c.l.b16 %v278
      %v423 = vunpack.c.l.b16 %v279
      %v424 = vunpack.c.l.b16 %v280
      %v425 = vunpack.c.l.b16 %v281
      %v426 = vunpack.c.l.b16 %v282
      %v427 = vunpack.c.l.b16 %v283
      %v428 = vunpack.c.l.b16 %v284
      %v429 = vunpack.c.l.b16 %v285
      %v430 = vunpack.c.l.b16 %v286
      %v431 = vunpack.c.l.b16 %v287
      %v432 = vunpack.c.l.b16 %v288
      %v433 = vunpack.c.l.b16 %v289
      %v434 = vunpack.c.l.b16 %v290
      %v435 = vunpack.c.l.b16 %v291
      %v436 = vunpack.c.l.b16 %v292
      %v437 = vunpack.c.l.b16 %v293
      %v438 = vunpack.c.l.b16 %v294
      %v439 = vunpack.c.l.b16 %v295
      %v440 = vunpack.c.l.b16 %v296
      %v441 = vunpack.c.l.b16 %v297
      %v442 = vunpack.c.l.b16 %v298
      %v443 = vunpack.c.l.b16 %v299
      %v444 = vunpack.c.l.b16 %v300
      %v445 = vunpack.c.l.b16 %v301
      %v446 = vunpack.c.l.b16 %v302
      %v447 = vunpack.c.l.b16 %v303
      %v448 = vunpack.c.l.b16 %v304
      %v449 = vunpack.c.l.b16 %v305
      %v450 = vunpack.c.l.b16 %v306
      %v451 = vunpack.c.l.b16 %v307
      %v452 = vunpack.c.l.b16 %v308
      %v453 = vunpack.c.l.b16 %v309
      %v454 = vunpack.c.l.b16 %v310
      %v455 = vunpack.c.l.b16 %v311
      %v456 = vunpack.c.l.b16 %v312
      %v457 = vpack.c.b16 %v394, %v393
      %v458 = vpack.c.b16 %v396, %v395
      %v459 = vpack.c.b16 %v398, %v397
      %v460 = vpack.c.b16 %v400, %v399
      %v461 = vpack.c.b16 %v402, %v401
      %v462 = vpack.c.b16 %v404, %v403
      %v463 = vpack.c.b16 %v406, %v405
      %v464 = vpack.c.b16 %v408, %v407
      %v465 = vpack.c.b16 %v410, %v409
      %v466 = vpack.c.b16 %v412, %v411
      %v467 = vpack.c.b16 %v414, %v413
      %v468 = vpack.c.b16 %v416, %v415
      %v469 = vpack.c.b16 %v418, %v417
      %v470 = vpack.c.b16 %v420, %v419
      %v471 = vpack.c.b16 %v422, %v421
      %v472 = vpack.c.b16 %v424, %v423
      %v473 = vpack.c.b16 %v426, %v425
      %v474 = vpack.c.b16 %v428, %v427
      %v475 = vpack.c.b16 %v430, %v429
      %v476 = vpack.c.b16 %v432, %v431
      %v477 = vpack.c.b16 %v434, %v433
      %v478 = vpack.c.b16 %v436, %v435
      %v479 = vpack.c.b16 %v438, %v437
      %v480 = vpack.c.b16 %v440, %v439
      %v481 = vpack.c.b16 %v442, %v441
      %v482 = vpack.c.b16 %v444, %v443
      %v483 = vpack.c.b16 %v446, %v445
      %v484 = vpack.c.b16 %v448, %v447
      %v485 = vpack.c.b16 %v450, %v449
      %v486 = vpack.c.b16 %v452, %v451
      %v487 = vpack.c.b16 %v454, %v453
      %v488 = vpack.c.b16 %v456, %v455
      %v537 = vunpack.c.l.b16 %v313
      %v538 = vunpack.c.l.b16 %v314
      %v539 = vunpack.c.l.b16 %v315
      %v540 = vunpack.c.l.b16 %v316
      %v541 = vunpack.c.l.b16 %v317
      %v542 = vunpack.c.l.b16 %v318
      %v543 = vunpack.c.l.b16 %v319
      %v544 = vunpack.c.l.b16 %v320
      %v545 = vunpack.c.l.b16 %v321
      %v546 = vunpack.c.l.b16 %v322
      %v547 = vunpack.c.l.b16 %v323
      %v548 = vunpack.c.l.b16 %v324
      %v549 = vunpack.c.l.b16 %v325
      %v550 = vunpack.c.l.b16 %v326
      %v551 = vunpack.c.l.b16 %v327
      %v552 = vunpack.c.l.b16 %v328
      %v553 = vpack.c.b16 %v538, %v537
      %v554 = vpack.c.b16 %v540, %v539
      %v555 = vpack.c.b16 %v542, %v541
      %v556 = vpack.c.b16 %v544, %v543
      %v557 = vpack.c.b16 %v546, %v545
      %v558 = vpack.c.b16 %v548, %v547
      %v559 = vpack.c.b16 %v550, %v549
      %v560 = vpack.c.b16 %v552, %v551
      %569 = vmatpush.bf16.msra.mxu0 %v560
      %570 = vmatpush.bf16.msra.mxu0 %v559
      %571 = vmatpush.bf16.msra.mxu0 %v558
      %572 = vmatpush.bf16.msra.mxu0 %v557
      %573 = vmatpush.bf16.msra.mxu0 %v556
      %574 = vmatpush.bf16.msra.mxu0 %v555
      %575 = vmatpush.bf16.msra.mxu0 %v554
      %576 = vmatpush.bf16.msra.mxu0 %v553
      %577 = vmatmul.bf16.gmra.mxu0 %v457
      %v578 = vpop.f32.mrf.mxu0
      %v579 = vadd.f32 0.0, %v578
      %v580 = vpop.f32.mrf.mxu0
      %v581 = vadd.f32 0.0, %v580
      %582 = vmatmul.bf16.gmra.mxu0 %v458
      %v583 = vpop.f32.mrf.mxu0
      %v584 = vadd.f32 0.0, %v583
      %v585 = vpop.f32.mrf.mxu0
      %v586 = vadd.f32 0.0, %v585
      %587 = vmatmul.bf16.gmra.mxu0 %v459
      %v588 = vpop.f32.mrf.mxu0
      %v589 = vadd.f32 0.0, %v588
      %v590 = vpop.f32.mrf.mxu0
      %v591 = vadd.f32 0.0, %v590
      %592 = vmatmul.bf16.gmra.mxu0 %v460
      %v593 = vpop.f32.mrf.mxu0
      %v594 = vadd.f32 0.0, %v593
      %v595 = vpop.f32.mrf.mxu0
      %v596 = vadd.f32 0.0, %v595
      %597 = vmatmul.bf16.gmra.mxu0 %v461
      %v598 = vpop.f32.mrf.mxu0
      %v599 = vadd.f32 0.0, %v598
      %v600 = vpop.f32.mrf.mxu0
      %v601 = vadd.f32 0.0, %v600
      %602 = vmatmul.bf16.gmra.mxu0 %v462
      %v603 = vpop.f32.mrf.mxu0
      %v604 = vadd.f32 0.0, %v603
      %v605 = vpop.f32.mrf.mxu0
      %v606 = vadd.f32 0.0, %v605
      %607 = vmatmul.bf16.gmra.mxu0 %v463
      %v608 = vpop.f32.mrf.mxu0
      %v609 = vadd.f32 0.0, %v608
      %v610 = vpop.f32.mrf.mxu0
      %v611 = vadd.f32 0.0, %v610
      %612 = vmatmul.bf16.gmra.mxu0 %v464
      %v613 = vpop.f32.mrf.mxu0
      %v614 = vadd.f32 0.0, %v613
      %v615 = vpop.f32.mrf.mxu0
      %v616 = vadd.f32 0.0, %v615
      %617 = vmatmul.bf16.gmra.mxu0 %v465
      %v618 = vpop.f32.mrf.mxu0
      %v619 = vadd.f32 0.0, %v618
      %v620 = vpop.f32.mrf.mxu0
      %v621 = vadd.f32 0.0, %v620
      %622 = vmatmul.bf16.gmra.mxu0 %v466
      %v623 = vpop.f32.mrf.mxu0
      %v624 = vadd.f32 0.0, %v623
      %v625 = vpop.f32.mrf.mxu0
      %v626 = vadd.f32 0.0, %v625
      %627 = vmatmul.bf16.gmra.mxu0 %v467
      %v628 = vpop.f32.mrf.mxu0
      %v629 = vadd.f32 0.0, %v628
      %v630 = vpop.f32.mrf.mxu0
      %v631 = vadd.f32 0.0, %v630
      %632 = vmatmul.bf16.gmra.mxu0 %v468
      %v633 = vpop.f32.mrf.mxu0
      %v634 = vadd.f32 0.0, %v633
      %v635 = vpop.f32.mrf.mxu0
      %v636 = vadd.f32 0.0, %v635
      %637 = vmatmul.bf16.gmra.mxu0 %v469
      %v638 = vpop.f32.mrf.mxu0
      %v639 = vadd.f32 0.0, %v638
      %v640 = vpop.f32.mrf.mxu0
      %v641 = vadd.f32 0.0, %v640
      %642 = vmatmul.bf16.gmra.mxu0 %v470
      %v643 = vpop.f32.mrf.mxu0
      %v644 = vadd.f32 0.0, %v643
      %v645 = vpop.f32.mrf.mxu0
      %v646 = vadd.f32 0.0, %v645
      %647 = vmatmul.bf16.gmra.mxu0 %v471
      %v648 = vpop.f32.mrf.mxu0
      %v649 = vadd.f32 0.0, %v648
      %v650 = vpop.f32.mrf.mxu0
      %v651 = vadd.f32 0.0, %v650
      %652 = vmatmul.bf16.gmra.mxu0 %v472
      %v653 = vpop.f32.mrf.mxu0
      %v654 = vadd.f32 0.0, %v653
      %v655 = vpop.f32.mrf.mxu0
      %v656 = vadd.f32 0.0, %v655
      %657 = vmatmul.bf16.gmra.mxu0 %v473
      %v658 = vpop.f32.mrf.mxu0
      %v659 = vadd.f32 0.0, %v658
      %v660 = vpop.f32.mrf.mxu0
      %v661 = vadd.f32 0.0, %v660
      %662 = vmatmul.bf16.gmra.mxu0 %v474
      %v663 = vpop.f32.mrf.mxu0
      %v664 = vadd.f32 0.0, %v663
      %v665 = vpop.f32.mrf.mxu0
      %v666 = vadd.f32 0.0, %v665
      %667 = vmatmul.bf16.gmra.mxu0 %v475
      %v668 = vpop.f32.mrf.mxu0
      %v669 = vadd.f32 0.0, %v668
      %v670 = vpop.f32.mrf.mxu0
      %v671 = vadd.f32 0.0, %v670
      %672 = vmatmul.bf16.gmra.mxu0 %v476
      %v673 = vpop.f32.mrf.mxu0
      %v674 = vadd.f32 0.0, %v673
      %v675 = vpop.f32.mrf.mxu0
      %v676 = vadd.f32 0.0, %v675
      %677 = vmatmul.bf16.gmra.mxu0 %v477
      %v678 = vpop.f32.mrf.mxu0
      %v679 = vadd.f32 0.0, %v678
      %v680 = vpop.f32.mrf.mxu0
      %v681 = vadd.f32 0.0, %v680
      %682 = vmatmul.bf16.gmra.mxu0 %v478
      %v683 = vpop.f32.mrf.mxu0
      %v684 = vadd.f32 0.0, %v683
      %v685 = vpop.f32.mrf.mxu0
      %v686 = vadd.f32 0.0, %v685
      %687 = vmatmul.bf16.gmra.mxu0 %v479
      %v688 = vpop.f32.mrf.mxu0
      %v689 = vadd.f32 0.0, %v688
      %v690 = vpop.f32.mrf.mxu0
      %v691 = vadd.f32 0.0, %v690
      %692 = vmatmul.bf16.gmra.mxu0 %v480
      %v693 = vpop.f32.mrf.mxu0
      %v694 = vadd.f32 0.0, %v693
      %v695 = vpop.f32.mrf.mxu0
      %v696 = vadd.f32 0.0, %v695
      %697 = vmatmul.bf16.gmra.mxu0 %v481
      %v698 = vpop.f32.mrf.mxu0
      %v699 = vadd.f32 0.0, %v698
      %v700 = vpop.f32.mrf.mxu0
      %v701 = vadd.f32 0.0, %v700
      %702 = vmatmul.bf16.gmra.mxu0 %v482
      %v703 = vpop.f32.mrf.mxu0
      %v704 = vadd.f32 0.0, %v703
      %v705 = vpop.f32.mrf.mxu0
      %v706 = vadd.f32 0.0, %v705
      %707 = vmatmul.bf16.gmra.mxu0 %v483
      %v708 = vpop.f32.mrf.mxu0
      %v709 = vadd.f32 0.0, %v708
      %v710 = vpop.f32.mrf.mxu0
      %v711 = vadd.f32 0.0, %v710
      %712 = vmatmul.bf16.gmra.mxu0 %v484
      %v713 = vpop.f32.mrf.mxu0
      %v714 = vadd.f32 0.0, %v713
      %v715 = vpop.f32.mrf.mxu0
      %v716 = vadd.f32 0.0, %v715
      %717 = vmatmul.bf16.gmra.mxu0 %v485
      %v718 = vpop.f32.mrf.mxu0
      %v719 = vadd.f32 0.0, %v718
      %v720 = vpop.f32.mrf.mxu0
      %v721 = vadd.f32 0.0, %v720
      %722 = vmatmul.bf16.gmra.mxu0 %v486
      %v723 = vpop.f32.mrf.mxu0
      %v724 = vadd.f32 0.0, %v723
      %v725 = vpop.f32.mrf.mxu0
      %v726 = vadd.f32 0.0, %v725
      %727 = vmatmul.bf16.gmra.mxu0 %v487
      %v728 = vpop.f32.mrf.mxu0
      %v729 = vadd.f32 0.0, %v728
      %v730 = vpop.f32.mrf.mxu0
      %v731 = vadd.f32 0.0, %v730
      %732 = vmatmul.bf16.gmra.mxu0 %v488
      %v733 = vpop.f32.mrf.mxu0
      %v734 = vadd.f32 0.0, %v733
      %v735 = vpop.f32.mrf.mxu0
      %v736 = vadd.f32 0.0, %v735
      %737 = vdwg.mxu0
      %v738 = vpack.c.bf16 %v579, %v579
      %v739 = vpack.c.bf16 %v581, %v581
      %v740 = vpack.c.bf16 %v584, %v584
      %v741 = vpack.c.bf16 %v586, %v586
      %v742 = vpack.c.bf16 %v589, %v589
      %v743 = vpack.c.bf16 %v591, %v591
      %v744 = vpack.c.bf16 %v594, %v594
      %v745 = vpack.c.bf16 %v596, %v596
      %v746 = vpack.c.bf16 %v599, %v599
      %v747 = vpack.c.bf16 %v601, %v601
      %v748 = vpack.c.bf16 %v604, %v604
      %v749 = vpack.c.bf16 %v606, %v606
      %v750 = vpack.c.bf16 %v609, %v609
      %v751 = vpack.c.bf16 %v611, %v611
      %v752 = vpack.c.bf16 %v614, %v614
      %v753 = vpack.c.bf16 %v616, %v616
      %v754 = vpack.c.bf16 %v619, %v619
      %v755 = vpack.c.bf16 %v621, %v621
      %v756 = vpack.c.bf16 %v624, %v624
      %v757 = vpack.c.bf16 %v626, %v626
      %v758 = vpack.c.bf16 %v629, %v629
      %v759 = vpack.c.bf16 %v631, %v631
      %v760 = vpack.c.bf16 %v634, %v634
      %v761 = vpack.c.bf16 %v636, %v636
      %v762 = vpack.c.bf16 %v639, %v639
      %v763 = vpack.c.bf16 %v641, %v641
      %v764 = vpack.c.bf16 %v644, %v644
      %v765 = vpack.c.bf16 %v646, %v646
      %v766 = vpack.c.bf16 %v649, %v649
      %v767 = vpack.c.bf16 %v651, %v651
      %v768 = vpack.c.bf16 %v654, %v654
      %v769 = vpack.c.bf16 %v656, %v656
      %v770 = vpack.c.bf16 %v659, %v659
      %v771 = vpack.c.bf16 %v661, %v661
      %v772 = vpack.c.bf16 %v664, %v664
      %v773 = vpack.c.bf16 %v666, %v666
      %v774 = vpack.c.bf16 %v669, %v669
      %v775 = vpack.c.bf16 %v671, %v671
      %v776 = vpack.c.bf16 %v674, %v674
      %v777 = vpack.c.bf16 %v676, %v676
      %v778 = vpack.c.bf16 %v679, %v679
      %v779 = vpack.c.bf16 %v681, %v681
      %v780 = vpack.c.bf16 %v684, %v684
      %v781 = vpack.c.bf16 %v686, %v686
      %v782 = vpack.c.bf16 %v689, %v689
      %v783 = vpack.c.bf16 %v691, %v691
      %v784 = vpack.c.bf16 %v694, %v694
      %v785 = vpack.c.bf16 %v696, %v696
      %v786 = vpack.c.bf16 %v699, %v699
      %v787 = vpack.c.bf16 %v701, %v701
      %v788 = vpack.c.bf16 %v704, %v704
      %v789 = vpack.c.bf16 %v706, %v706
      %v790 = vpack.c.bf16 %v709, %v709
      %v791 = vpack.c.bf16 %v711, %v711
      %v792 = vpack.c.bf16 %v714, %v714
      %v793 = vpack.c.bf16 %v716, %v716
      %v794 = vpack.c.bf16 %v719, %v719
      %v795 = vpack.c.bf16 %v721, %v721
      %v796 = vpack.c.bf16 %v724, %v724
      %v797 = vpack.c.bf16 %v726, %v726
      %v798 = vpack.c.bf16 %v729, %v729
      %v799 = vpack.c.bf16 %v731, %v731
      %v800 = vpack.c.bf16 %v734, %v734
      %v801 = vpack.c.bf16 %v736, %v736
      %vm802 = vcmask 125952
      %803 = vst.msk [vmem:[%s240] sm:$0xf] %vm802, %v738
      %804 = vst.msk [vmem:[%s240 + $0x4] sm:$0xf] %vm802, %v739
      %805 = vst.msk [vmem:[%s240 + $0x8] sm:$0xf] %vm802, %v740
      %806 = vst.msk [vmem:[%s240 + $0xc] sm:$0xf] %vm802, %v741
      %807 = vst.msk [vmem:[%s240 + $0x10] sm:$0xf] %vm802, %v742
      %808 = vst.msk [vmem:[%s240 + $0x14] sm:$0xf] %vm802, %v743
      %809 = vst.msk [vmem:[%s240 + $0x18] sm:$0xf] %vm802, %v744
      %810 = vst.msk [vmem:[%s240 + $0x1c] sm:$0xf] %vm802, %v745
      %811 = vst.msk [vmem:[%s240 + $0x20] sm:$0xf] %vm802, %v746
      %812 = vst.msk [vmem:[%s240 + $0x24] sm:$0xf] %vm802, %v747
      %813 = vst.msk [vmem:[%s240 + $0x28] sm:$0xf] %vm802, %v748
      %814 = vst.msk [vmem:[%s240 + $0x2c] sm:$0xf] %vm802, %v749
      %815 = vst.msk [vmem:[%s240 + $0x30] sm:$0xf] %vm802, %v750
      %816 = vst.msk [vmem:[%s240 + $0x34] sm:$0xf] %vm802, %v751
      %817 = vst.msk [vmem:[%s240 + $0x38] sm:$0xf] %vm802, %v752
      %818 = vst.msk [vmem:[%s240 + $0x3c] sm:$0xf] %vm802, %v753
      %819 = vst.msk [vmem:[%s240 + $0x40] sm:$0xf] %vm802, %v754
      %820 = vst.msk [vmem:[%s240 + $0x44] sm:$0xf] %vm802, %v755
      %821 = vst.msk [vmem:[%s240 + $0x48] sm:$0xf] %vm802, %v756
      %822 = vst.msk [vmem:[%s240 + $0x4c] sm:$0xf] %vm802, %v757
      %823 = vst.msk [vmem:[%s240 + $0x50] sm:$0xf] %vm802, %v758
      %824 = vst.msk [vmem:[%s240 + $0x54] sm:$0xf] %vm802, %v759
      %825 = vst.msk [vmem:[%s240 + $0x58] sm:$0xf] %vm802, %v760
      %826 = vst.msk [vmem:[%s240 + $0x5c] sm:$0xf] %vm802, %v761
      %827 = vst.msk [vmem:[%s240 + $0x60] sm:$0xf] %vm802, %v762
      %828 = vst.msk [vmem:[%s240 + $0x64] sm:$0xf] %vm802, %v763
      %829 = vst.msk [vmem:[%s240 + $0x68] sm:$0xf] %vm802, %v764
      %830 = vst.msk [vmem:[%s240 + $0x6c] sm:$0xf] %vm802, %v765
      %831 = vst.msk [vmem:[%s240 + $0x70] sm:$0xf] %vm802, %v766
      %832 = vst.msk [vmem:[%s240 + $0x74] sm:$0xf] %vm802, %v767
      %833 = vst.msk [vmem:[%s240 + $0x78] sm:$0xf] %vm802, %v768
      %834 = vst.msk [vmem:[%s240 + $0x7c] sm:$0xf] %vm802, %v769
      %835 = vst.msk [vmem:[%s240 + $0x80] sm:$0xf] %vm802, %v770
      %836 = vst.msk [vmem:[%s240 + $0x84] sm:$0xf] %vm802, %v771
      %837 = vst.msk [vmem:[%s240 + $0x88] sm:$0xf] %vm802, %v772
      %838 = vst.msk [vmem:[%s240 + $0x8c] sm:$0xf] %vm802, %v773
      %839 = vst.msk [vmem:[%s240 + $0x90] sm:$0xf] %vm802, %v774
      %840 = vst.msk [vmem:[%s240 + $0x94] sm:$0xf] %vm802, %v775
      %841 = vst.msk [vmem:[%s240 + $0x98] sm:$0xf] %vm802, %v776
      %842 = vst.msk [vmem:[%s240 + $0x9c] sm:$0xf] %vm802, %v777
      %843 = vst.msk [vmem:[%s240 + $0xa0] sm:$0xf] %vm802, %v778
      %844 = vst.msk [vmem:[%s240 + $0xa4] sm:$0xf] %vm802, %v779
      %845 = vst.msk [vmem:[%s240 + $0xa8] sm:$0xf] %vm802, %v780
      %846 = vst.msk [vmem:[%s240 + $0xac] sm:$0xf] %vm802, %v781
      %847 = vst.msk [vmem:[%s240 + $0xb0] sm:$0xf] %vm802, %v782
      %848 = vst.msk [vmem:[%s240 + $0xb4] sm:$0xf] %vm802, %v783
      %849 = vst.msk [vmem:[%s240 + $0xb8] sm:$0xf] %vm802, %v784
      %850 = vst.msk [vmem:[%s240 + $0xbc] sm:$0xf] %vm802, %v785
      %851 = vst.msk [vmem:[%s240 + $0xc0] sm:$0xf] %vm802, %v786
      %852 = vst.msk [vmem:[%s240 + $0xc4] sm:$0xf] %vm802, %v787
      %853 = vst.msk [vmem:[%s240 + $0xc8] sm:$0xf] %vm802, %v788
      %854 = vst.msk [vmem:[%s240 + $0xcc] sm:$0xf] %vm802, %v789
      %855 = vst.msk [vmem:[%s240 + $0xd0] sm:$0xf] %vm802, %v790
      %856 = vst.msk [vmem:[%s240 + $0xd4] sm:$0xf] %vm802, %v791
      %857 = vst.msk [vmem:[%s240 + $0xd8] sm:$0xf] %vm802, %v792
      %858 = vst.msk [vmem:[%s240 + $0xdc] sm:$0xf] %vm802, %v793
      %859 = vst.msk [vmem:[%s240 + $0xe0] sm:$0xf] %vm802, %v794
      %860 = vst.msk [vmem:[%s240 + $0xe4] sm:$0xf] %vm802, %v795
      %861 = vst.msk [vmem:[%s240 + $0xe8] sm:$0xf] %vm802, %v796
      %862 = vst.msk [vmem:[%s240 + $0xec] sm:$0xf] %vm802, %v797
      %863 = vst.msk [vmem:[%s240 + $0xf0] sm:$0xf] %vm802, %v798
      %864 = vst.msk [vmem:[%s240 + $0xf4] sm:$0xf] %vm802, %v799
      %865 = vst.msk [vmem:[%s240 + $0xf8] sm:$0xf] %vm802, %v800
      %866 = vst.msk [vmem:[%s240 + $0xfc] sm:$0xf] %vm802, %v801
      %vm867 = vcmask 130048
      %v868 = vsel %vm867, %v579, 0.0
      %v869 = vsel %vm867, %v581, 0.0
      %v870 = vadd.f32 %v868, %v869
      %v871 = vsel %vm867, %v584, 0.0
      %v872 = vadd.f32 %v870, %v871
      %v873 = vsel %vm867, %v586, 0.0
      %v874 = vadd.f32 %v872, %v873
      %v875 = vsel %vm867, %v589, 0.0
      %v876 = vadd.f32 %v874, %v875
      %v877 = vsel %vm867, %v591, 0.0
      %v878 = vadd.f32 %v876, %v877
      %v879 = vsel %vm867, %v594, 0.0
      %v880 = vadd.f32 %v878, %v879
      %v881 = vsel %vm867, %v596, 0.0
      %v882 = vadd.f32 %v880, %v881
      %v883 = vsel %vm867, %v599, 0.0
      %v884 = vadd.f32 %v882, %v883
      %v885 = vsel %vm867, %v601, 0.0
      %v886 = vadd.f32 %v884, %v885
      %v887 = vsel %vm867, %v604, 0.0
      %v888 = vadd.f32 %v886, %v887
      %v889 = vsel %vm867, %v606, 0.0
      %v890 = vadd.f32 %v888, %v889
      %v891 = vsel %vm867, %v609, 0.0
      %v892 = vadd.f32 %v890, %v891
      %v893 = vsel %vm867, %v611, 0.0
      %v894 = vadd.f32 %v892, %v893
      %v895 = vsel %vm867, %v614, 0.0
      %v896 = vadd.f32 %v894, %v895
      %v897 = vsel %vm867, %v616, 0.0
      %v898 = vadd.f32 %v896, %v897
      %v899 = vsel %vm867, %v619, 0.0
      %v900 = vadd.f32 %v898, %v899
      %v901 = vsel %vm867, %v621, 0.0
      %v902 = vadd.f32 %v900, %v901
      %v903 = vsel %vm867, %v624, 0.0
      %v904 = vadd.f32 %v902, %v903
      %v905 = vsel %vm867, %v626, 0.0
      %v906 = vadd.f32 %v904, %v905
      %v907 = vsel %vm867, %v629, 0.0
      %v908 = vadd.f32 %v906, %v907
      %v909 = vsel %vm867, %v631, 0.0
      %v910 = vadd.f32 %v908, %v909
      %v911 = vsel %vm867, %v634, 0.0
      %v912 = vadd.f32 %v910, %v911
      %v913 = vsel %vm867, %v636, 0.0
      %v914 = vadd.f32 %v912, %v913
      %v915 = vsel %vm867, %v639, 0.0
      %v916 = vadd.f32 %v914, %v915
      %v917 = vsel %vm867, %v641, 0.0
      %v918 = vadd.f32 %v916, %v917
      %v919 = vsel %vm867, %v644, 0.0
      %v920 = vadd.f32 %v918, %v919
      %v921 = vsel %vm867, %v646, 0.0
      %v922 = vadd.f32 %v920, %v921
      %v923 = vsel %vm867, %v649, 0.0
      %v924 = vadd.f32 %v922, %v923
      %v925 = vsel %vm867, %v651, 0.0
      %v926 = vadd.f32 %v924, %v925
      %v927 = vsel %vm867, %v654, 0.0
      %v928 = vadd.f32 %v926, %v927
      %v929 = vsel %vm867, %v656, 0.0
      %v930 = vadd.f32 %v928, %v929
      %v931 = vsel %vm867, %v659, 0.0
      %v932 = vadd.f32 %v930, %v931
      %v933 = vsel %vm867, %v661, 0.0
      %v934 = vadd.f32 %v932, %v933
      %v935 = vsel %vm867, %v664, 0.0
      %v936 = vadd.f32 %v934, %v935
      %v937 = vsel %vm867, %v666, 0.0
      %v938 = vadd.f32 %v936, %v937
      %v939 = vsel %vm867, %v669, 0.0
      %v940 = vadd.f32 %v938, %v939
      %v941 = vsel %vm867, %v671, 0.0
      %v942 = vadd.f32 %v940, %v941
      %v943 = vsel %vm867, %v674, 0.0
      %v944 = vadd.f32 %v942, %v943
      %v945 = vsel %vm867, %v676, 0.0
      %v946 = vadd.f32 %v944, %v945
      %v947 = vsel %vm867, %v679, 0.0
      %v948 = vadd.f32 %v946, %v947
      %v949 = vsel %vm867, %v681, 0.0
      %v950 = vadd.f32 %v948, %v949
      %v951 = vsel %vm867, %v684, 0.0
      %v952 = vadd.f32 %v950, %v951
      %v953 = vsel %vm867, %v686, 0.0
      %v954 = vadd.f32 %v952, %v953
      %v955 = vsel %vm867, %v689, 0.0
      %v956 = vadd.f32 %v954, %v955
      %v957 = vsel %vm867, %v691, 0.0
      %v958 = vadd.f32 %v956, %v957
      %v959 = vsel %vm867, %v694, 0.0
      %v960 = vadd.f32 %v958, %v959
      %v961 = vsel %vm867, %v696, 0.0
      %v962 = vadd.f32 %v960, %v961
      %v963 = vsel %vm867, %v699, 0.0
      %v964 = vadd.f32 %v962, %v963
      %v965 = vsel %vm867, %v701, 0.0
      %v966 = vadd.f32 %v964, %v965
      %v967 = vsel %vm867, %v704, 0.0
      %v968 = vadd.f32 %v966, %v967
      %v969 = vsel %vm867, %v706, 0.0
      %v970 = vadd.f32 %v968, %v969
      %v971 = vsel %vm867, %v709, 0.0
      %v972 = vadd.f32 %v970, %v971
      %v973 = vsel %vm867, %v711, 0.0
      %v974 = vadd.f32 %v972, %v973
      %v975 = vsel %vm867, %v714, 0.0
      %v976 = vadd.f32 %v974, %v975
      %v977 = vsel %vm867, %v716, 0.0
      %v978 = vadd.f32 %v976, %v977
      %v979 = vsel %vm867, %v719, 0.0
      %v980 = vadd.f32 %v978, %v979
      %v981 = vsel %vm867, %v721, 0.0
      %v982 = vadd.f32 %v980, %v981
      %v983 = vsel %vm867, %v724, 0.0
      %v984 = vadd.f32 %v982, %v983
      %v985 = vsel %vm867, %v726, 0.0
      %v986 = vadd.f32 %v984, %v985
      %v987 = vsel %vm867, %v729, 0.0
      %v988 = vadd.f32 %v986, %v987
      %v989 = vsel %vm867, %v731, 0.0
      %v990 = vadd.f32 %v988, %v989
      %v991 = vsel %vm867, %v734, 0.0
      %v992 = vadd.f32 %v990, %v991
      %v993 = vsel %vm867, %v736, 0.0
      %v994 = vadd.f32 %v992, %v993
      %v995 = vrot.slane %v994, 4
      %v996 = vadd.f32 %v994, %v995
      %v997 = vrot.slane %v996, 2
      %v998 = vadd.f32 %v996, %v997
      %v999 = vrot.slane %v998, 1
      %v1000 = vadd.f32 %v998, %v999
      %v1001 = vmul.f32 %v579, %v579
      %v1002 = vmul.f32 %v581, %v581
      %v1003 = vmul.f32 %v584, %v584
      %v1004 = vmul.f32 %v586, %v586
      %v1005 = vmul.f32 %v589, %v589
      %v1006 = vmul.f32 %v591, %v591
      %v1007 = vmul.f32 %v594, %v594
      %v1008 = vmul.f32 %v596, %v596
      %v1009 = vmul.f32 %v599, %v599
      %v1010 = vmul.f32 %v601, %v601
      %v1011 = vmul.f32 %v604, %v604
      %v1012 = vmul.f32 %v606, %v606
      %v1013 = vmul.f32 %v609, %v609
      %v1014 = vmul.f32 %v611, %v611
      %v1015 = vmul.f32 %v614, %v614
      %v1016 = vmul.f32 %v616, %v616
      %v1017 = vmul.f32 %v619, %v619
      %v1018 = vmul.f32 %v621, %v621
      %v1019 = vmul.f32 %v624, %v624
      %v1020 = vmul.f32 %v626, %v626
      %v1021 = vmul.f32 %v629, %v629
      %v1022 = vmul.f32 %v631, %v631
      %v1023 = vmul.f32 %v634, %v634
      %v1024 = vmul.f32 %v636, %v636
      %v1025 = vmul.f32 %v639, %v639
      %v1026 = vmul.f32 %v641, %v641
      %v1027 = vmul.f32 %v644, %v644
      %v1028 = vmul.f32 %v646, %v646
      %v1029 = vmul.f32 %v649, %v649
      %v1030 = vmul.f32 %v651, %v651
      %v1031 = vmul.f32 %v654, %v654
      %v1032 = vmul.f32 %v656, %v656
      %v1033 = vmul.f32 %v659, %v659
      %v1034 = vmul.f32 %v661, %v661
      %v1035 = vmul.f32 %v664, %v664
      %v1036 = vmul.f32 %v666, %v666
      %v1037 = vmul.f32 %v669, %v669
      %v1038 = vmul.f32 %v671, %v671
      %v1039 = vmul.f32 %v674, %v674
      %v1040 = vmul.f32 %v676, %v676
      %v1041 = vmul.f32 %v679, %v679
      %v1042 = vmul.f32 %v681, %v681
      %v1043 = vmul.f32 %v684, %v684
      %v1044 = vmul.f32 %v686, %v686
      %v1045 = vmul.f32 %v689, %v689
      %v1046 = vmul.f32 %v691, %v691
      %v1047 = vmul.f32 %v694, %v694
      %v1048 = vmul.f32 %v696, %v696
      %v1049 = vmul.f32 %v699, %v699
      %v1050 = vmul.f32 %v701, %v701
      %v1051 = vmul.f32 %v704, %v704
      %v1052 = vmul.f32 %v706, %v706
      %v1053 = vmul.f32 %v709, %v709
      %v1054 = vmul.f32 %v711, %v711
      %v1055 = vmul.f32 %v714, %v714
      %v1056 = vmul.f32 %v716, %v716
      %v1057 = vmul.f32 %v719, %v719
      %v1058 = vmul.f32 %v721, %v721
      %v1059 = vmul.f32 %v724, %v724
      %v1060 = vmul.f32 %v726, %v726
      %v1061 = vmul.f32 %v729, %v729
      %v1062 = vmul.f32 %v731, %v731
      %v1063 = vmul.f32 %v734, %v734
      %v1064 = vmul.f32 %v736, %v736
      %v1065 = vsel %vm867, %v1001, 0.0
      %v1066 = vsel %vm867, %v1002, 0.0
      %v1067 = vadd.f32 %v1065, %v1066
      %v1068 = vsel %vm867, %v1003, 0.0
      %v1069 = vadd.f32 %v1067, %v1068
      %v1070 = vsel %vm867, %v1004, 0.0
      %v1071 = vadd.f32 %v1069, %v1070
      %v1072 = vsel %vm867, %v1005, 0.0
      %v1073 = vadd.f32 %v1071, %v1072
      %v1074 = vsel %vm867, %v1006, 0.0
      %v1075 = vadd.f32 %v1073, %v1074
      %v1076 = vsel %vm867, %v1007, 0.0
      %v1077 = vadd.f32 %v1075, %v1076
      %v1078 = vsel %vm867, %v1008, 0.0
      %v1079 = vadd.f32 %v1077, %v1078
      %v1080 = vsel %vm867, %v1009, 0.0
      %v1081 = vadd.f32 %v1079, %v1080
      %v1082 = vsel %vm867, %v1010, 0.0
      %v1083 = vadd.f32 %v1081, %v1082
      %v1084 = vsel %vm867, %v1011, 0.0
      %v1085 = vadd.f32 %v1083, %v1084
      %v1086 = vsel %vm867, %v1012, 0.0
      %v1087 = vadd.f32 %v1085, %v1086
      %v1088 = vsel %vm867, %v1013, 0.0
      %v1089 = vadd.f32 %v1087, %v1088
      %v1090 = vsel %vm867, %v1014, 0.0
      %v1091 = vadd.f32 %v1089, %v1090
      %v1092 = vsel %vm867, %v1015, 0.0
      %v1093 = vadd.f32 %v1091, %v1092
      %v1094 = vsel %vm867, %v1016, 0.0
      %v1095 = vadd.f32 %v1093, %v1094
      %v1096 = vsel %vm867, %v1017, 0.0
      %v1097 = vadd.f32 %v1095, %v1096
      %v1098 = vsel %vm867, %v1018, 0.0
      %v1099 = vadd.f32 %v1097, %v1098
      %v1100 = vsel %vm867, %v1019, 0.0
      %v1101 = vadd.f32 %v1099, %v1100
      %v1102 = vsel %vm867, %v1020, 0.0
      %v1103 = vadd.f32 %v1101, %v1102
      %v1104 = vsel %vm867, %v1021, 0.0
      %v1105 = vadd.f32 %v1103, %v1104
      %v1106 = vsel %vm867, %v1022, 0.0
      %v1107 = vadd.f32 %v1105, %v1106
      %v1108 = vsel %vm867, %v1023, 0.0
      %v1109 = vadd.f32 %v1107, %v1108
      %v1110 = vsel %vm867, %v1024, 0.0
      %v1111 = vadd.f32 %v1109, %v1110
      %v1112 = vsel %vm867, %v1025, 0.0
      %v1113 = vadd.f32 %v1111, %v1112
      %v1114 = vsel %vm867, %v1026, 0.0
      %v1115 = vadd.f32 %v1113, %v1114
      %v1116 = vsel %vm867, %v1027, 0.0
      %v1117 = vadd.f32 %v1115, %v1116
      %v1118 = vsel %vm867, %v1028, 0.0
      %v1119 = vadd.f32 %v1117, %v1118
      %v1120 = vsel %vm867, %v1029, 0.0
      %v1121 = vadd.f32 %v1119, %v1120
      %v1122 = vsel %vm867, %v1030, 0.0
      %v1123 = vadd.f32 %v1121, %v1122
      %v1124 = vsel %vm867, %v1031, 0.0
      %v1125 = vadd.f32 %v1123, %v1124
      %v1126 = vsel %vm867, %v1032, 0.0
      %v1127 = vadd.f32 %v1125, %v1126
      %v1128 = vsel %vm867, %v1033, 0.0
      %v1129 = vadd.f32 %v1127, %v1128
      %v1130 = vsel %vm867, %v1034, 0.0
      %v1131 = vadd.f32 %v1129, %v1130
      %v1132 = vsel %vm867, %v1035, 0.0
      %v1133 = vadd.f32 %v1131, %v1132
      %v1134 = vsel %vm867, %v1036, 0.0
      %v1135 = vadd.f32 %v1133, %v1134
      %v1136 = vsel %vm867, %v1037, 0.0
      %v1137 = vadd.f32 %v1135, %v1136
      %v1138 = vsel %vm867, %v1038, 0.0
      %v1139 = vadd.f32 %v1137, %v1138
      %v1140 = vsel %vm867, %v1039, 0.0
      %v1141 = vadd.f32 %v1139, %v1140
      %v1142 = vsel %vm867, %v1040, 0.0
      %v1143 = vadd.f32 %v1141, %v1142
      %v1144 = vsel %vm867, %v1041, 0.0
      %v1145 = vadd.f32 %v1143, %v1144
      %v1146 = vsel %vm867, %v1042, 0.0
      %v1147 = vadd.f32 %v1145, %v1146
      %v1148 = vsel %vm867, %v1043, 0.0
      %v1149 = vadd.f32 %v1147, %v1148
      %v1150 = vsel %vm867, %v1044, 0.0
      %v1151 = vadd.f32 %v1149, %v1150
      %v1152 = vsel %vm867, %v1045, 0.0
      %v1153 = vadd.f32 %v1151, %v1152
      %v1154 = vsel %vm867, %v1046, 0.0
      %v1155 = vadd.f32 %v1153, %v1154
      %v1156 = vsel %vm867, %v1047, 0.0
      %v1157 = vadd.f32 %v1155, %v1156
      %v1158 = vsel %vm867, %v1048, 0.0
      %v1159 = vadd.f32 %v1157, %v1158
      %v1160 = vsel %vm867, %v1049, 0.0
      %v1161 = vadd.f32 %v1159, %v1160
      %v1162 = vsel %vm867, %v1050, 0.0
      %v1163 = vadd.f32 %v1161, %v1162
      %v1164 = vsel %vm867, %v1051, 0.0
      %v1165 = vadd.f32 %v1163, %v1164
      %v1166 = vsel %vm867, %v1052, 0.0
      %v1167 = vadd.f32 %v1165, %v1166
      %v1168 = vsel %vm867, %v1053, 0.0
      %v1169 = vadd.f32 %v1167, %v1168
      %v1170 = vsel %vm867, %v1054, 0.0
      %v1171 = vadd.f32 %v1169, %v1170
      %v1172 = vsel %vm867, %v1055, 0.0
      %v1173 = vadd.f32 %v1171, %v1172
      %v1174 = vsel %vm867, %v1056, 0.0
      %v1175 = vadd.f32 %v1173, %v1174
      %v1176 = vsel %vm867, %v1057, 0.0
      %v1177 = vadd.f32 %v1175, %v1176
      %v1178 = vsel %vm867, %v1058, 0.0
      %v1179 = vadd.f32 %v1177, %v1178
      %v1180 = vsel %vm867, %v1059, 0.0
      %v1181 = vadd.f32 %v1179, %v1180
      %v1182 = vsel %vm867, %v1060, 0.0
      %v1183 = vadd.f32 %v1181, %v1182
      %v1184 = vsel %vm867, %v1061, 0.0
      %v1185 = vadd.f32 %v1183, %v1184
      %v1186 = vsel %vm867, %v1062, 0.0
      %v1187 = vadd.f32 %v1185, %v1186
      %v1188 = vsel %vm867, %v1063, 0.0
      %v1189 = vadd.f32 %v1187, %v1188
      %v1190 = vsel %vm867, %v1064, 0.0
      %v1191 = vadd.f32 %v1189, %v1190
      %v1192 = vrot.slane %v1191, 4
      %v1193 = vadd.f32 %v1191, %v1192
      %v1194 = vrot.slane %v1193, 2
      %v1195 = vadd.f32 %v1193, %v1194
      %v1196 = vrot.slane %v1195, 1
      %v1197 = vadd.f32 %v1195, %v1196
      %vm1198 = vcmask 1040384
      %v1199 = vsel %vm1198, %v1000, %v1197
      %vm1200 = vcmask 1041408
      %v1201 = vsel %vm1200, %v1199, 0.0
      %1202 = vst.msk [vmem:[%s248] sm:$0xff] %vm867, %v1201
      %s1203 = smul.u32 64, %s20
      %p1204 = scmp.lt.s32.totalorder %s19, 3
      %s1205 = scalar_select %p1204, %s19, 3
      %p1206 = scmp.lt.s32.totalorder %s1203, 63
      %s1207 = scalar_select %p1206, %s1203, 63
      %s1208 = smul.addr %s1205, 64
      %s1209 = sadd.s32 %s1207, %s1208
      %s1210 = smul.addr %s1209, 4
      %s1211 = scalar_lea.vmem %s2, %s1210
      %p1212 = scmp.lt.s32.totalorder %s19, 3
      %s1213 = scalar_select %p1212, %s19, 3
      %p1214 = scmp.lt.s32.totalorder %s20, 0
      %s1215 = scalar_select %p1214, %s20, 0
      %s1216 = sadd.s32 %s1215, %s1213
      %s1217 = smul.addr %s1216, 8
      %s1218 = scalar_lea.vmem %s3, %s1217
      // Predicated region
      $region29: #{generator_forward.17} parent=27 // pred_check
        %p1219 = pneg %p101
      $region30: #{generator_forward.17} parent=27 // pred_check_branch
        %1221 = sbr.rel (%p1219) target = $region32
      $region31: #{generator_forward.17} parent=27 // pred_region
        %s1222 = smul.u32 64, %s20
      $region32: #{generator_forward.17} parent=27 // pred_fallthru
        _
      // Predicated region
      $region33: #{generator_forward.17} parent=27 // pred_check
        %p1223 = pneg %p129
      $region34: #{generator_forward.17} parent=27 // pred_check_branch
        %1225 = sbr.rel (%p1223) target = $region36
      $region35: #{generator_forward.17} parent=27 // pred_region
        _
      $region36: #{generator_forward.17} parent=27 // pred_fallthru
        _
    $region28: #{generator_forward.17} parent=5 // pred_fallthru
      _
    %p1226 = scmp.le.s32.totalorder 2, %s10
    // Predicated region
    $region37: #{generator_forward.17} parent=5 // pred_check
      %p1227 = pneg %p1226
    $region38: #{generator_forward.17} parent=5 // pred_check_branch
      %1229 = sbr.rel (%p1227) target = $region40
    $region39: #{generator_forward.17} parent=5 // pred_region
      %s1230 = ssub.s32 %s10, 2
      // Predicated region
      $region41: #{generator_forward.17} parent=39 // pred_check
        %p1231 = pneg %p107
      $region42: #{generator_forward.17} parent=39 // pred_check_branch
        %1233 = sbr.rel (%p1231) target = $region44
      $region43: #{generator_forward.17} parent=39 // pred_region
        %s1234 = smul.u32 64, %s22
        %p1235 = scmp.lt.s32.totalorder %s21, 3
        %s1236 = scalar_select %p1235, %s21, 3
        %p1237 = scmp.lt.s32.totalorder %s1234, 63
        %s1238 = scalar_select %p1237, %s1234, 63
        %s1239 = smul.addr %s1236, 64
        %s1240 = sadd.s32 %s1238, %s1239
        %s1241 = smul.addr %s1240, 4
        %s1242 = scalar_lea.vmem %s2, %s1241
      $region44: #{generator_forward.17} parent=39 // pred_fallthru
        _
      // Predicated region
      $region45: #{generator_forward.17} parent=39 // pred_check
        %p1243 = pneg %p135
      $region46: #{generator_forward.17} parent=39 // pred_check_branch
        %1245 = sbr.rel (%p1243) target = $region48
      $region47: #{generator_forward.17} parent=39 // pred_region
        %p1246 = scmp.lt.s32.totalorder %s21, 3
        %s1247 = scalar_select %p1246, %s21, 3
        %p1248 = scmp.lt.s32.totalorder %s22, 0
        %s1249 = scalar_select %p1248, %s22, 0
        %s1250 = sadd.s32 %s1249, %s1247
        %s1251 = smul.addr %s1250, 8
        %s1252 = scalar_lea.vmem %s3, %s1251
      $region48: #{generator_forward.17} parent=39 // pred_fallthru
        _
    $region40: #{generator_forward.17} parent=5 // pred_fallthru
      _
  $region6: #{generator_forward.17} parent=0 // loop_footer
    %s14 = sadd.s32 1, %s10
  $region7: #{generator_forward.17} parent=0 // loop_footer_branch
    %9 = sbr.rel target = $region3
  $region8: #{generator_forward.17} parent=0 // loop_exit
    _

// kernel: tile.93
$region0: #{tile.93}
  #allocation0 [shape = 's32[1]{0}', space=sflag, size = 0x4, scoped, tag = 'scoped memory for tile.93']
  %s0 = inlined_call_operand.vmem [shape: f32[8], index: 0, kind: input, shape index: {}]
  %s1 = inlined_call_operand.vmem [shape: f32[16,8], index: 1, kind: output, shape index: {}]
  // Predicated region
  $region2: #{tile.93} parent=0 // pred_check
    _
  $region3: #{tile.93} parent=0 // pred_check_branch
    %3 = sbr.rel (0) target = $region5
  $region4: #{tile.93} parent=0 // pred_region
    _
  $region5: #{tile.93} parent=0 // pred_fallthru
    _
  %v4 = vld [vmem:[%s0] ss:$0 sm:$0xff]
  %5 = vst [vmem:[%s1] sm:$0xff] %v4
  %s6 = scalar_lea.vmem %s1, 8
  %7 = vst [vmem:[%s6] sm:$0xff] %v4

// kernel: tile.98
$region0: #{tile.98}
  %s0 = inlined_call_operand.vmem [shape: f32[16,8], index: 0, kind: input, shape index: {}]
  %s1 = inlined_call_operand.vmem [shape: f32[1,128], index: 1, kind: output, shape index: {}]
  $region1: #{tile.98} parent=0
    #allocation0 [shape = 'u8[4096]{0}', space=vmem, size = 0x1000, scoped, tag = 'scoped mem for output reshape']
    %v2 = vld [vmem:[%s0] sm:$0x1]
    %vm3 = vcmask 64512
    %4 = vst.msk [vmem:[#allocation0] sm:$0x1] %vm3, %v2
    %s5 = scalar_lea.vmem %s0, 15
    %v6 = vld [vmem:[%s5] sm:$0x1]
    %7 = vrot.lane.b32.xlu0 %v6, 120
    %v8 = vpop.permute.xlu0 %7
    %vm9 = vcmask 1048512
    %10 = vst.msk [vmem:[#allocation0] sm:$0x1] %vm9, %v8
    %s11 = scalar_lea.vmem %s0, 14
    %v12 = vld [vmem:[%s11] sm:$0x1]
    %13 = vrot.lane.b32.xlu0 %v12, 112
    %v14 = vpop.permute.xlu0 %13
    %vm15 = vcmask 982912
    %16 = vst.msk [vmem:[#allocation0] sm:$0x1] %vm15, %v14
    %s17 = scalar_lea.vmem %s0, 13
    %v18 = vld [vmem:[%s17] sm:$0x1]
    %19 = vrot.lane.b32.xlu0 %v18, 104
    %v20 = vpop.permute.xlu0 %19
    %vm21 = vcmask 917312
    %22 = vst.msk [vmem:[#allocation0] sm:$0x1] %vm21, %v20
    %s23 = scalar_lea.vmem %s0, 12
    %v24 = vld [vmem:[%s23] sm:$0x1]
    %25 = vrot.lane.b32.xlu0 %v24, 96
    %v26 = vpop.permute.xlu0 %25
    %vm27 = vcmask 851712
    %28 = vst.msk [vmem:[#allocation0] sm:$0x1] %vm27, %v26
    %s29 = scalar_lea.vmem %s0, 11
    %v30 = vld [vmem:[%s29] sm:$0x1]
    %31 = vrot.lane.b32.xlu0 %v30, 88
    %v32 = vpop.permute.xlu0 %31
    %vm33 = vcmask 786112
    %34 = vst.msk [vmem:[#allocation0] sm:$0x1] %vm33, %v32
    %s35 = scalar_lea.vmem %s0, 10
    %v36 = vld [vmem:[%s35] sm:$0x1]
    %37 = vrot.lane.b32.xlu0 %v36, 80
    %v38 = vpop.permute.xlu0 %37
    %vm39 = vcmask 720512
    %40 = vst.msk [vmem:[#allocation0] sm:$0x1] %vm39, %v38
    %s41 = scalar_lea.vmem %s0, 9
    %v42 = vld [vmem:[%s41] sm:$0x1]
    %43 = vrot.lane.b32.xlu0 %v42, 72
    %v44 = vpop.permute.xlu0 %43
    %vm45 = vcmask 654912
    %46 = vst.msk [vmem:[#allocation0] sm:$0x1] %vm45, %v44
    %s47 = scalar_lea.vmem %s0, 8
    %v48 = vld [vmem:[%s47] sm:$0x1]
    %49 = vrot.lane.b32.xlu0 %v48, 64
    %v50 = vpop.permute.xlu0 %49
    %vm51 = vcmask 589312
    %52 = vst.msk [vmem:[#allocation0] sm:$0x1] %vm51, %v50
    %s53 = scalar_lea.vmem %s0, 7
    %v54 = vld [vmem:[%s53] sm:$0x1]
    %55 = vrot.lane.b32.xlu0 %v54, 56
    %v56 = vpop.permute.xlu0 %55
    %vm57 = vcmask 523712
    %58 = vst.msk [vmem:[#allocation0] sm:$0x1] %vm57, %v56
    %s59 = scalar_lea.vmem %s0, 6
    %v60 = vld [vmem:[%s59] sm:$0x1]
    %61 = vrot.lane.b32.xlu0 %v60, 48
    %v62 = vpop.permute.xlu0 %61
    %vm63 = vcmask 458112
    %64 = vst.msk [vmem:[#allocation0] sm:$0x1] %vm63, %v62
    %s65 = scalar_lea.vmem %s0, 5
    %v66 = vld [vmem:[%s65] sm:$0x1]
    %67 = vrot.lane.b32.xlu0 %v66, 40
    %v68 = vpop.permute.xlu0 %67
    %vm69 = vcmask 392512
    %70 = vst.msk [vmem:[#allocation0] sm:$0x1] %vm69, %v68
    %s71 = scalar_lea.vmem %s0, 4
    %v72 = vld [vmem:[%s71] sm:$0x1]
    %73 = vrot.lane.b32.xlu0 %v72, 32
    %v74 = vpop.permute.xlu0 %73
    %vm75 = vcmask 326912
    %76 = vst.msk [vmem:[#allocation0] sm:$0x1] %vm75, %v74
    %s77 = scalar_lea.vmem %s0, 3
    %v78 = vld [vmem:[%s77] sm:$0x1]
    %79 = vrot.lane.b32.xlu0 %v78, 24
    %v80 = vpop.permute.xlu0 %79
    %vm81 = vcmask 261312
    %82 = vst.msk [vmem:[#allocation0] sm:$0x1] %vm81, %v80
    %s83 = scalar_lea.vmem %s0, 2
    %v84 = vld [vmem:[%s83] sm:$0x1]
    %85 = vrot.lane.b32.xlu0 %v84, 16
    %v86 = vpop.permute.xlu0 %85
    %vm87 = vcmask 195712
    %88 = vst.msk [vmem:[#allocation0] sm:$0x1] %vm87, %v86
    %s89 = scalar_lea.vmem %s0, 1
    %v90 = vld [vmem:[%s89] sm:$0x1]
    %91 = vrot.lane.b32.xlu0 %v90, 8
    %v92 = vpop.permute.xlu0 %91
    %vm93 = vcmask 130112
    %94 = vst.msk [vmem:[#allocation0] sm:$0x1] %vm93, %v92
    %s96 = ssub.s32 2, 1
    %v97 = vld [vmem:[#allocation0] sm:%s96]
    %s99 = ssub.s32 2, 1
    %100 = vst [vmem:[%s1] sm:%s99] %v97

// kernel: generator_forward.19
$region0: #{generator_forward.19}
  #allocation0 [shape = 'u32[]', space=smem, size = 0x4, offset = 0x4, fixed_abs, tag = 'smem constant byte address 0x4 - core index']
  #allocation1 [shape = 'u32[72,128]{1,0:T(1,128)}', space=vmem, size = 0x9000, scoped, tag = 'internal scratch']
  %s0 = inlined_call_operand.vmem [shape: bf16[4,2048,64], index: 0, kind: input, shape index: {}]
  %s1 = inlined_call_operand.vmem [shape: bf16[4,64,8], index: 1, kind: input, shape index: {}]
  %s2 = inlined_call_operand.vmem [shape: bf16[4,2048,8], index: 2, kind: output, shape index: {0}]
  %s3 = inlined_call_operand.vmem [shape: f32[4,4,8,8], index: 3, kind: output, shape index: {1}]
  %4 = xla_tuple %s2, %s3
  %s5 = sld [smem:[#allocation0]]
  $region49: #{generator_forward.19} parent=0
    _
  %s7 = ssub.s32 1, %s5
  %s8 = scalar_select 0, %s7, %s5
  loop: start=0, step=1, limit=18
  $region2: #{generator_forward.19} parent=0 // loop_pre_header
    _
  $region3: #{generator_forward.19} parent=0 // loop_header
    %s10 = sphi 0, %s14
    %p11 = scmp.ge.s32.totalorder %s10, 18
    %s17 = sphi 0, %s29
    %s18 = sphi 0, %s25
    %s19 = sphi 0, %s17
    %s20 = sphi 0, %s18
    %s21 = sphi 0, %s19
    %s22 = sphi 0, %s20
    %s34 = sphi 0, %s36
    %s37 = sphi 0, %s34
    %s38 = sphi 0, %s37
    %s54 = sphi 0, %s38
    %s60 = sphi 0, %s62
    %s63 = sphi 0, %s60
    %s64 = sphi 0, %s63
    %s80 = sphi 0, %s64
    %s88 = sphi 0, %s90
    %s91 = sphi 0, %s88
    %s92 = sphi 0, %s91
    %s108 = sphi 0, %s92
    %s116 = sphi 0, %s118
    %s119 = sphi 0, %s116
    %s120 = sphi 0, %s119
    %s136 = sphi 0, %s120
  $region4: #{generator_forward.19} parent=0 // loop_header_branch
    %13 = sbr.rel (%p11) target = $region8
  $region5: #{generator_forward.19} parent=0 // loop_body
    %s15 = ssub.s32 %s10, 1
    %s16 = ssub.s32 %s10, 2
    %s23 = sadd.s32 1, %s18
    %p24 = scmp.ge.s32.totalorder %s23, 4
    %s25 = scalar_select %p24, 0, %s23
    %s26 = sadd.s32 1, %s17
    %s27 = scalar_select %p24, %s26, %s17
    %p28 = scmp.ge.s32.totalorder %s27, 4
    %s29 = scalar_select %p28, 0, %s27
    %s30 = ssub.s32 %s17, %s29
    %s31 = ssub.s32 %s18, %s25
    %s32 = sor.u32 %s30, %s31
    %p33 = scmp.eq.s32.totalorder %s32, 0
    %s35 = sadd.s32 %s34, 1
    %s36 = scalar_select %p33, %s34, %s35
    %p39 = pneg %p33
    %p40 = scmp.eq.s32.totalorder %s10, 15
    %p41 = por %p39, %p40
    %p42 = scmp.ne.s32.totalorder %s34, %s37
    %p43 = scmp.eq.s32.totalorder %s10, 0
    %p44 = por %p42, %p43
    %p45 = scmp.ne.s32.totalorder %s34, %s37
    %p46 = scmp.eq.s32.totalorder %s15, 15
    %p47 = por %p45, %p46
    %p48 = scmp.ne.s32.totalorder %s37, %s38
    %p49 = scmp.eq.s32.totalorder %s15, 0
    %p50 = por %p48, %p49
    %p51 = scmp.ne.s32.totalorder %s37, %s38
    %p52 = scmp.eq.s32.totalorder %s16, 15
    %p53 = por %p51, %p52
    %p55 = scmp.ne.s32.totalorder %s38, %s54
    %p56 = scmp.eq.s32.totalorder %s16, 0
    %p57 = por %p55, %p56
    %s58 = ssub.s32 %s17, %s29
    %p59 = scmp.eq.s32.totalorder %s58, 0
    %s61 = sadd.s32 %s60, 1
    %s62 = scalar_select %p59, %s60, %s61
    %p65 = pneg %p59
    %p66 = scmp.eq.s32.totalorder %s10, 15
    %p67 = por %p65, %p66
    %p68 = scmp.ne.s32.totalorder %s60, %s63
    %p69 = scmp.eq.s32.totalorder %s10, 0
    %p70 = por %p68, %p69
    %p71 = scmp.ne.s32.totalorder %s60, %s63
    %p72 = scmp.eq.s32.totalorder %s15, 15
    %p73 = por %p71, %p72
    %p74 = scmp.ne.s32.totalorder %s63, %s64
    %p75 = scmp.eq.s32.totalorder %s15, 0
    %p76 = por %p74, %p75
    %p77 = scmp.ne.s32.totalorder %s63, %s64
    %p78 = scmp.eq.s32.totalorder %s16, 15
    %p79 = por %p77, %p78
    %p81 = scmp.ne.s32.totalorder %s64, %s80
    %p82 = scmp.eq.s32.totalorder %s16, 0
    %p83 = por %p81, %p82
    %s84 = ssub.s32 %s17, %s29
    %s85 = ssub.s32 %s18, %s25
    %s86 = sor.u32 %s84, %s85
    %p87 = scmp.eq.s32.totalorder %s86, 0
    %s89 = sadd.s32 %s88, 1
    %s90 = scalar_select %p87, %s88, %s89
    %p93 = pneg %p87
    %p94 = scmp.eq.s32.totalorder %s10, 15
    %p95 = por %p93, %p94
    %p96 = scmp.ne.s32.totalorder %s88, %s91
    %p97 = scmp.eq.s32.totalorder %s10, 0
    %p98 = por %p96, %p97
    %p99 = scmp.ne.s32.totalorder %s88, %s91
    %p100 = scmp.eq.s32.totalorder %s15, 15
    %p101 = por %p99, %p100
    %p102 = scmp.ne.s32.totalorder %s91, %s92
    %p103 = scmp.eq.s32.totalorder %s15, 0
    %p104 = por %p102, %p103
    %p105 = scmp.ne.s32.totalorder %s91, %s92
    %p106 = scmp.eq.s32.totalorder %s16, 15
    %p107 = por %p105, %p106
    %p109 = scmp.ne.s32.totalorder %s92, %s108
    %p110 = scmp.eq.s32.totalorder %s16, 0
    %p111 = por %p109, %p110
    %s112 = ssub.s32 %s17, %s29
    %s113 = ssub.s32 %s18, %s25
    %s114 = sor.u32 %s112, %s113
    %p115 = scmp.eq.s32.totalorder %s114, 0
    %s117 = sadd.s32 %s116, 1
    %s118 = scalar_select %p115, %s116, %s117
    %p121 = pneg %p115
    %p122 = scmp.eq.s32.totalorder %s10, 15
    %p123 = por %p121, %p122
    %p124 = scmp.ne.s32.totalorder %s116, %s119
    %p125 = scmp.eq.s32.totalorder %s10, 0
    %p126 = por %p124, %p125
    %p127 = scmp.ne.s32.totalorder %s116, %s119
    %p128 = scmp.eq.s32.totalorder %s15, 15
    %p129 = por %p127, %p128
    %p130 = scmp.ne.s32.totalorder %s119, %s120
    %p131 = scmp.eq.s32.totalorder %s15, 0
    %p132 = por %p130, %p131
    %p133 = scmp.ne.s32.totalorder %s119, %s120
    %p134 = scmp.eq.s32.totalorder %s16, 15
    %p135 = por %p133, %p134
    %p137 = scmp.ne.s32.totalorder %s120, %s136
    %p138 = scmp.eq.s32.totalorder %s16, 0
    %p139 = por %p137, %p138
    %p140 = scmp.le.s32.totalorder 1, %s10
    %p141 = scmp.lt.s32.totalorder %s10, 17
    %p142 = pnand %p140, %p141
    %p143 = pneg %p142
    // Predicated region
    $region9: #{generator_forward.19} parent=5 // pred_check
      _
    $region10: #{generator_forward.19} parent=5 // pred_check_branch
      %145 = sbr.rel (%p142) target = $region12
    $region11: #{generator_forward.19} parent=5 // pred_region
      %s146 = ssub.s32 %s10, 1
    $region12: #{generator_forward.19} parent=5 // pred_fallthru
      _
    %p147 = scmp.lt.s32.totalorder %s10, 16
    // Predicated region
    $region13: #{generator_forward.19} parent=5 // pred_check
      %p148 = pneg %p147
    $region14: #{generator_forward.19} parent=5 // pred_check_branch
      %150 = sbr.rel (%p148) target = $region16
    $region15: #{generator_forward.19} parent=5 // pred_region
      // Predicated region
      $region17: #{generator_forward.19} parent=15 // pred_check
        %p151 = pneg %p44
      $region18: #{generator_forward.19} parent=15 // pred_check_branch
        %153 = sbr.rel (%p151) target = $region20
      $region19: #{generator_forward.19} parent=15 // pred_region
        %s154 = smul.u32 64, %s18
        %p155 = scmp.lt.s32.totalorder %s17, 3
        %s156 = scalar_select %p155, %s17, 3
        %p157 = scmp.lt.s32.totalorder %s154, 255
        %s158 = scalar_select %p157, %s154, 255
        %s159 = smul.addr %s156, 256
        %s160 = sadd.s32 %s158, %s159
        %s161 = smul.addr %s160, 4
        %s162 = scalar_lea.vmem %s0, %s161
        %s163 = smul.u32 64, %s18
      $region20: #{generator_forward.19} parent=15 // pred_fallthru
        _
      // Predicated region
      $region21: #{generator_forward.19} parent=15 // pred_check
        %p164 = pneg %p70
      $region22: #{generator_forward.19} parent=15 // pred_check_branch
        %166 = sbr.rel (%p164) target = $region24
      $region23: #{generator_forward.19} parent=15 // pred_region
        %p167 = scmp.lt.s32.totalorder %s17, 3
        %s168 = scalar_select %p167, %s17, 3
        %s169 = smul.addr %s168, 8
        %s170 = smul.addr %s169, 4
        %s171 = scalar_lea.vmem %s1, %s170
      $region24: #{generator_forward.19} parent=15 // pred_fallthru
        _
    $region16: #{generator_forward.19} parent=5 // pred_fallthru
      _
    %p172 = scmp.le.s32.totalorder 1, %s10
    %p173 = scmp.lt.s32.totalorder %s10, 17
    %p174 = pnand %p172, %p173
    %p175 = pneg %p174
    // Predicated region
    $region25: #{generator_forward.19} parent=5 // pred_check
      _
    $region26: #{generator_forward.19} parent=5 // pred_check_branch
      %177 = sbr.rel (%p174) target = $region28
    $region27: #{generator_forward.19} parent=5 // pred_region
      %s178 = ssub.s32 %s10, 1
      %s179 = smul.u32 64, %s20
      %p180 = scmp.lt.s32.totalorder %s19, 3
      %s181 = scalar_select %p180, %s19, 3
      %p182 = scmp.lt.s32.totalorder %s179, 255
      %s183 = scalar_select %p182, %s179, 255
      %s184 = smul.addr %s181, 256
      %s185 = sadd.s32 %s183, %s184
      %s186 = smul.addr %s185, 4
      %s187 = scalar_lea.vmem %s0, %s186
      %p188 = pneg %p50
      %p189 = pneg %p47
      %p190 = scmp.lt.s32.totalorder %s19, 3
      %s191 = scalar_select %p190, %s19, 3
      %s192 = smul.addr %s191, 8
      %s193 = smul.addr %s192, 4
      %s194 = scalar_lea.vmem %s1, %s193
      %p195 = pneg %p76
      %p196 = pneg %p73
      %p197 = pneg %p104
      %p198 = pneg %p101
      %s199 = smul.u32 64, %s20
      %p200 = scmp.lt.s32.totalorder %s19, 3
      %s201 = scalar_select %p200, %s19, 3
      %p202 = scmp.lt.s32.totalorder %s199, 255
      %s203 = scalar_select %p202, %s199, 255
      %s204 = smul.addr %s201, 256
      %s205 = sadd.s32 %s203, %s204
      %s206 = smul.addr %s205, 4
      %s207 = scalar_lea.vmem %s2, %s206
      %p208 = pneg %p132
      %p209 = pneg %p129
      %p210 = scmp.lt.s32.totalorder %s19, 3
      %s211 = scalar_select %p210, %s19, 3
      %p212 = scmp.lt.s32.totalorder %s20, 3
      %s213 = scalar_select %p212, %s20, 3
      %s214 = smul.addr %s211, 4
      %s215 = sadd.s32 %s213, %s214
      %s216 = smul.addr %s215, 8
      %s217 = scalar_lea.vmem %s3, %s216
      %s218 = smul.u32 64, %s20
      %p219 = scmp.lt.s32.totalorder %s19, 3
      %s220 = scalar_select %p219, %s19, 3
      %p221 = scmp.lt.s32.totalorder %s218, 255
      %s222 = scalar_select %p221, %s218, 255
      %s223 = smul.addr %s220, 256
      %s224 = sadd.s32 %s222, %s223
      %s225 = smul.addr %s224, 4
      %s226 = scalar_lea.vmem %s0, %s225
      %s227 = smul.u32 64, %s20
      %p228 = scmp.lt.s32.totalorder %s19, 3
      %s229 = scalar_select %p228, %s19, 3
      %s230 = smul.addr %s229, 8
      %s231 = smul.addr %s230, 4
      %s232 = scalar_lea.vmem %s1, %s231
      %s233 = smul.u32 64, %s20
      %p234 = scmp.lt.s32.totalorder %s19, 3
      %s235 = scalar_select %p234, %s19, 3
      %p236 = scmp.lt.s32.totalorder %s233, 255
      %s237 = scalar_select %p236, %s233, 255
      %s238 = smul.addr %s235, 256
      %s239 = sadd.s32 %s237, %s238
      %s240 = smul.addr %s239, 4
      %s241 = scalar_lea.vmem %s2, %s240
      %s242 = smul.u32 64, %s20
      %p243 = scmp.lt.s32.totalorder %s19, 3
      %s244 = scalar_select %p243, %s19, 3
      %p245 = scmp.lt.s32.totalorder %s20, 3
      %s246 = scalar_select %p245, %s20, 3
      %s247 = smul.addr %s244, 4
      %s248 = sadd.s32 %s246, %s247
      %s249 = smul.addr %s248, 8
      %s250 = scalar_lea.vmem %s3, %s249
      %v252 = vld [vmem:[%s226] sm:$0xf]
      %v253 = vld [vmem:[%s226 + $0x4] sm:$0xf]
      %v254 = vld [vmem:[%s226 + $0x8] sm:$0xf]
      %v255 = vld [vmem:[%s226 + $0xc] sm:$0xf]
      %v256 = vld [vmem:[%s226 + $0x10] sm:$0xf]
      %v257 = vld [vmem:[%s226 + $0x14] sm:$0xf]
      %v258 = vld [vmem:[%s226 + $0x18] sm:$0xf]
      %v259 = vld [vmem:[%s226 + $0x1c] sm:$0xf]
      %v260 = vld [vmem:[%s226 + $0x20] sm:$0xf]
      %v261 = vld [vmem:[%s226 + $0x24] sm:$0xf]
      %v262 = vld [vmem:[%s226 + $0x28] sm:$0xf]
      %v263 = vld [vmem:[%s226 + $0x2c] sm:$0xf]
      %v264 = vld [vmem:[%s226 + $0x30] sm:$0xf]
      %v265 = vld [vmem:[%s226 + $0x34] sm:$0xf]
      %v266 = vld [vmem:[%s226 + $0x38] sm:$0xf]
      %v267 = vld [vmem:[%s226 + $0x3c] sm:$0xf]
      %v268 = vld [vmem:[%s226 + $0x40] sm:$0xf]
      %v269 = vld [vmem:[%s226 + $0x44] sm:$0xf]
      %v270 = vld [vmem:[%s226 + $0x48] sm:$0xf]
      %v271 = vld [vmem:[%s226 + $0x4c] sm:$0xf]
      %v272 = vld [vmem:[%s226 + $0x50] sm:$0xf]
      %v273 = vld [vmem:[%s226 + $0x54] sm:$0xf]
      %v274 = vld [vmem:[%s226 + $0x58] sm:$0xf]
      %v275 = vld [vmem:[%s226 + $0x5c] sm:$0xf]
      %v276 = vld [vmem:[%s226 + $0x60] sm:$0xf]
      %v277 = vld [vmem:[%s226 + $0x64] sm:$0xf]
      %v278 = vld [vmem:[%s226 + $0x68] sm:$0xf]
      %v279 = vld [vmem:[%s226 + $0x6c] sm:$0xf]
      %v280 = vld [vmem:[%s226 + $0x70] sm:$0xf]
      %v281 = vld [vmem:[%s226 + $0x74] sm:$0xf]
      %v282 = vld [vmem:[%s226 + $0x78] sm:$0xf]
      %v283 = vld [vmem:[%s226 + $0x7c] sm:$0xf]
      %v284 = vld [vmem:[%s226 + $0x80] sm:$0xf]
      %v285 = vld [vmem:[%s226 + $0x84] sm:$0xf]
      %v286 = vld [vmem:[%s226 + $0x88] sm:$0xf]
      %v287 = vld [vmem:[%s226 + $0x8c] sm:$0xf]
      %v288 = vld [vmem:[%s226 + $0x90] sm:$0xf]
      %v289 = vld [vmem:[%s226 + $0x94] sm:$0xf]
      %v290 = vld [vmem:[%s226 + $0x98] sm:$0xf]
      %v291 = vld [vmem:[%s226 + $0x9c] sm:$0xf]
      %v292 = vld [vmem:[%s226 + $0xa0] sm:$0xf]
      %v293 = vld [vmem:[%s226 + $0xa4] sm:$0xf]
      %v294 = vld [vmem:[%s226 + $0xa8] sm:$0xf]
      %v295 = vld [vmem:[%s226 + $0xac] sm:$0xf]
      %v296 = vld [vmem:[%s226 + $0xb0] sm:$0xf]
      %v297 = vld [vmem:[%s226 + $0xb4] sm:$0xf]
      %v298 = vld [vmem:[%s226 + $0xb8] sm:$0xf]
      %v299 = vld [vmem:[%s226 + $0xbc] sm:$0xf]
      %v300 = vld [vmem:[%s226 + $0xc0] sm:$0xf]
      %v301 = vld [vmem:[%s226 + $0xc4] sm:$0xf]
      %v302 = vld [vmem:[%s226 + $0xc8] sm:$0xf]
      %v303 = vld [vmem:[%s226 + $0xcc] sm:$0xf]
      %v304 = vld [vmem:[%s226 + $0xd0] sm:$0xf]
      %v305 = vld [vmem:[%s226 + $0xd4] sm:$0xf]
      %v306 = vld [vmem:[%s226 + $0xd8] sm:$0xf]
      %v307 = vld [vmem:[%s226 + $0xdc] sm:$0xf]
      %v308 = vld [vmem:[%s226 + $0xe0] sm:$0xf]
      %v309 = vld [vmem:[%s226 + $0xe4] sm:$0xf]
      %v310 = vld [vmem:[%s226 + $0xe8] sm:$0xf]
      %v311 = vld [vmem:[%s226 + $0xec] sm:$0xf]
      %v312 = vld [vmem:[%s226 + $0xf0] sm:$0xf]
      %v313 = vld [vmem:[%s226 + $0xf4] sm:$0xf]
      %v314 = vld [vmem:[%s226 + $0xf8] sm:$0xf]
      %v315 = vld [vmem:[%s226 + $0xfc] sm:$0xf]
      %v316 = vld [vmem:[%s232] sm:$0xf]
      %v317 = vld [vmem:[%s232 + $0x4] sm:$0xf]
      %v318 = vld [vmem:[%s232 + $0x8] sm:$0xf]
      %v319 = vld [vmem:[%s232 + $0xc] sm:$0xf]
      %v320 = vld [vmem:[%s232 + $0x10] sm:$0xf]
      %v321 = vld [vmem:[%s232 + $0x14] sm:$0xf]
      %v322 = vld [vmem:[%s232 + $0x18] sm:$0xf]
      %v323 = vld [vmem:[%s232 + $0x1c] sm:$0xf]
      %v388 = vunpack.c.l.b16 %v252
      %v389 = vunpack.c.l.b16 %v253
      %v390 = vunpack.c.l.b16 %v254
      %v391 = vunpack.c.l.b16 %v255
      %v392 = vunpack.c.l.b16 %v256
      %v393 = vunpack.c.l.b16 %v257
      %v394 = vunpack.c.l.b16 %v258
      %v395 = vunpack.c.l.b16 %v259
      %v396 = vunpack.c.l.b16 %v260
      %v397 = vunpack.c.l.b16 %v261
      %v398 = vunpack.c.l.b16 %v262
      %v399 = vunpack.c.l.b16 %v263
      %v400 = vunpack.c.l.b16 %v264
      %v401 = vunpack.c.l.b16 %v265
      %v402 = vunpack.c.l.b16 %v266
      %v403 = vunpack.c.l.b16 %v267
      %v404 = vunpack.c.l.b16 %v268
      %v405 = vunpack.c.l.b16 %v269
      %v406 = vunpack.c.l.b16 %v270
      %v407 = vunpack.c.l.b16 %v271
      %v408 = vunpack.c.l.b16 %v272
      %v409 = vunpack.c.l.b16 %v273
      %v410 = vunpack.c.l.b16 %v274
      %v411 = vunpack.c.l.b16 %v275
      %v412 = vunpack.c.l.b16 %v276
      %v413 = vunpack.c.l.b16 %v277
      %v414 = vunpack.c.l.b16 %v278
      %v415 = vunpack.c.l.b16 %v279
      %v416 = vunpack.c.l.b16 %v280
      %v417 = vunpack.c.l.b16 %v281
      %v418 = vunpack.c.l.b16 %v282
      %v419 = vunpack.c.l.b16 %v283
      %v420 = vunpack.c.l.b16 %v284
      %v421 = vunpack.c.l.b16 %v285
      %v422 = vunpack.c.l.b16 %v286
      %v423 = vunpack.c.l.b16 %v287
      %v424 = vunpack.c.l.b16 %v288
      %v425 = vunpack.c.l.b16 %v289
      %v426 = vunpack.c.l.b16 %v290
      %v427 = vunpack.c.l.b16 %v291
      %v428 = vunpack.c.l.b16 %v292
      %v429 = vunpack.c.l.b16 %v293
      %v430 = vunpack.c.l.b16 %v294
      %v431 = vunpack.c.l.b16 %v295
      %v432 = vunpack.c.l.b16 %v296
      %v433 = vunpack.c.l.b16 %v297
      %v434 = vunpack.c.l.b16 %v298
      %v435 = vunpack.c.l.b16 %v299
      %v436 = vunpack.c.l.b16 %v300
      %v437 = vunpack.c.l.b16 %v301
      %v438 = vunpack.c.l.b16 %v302
      %v439 = vunpack.c.l.b16 %v303
      %v440 = vunpack.c.l.b16 %v304
      %v441 = vunpack.c.l.b16 %v305
      %v442 = vunpack.c.l.b16 %v306
      %v443 = vunpack.c.l.b16 %v307
      %v444 = vunpack.c.l.b16 %v308
      %v445 = vunpack.c.l.b16 %v309
      %v446 = vunpack.c.l.b16 %v310
      %v447 = vunpack.c.l.b16 %v311
      %v448 = vunpack.c.l.b16 %v312
      %v449 = vunpack.c.l.b16 %v313
      %v450 = vunpack.c.l.b16 %v314
      %v451 = vunpack.c.l.b16 %v315
      %v452 = vpack.c.b16 %v389, %v388
      %v453 = vpack.c.b16 %v391, %v390
      %v454 = vpack.c.b16 %v393, %v392
      %v455 = vpack.c.b16 %v395, %v394
      %v456 = vpack.c.b16 %v397, %v396
      %v457 = vpack.c.b16 %v399, %v398
      %v458 = vpack.c.b16 %v401, %v400
      %v459 = vpack.c.b16 %v403, %v402
      %v460 = vpack.c.b16 %v405, %v404
      %v461 = vpack.c.b16 %v407, %v406
      %v462 = vpack.c.b16 %v409, %v408
      %v463 = vpack.c.b16 %v411, %v410
      %v464 = vpack.c.b16 %v413, %v412
      %v465 = vpack.c.b16 %v415, %v414
      %v466 = vpack.c.b16 %v417, %v416
      %v467 = vpack.c.b16 %v419, %v418
      %v468 = vpack.c.b16 %v421, %v420
      %v469 = vpack.c.b16 %v423, %v422
      %v470 = vpack.c.b16 %v425, %v424
      %v471 = vpack.c.b16 %v427, %v426
      %v472 = vpack.c.b16 %v429, %v428
      %v473 = vpack.c.b16 %v431, %v430
      %v474 = vpack.c.b16 %v433, %v432
      %v475 = vpack.c.b16 %v435, %v434
      %v476 = vpack.c.b16 %v437, %v436
      %v477 = vpack.c.b16 %v439, %v438
      %v478 = vpack.c.b16 %v441, %v440
      %v479 = vpack.c.b16 %v443, %v442
      %v480 = vpack.c.b16 %v445, %v444
      %v481 = vpack.c.b16 %v447, %v446
      %v482 = vpack.c.b16 %v449, %v448
      %v483 = vpack.c.b16 %v451, %v450
      %v492 = vunpack.c.l.b16 %v316
      %v493 = vunpack.c.l.b16 %v317
      %v494 = vunpack.c.l.b16 %v318
      %v495 = vunpack.c.l.b16 %v319
      %v496 = vunpack.c.l.b16 %v320
      %v497 = vunpack.c.l.b16 %v321
      %v498 = vunpack.c.l.b16 %v322
      %v499 = vunpack.c.l.b16 %v323
      %v500 = vpack.c.b16 %v493, %v492
      %v501 = vpack.c.b16 %v495, %v494
      %v502 = vpack.c.b16 %v497, %v496
      %v503 = vpack.c.b16 %v499, %v498
      %vm508 = vcmask 523264
      %v510 = vsel %vm508, %v452, 0
      %v513 = vsel %vm508, %v453, 0
      %v516 = vsel %vm508, %v454, 0
      %v519 = vsel %vm508, %v455, 0
      %v522 = vsel %vm508, %v456, 0
      %v525 = vsel %vm508, %v457, 0
      %v528 = vsel %vm508, %v458, 0
      %v531 = vsel %vm508, %v459, 0
      %v534 = vsel %vm508, %v460, 0
      %v537 = vsel %vm508, %v461, 0
      %v540 = vsel %vm508, %v462, 0
      %v543 = vsel %vm508, %v463, 0
      %v546 = vsel %vm508, %v464, 0
      %v549 = vsel %vm508, %v465, 0
      %v552 = vsel %vm508, %v466, 0
      %v555 = vsel %vm508, %v467, 0
      %v558 = vsel %vm508, %v468, 0
      %v561 = vsel %vm508, %v469, 0
      %v564 = vsel %vm508, %v470, 0
      %v567 = vsel %vm508, %v471, 0
      %v570 = vsel %vm508, %v472, 0
      %v573 = vsel %vm508, %v473, 0
      %v576 = vsel %vm508, %v474, 0
      %v579 = vsel %vm508, %v475, 0
      %v582 = vsel %vm508, %v476, 0
      %v585 = vsel %vm508, %v477, 0
      %v588 = vsel %vm508, %v478, 0
      %v591 = vsel %vm508, %v479, 0
      %v594 = vsel %vm508, %v480, 0
      %v597 = vsel %vm508, %v481, 0
      %v600 = vsel %vm508, %v482, 0
      %v603 = vsel %vm508, %v483, 0
      %605 = vmatpush.bf16.msra.mxu0 0
      %606 = vmatpush.bf16.msra.mxu0 0
      %607 = vmatpush.bf16.msra.mxu0 0
      %608 = vmatpush.bf16.msra.mxu0 0
      %609 = vmatpush.bf16.msra.mxu0 %v503
      %610 = vmatpush.bf16.msra.mxu0 %v502
      %611 = vmatpush.bf16.msra.mxu0 %v501
      %612 = vmatpush.bf16.msra.mxu0 %v500
      %613 = vmatmul.bf16.gmra.mxu0 %v510
      %v614 = vpop.f32.mrf.mxu0
      %v615 = vadd.f32 0.0, %v614
      %v616 = vpop.f32.mrf.mxu0
      %v617 = vadd.f32 0.0, %v616
      %618 = vmatmul.bf16.gmra.mxu0 %v513
      %v619 = vpop.f32.mrf.mxu0
      %v620 = vadd.f32 0.0, %v619
      %v621 = vpop.f32.mrf.mxu0
      %v622 = vadd.f32 0.0, %v621
      %623 = vmatmul.bf16.gmra.mxu0 %v516
      %v624 = vpop.f32.mrf.mxu0
      %v625 = vadd.f32 0.0, %v624
      %v626 = vpop.f32.mrf.mxu0
      %v627 = vadd.f32 0.0, %v626
      %628 = vmatmul.bf16.gmra.mxu0 %v519
      %v629 = vpop.f32.mrf.mxu0
      %v630 = vadd.f32 0.0, %v629
      %v631 = vpop.f32.mrf.mxu0
      %v632 = vadd.f32 0.0, %v631
      %633 = vmatmul.bf16.gmra.mxu0 %v522
      %v634 = vpop.f32.mrf.mxu0
      %v635 = vadd.f32 0.0, %v634
      %v636 = vpop.f32.mrf.mxu0
      %v637 = vadd.f32 0.0, %v636
      %638 = vmatmul.bf16.gmra.mxu0 %v525
      %v639 = vpop.f32.mrf.mxu0
      %v640 = vadd.f32 0.0, %v639
      %v641 = vpop.f32.mrf.mxu0
      %v642 = vadd.f32 0.0, %v641
      %643 = vmatmul.bf16.gmra.mxu0 %v528
      %v644 = vpop.f32.mrf.mxu0
      %v645 = vadd.f32 0.0, %v644
      %v646 = vpop.f32.mrf.mxu0
      %v647 = vadd.f32 0.0, %v646
      %648 = vmatmul.bf16.gmra.mxu0 %v531
      %v649 = vpop.f32.mrf.mxu0
      %v650 = vadd.f32 0.0, %v649
      %v651 = vpop.f32.mrf.mxu0
      %v652 = vadd.f32 0.0, %v651
      %653 = vmatmul.bf16.gmra.mxu0 %v534
      %v654 = vpop.f32.mrf.mxu0
      %v655 = vadd.f32 0.0, %v654
      %v656 = vpop.f32.mrf.mxu0
      %v657 = vadd.f32 0.0, %v656
      %658 = vmatmul.bf16.gmra.mxu0 %v537
      %v659 = vpop.f32.mrf.mxu0
      %v660 = vadd.f32 0.0, %v659
      %v661 = vpop.f32.mrf.mxu0
      %v662 = vadd.f32 0.0, %v661
      %663 = vmatmul.bf16.gmra.mxu0 %v540
      %v664 = vpop.f32.mrf.mxu0
      %v665 = vadd.f32 0.0, %v664
      %v666 = vpop.f32.mrf.mxu0
      %v667 = vadd.f32 0.0, %v666
      %668 = vmatmul.bf16.gmra.mxu0 %v543
      %v669 = vpop.f32.mrf.mxu0
      %v670 = vadd.f32 0.0, %v669
      %v671 = vpop.f32.mrf.mxu0
      %v672 = vadd.f32 0.0, %v671
      %673 = vmatmul.bf16.gmra.mxu0 %v546
      %v674 = vpop.f32.mrf.mxu0
      %v675 = vadd.f32 0.0, %v674
      %v676 = vpop.f32.mrf.mxu0
      %v677 = vadd.f32 0.0, %v676
      %678 = vmatmul.bf16.gmra.mxu0 %v549
      %v679 = vpop.f32.mrf.mxu0
      %v680 = vadd.f32 0.0, %v679
      %v681 = vpop.f32.mrf.mxu0
      %v682 = vadd.f32 0.0, %v681
      %683 = vmatmul.bf16.gmra.mxu0 %v552
      %v684 = vpop.f32.mrf.mxu0
      %v685 = vadd.f32 0.0, %v684
      %v686 = vpop.f32.mrf.mxu0
      %v687 = vadd.f32 0.0, %v686
      %688 = vmatmul.bf16.gmra.mxu0 %v555
      %v689 = vpop.f32.mrf.mxu0
      %v690 = vadd.f32 0.0, %v689
      %v691 = vpop.f32.mrf.mxu0
      %v692 = vadd.f32 0.0, %v691
      %693 = vmatmul.bf16.gmra.mxu0 %v558
      %v694 = vpop.f32.mrf.mxu0
      %v695 = vadd.f32 0.0, %v694
      %v696 = vpop.f32.mrf.mxu0
      %v697 = vadd.f32 0.0, %v696
      %698 = vmatmul.bf16.gmra.mxu0 %v561
      %v699 = vpop.f32.mrf.mxu0
      %v700 = vadd.f32 0.0, %v699
      %v701 = vpop.f32.mrf.mxu0
      %v702 = vadd.f32 0.0, %v701
      %703 = vmatmul.bf16.gmra.mxu0 %v564
      %v704 = vpop.f32.mrf.mxu0
      %v705 = vadd.f32 0.0, %v704
      %v706 = vpop.f32.mrf.mxu0
      %v707 = vadd.f32 0.0, %v706
      %708 = vmatmul.bf16.gmra.mxu0 %v567
      %v709 = vpop.f32.mrf.mxu0
      %v710 = vadd.f32 0.0, %v709
      %v711 = vpop.f32.mrf.mxu0
      %v712 = vadd.f32 0.0, %v711
      %713 = vmatmul.bf16.gmra.mxu0 %v570
      %v714 = vpop.f32.mrf.mxu0
      %v715 = vadd.f32 0.0, %v714
      %v716 = vpop.f32.mrf.mxu0
      %v717 = vadd.f32 0.0, %v716
      %718 = vmatmul.bf16.gmra.mxu0 %v573
      %v719 = vpop.f32.mrf.mxu0
      %v720 = vadd.f32 0.0, %v719
      %v721 = vpop.f32.mrf.mxu0
      %v722 = vadd.f32 0.0, %v721
      %723 = vmatmul.bf16.gmra.mxu0 %v576
      %v724 = vpop.f32.mrf.mxu0
      %v725 = vadd.f32 0.0, %v724
      %v726 = vpop.f32.mrf.mxu0
      %v727 = vadd.f32 0.0, %v726
      %728 = vmatmul.bf16.gmra.mxu0 %v579
      %v729 = vpop.f32.mrf.mxu0
      %v730 = vadd.f32 0.0, %v729
      %v731 = vpop.f32.mrf.mxu0
      %v732 = vadd.f32 0.0, %v731
      %733 = vmatmul.bf16.gmra.mxu0 %v582
      %v734 = vpop.f32.mrf.mxu0
      %v735 = vadd.f32 0.0, %v734
      %v736 = vpop.f32.mrf.mxu0
      %v737 = vadd.f32 0.0, %v736
      %738 = vmatmul.bf16.gmra.mxu0 %v585
      %v739 = vpop.f32.mrf.mxu0
      %v740 = vadd.f32 0.0, %v739
      %v741 = vpop.f32.mrf.mxu0
      %v742 = vadd.f32 0.0, %v741
      %743 = vmatmul.bf16.gmra.mxu0 %v588
      %v744 = vpop.f32.mrf.mxu0
      %v745 = vadd.f32 0.0, %v744
      %v746 = vpop.f32.mrf.mxu0
      %v747 = vadd.f32 0.0, %v746
      %748 = vmatmul.bf16.gmra.mxu0 %v591
      %v749 = vpop.f32.mrf.mxu0
      %v750 = vadd.f32 0.0, %v749
      %v751 = vpop.f32.mrf.mxu0
      %v752 = vadd.f32 0.0, %v751
      %753 = vmatmul.bf16.gmra.mxu0 %v594
      %v754 = vpop.f32.mrf.mxu0
      %v755 = vadd.f32 0.0, %v754
      %v756 = vpop.f32.mrf.mxu0
      %v757 = vadd.f32 0.0, %v756
      %758 = vmatmul.bf16.gmra.mxu0 %v597
      %v759 = vpop.f32.mrf.mxu0
      %v760 = vadd.f32 0.0, %v759
      %v761 = vpop.f32.mrf.mxu0
      %v762 = vadd.f32 0.0, %v761
      %763 = vmatmul.bf16.gmra.mxu0 %v600
      %v764 = vpop.f32.mrf.mxu0
      %v765 = vadd.f32 0.0, %v764
      %v766 = vpop.f32.mrf.mxu0
      %v767 = vadd.f32 0.0, %v766
      %768 = vmatmul.bf16.gmra.mxu0 %v603
      %v769 = vpop.f32.mrf.mxu0
      %v770 = vadd.f32 0.0, %v769
      %v771 = vpop.f32.mrf.mxu0
      %v772 = vadd.f32 0.0, %v771
      %773 = vdwg.mxu0
      %v774 = vpack.c.bf16 %v615, %v615
      %v775 = vpack.c.bf16 %v617, %v617
      %v776 = vpack.c.bf16 %v620, %v620
      %v777 = vpack.c.bf16 %v622, %v622
      %v778 = vpack.c.bf16 %v625, %v625
      %v779 = vpack.c.bf16 %v627, %v627
      %v780 = vpack.c.bf16 %v630, %v630
      %v781 = vpack.c.bf16 %v632, %v632
      %v782 = vpack.c.bf16 %v635, %v635
      %v783 = vpack.c.bf16 %v637, %v637
      %v784 = vpack.c.bf16 %v640, %v640
      %v785 = vpack.c.bf16 %v642, %v642
      %v786 = vpack.c.bf16 %v645, %v645
      %v787 = vpack.c.bf16 %v647, %v647
      %v788 = vpack.c.bf16 %v650, %v650
      %v789 = vpack.c.bf16 %v652, %v652
      %v790 = vpack.c.bf16 %v655, %v655
      %v791 = vpack.c.bf16 %v657, %v657
      %v792 = vpack.c.bf16 %v660, %v660
      %v793 = vpack.c.bf16 %v662, %v662
      %v794 = vpack.c.bf16 %v665, %v665
      %v795 = vpack.c.bf16 %v667, %v667
      %v796 = vpack.c.bf16 %v670, %v670
      %v797 = vpack.c.bf16 %v672, %v672
      %v798 = vpack.c.bf16 %v675, %v675
      %v799 = vpack.c.bf16 %v677, %v677
      %v800 = vpack.c.bf16 %v680, %v680
      %v801 = vpack.c.bf16 %v682, %v682
      %v802 = vpack.c.bf16 %v685, %v685
      %v803 = vpack.c.bf16 %v687, %v687
      %v804 = vpack.c.bf16 %v690, %v690
      %v805 = vpack.c.bf16 %v692, %v692
      %v806 = vpack.c.bf16 %v695, %v695
      %v807 = vpack.c.bf16 %v697, %v697
      %v808 = vpack.c.bf16 %v700, %v700
      %v809 = vpack.c.bf16 %v702, %v702
      %v810 = vpack.c.bf16 %v705, %v705
      %v811 = vpack.c.bf16 %v707, %v707
      %v812 = vpack.c.bf16 %v710, %v710
      %v813 = vpack.c.bf16 %v712, %v712
      %v814 = vpack.c.bf16 %v715, %v715
      %v815 = vpack.c.bf16 %v717, %v717
      %v816 = vpack.c.bf16 %v720, %v720
      %v817 = vpack.c.bf16 %v722, %v722
      %v818 = vpack.c.bf16 %v725, %v725
      %v819 = vpack.c.bf16 %v727, %v727
      %v820 = vpack.c.bf16 %v730, %v730
      %v821 = vpack.c.bf16 %v732, %v732
      %v822 = vpack.c.bf16 %v735, %v735
      %v823 = vpack.c.bf16 %v737, %v737
      %v824 = vpack.c.bf16 %v740, %v740
      %v825 = vpack.c.bf16 %v742, %v742
      %v826 = vpack.c.bf16 %v745, %v745
      %v827 = vpack.c.bf16 %v747, %v747
      %v828 = vpack.c.bf16 %v750, %v750
      %v829 = vpack.c.bf16 %v752, %v752
      %v830 = vpack.c.bf16 %v755, %v755
      %v831 = vpack.c.bf16 %v757, %v757
      %v832 = vpack.c.bf16 %v760, %v760
      %v833 = vpack.c.bf16 %v762, %v762
      %v834 = vpack.c.bf16 %v765, %v765
      %v835 = vpack.c.bf16 %v767, %v767
      %v836 = vpack.c.bf16 %v770, %v770
      %v837 = vpack.c.bf16 %v772, %v772
      %vm838 = vcmask 60416
      %839 = vst.msk [vmem:[%s241] sm:$0xf] %vm838, %v774
      %840 = vst.msk [vmem:[%s241 + $0x4] sm:$0xf] %vm838, %v775
      %841 = vst.msk [vmem:[%s241 + $0x8] sm:$0xf] %vm838, %v776
      %842 = vst.msk [vmem:[%s241 + $0xc] sm:$0xf] %vm838, %v777
      %843 = vst.msk [vmem:[%s241 + $0x10] sm:$0xf] %vm838, %v778
      %844 = vst.msk [vmem:[%s241 + $0x14] sm:$0xf] %vm838, %v779
      %845 = vst.msk [vmem:[%s241 + $0x18] sm:$0xf] %vm838, %v780
      %846 = vst.msk [vmem:[%s241 + $0x1c] sm:$0xf] %vm838, %v781
      %847 = vst.msk [vmem:[%s241 + $0x20] sm:$0xf] %vm838, %v782
      %848 = vst.msk [vmem:[%s241 + $0x24] sm:$0xf] %vm838, %v783
      %849 = vst.msk [vmem:[%s241 + $0x28] sm:$0xf] %vm838, %v784
      %850 = vst.msk [vmem:[%s241 + $0x2c] sm:$0xf] %vm838, %v785
      %851 = vst.msk [vmem:[%s241 + $0x30] sm:$0xf] %vm838, %v786
      %852 = vst.msk [vmem:[%s241 + $0x34] sm:$0xf] %vm838, %v787
      %853 = vst.msk [vmem:[%s241 + $0x38] sm:$0xf] %vm838, %v788
      %854 = vst.msk [vmem:[%s241 + $0x3c] sm:$0xf] %vm838, %v789
      %855 = vst.msk [vmem:[%s241 + $0x40] sm:$0xf] %vm838, %v790
      %856 = vst.msk [vmem:[%s241 + $0x44] sm:$0xf] %vm838, %v791
      %857 = vst.msk [vmem:[%s241 + $0x48] sm:$0xf] %vm838, %v792
      %858 = vst.msk [vmem:[%s241 + $0x4c] sm:$0xf] %vm838, %v793
      %859 = vst.msk [vmem:[%s241 + $0x50] sm:$0xf] %vm838, %v794
      %860 = vst.msk [vmem:[%s241 + $0x54] sm:$0xf] %vm838, %v795
      %861 = vst.msk [vmem:[%s241 + $0x58] sm:$0xf] %vm838, %v796
      %862 = vst.msk [vmem:[%s241 + $0x5c] sm:$0xf] %vm838, %v797
      %863 = vst.msk [vmem:[%s241 + $0x60] sm:$0xf] %vm838, %v798
      %864 = vst.msk [vmem:[%s241 + $0x64] sm:$0xf] %vm838, %v799
      %865 = vst.msk [vmem:[%s241 + $0x68] sm:$0xf] %vm838, %v800
      %866 = vst.msk [vmem:[%s241 + $0x6c] sm:$0xf] %vm838, %v801
      %867 = vst.msk [vmem:[%s241 + $0x70] sm:$0xf] %vm838, %v802
      %868 = vst.msk [vmem:[%s241 + $0x74] sm:$0xf] %vm838, %v803
      %869 = vst.msk [vmem:[%s241 + $0x78] sm:$0xf] %vm838, %v804
      %870 = vst.msk [vmem:[%s241 + $0x7c] sm:$0xf] %vm838, %v805
      %871 = vst.msk [vmem:[%s241 + $0x80] sm:$0xf] %vm838, %v806
      %872 = vst.msk [vmem:[%s241 + $0x84] sm:$0xf] %vm838, %v807
      %873 = vst.msk [vmem:[%s241 + $0x88] sm:$0xf] %vm838, %v808
      %874 = vst.msk [vmem:[%s241 + $0x8c] sm:$0xf] %vm838, %v809
      %875 = vst.msk [vmem:[%s241 + $0x90] sm:$0xf] %vm838, %v810
      %876 = vst.msk [vmem:[%s241 + $0x94] sm:$0xf] %vm838, %v811
      %877 = vst.msk [vmem:[%s241 + $0x98] sm:$0xf] %vm838, %v812
      %878 = vst.msk [vmem:[%s241 + $0x9c] sm:$0xf] %vm838, %v813
      %879 = vst.msk [vmem:[%s241 + $0xa0] sm:$0xf] %vm838, %v814
      %880 = vst.msk [vmem:[%s241 + $0xa4] sm:$0xf] %vm838, %v815
      %881 = vst.msk [vmem:[%s241 + $0xa8] sm:$0xf] %vm838, %v816
      %882 = vst.msk [vmem:[%s241 + $0xac] sm:$0xf] %vm838, %v817
      %883 = vst.msk [vmem:[%s241 + $0xb0] sm:$0xf] %vm838, %v818
      %884 = vst.msk [vmem:[%s241 + $0xb4] sm:$0xf] %vm838, %v819
      %885 = vst.msk [vmem:[%s241 + $0xb8] sm:$0xf] %vm838, %v820
      %886 = vst.msk [vmem:[%s241 + $0xbc] sm:$0xf] %vm838, %v821
      %887 = vst.msk [vmem:[%s241 + $0xc0] sm:$0xf] %vm838, %v822
      %888 = vst.msk [vmem:[%s241 + $0xc4] sm:$0xf] %vm838, %v823
      %889 = vst.msk [vmem:[%s241 + $0xc8] sm:$0xf] %vm838, %v824
      %890 = vst.msk [vmem:[%s241 + $0xcc] sm:$0xf] %vm838, %v825
      %891 = vst.msk [vmem:[%s241 + $0xd0] sm:$0xf] %vm838, %v826
      %892 = vst.msk [vmem:[%s241 + $0xd4] sm:$0xf] %vm838, %v827
      %893 = vst.msk [vmem:[%s241 + $0xd8] sm:$0xf] %vm838, %v828
      %894 = vst.msk [vmem:[%s241 + $0xdc] sm:$0xf] %vm838, %v829
      %895 = vst.msk [vmem:[%s241 + $0xe0] sm:$0xf] %vm838, %v830
      %896 = vst.msk [vmem:[%s241 + $0xe4] sm:$0xf] %vm838, %v831
      %897 = vst.msk [vmem:[%s241 + $0xe8] sm:$0xf] %vm838, %v832
      %898 = vst.msk [vmem:[%s241 + $0xec] sm:$0xf] %vm838, %v833
      %899 = vst.msk [vmem:[%s241 + $0xf0] sm:$0xf] %vm838, %v834
      %900 = vst.msk [vmem:[%s241 + $0xf4] sm:$0xf] %vm838, %v835
      %901 = vst.msk [vmem:[%s241 + $0xf8] sm:$0xf] %vm838, %v836
      %902 = vst.msk [vmem:[%s241 + $0xfc] sm:$0xf] %vm838, %v837
      %vm903 = vcmask 64512
      %v904 = vsel %vm903, %v615, 0.0
      %v905 = vsel %vm903, %v617, 0.0
      %v906 = vadd.f32 %v904, %v905
      %v907 = vsel %vm903, %v620, 0.0
      %v908 = vadd.f32 %v906, %v907
      %v909 = vsel %vm903, %v622, 0.0
      %v910 = vadd.f32 %v908, %v909
      %v911 = vsel %vm903, %v625, 0.0
      %v912 = vadd.f32 %v910, %v911
      %v913 = vsel %vm903, %v627, 0.0
      %v914 = vadd.f32 %v912, %v913
      %v915 = vsel %vm903, %v630, 0.0
      %v916 = vadd.f32 %v914, %v915
      %v917 = vsel %vm903, %v632, 0.0
      %v918 = vadd.f32 %v916, %v917
      %v919 = vsel %vm903, %v635, 0.0
      %v920 = vadd.f32 %v918, %v919
      %v921 = vsel %vm903, %v637, 0.0
      %v922 = vadd.f32 %v920, %v921
      %v923 = vsel %vm903, %v640, 0.0
      %v924 = vadd.f32 %v922, %v923
      %v925 = vsel %vm903, %v642, 0.0
      %v926 = vadd.f32 %v924, %v925
      %v927 = vsel %vm903, %v645, 0.0
      %v928 = vadd.f32 %v926, %v927
      %v929 = vsel %vm903, %v647, 0.0
      %v930 = vadd.f32 %v928, %v929
      %v931 = vsel %vm903, %v650, 0.0
      %v932 = vadd.f32 %v930, %v931
      %v933 = vsel %vm903, %v652, 0.0
      %v934 = vadd.f32 %v932, %v933
      %v935 = vsel %vm903, %v655, 0.0
      %v936 = vadd.f32 %v934, %v935
      %v937 = vsel %vm903, %v657, 0.0
      %v938 = vadd.f32 %v936, %v937
      %v939 = vsel %vm903, %v660, 0.0
      %v940 = vadd.f32 %v938, %v939
      %v941 = vsel %vm903, %v662, 0.0
      %v942 = vadd.f32 %v940, %v941
      %v943 = vsel %vm903, %v665, 0.0
      %v944 = vadd.f32 %v942, %v943
      %v945 = vsel %vm903, %v667, 0.0
      %v946 = vadd.f32 %v944, %v945
      %v947 = vsel %vm903, %v670, 0.0
      %v948 = vadd.f32 %v946, %v947
      %v949 = vsel %vm903, %v672, 0.0
      %v950 = vadd.f32 %v948, %v949
      %v951 = vsel %vm903, %v675, 0.0
      %v952 = vadd.f32 %v950, %v951
      %v953 = vsel %vm903, %v677, 0.0
      %v954 = vadd.f32 %v952, %v953
      %v955 = vsel %vm903, %v680, 0.0
      %v956 = vadd.f32 %v954, %v955
      %v957 = vsel %vm903, %v682, 0.0
      %v958 = vadd.f32 %v956, %v957
      %v959 = vsel %vm903, %v685, 0.0
      %v960 = vadd.f32 %v958, %v959
      %v961 = vsel %vm903, %v687, 0.0
      %v962 = vadd.f32 %v960, %v961
      %v963 = vsel %vm903, %v690, 0.0
      %v964 = vadd.f32 %v962, %v963
      %v965 = vsel %vm903, %v692, 0.0
      %v966 = vadd.f32 %v964, %v965
      %v967 = vsel %vm903, %v695, 0.0
      %v968 = vadd.f32 %v966, %v967
      %v969 = vsel %vm903, %v697, 0.0
      %v970 = vadd.f32 %v968, %v969
      %v971 = vsel %vm903, %v700, 0.0
      %v972 = vadd.f32 %v970, %v971
      %v973 = vsel %vm903, %v702, 0.0
      %v974 = vadd.f32 %v972, %v973
      %v975 = vsel %vm903, %v705, 0.0
      %v976 = vadd.f32 %v974, %v975
      %v977 = vsel %vm903, %v707, 0.0
      %v978 = vadd.f32 %v976, %v977
      %v979 = vsel %vm903, %v710, 0.0
      %v980 = vadd.f32 %v978, %v979
      %v981 = vsel %vm903, %v712, 0.0
      %v982 = vadd.f32 %v980, %v981
      %v983 = vsel %vm903, %v715, 0.0
      %v984 = vadd.f32 %v982, %v983
      %v985 = vsel %vm903, %v717, 0.0
      %v986 = vadd.f32 %v984, %v985
      %v987 = vsel %vm903, %v720, 0.0
      %v988 = vadd.f32 %v986, %v987
      %v989 = vsel %vm903, %v722, 0.0
      %v990 = vadd.f32 %v988, %v989
      %v991 = vsel %vm903, %v725, 0.0
      %v992 = vadd.f32 %v990, %v991
      %v993 = vsel %vm903, %v727, 0.0
      %v994 = vadd.f32 %v992, %v993
      %v995 = vsel %vm903, %v730, 0.0
      %v996 = vadd.f32 %v994, %v995
      %v997 = vsel %vm903, %v732, 0.0
      %v998 = vadd.f32 %v996, %v997
      %v999 = vsel %vm903, %v735, 0.0
      %v1000 = vadd.f32 %v998, %v999
      %v1001 = vsel %vm903, %v737, 0.0
      %v1002 = vadd.f32 %v1000, %v1001
      %v1003 = vsel %vm903, %v740, 0.0
      %v1004 = vadd.f32 %v1002, %v1003
      %v1005 = vsel %vm903, %v742, 0.0
      %v1006 = vadd.f32 %v1004, %v1005
      %v1007 = vsel %vm903, %v745, 0.0
      %v1008 = vadd.f32 %v1006, %v1007
      %v1009 = vsel %vm903, %v747, 0.0
      %v1010 = vadd.f32 %v1008, %v1009
      %v1011 = vsel %vm903, %v750, 0.0
      %v1012 = vadd.f32 %v1010, %v1011
      %v1013 = vsel %vm903, %v752, 0.0
      %v1014 = vadd.f32 %v1012, %v1013
      %v1015 = vsel %vm903, %v755, 0.0
      %v1016 = vadd.f32 %v1014, %v1015
      %v1017 = vsel %vm903, %v757, 0.0
      %v1018 = vadd.f32 %v1016, %v1017
      %v1019 = vsel %vm903, %v760, 0.0
      %v1020 = vadd.f32 %v1018, %v1019
      %v1021 = vsel %vm903, %v762, 0.0
      %v1022 = vadd.f32 %v1020, %v1021
      %v1023 = vsel %vm903, %v765, 0.0
      %v1024 = vadd.f32 %v1022, %v1023
      %v1025 = vsel %vm903, %v767, 0.0
      %v1026 = vadd.f32 %v1024, %v1025
      %v1027 = vsel %vm903, %v770, 0.0
      %v1028 = vadd.f32 %v1026, %v1027
      %v1029 = vsel %vm903, %v772, 0.0
      %v1030 = vadd.f32 %v1028, %v1029
      %v1031 = vrot.slane %v1030, 4
      %v1032 = vadd.f32 %v1030, %v1031
      %v1033 = vrot.slane %v1032, 2
      %v1034 = vadd.f32 %v1032, %v1033
      %v1035 = vrot.slane %v1034, 1
      %v1036 = vadd.f32 %v1034, %v1035
      %v1037 = vmul.f32 %v615, %v615
      %v1038 = vmul.f32 %v617, %v617
      %v1039 = vmul.f32 %v620, %v620
      %v1040 = vmul.f32 %v622, %v622
      %v1041 = vmul.f32 %v625, %v625
      %v1042 = vmul.f32 %v627, %v627
      %v1043 = vmul.f32 %v630, %v630
      %v1044 = vmul.f32 %v632, %v632
      %v1045 = vmul.f32 %v635, %v635
      %v1046 = vmul.f32 %v637, %v637
      %v1047 = vmul.f32 %v640, %v640
      %v1048 = vmul.f32 %v642, %v642
      %v1049 = vmul.f32 %v645, %v645
      %v1050 = vmul.f32 %v647, %v647
      %v1051 = vmul.f32 %v650, %v650
      %v1052 = vmul.f32 %v652, %v652
      %v1053 = vmul.f32 %v655, %v655
      %v1054 = vmul.f32 %v657, %v657
      %v1055 = vmul.f32 %v660, %v660
      %v1056 = vmul.f32 %v662, %v662
      %v1057 = vmul.f32 %v665, %v665
      %v1058 = vmul.f32 %v667, %v667
      %v1059 = vmul.f32 %v670, %v670
      %v1060 = vmul.f32 %v672, %v672
      %v1061 = vmul.f32 %v675, %v675
      %v1062 = vmul.f32 %v677, %v677
      %v1063 = vmul.f32 %v680, %v680
      %v1064 = vmul.f32 %v682, %v682
      %v1065 = vmul.f32 %v685, %v685
      %v1066 = vmul.f32 %v687, %v687
      %v1067 = vmul.f32 %v690, %v690
      %v1068 = vmul.f32 %v692, %v692
      %v1069 = vmul.f32 %v695, %v695
      %v1070 = vmul.f32 %v697, %v697
      %v1071 = vmul.f32 %v700, %v700
      %v1072 = vmul.f32 %v702, %v702
      %v1073 = vmul.f32 %v705, %v705
      %v1074 = vmul.f32 %v707, %v707
      %v1075 = vmul.f32 %v710, %v710
      %v1076 = vmul.f32 %v712, %v712
      %v1077 = vmul.f32 %v715, %v715
      %v1078 = vmul.f32 %v717, %v717
      %v1079 = vmul.f32 %v720, %v720
      %v1080 = vmul.f32 %v722, %v722
      %v1081 = vmul.f32 %v725, %v725
      %v1082 = vmul.f32 %v727, %v727
      %v1083 = vmul.f32 %v730, %v730
      %v1084 = vmul.f32 %v732, %v732
      %v1085 = vmul.f32 %v735, %v735
      %v1086 = vmul.f32 %v737, %v737
      %v1087 = vmul.f32 %v740, %v740
      %v1088 = vmul.f32 %v742, %v742
      %v1089 = vmul.f32 %v745, %v745
      %v1090 = vmul.f32 %v747, %v747
      %v1091 = vmul.f32 %v750, %v750
      %v1092 = vmul.f32 %v752, %v752
      %v1093 = vmul.f32 %v755, %v755
      %v1094 = vmul.f32 %v757, %v757
      %v1095 = vmul.f32 %v760, %v760
      %v1096 = vmul.f32 %v762, %v762
      %v1097 = vmul.f32 %v765, %v765
      %v1098 = vmul.f32 %v767, %v767
      %v1099 = vmul.f32 %v770, %v770
      %v1100 = vmul.f32 %v772, %v772
      %v1101 = vsel %vm903, %v1037, 0.0
      %v1102 = vsel %vm903, %v1038, 0.0
      %v1103 = vadd.f32 %v1101, %v1102
      %v1104 = vsel %vm903, %v1039, 0.0
      %v1105 = vadd.f32 %v1103, %v1104
      %v1106 = vsel %vm903, %v1040, 0.0
      %v1107 = vadd.f32 %v1105, %v1106
      %v1108 = vsel %vm903, %v1041, 0.0
      %v1109 = vadd.f32 %v1107, %v1108
      %v1110 = vsel %vm903, %v1042, 0.0
      %v1111 = vadd.f32 %v1109, %v1110
      %v1112 = vsel %vm903, %v1043, 0.0
      %v1113 = vadd.f32 %v1111, %v1112
      %v1114 = vsel %vm903, %v1044, 0.0
      %v1115 = vadd.f32 %v1113, %v1114
      %v1116 = vsel %vm903, %v1045, 0.0
      %v1117 = vadd.f32 %v1115, %v1116
      %v1118 = vsel %vm903, %v1046, 0.0
      %v1119 = vadd.f32 %v1117, %v1118
      %v1120 = vsel %vm903, %v1047, 0.0
      %v1121 = vadd.f32 %v1119, %v1120
      %v1122 = vsel %vm903, %v1048, 0.0
      %v1123 = vadd.f32 %v1121, %v1122
      %v1124 = vsel %vm903, %v1049, 0.0
      %v1125 = vadd.f32 %v1123, %v1124
      %v1126 = vsel %vm903, %v1050, 0.0
      %v1127 = vadd.f32 %v1125, %v1126
      %v1128 = vsel %vm903, %v1051, 0.0
      %v1129 = vadd.f32 %v1127, %v1128
      %v1130 = vsel %vm903, %v1052, 0.0
      %v1131 = vadd.f32 %v1129, %v1130
      %v1132 = vsel %vm903, %v1053, 0.0
      %v1133 = vadd.f32 %v1131, %v1132
      %v1134 = vsel %vm903, %v1054, 0.0
      %v1135 = vadd.f32 %v1133, %v1134
      %v1136 = vsel %vm903, %v1055, 0.0
      %v1137 = vadd.f32 %v1135, %v1136
      %v1138 = vsel %vm903, %v1056, 0.0
      %v1139 = vadd.f32 %v1137, %v1138
      %v1140 = vsel %vm903, %v1057, 0.0
      %v1141 = vadd.f32 %v1139, %v1140
      %v1142 = vsel %vm903, %v1058, 0.0
      %v1143 = vadd.f32 %v1141, %v1142
      %v1144 = vsel %vm903, %v1059, 0.0
      %v1145 = vadd.f32 %v1143, %v1144
      %v1146 = vsel %vm903, %v1060, 0.0
      %v1147 = vadd.f32 %v1145, %v1146
      %v1148 = vsel %vm903, %v1061, 0.0
      %v1149 = vadd.f32 %v1147, %v1148
      %v1150 = vsel %vm903, %v1062, 0.0
      %v1151 = vadd.f32 %v1149, %v1150
      %v1152 = vsel %vm903, %v1063, 0.0
      %v1153 = vadd.f32 %v1151, %v1152
      %v1154 = vsel %vm903, %v1064, 0.0
      %v1155 = vadd.f32 %v1153, %v1154
      %v1156 = vsel %vm903, %v1065, 0.0
      %v1157 = vadd.f32 %v1155, %v1156
      %v1158 = vsel %vm903, %v1066, 0.0
      %v1159 = vadd.f32 %v1157, %v1158
      %v1160 = vsel %vm903, %v1067, 0.0
      %v1161 = vadd.f32 %v1159, %v1160
      %v1162 = vsel %vm903, %v1068, 0.0
      %v1163 = vadd.f32 %v1161, %v1162
      %v1164 = vsel %vm903, %v1069, 0.0
      %v1165 = vadd.f32 %v1163, %v1164
      %v1166 = vsel %vm903, %v1070, 0.0
      %v1167 = vadd.f32 %v1165, %v1166
      %v1168 = vsel %vm903, %v1071, 0.0
      %v1169 = vadd.f32 %v1167, %v1168
      %v1170 = vsel %vm903, %v1072, 0.0
      %v1171 = vadd.f32 %v1169, %v1170
      %v1172 = vsel %vm903, %v1073, 0.0
      %v1173 = vadd.f32 %v1171, %v1172
      %v1174 = vsel %vm903, %v1074, 0.0
      %v1175 = vadd.f32 %v1173, %v1174
      %v1176 = vsel %vm903, %v1075, 0.0
      %v1177 = vadd.f32 %v1175, %v1176
      %v1178 = vsel %vm903, %v1076, 0.0
      %v1179 = vadd.f32 %v1177, %v1178
      %v1180 = vsel %vm903, %v1077, 0.0
      %v1181 = vadd.f32 %v1179, %v1180
      %v1182 = vsel %vm903, %v1078, 0.0
      %v1183 = vadd.f32 %v1181, %v1182
      %v1184 = vsel %vm903, %v1079, 0.0
      %v1185 = vadd.f32 %v1183, %v1184
      %v1186 = vsel %vm903, %v1080, 0.0
      %v1187 = vadd.f32 %v1185, %v1186
      %v1188 = vsel %vm903, %v1081, 0.0
      %v1189 = vadd.f32 %v1187, %v1188
      %v1190 = vsel %vm903, %v1082, 0.0
      %v1191 = vadd.f32 %v1189, %v1190
      %v1192 = vsel %vm903, %v1083, 0.0
      %v1193 = vadd.f32 %v1191, %v1192
      %v1194 = vsel %vm903, %v1084, 0.0
      %v1195 = vadd.f32 %v1193, %v1194
      %v1196 = vsel %vm903, %v1085, 0.0
      %v1197 = vadd.f32 %v1195, %v1196
      %v1198 = vsel %vm903, %v1086, 0.0
      %v1199 = vadd.f32 %v1197, %v1198
      %v1200 = vsel %vm903, %v1087, 0.0
      %v1201 = vadd.f32 %v1199, %v1200
      %v1202 = vsel %vm903, %v1088, 0.0
      %v1203 = vadd.f32 %v1201, %v1202
      %v1204 = vsel %vm903, %v1089, 0.0
      %v1205 = vadd.f32 %v1203, %v1204
      %v1206 = vsel %vm903, %v1090, 0.0
      %v1207 = vadd.f32 %v1205, %v1206
      %v1208 = vsel %vm903, %v1091, 0.0
      %v1209 = vadd.f32 %v1207, %v1208
      %v1210 = vsel %vm903, %v1092, 0.0
      %v1211 = vadd.f32 %v1209, %v1210
      %v1212 = vsel %vm903, %v1093, 0.0
      %v1213 = vadd.f32 %v1211, %v1212
      %v1214 = vsel %vm903, %v1094, 0.0
      %v1215 = vadd.f32 %v1213, %v1214
      %v1216 = vsel %vm903, %v1095, 0.0
      %v1217 = vadd.f32 %v1215, %v1216
      %v1218 = vsel %vm903, %v1096, 0.0
      %v1219 = vadd.f32 %v1217, %v1218
      %v1220 = vsel %vm903, %v1097, 0.0
      %v1221 = vadd.f32 %v1219, %v1220
      %v1222 = vsel %vm903, %v1098, 0.0
      %v1223 = vadd.f32 %v1221, %v1222
      %v1224 = vsel %vm903, %v1099, 0.0
      %v1225 = vadd.f32 %v1223, %v1224
      %v1226 = vsel %vm903, %v1100, 0.0
      %v1227 = vadd.f32 %v1225, %v1226
      %v1228 = vrot.slane %v1227, 4
      %v1229 = vadd.f32 %v1227, %v1228
      %v1230 = vrot.slane %v1229, 2
      %v1231 = vadd.f32 %v1229, %v1230
      %v1232 = vrot.slane %v1231, 1
      %v1233 = vadd.f32 %v1231, %v1232
      %vm1234 = vcmask 1040384
      %v1235 = vsel %vm1234, %v1036, %v1233
      %vm1236 = vcmask 1041408
      %v1237 = vsel %vm1236, %v1235, 0.0
      %1238 = vst.msk [vmem:[%s250] sm:$0xff] %vm903, %v1237
      %s1239 = smul.u32 64, %s20
      %p1240 = scmp.lt.s32.totalorder %s19, 3
      %s1241 = scalar_select %p1240, %s19, 3
      %p1242 = scmp.lt.s32.totalorder %s1239, 255
      %s1243 = scalar_select %p1242, %s1239, 255
      %s1244 = smul.addr %s1241, 256
      %s1245 = sadd.s32 %s1243, %s1244
      %s1246 = smul.addr %s1245, 4
      %s1247 = scalar_lea.vmem %s2, %s1246
      %p1248 = scmp.lt.s32.totalorder %s19, 3
      %s1249 = scalar_select %p1248, %s19, 3
      %p1250 = scmp.lt.s32.totalorder %s20, 3
      %s1251 = scalar_select %p1250, %s20, 3
      %s1252 = smul.addr %s1249, 4
      %s1253 = sadd.s32 %s1251, %s1252
      %s1254 = smul.addr %s1253, 8
      %s1255 = scalar_lea.vmem %s3, %s1254
      // Predicated region
      $region29: #{generator_forward.19} parent=27 // pred_check
        %p1256 = pneg %p101
      $region30: #{generator_forward.19} parent=27 // pred_check_branch
        %1258 = sbr.rel (%p1256) target = $region32
      $region31: #{generator_forward.19} parent=27 // pred_region
        %s1259 = smul.u32 64, %s20
      $region32: #{generator_forward.19} parent=27 // pred_fallthru
        _
      // Predicated region
      $region33: #{generator_forward.19} parent=27 // pred_check
        %p1260 = pneg %p129
      $region34: #{generator_forward.19} parent=27 // pred_check_branch
        %1262 = sbr.rel (%p1260) target = $region36
      $region35: #{generator_forward.19} parent=27 // pred_region
        _
      $region36: #{generator_forward.19} parent=27 // pred_fallthru
        _
    $region28: #{generator_forward.19} parent=5 // pred_fallthru
      _
    %p1263 = scmp.le.s32.totalorder 2, %s10
    // Predicated region
    $region37: #{generator_forward.19} parent=5 // pred_check
      %p1264 = pneg %p1263
    $region38: #{generator_forward.19} parent=5 // pred_check_branch
      %1266 = sbr.rel (%p1264) target = $region40
    $region39: #{generator_forward.19} parent=5 // pred_region
      %s1267 = ssub.s32 %s10, 2
      // Predicated region
      $region41: #{generator_forward.19} parent=39 // pred_check
        %p1268 = pneg %p107
      $region42: #{generator_forward.19} parent=39 // pred_check_branch
        %1270 = sbr.rel (%p1268) target = $region44
      $region43: #{generator_forward.19} parent=39 // pred_region
        %s1271 = smul.u32 64, %s22
        %p1272 = scmp.lt.s32.totalorder %s21, 3
        %s1273 = scalar_select %p1272, %s21, 3
        %p1274 = scmp.lt.s32.totalorder %s1271, 255
        %s1275 = scalar_select %p1274, %s1271, 255
        %s1276 = smul.addr %s1273, 256
        %s1277 = sadd.s32 %s1275, %s1276
        %s1278 = smul.addr %s1277, 4
        %s1279 = scalar_lea.vmem %s2, %s1278
      $region44: #{generator_forward.19} parent=39 // pred_fallthru
        _
      // Predicated region
      $region45: #{generator_forward.19} parent=39 // pred_check
        %p1280 = pneg %p135
      $region46: #{generator_forward.19} parent=39 // pred_check_branch
        %1282 = sbr.rel (%p1280) target = $region48
      $region47: #{generator_forward.19} parent=39 // pred_region
        %p1283 = scmp.lt.s32.totalorder %s21, 3
        %s1284 = scalar_select %p1283, %s21, 3
        %p1285 = scmp.lt.s32.totalorder %s22, 3
        %s1286 = scalar_select %p1285, %s22, 3
        %s1287 = smul.addr %s1284, 4
        %s1288 = sadd.s32 %s1286, %s1287
        %s1289 = smul.addr %s1288, 8
        %s1290 = scalar_lea.vmem %s3, %s1289
      $region48: #{generator_forward.19} parent=39 // pred_fallthru
        _
    $region40: #{generator_forward.19} parent=5 // pred_fallthru
      _
  $region6: #{generator_forward.19} parent=0 // loop_footer
    %s14 = sadd.s32 1, %s10
  $region7: #{generator_forward.19} parent=0 // loop_footer_branch
    %9 = sbr.rel target = $region3
  $region8: #{generator_forward.19} parent=0 // loop_exit
    _

// kernel: generator_forward.20
$region0: #{generator_forward.20}
  #allocation0 [shape = 'u32[]', space=smem, size = 0x4, offset = 0x4, fixed_abs, tag = 'smem constant byte address 0x4 - core index']
  #allocation1 [shape = 'u32[72,128]{1,0:T(1,128)}', space=vmem, size = 0x9000, scoped, tag = 'internal scratch']
  %s0 = inlined_call_operand.vmem [shape: bf16[512,128], index: 0, kind: input, shape index: {}]
  %s1 = inlined_call_operand.vmem [shape: f32[1,128], index: 1, kind: input, shape index: {}]
  %s2 = inlined_call_operand.vmem [shape: f32[1,128], index: 2, kind: input, shape index: {}]
  %s3 = inlined_call_operand.vmem [shape: bf16[512,128], index: 3, kind: output, shape index: {}]
  %s4 = sld [smem:[#allocation0]]
  $region22: #{generator_forward.20} parent=0
    _
  %s6 = ssub.s32 1, %s4
  %s7 = scalar_select 0, %s6, %s4
  // Predicated region
  $region2: #{generator_forward.20} parent=0 // pred_check
    _
  $region3: #{generator_forward.20} parent=0 // pred_check_branch
    %9 = sbr.rel (0) target = $region5
  $region4: #{generator_forward.20} parent=0 // pred_region
    _
  $region5: #{generator_forward.20} parent=0 // pred_fallthru
    _
  // Predicated region
  $region6: #{generator_forward.20} parent=0 // pred_check
    _
  $region7: #{generator_forward.20} parent=0 // pred_check_branch
    %11 = sbr.rel (0) target = $region9
  $region8: #{generator_forward.20} parent=0 // pred_region
    _
  $region9: #{generator_forward.20} parent=0 // pred_fallthru
    _
  // Predicated region
  $region10: #{generator_forward.20} parent=0 // pred_check
    _
  $region11: #{generator_forward.20} parent=0 // pred_check_branch
    %13 = sbr.rel (0) target = $region13
  $region12: #{generator_forward.20} parent=0 // pred_region
    _
  $region13: #{generator_forward.20} parent=0 // pred_fallthru
    _
  %v14 = vld [vmem:[%s0] sm:$0xf]
  %v15 = vld [vmem:[%s0 + $0x4] sm:$0xf]
  %v16 = vld [vmem:[%s0 + $0x8] sm:$0xf]
  %v17 = vld [vmem:[%s0 + $0xc] sm:$0xf]
  %v18 = vld [vmem:[%s0 + $0x10] sm:$0xf]
  %v19 = vld [vmem:[%s0 + $0x14] sm:$0xf]
  %v20 = vld [vmem:[%s0 + $0x18] sm:$0xf]
  %v21 = vld [vmem:[%s0 + $0x1c] sm:$0xf]
  %v22 = vld [vmem:[%s0 + $0x20] sm:$0xf]
  %v23 = vld [vmem:[%s0 + $0x24] sm:$0xf]
  %v24 = vld [vmem:[%s0 + $0x28] sm:$0xf]
  %v25 = vld [vmem:[%s0 + $0x2c] sm:$0xf]
  %v26 = vld [vmem:[%s0 + $0x30] sm:$0xf]
  %v27 = vld [vmem:[%s0 + $0x34] sm:$0xf]
  %v28 = vld [vmem:[%s0 + $0x38] sm:$0xf]
  %v29 = vld [vmem:[%s0 + $0x3c] sm:$0xf]
  %v30 = vld [vmem:[%s0 + $0x40] sm:$0xf]
  %v31 = vld [vmem:[%s0 + $0x44] sm:$0xf]
  %v32 = vld [vmem:[%s0 + $0x48] sm:$0xf]
  %v33 = vld [vmem:[%s0 + $0x4c] sm:$0xf]
  %v34 = vld [vmem:[%s0 + $0x50] sm:$0xf]
  %v35 = vld [vmem:[%s0 + $0x54] sm:$0xf]
  %v36 = vld [vmem:[%s0 + $0x58] sm:$0xf]
  %v37 = vld [vmem:[%s0 + $0x5c] sm:$0xf]
  %v38 = vld [vmem:[%s0 + $0x60] sm:$0xf]
  %v39 = vld [vmem:[%s0 + $0x64] sm:$0xf]
  %v40 = vld [vmem:[%s0 + $0x68] sm:$0xf]
  %v41 = vld [vmem:[%s0 + $0x6c] sm:$0xf]
  %v42 = vld [vmem:[%s0 + $0x70] sm:$0xf]
  %v43 = vld [vmem:[%s0 + $0x74] sm:$0xf]
  %v44 = vld [vmem:[%s0 + $0x78] sm:$0xf]
  %v45 = vld [vmem:[%s0 + $0x7c] sm:$0xf]
  %v46 = vld [vmem:[%s0 + $0x80] sm:$0xf]
  %v47 = vld [vmem:[%s0 + $0x84] sm:$0xf]
  %v48 = vld [vmem:[%s0 + $0x88] sm:$0xf]
  %v49 = vld [vmem:[%s0 + $0x8c] sm:$0xf]
  %v50 = vld [vmem:[%s0 + $0x90] sm:$0xf]
  %v51 = vld [vmem:[%s0 + $0x94] sm:$0xf]
  %v52 = vld [vmem:[%s0 + $0x98] sm:$0xf]
  %v53 = vld [vmem:[%s0 + $0x9c] sm:$0xf]
  %v54 = vld [vmem:[%s0 + $0xa0] sm:$0xf]
  %v55 = vld [vmem:[%s0 + $0xa4] sm:$0xf]
  %v56 = vld [vmem:[%s0 + $0xa8] sm:$0xf]
  %v57 = vld [vmem:[%s0 + $0xac] sm:$0xf]
  %v58 = vld [vmem:[%s0 + $0xb0] sm:$0xf]
  %v59 = vld [vmem:[%s0 + $0xb4] sm:$0xf]
  %v60 = vld [vmem:[%s0 + $0xb8] sm:$0xf]
  %v61 = vld [vmem:[%s0 + $0xbc] sm:$0xf]
  %v62 = vld [vmem:[%s0 + $0xc0] sm:$0xf]
  %v63 = vld [vmem:[%s0 + $0xc4] sm:$0xf]
  %v64 = vld [vmem:[%s0 + $0xc8] sm:$0xf]
  %v65 = vld [vmem:[%s0 + $0xcc] sm:$0xf]
  %v66 = vld [vmem:[%s0 + $0xd0] sm:$0xf]
  %v67 = vld [vmem:[%s0 + $0xd4] sm:$0xf]
  %v68 = vld [vmem:[%s0 + $0xd8] sm:$0xf]
  %v69 = vld [vmem:[%s0 + $0xdc] sm:$0xf]
  %v70 = vld [vmem:[%s0 + $0xe0] sm:$0xf]
  %v71 = vld [vmem:[%s0 + $0xe4] sm:$0xf]
  %v72 = vld [vmem:[%s0 + $0xe8] sm:$0xf]
  %v73 = vld [vmem:[%s0 + $0xec] sm:$0xf]
  %v74 = vld [vmem:[%s0 + $0xf0] sm:$0xf]
  %v75 = vld [vmem:[%s0 + $0xf4] sm:$0xf]
  %v76 = vld [vmem:[%s0 + $0xf8] sm:$0xf]
  %v77 = vld [vmem:[%s0 + $0xfc] sm:$0xf]
  %v78 = vunpack.c.l.bf16 %v14
  %v79 = vunpack.c.l.bf16 %v15
  %v80 = vunpack.c.l.bf16 %v16
  %v81 = vunpack.c.l.bf16 %v17
  %v82 = vunpack.c.l.bf16 %v18
  %v83 = vunpack.c.l.bf16 %v19
  %v84 = vunpack.c.l.bf16 %v20
  %v85 = vunpack.c.l.bf16 %v21
  %v86 = vunpack.c.l.bf16 %v22
  %v87 = vunpack.c.l.bf16 %v23
  %v88 = vunpack.c.l.bf16 %v24
  %v89 = vunpack.c.l.bf16 %v25
  %v90 = vunpack.c.l.bf16 %v26
  %v91 = vunpack.c.l.bf16 %v27
  %v92 = vunpack.c.l.bf16 %v28
  %v93 = vunpack.c.l.bf16 %v29
  %v94 = vunpack.c.l.bf16 %v30
  %v95 = vunpack.c.l.bf16 %v31
  %v96 = vunpack.c.l.bf16 %v32
  %v97 = vunpack.c.l.bf16 %v33
  %v98 = vunpack.c.l.bf16 %v34
  %v99 = vunpack.c.l.bf16 %v35
  %v100 = vunpack.c.l.bf16 %v36
  %v101 = vunpack.c.l.bf16 %v37
  %v102 = vunpack.c.l.bf16 %v38
  %v103 = vunpack.c.l.bf16 %v39
  %v104 = vunpack.c.l.bf16 %v40
  %v105 = vunpack.c.l.bf16 %v41
  %v106 = vunpack.c.l.bf16 %v42
  %v107 = vunpack.c.l.bf16 %v43
  %v108 = vunpack.c.l.bf16 %v44
  %v109 = vunpack.c.l.bf16 %v45
  %v110 = vunpack.c.l.bf16 %v46
  %v111 = vunpack.c.l.bf16 %v47
  %v112 = vunpack.c.l.bf16 %v48
  %v113 = vunpack.c.l.bf16 %v49
  %v114 = vunpack.c.l.bf16 %v50
  %v115 = vunpack.c.l.bf16 %v51
  %v116 = vunpack.c.l.bf16 %v52
  %v117 = vunpack.c.l.bf16 %v53
  %v118 = vunpack.c.l.bf16 %v54
  %v119 = vunpack.c.l.bf16 %v55
  %v120 = vunpack.c.l.bf16 %v56
  %v121 = vunpack.c.l.bf16 %v57
  %v122 = vunpack.c.l.bf16 %v58
  %v123 = vunpack.c.l.bf16 %v59
  %v124 = vunpack.c.l.bf16 %v60
  %v125 = vunpack.c.l.bf16 %v61
  %v126 = vunpack.c.l.bf16 %v62
  %v127 = vunpack.c.l.bf16 %v63
  %v128 = vunpack.c.l.bf16 %v64
  %v129 = vunpack.c.l.bf16 %v65
  %v130 = vunpack.c.l.bf16 %v66
  %v131 = vunpack.c.l.bf16 %v67
  %v132 = vunpack.c.l.bf16 %v68
  %v133 = vunpack.c.l.bf16 %v69
  %v134 = vunpack.c.l.bf16 %v70
  %v135 = vunpack.c.l.bf16 %v71
  %v136 = vunpack.c.l.bf16 %v72
  %v137 = vunpack.c.l.bf16 %v73
  %v138 = vunpack.c.l.bf16 %v74
  %v139 = vunpack.c.l.bf16 %v75
  %v140 = vunpack.c.l.bf16 %v76
  %v141 = vunpack.c.l.bf16 %v77
  %v142 = vld [vmem:[%s1] sm:$0x1]
  %v144 = vperm.slane %v142, 0
  %v146 = vmul.f32 %v78, %v144
  %v147 = vmul.f32 %v79, %v144
  %v148 = vmul.f32 %v80, %v144
  %v149 = vmul.f32 %v81, %v144
  %v150 = vmul.f32 %v82, %v144
  %v151 = vmul.f32 %v83, %v144
  %v152 = vmul.f32 %v84, %v144
  %v153 = vmul.f32 %v85, %v144
  %v154 = vmul.f32 %v86, %v144
  %v155 = vmul.f32 %v87, %v144
  %v156 = vmul.f32 %v88, %v144
  %v157 = vmul.f32 %v89, %v144
  %v158 = vmul.f32 %v90, %v144
  %v159 = vmul.f32 %v91, %v144
  %v160 = vmul.f32 %v92, %v144
  %v161 = vmul.f32 %v93, %v144
  %v162 = vmul.f32 %v94, %v144
  %v163 = vmul.f32 %v95, %v144
  %v164 = vmul.f32 %v96, %v144
  %v165 = vmul.f32 %v97, %v144
  %v166 = vmul.f32 %v98, %v144
  %v167 = vmul.f32 %v99, %v144
  %v168 = vmul.f32 %v100, %v144
  %v169 = vmul.f32 %v101, %v144
  %v170 = vmul.f32 %v102, %v144
  %v171 = vmul.f32 %v103, %v144
  %v172 = vmul.f32 %v104, %v144
  %v173 = vmul.f32 %v105, %v144
  %v174 = vmul.f32 %v106, %v144
  %v175 = vmul.f32 %v107, %v144
  %v176 = vmul.f32 %v108, %v144
  %v177 = vmul.f32 %v109, %v144
  %v178 = vmul.f32 %v110, %v144
  %v179 = vmul.f32 %v111, %v144
  %v180 = vmul.f32 %v112, %v144
  %v181 = vmul.f32 %v113, %v144
  %v182 = vmul.f32 %v114, %v144
  %v183 = vmul.f32 %v115, %v144
  %v184 = vmul.f32 %v116, %v144
  %v185 = vmul.f32 %v117, %v144
  %v186 = vmul.f32 %v118, %v144
  %v187 = vmul.f32 %v119, %v144
  %v188 = vmul.f32 %v120, %v144
  %v189 = vmul.f32 %v121, %v144
  %v190 = vmul.f32 %v122, %v144
  %v191 = vmul.f32 %v123, %v144
  %v192 = vmul.f32 %v124, %v144
  %v193 = vmul.f32 %v125, %v144
  %v194 = vmul.f32 %v126, %v144
  %v195 = vmul.f32 %v127, %v144
  %v196 = vmul.f32 %v128, %v144
  %v197 = vmul.f32 %v129, %v144
  %v198 = vmul.f32 %v130, %v144
  %v199 = vmul.f32 %v131, %v144
  %v200 = vmul.f32 %v132, %v144
  %v201 = vmul.f32 %v133, %v144
  %v202 = vmul.f32 %v134, %v144
  %v203 = vmul.f32 %v135, %v144
  %v204 = vmul.f32 %v136, %v144
  %v205 = vmul.f32 %v137, %v144
  %v206 = vmul.f32 %v138, %v144
  %v207 = vmul.f32 %v139, %v144
  %v208 = vmul.f32 %v140, %v144
  %v209 = vmul.f32 %v141, %v144
  %v210 = vld [vmem:[%s2] sm:$0x1]
  %v212 = vperm.slane %v210, 0
  %v214 = vadd.f32 %v146, %v212
  %v215 = vadd.f32 %v147, %v212
  %v216 = vadd.f32 %v148, %v212
  %v217 = vadd.f32 %v149, %v212
  %v218 = vadd.f32 %v150, %v212
  %v219 = vadd.f32 %v151, %v212
  %v220 = vadd.f32 %v152, %v212
  %v221 = vadd.f32 %v153, %v212
  %v222 = vadd.f32 %v154, %v212
  %v223 = vadd.f32 %v155, %v212
  %v224 = vadd.f32 %v156, %v212
  %v225 = vadd.f32 %v157, %v212
  %v226 = vadd.f32 %v158, %v212
  %v227 = vadd.f32 %v159, %v212
  %v228 = vadd.f32 %v160, %v212
  %v229 = vadd.f32 %v161, %v212
  %v230 = vadd.f32 %v162, %v212
  %v231 = vadd.f32 %v163, %v212
  %v232 = vadd.f32 %v164, %v212
  %v233 = vadd.f32 %v165, %v212
  %v234 = vadd.f32 %v166, %v212
  %v235 = vadd.f32 %v167, %v212
  %v236 = vadd.f32 %v168, %v212
  %v237 = vadd.f32 %v169, %v212
  %v238 = vadd.f32 %v170, %v212
  %v239 = vadd.f32 %v171, %v212
  %v240 = vadd.f32 %v172, %v212
  %v241 = vadd.f32 %v173, %v212
  %v242 = vadd.f32 %v174, %v212
  %v243 = vadd.f32 %v175, %v212
  %v244 = vadd.f32 %v176, %v212
  %v245 = vadd.f32 %v177, %v212
  %v246 = vadd.f32 %v178, %v212
  %v247 = vadd.f32 %v179, %v212
  %v248 = vadd.f32 %v180, %v212
  %v249 = vadd.f32 %v181, %v212
  %v250 = vadd.f32 %v182, %v212
  %v251 = vadd.f32 %v183, %v212
  %v252 = vadd.f32 %v184, %v212
  %v253 = vadd.f32 %v185, %v212
  %v254 = vadd.f32 %v186, %v212
  %v255 = vadd.f32 %v187, %v212
  %v256 = vadd.f32 %v188, %v212
  %v257 = vadd.f32 %v189, %v212
  %v258 = vadd.f32 %v190, %v212
  %v259 = vadd.f32 %v191, %v212
  %v260 = vadd.f32 %v192, %v212
  %v261 = vadd.f32 %v193, %v212
  %v262 = vadd.f32 %v194, %v212
  %v263 = vadd.f32 %v195, %v212
  %v264 = vadd.f32 %v196, %v212
  %v265 = vadd.f32 %v197, %v212
  %v266 = vadd.f32 %v198, %v212
  %v267 = vadd.f32 %v199, %v212
  %v268 = vadd.f32 %v200, %v212
  %v269 = vadd.f32 %v201, %v212
  %v270 = vadd.f32 %v202, %v212
  %v271 = vadd.f32 %v203, %v212
  %v272 = vadd.f32 %v204, %v212
  %v273 = vadd.f32 %v205, %v212
  %v274 = vadd.f32 %v206, %v212
  %v275 = vadd.f32 %v207, %v212
  %v276 = vadd.f32 %v208, %v212
  %v277 = vadd.f32 %v209, %v212
  %v278 = vmax.f32 %v214, 0.0
  %v279 = vmax.f32 %v215, 0.0
  %v280 = vmax.f32 %v216, 0.0
  %v281 = vmax.f32 %v217, 0.0
  %v282 = vmax.f32 %v218, 0.0
  %v283 = vmax.f32 %v219, 0.0
  %v284 = vmax.f32 %v220, 0.0
  %v285 = vmax.f32 %v221, 0.0
  %v286 = vmax.f32 %v222, 0.0
  %v287 = vmax.f32 %v223, 0.0
  %v288 = vmax.f32 %v224, 0.0
  %v289 = vmax.f32 %v225, 0.0
  %v290 = vmax.f32 %v226, 0.0
  %v291 = vmax.f32 %v227, 0.0
  %v292 = vmax.f32 %v228, 0.0
  %v293 = vmax.f32 %v229, 0.0
  %v294 = vmax.f32 %v230, 0.0
  %v295 = vmax.f32 %v231, 0.0
  %v296 = vmax.f32 %v232, 0.0
  %v297 = vmax.f32 %v233, 0.0
  %v298 = vmax.f32 %v234, 0.0
  %v299 = vmax.f32 %v235, 0.0
  %v300 = vmax.f32 %v236, 0.0
  %v301 = vmax.f32 %v237, 0.0
  %v302 = vmax.f32 %v238, 0.0
  %v303 = vmax.f32 %v239, 0.0
  %v304 = vmax.f32 %v240, 0.0
  %v305 = vmax.f32 %v241, 0.0
  %v306 = vmax.f32 %v242, 0.0
  %v307 = vmax.f32 %v243, 0.0
  %v308 = vmax.f32 %v244, 0.0
  %v309 = vmax.f32 %v245, 0.0
  %v310 = vmax.f32 %v246, 0.0
  %v311 = vmax.f32 %v247, 0.0
  %v312 = vmax.f32 %v248, 0.0
  %v313 = vmax.f32 %v249, 0.0
  %v314 = vmax.f32 %v250, 0.0
  %v315 = vmax.f32 %v251, 0.0
  %v316 = vmax.f32 %v252, 0.0
  %v317 = vmax.f32 %v253, 0.0
  %v318 = vmax.f32 %v254, 0.0
  %v319 = vmax.f32 %v255, 0.0
  %v320 = vmax.f32 %v256, 0.0
  %v321 = vmax.f32 %v257, 0.0
  %v322 = vmax.f32 %v258, 0.0
  %v323 = vmax.f32 %v259, 0.0
  %v324 = vmax.f32 %v260, 0.0
  %v325 = vmax.f32 %v261, 0.0
  %v326 = vmax.f32 %v262, 0.0
  %v327 = vmax.f32 %v263, 0.0
  %v328 = vmax.f32 %v264, 0.0
  %v329 = vmax.f32 %v265, 0.0
  %v330 = vmax.f32 %v266, 0.0
  %v331 = vmax.f32 %v267, 0.0
  %v332 = vmax.f32 %v268, 0.0
  %v333 = vmax.f32 %v269, 0.0
  %v334 = vmax.f32 %v270, 0.0
  %v335 = vmax.f32 %v271, 0.0
  %v336 = vmax.f32 %v272, 0.0
  %v337 = vmax.f32 %v273, 0.0
  %v338 = vmax.f32 %v274, 0.0
  %v339 = vmax.f32 %v275, 0.0
  %v340 = vmax.f32 %v276, 0.0
  %v341 = vmax.f32 %v277, 0.0
  %v342 = vpack.c.bf16 %v278, %v278
  %v343 = vpack.c.bf16 %v279, %v279
  %v344 = vpack.c.bf16 %v280, %v280
  %v345 = vpack.c.bf16 %v281, %v281
  %v346 = vpack.c.bf16 %v282, %v282
  %v347 = vpack.c.bf16 %v283, %v283
  %v348 = vpack.c.bf16 %v284, %v284
  %v349 = vpack.c.bf16 %v285, %v285
  %v350 = vpack.c.bf16 %v286, %v286
  %v351 = vpack.c.bf16 %v287, %v287
  %v352 = vpack.c.bf16 %v288, %v288
  %v353 = vpack.c.bf16 %v289, %v289
  %v354 = vpack.c.bf16 %v290, %v290
  %v355 = vpack.c.bf16 %v291, %v291
  %v356 = vpack.c.bf16 %v292, %v292
  %v357 = vpack.c.bf16 %v293, %v293
  %v358 = vpack.c.bf16 %v294, %v294
  %v359 = vpack.c.bf16 %v295, %v295
  %v360 = vpack.c.bf16 %v296, %v296
  %v361 = vpack.c.bf16 %v297, %v297
  %v362 = vpack.c.bf16 %v298, %v298
  %v363 = vpack.c.bf16 %v299, %v299
  %v364 = vpack.c.bf16 %v300, %v300
  %v365 = vpack.c.bf16 %v301, %v301
  %v366 = vpack.c.bf16 %v302, %v302
  %v367 = vpack.c.bf16 %v303, %v303
  %v368 = vpack.c.bf16 %v304, %v304
  %v369 = vpack.c.bf16 %v305, %v305
  %v370 = vpack.c.bf16 %v306, %v306
  %v371 = vpack.c.bf16 %v307, %v307
  %v372 = vpack.c.bf16 %v308, %v308
  %v373 = vpack.c.bf16 %v309, %v309
  %v374 = vpack.c.bf16 %v310, %v310
  %v375 = vpack.c.bf16 %v311, %v311
  %v376 = vpack.c.bf16 %v312, %v312
  %v377 = vpack.c.bf16 %v313, %v313
  %v378 = vpack.c.bf16 %v314, %v314
  %v379 = vpack.c.bf16 %v315, %v315
  %v380 = vpack.c.bf16 %v316, %v316
  %v381 = vpack.c.bf16 %v317, %v317
  %v382 = vpack.c.bf16 %v318, %v318
  %v383 = vpack.c.bf16 %v319, %v319
  %v384 = vpack.c.bf16 %v320, %v320
  %v385 = vpack.c.bf16 %v321, %v321
  %v386 = vpack.c.bf16 %v322, %v322
  %v387 = vpack.c.bf16 %v323, %v323
  %v388 = vpack.c.bf16 %v324, %v324
  %v389 = vpack.c.bf16 %v325, %v325
  %v390 = vpack.c.bf16 %v326, %v326
  %v391 = vpack.c.bf16 %v327, %v327
  %v392 = vpack.c.bf16 %v328, %v328
  %v393 = vpack.c.bf16 %v329, %v329
  %v394 = vpack.c.bf16 %v330, %v330
  %v395 = vpack.c.bf16 %v331, %v331
  %v396 = vpack.c.bf16 %v332, %v332
  %v397 = vpack.c.bf16 %v333, %v333
  %v398 = vpack.c.bf16 %v334, %v334
  %v399 = vpack.c.bf16 %v335, %v335
  %v400 = vpack.c.bf16 %v336, %v336
  %v401 = vpack.c.bf16 %v337, %v337
  %v402 = vpack.c.bf16 %v338, %v338
  %v403 = vpack.c.bf16 %v339, %v339
  %v404 = vpack.c.bf16 %v340, %v340
  %v405 = vpack.c.bf16 %v341, %v341
  %406 = vst [vmem:[%s3] sm:$0xf] %v342
  %407 = vst [vmem:[%s3 + $0x4] sm:$0xf] %v343
  %408 = vst [vmem:[%s3 + $0x8] sm:$0xf] %v344
  %409 = vst [vmem:[%s3 + $0xc] sm:$0xf] %v345
  %410 = vst [vmem:[%s3 + $0x10] sm:$0xf] %v346
  %411 = vst [vmem:[%s3 + $0x14] sm:$0xf] %v347
  %412 = vst [vmem:[%s3 + $0x18] sm:$0xf] %v348
  %413 = vst [vmem:[%s3 + $0x1c] sm:$0xf] %v349
  %414 = vst [vmem:[%s3 + $0x20] sm:$0xf] %v350
  %415 = vst [vmem:[%s3 + $0x24] sm:$0xf] %v351
  %416 = vst [vmem:[%s3 + $0x28] sm:$0xf] %v352
  %417 = vst [vmem:[%s3 + $0x2c] sm:$0xf] %v353
  %418 = vst [vmem:[%s3 + $0x30] sm:$0xf] %v354
  %419 = vst [vmem:[%s3 + $0x34] sm:$0xf] %v355
  %420 = vst [vmem:[%s3 + $0x38] sm:$0xf] %v356
  %421 = vst [vmem:[%s3 + $0x3c] sm:$0xf] %v357
  %422 = vst [vmem:[%s3 + $0x40] sm:$0xf] %v358
  %423 = vst [vmem:[%s3 + $0x44] sm:$0xf] %v359
  %424 = vst [vmem:[%s3 + $0x48] sm:$0xf] %v360
  %425 = vst [vmem:[%s3 + $0x4c] sm:$0xf] %v361
  %426 = vst [vmem:[%s3 + $0x50] sm:$0xf] %v362
  %427 = vst [vmem:[%s3 + $0x54] sm:$0xf] %v363
  %428 = vst [vmem:[%s3 + $0x58] sm:$0xf] %v364
  %429 = vst [vmem:[%s3 + $0x5c] sm:$0xf] %v365
  %430 = vst [vmem:[%s3 + $0x60] sm:$0xf] %v366
  %431 = vst [vmem:[%s3 + $0x64] sm:$0xf] %v367
  %432 = vst [vmem:[%s3 + $0x68] sm:$0xf] %v368
  %433 = vst [vmem:[%s3 + $0x6c] sm:$0xf] %v369
  %434 = vst [vmem:[%s3 + $0x70] sm:$0xf] %v370
  %435 = vst [vmem:[%s3 + $0x74] sm:$0xf] %v371
  %436 = vst [vmem:[%s3 + $0x78] sm:$0xf] %v372
  %437 = vst [vmem:[%s3 + $0x7c] sm:$0xf] %v373
  %438 = vst [vmem:[%s3 + $0x80] sm:$0xf] %v374
  %439 = vst [vmem:[%s3 + $0x84] sm:$0xf] %v375
  %440 = vst [vmem:[%s3 + $0x88] sm:$0xf] %v376
  %441 = vst [vmem:[%s3 + $0x8c] sm:$0xf] %v377
  %442 = vst [vmem:[%s3 + $0x90] sm:$0xf] %v378
  %443 = vst [vmem:[%s3 + $0x94] sm:$0xf] %v379
  %444 = vst [vmem:[%s3 + $0x98] sm:$0xf] %v380
  %445 = vst [vmem:[%s3 + $0x9c] sm:$0xf] %v381
  %446 = vst [vmem:[%s3 + $0xa0] sm:$0xf] %v382
  %447 = vst [vmem:[%s3 + $0xa4] sm:$0xf] %v383
  %448 = vst [vmem:[%s3 + $0xa8] sm:$0xf] %v384
  %449 = vst [vmem:[%s3 + $0xac] sm:$0xf] %v385
  %450 = vst [vmem:[%s3 + $0xb0] sm:$0xf] %v386
  %451 = vst [vmem:[%s3 + $0xb4] sm:$0xf] %v387
  %452 = vst [vmem:[%s3 + $0xb8] sm:$0xf] %v388
  %453 = vst [vmem:[%s3 + $0xbc] sm:$0xf] %v389
  %454 = vst [vmem:[%s3 + $0xc0] sm:$0xf] %v390
  %455 = vst [vmem:[%s3 + $0xc4] sm:$0xf] %v391
  %456 = vst [vmem:[%s3 + $0xc8] sm:$0xf] %v392
  %457 = vst [vmem:[%s3 + $0xcc] sm:$0xf] %v393
  %458 = vst [vmem:[%s3 + $0xd0] sm:$0xf] %v394
  %459 = vst [vmem:[%s3 + $0xd4] sm:$0xf] %v395
  %460 = vst [vmem:[%s3 + $0xd8] sm:$0xf] %v396
  %461 = vst [vmem:[%s3 + $0xdc] sm:$0xf] %v397
  %462 = vst [vmem:[%s3 + $0xe0] sm:$0xf] %v398
  %463 = vst [vmem:[%s3 + $0xe4] sm:$0xf] %v399
  %464 = vst [vmem:[%s3 + $0xe8] sm:$0xf] %v400
  %465 = vst [vmem:[%s3 + $0xec] sm:$0xf] %v401
  %466 = vst [vmem:[%s3 + $0xf0] sm:$0xf] %v402
  %467 = vst [vmem:[%s3 + $0xf4] sm:$0xf] %v403
  %468 = vst [vmem:[%s3 + $0xf8] sm:$0xf] %v404
  %469 = vst [vmem:[%s3 + $0xfc] sm:$0xf] %v405
  // Predicated region
  $region14: #{generator_forward.20} parent=0 // pred_check
    _
  $region15: #{generator_forward.20} parent=0 // pred_check_branch
    %471 = sbr.rel (0) target = $region17
  $region16: #{generator_forward.20} parent=0 // pred_region
    _
  $region17: #{generator_forward.20} parent=0 // pred_fallthru
    _
  // Predicated region
  $region18: #{generator_forward.20} parent=0 // pred_check
    _
  $region19: #{generator_forward.20} parent=0 // pred_check_branch
    %473 = sbr.rel (0) target = $region21
  $region20: #{generator_forward.20} parent=0 // pred_region
    _
  $region21: #{generator_forward.20} parent=0 // pred_fallthru
    _

// kernel: generator_forward.21
$region0: #{generator_forward.21}
  #allocation0 [shape = 'u32[]', space=smem, size = 0x4, offset = 0x4, fixed_abs, tag = 'smem constant byte address 0x4 - core index']
  #allocation1 [shape = 'u32[72,128]{1,0:T(1,128)}', space=vmem, size = 0x9000, scoped, tag = 'internal scratch']
  %s0 = inlined_call_operand.vmem [shape: bf16[4,8192,32], index: 0, kind: input, shape index: {}]
  %s1 = inlined_call_operand.vmem [shape: bf16[4,32,3], index: 1, kind: input, shape index: {}]
  %s2 = inlined_call_operand.vmem [shape: f32[4,8192,3], index: 2, kind: output, shape index: {}]
  %s3 = sld [smem:[#allocation0]]
  $region41: #{generator_forward.21} parent=0
    _
  %s5 = ssub.s32 1, %s3
  %s6 = scalar_select 0, %s5, %s3
  loop: start=0, step=1, limit=66
  $region2: #{generator_forward.21} parent=0 // loop_pre_header
    _
  $region3: #{generator_forward.21} parent=0 // loop_header
    %s8 = sphi 0, %s12
    %p9 = scmp.ge.s32.totalorder %s8, 66
    %s15 = sphi 0, %s27
    %s16 = sphi 0, %s23
    %s17 = sphi 0, %s15
    %s18 = sphi 0, %s16
    %s19 = sphi 0, %s17
    %s20 = sphi 0, %s18
    %s32 = sphi 0, %s34
    %s35 = sphi 0, %s32
    %s36 = sphi 0, %s35
    %s52 = sphi 0, %s36
    %s58 = sphi 0, %s60
    %s61 = sphi 0, %s58
    %s62 = sphi 0, %s61
    %s78 = sphi 0, %s62
    %s86 = sphi 0, %s88
    %s89 = sphi 0, %s86
    %s90 = sphi 0, %s89
    %s106 = sphi 0, %s90
  $region4: #{generator_forward.21} parent=0 // loop_header_branch
    %11 = sbr.rel (%p9) target = $region8
  $region5: #{generator_forward.21} parent=0 // loop_body
    %s13 = ssub.s32 %s8, 1
    %s14 = ssub.s32 %s8, 2
    %s21 = sadd.s32 1, %s16
    %p22 = scmp.ge.s32.totalorder %s21, 16
    %s23 = scalar_select %p22, 0, %s21
    %s24 = sadd.s32 1, %s15
    %s25 = scalar_select %p22, %s24, %s15
    %p26 = scmp.ge.s32.totalorder %s25, 4
    %s27 = scalar_select %p26, 0, %s25
    %s28 = ssub.s32 %s15, %s27
    %s29 = ssub.s32 %s16, %s23
    %s30 = sor.u32 %s28, %s29
    %p31 = scmp.eq.s32.totalorder %s30, 0
    %s33 = sadd.s32 %s32, 1
    %s34 = scalar_select %p31, %s32, %s33
    %p37 = pneg %p31
    %p38 = scmp.eq.s32.totalorder %s8, 63
    %p39 = por %p37, %p38
    %p40 = scmp.ne.s32.totalorder %s32, %s35
    %p41 = scmp.eq.s32.totalorder %s8, 0
    %p42 = por %p40, %p41
    %p43 = scmp.ne.s32.totalorder %s32, %s35
    %p44 = scmp.eq.s32.totalorder %s13, 63
    %p45 = por %p43, %p44
    %p46 = scmp.ne.s32.totalorder %s35, %s36
    %p47 = scmp.eq.s32.totalorder %s13, 0
    %p48 = por %p46, %p47
    %p49 = scmp.ne.s32.totalorder %s35, %s36
    %p50 = scmp.eq.s32.totalorder %s14, 63
    %p51 = por %p49, %p50
    %p53 = scmp.ne.s32.totalorder %s36, %s52
    %p54 = scmp.eq.s32.totalorder %s14, 0
    %p55 = por %p53, %p54
    %s56 = ssub.s32 %s15, %s27
    %p57 = scmp.eq.s32.totalorder %s56, 0
    %s59 = sadd.s32 %s58, 1
    %s60 = scalar_select %p57, %s58, %s59
    %p63 = pneg %p57
    %p64 = scmp.eq.s32.totalorder %s8, 63
    %p65 = por %p63, %p64
    %p66 = scmp.ne.s32.totalorder %s58, %s61
    %p67 = scmp.eq.s32.totalorder %s8, 0
    %p68 = por %p66, %p67
    %p69 = scmp.ne.s32.totalorder %s58, %s61
    %p70 = scmp.eq.s32.totalorder %s13, 63
    %p71 = por %p69, %p70
    %p72 = scmp.ne.s32.totalorder %s61, %s62
    %p73 = scmp.eq.s32.totalorder %s13, 0
    %p74 = por %p72, %p73
    %p75 = scmp.ne.s32.totalorder %s61, %s62
    %p76 = scmp.eq.s32.totalorder %s14, 63
    %p77 = por %p75, %p76
    %p79 = scmp.ne.s32.totalorder %s62, %s78
    %p80 = scmp.eq.s32.totalorder %s14, 0
    %p81 = por %p79, %p80
    %s82 = ssub.s32 %s15, %s27
    %s83 = ssub.s32 %s16, %s23
    %s84 = sor.u32 %s82, %s83
    %p85 = scmp.eq.s32.totalorder %s84, 0
    %s87 = sadd.s32 %s86, 1
    %s88 = scalar_select %p85, %s86, %s87
    %p91 = pneg %p85
    %p92 = scmp.eq.s32.totalorder %s8, 63
    %p93 = por %p91, %p92
    %p94 = scmp.ne.s32.totalorder %s86, %s89
    %p95 = scmp.eq.s32.totalorder %s8, 0
    %p96 = por %p94, %p95
    %p97 = scmp.ne.s32.totalorder %s86, %s89
    %p98 = scmp.eq.s32.totalorder %s13, 63
    %p99 = por %p97, %p98
    %p100 = scmp.ne.s32.totalorder %s89, %s90
    %p101 = scmp.eq.s32.totalorder %s13, 0
    %p102 = por %p100, %p101
    %p103 = scmp.ne.s32.totalorder %s89, %s90
    %p104 = scmp.eq.s32.totalorder %s14, 63
    %p105 = por %p103, %p104
    %p107 = scmp.ne.s32.totalorder %s90, %s106
    %p108 = scmp.eq.s32.totalorder %s14, 0
    %p109 = por %p107, %p108
    %p110 = scmp.le.s32.totalorder 1, %s8
    %p111 = scmp.lt.s32.totalorder %s8, 65
    %p112 = pnand %p110, %p111
    %p113 = pneg %p112
    // Predicated region
    $region9: #{generator_forward.21} parent=5 // pred_check
      _
    $region10: #{generator_forward.21} parent=5 // pred_check_branch
      %115 = sbr.rel (%p112) target = $region12
    $region11: #{generator_forward.21} parent=5 // pred_region
      %s116 = ssub.s32 %s8, 1
    $region12: #{generator_forward.21} parent=5 // pred_fallthru
      _
    %p117 = scmp.lt.s32.totalorder %s8, 64
    // Predicated region
    $region13: #{generator_forward.21} parent=5 // pred_check
      %p118 = pneg %p117
    $region14: #{generator_forward.21} parent=5 // pred_check_branch
      %120 = sbr.rel (%p118) target = $region16
    $region15: #{generator_forward.21} parent=5 // pred_region
      // Predicated region
      $region17: #{generator_forward.21} parent=15 // pred_check
        %p121 = pneg %p42
      $region18: #{generator_forward.21} parent=15 // pred_check_branch
        %123 = sbr.rel (%p121) target = $region20
      $region19: #{generator_forward.21} parent=15 // pred_region
        %s124 = smul.u32 64, %s16
        %p125 = scmp.lt.s32.totalorder %s15, 3
        %s126 = scalar_select %p125, %s15, 3
        %p127 = scmp.lt.s32.totalorder %s124, 1023
        %s128 = scalar_select %p127, %s124, 1023
        %s129 = smul.addr %s126, 1024
        %s130 = sadd.s32 %s128, %s129
        %s131 = smul.addr %s130, 4
        %s132 = scalar_lea.vmem %s0, %s131
        %s133 = smul.u32 64, %s16
      $region20: #{generator_forward.21} parent=15 // pred_fallthru
        _
      // Predicated region
      $region21: #{generator_forward.21} parent=15 // pred_check
        %p134 = pneg %p68
      $region22: #{generator_forward.21} parent=15 // pred_check_branch
        %136 = sbr.rel (%p134) target = $region24
      $region23: #{generator_forward.21} parent=15 // pred_region
        %p137 = scmp.lt.s32.totalorder %s15, 3
        %s138 = scalar_select %p137, %s15, 3
        %s139 = smul.addr %s138, 4
        %s140 = smul.addr %s139, 4
        %s141 = scalar_lea.vmem %s1, %s140
      $region24: #{generator_forward.21} parent=15 // pred_fallthru
        _
    $region16: #{generator_forward.21} parent=5 // pred_fallthru
      _
    %p142 = scmp.le.s32.totalorder 1, %s8
    %p143 = scmp.lt.s32.totalorder %s8, 65
    %p144 = pnand %p142, %p143
    %p145 = pneg %p144
    // Predicated region
    $region25: #{generator_forward.21} parent=5 // pred_check
      _
    $region26: #{generator_forward.21} parent=5 // pred_check_branch
      %147 = sbr.rel (%p144) target = $region28
    $region27: #{generator_forward.21} parent=5 // pred_region
      %s148 = ssub.s32 %s8, 1
      %s149 = smul.u32 64, %s18
      %p150 = scmp.lt.s32.totalorder %s17, 3
      %s151 = scalar_select %p150, %s17, 3
      %p152 = scmp.lt.s32.totalorder %s149, 1023
      %s153 = scalar_select %p152, %s149, 1023
      %s154 = smul.addr %s151, 1024
      %s155 = sadd.s32 %s153, %s154
      %s156 = smul.addr %s155, 4
      %s157 = scalar_lea.vmem %s0, %s156
      %p158 = pneg %p48
      %p159 = pneg %p45
      %p160 = scmp.lt.s32.totalorder %s17, 3
      %s161 = scalar_select %p160, %s17, 3
      %s162 = smul.addr %s161, 4
      %s163 = smul.addr %s162, 4
      %s164 = scalar_lea.vmem %s1, %s163
      %p165 = pneg %p74
      %p166 = pneg %p71
      %p167 = pneg %p102
      %p168 = pneg %p99
      %s169 = smul.u32 64, %s18
      %p170 = scmp.lt.s32.totalorder %s17, 3
      %s171 = scalar_select %p170, %s17, 3
      %p172 = scmp.lt.s32.totalorder %s169, 1023
      %s173 = scalar_select %p172, %s169, 1023
      %s174 = smul.addr %s171, 1024
      %s175 = sadd.s32 %s173, %s174
      %s176 = smul.addr %s175, 8
      %s177 = scalar_lea.vmem %s2, %s176
      %s178 = smul.u32 64, %s18
      %p179 = scmp.lt.s32.totalorder %s17, 3
      %s180 = scalar_select %p179, %s17, 3
      %p181 = scmp.lt.s32.totalorder %s178, 1023
      %s182 = scalar_select %p181, %s178, 1023
      %s183 = smul.addr %s180, 1024
      %s184 = sadd.s32 %s182, %s183
      %s185 = smul.addr %s184, 4
      %s186 = scalar_lea.vmem %s0, %s185
      %s187 = smul.u32 64, %s18
      %p188 = scmp.lt.s32.totalorder %s17, 3
      %s189 = scalar_select %p188, %s17, 3
      %s190 = smul.addr %s189, 4
      %s191 = smul.addr %s190, 4
      %s192 = scalar_lea.vmem %s1, %s191
      %s193 = smul.u32 64, %s18
      %p194 = scmp.lt.s32.totalorder %s17, 3
      %s195 = scalar_select %p194, %s17, 3
      %p196 = scmp.lt.s32.totalorder %s193, 1023
      %s197 = scalar_select %p196, %s193, 1023
      %s198 = smul.addr %s195, 1024
      %s199 = sadd.s32 %s197, %s198
      %s200 = smul.addr %s199, 8
      %s201 = scalar_lea.vmem %s2, %s200
      %s202 = smul.u32 64, %s18
      %v204 = vld [vmem:[%s186] sm:$0xf]
      %v205 = vld [vmem:[%s186 + $0x4] sm:$0xf]
      %v206 = vld [vmem:[%s186 + $0x8] sm:$0xf]
      %v207 = vld [vmem:[%s186 + $0xc] sm:$0xf]
      %v208 = vld [vmem:[%s186 + $0x10] sm:$0xf]
      %v209 = vld [vmem:[%s186 + $0x14] sm:$0xf]
      %v210 = vld [vmem:[%s186 + $0x18] sm:$0xf]
      %v211 = vld [vmem:[%s186 + $0x1c] sm:$0xf]
      %v212 = vld [vmem:[%s186 + $0x20] sm:$0xf]
      %v213 = vld [vmem:[%s186 + $0x24] sm:$0xf]
      %v214 = vld [vmem:[%s186 + $0x28] sm:$0xf]
      %v215 = vld [vmem:[%s186 + $0x2c] sm:$0xf]
      %v216 = vld [vmem:[%s186 + $0x30] sm:$0xf]
      %v217 = vld [vmem:[%s186 + $0x34] sm:$0xf]
      %v218 = vld [vmem:[%s186 + $0x38] sm:$0xf]
      %v219 = vld [vmem:[%s186 + $0x3c] sm:$0xf]
      %v220 = vld [vmem:[%s186 + $0x40] sm:$0xf]
      %v221 = vld [vmem:[%s186 + $0x44] sm:$0xf]
      %v222 = vld [vmem:[%s186 + $0x48] sm:$0xf]
      %v223 = vld [vmem:[%s186 + $0x4c] sm:$0xf]
      %v224 = vld [vmem:[%s186 + $0x50] sm:$0xf]
      %v225 = vld [vmem:[%s186 + $0x54] sm:$0xf]
      %v226 = vld [vmem:[%s186 + $0x58] sm:$0xf]
      %v227 = vld [vmem:[%s186 + $0x5c] sm:$0xf]
      %v228 = vld [vmem:[%s186 + $0x60] sm:$0xf]
      %v229 = vld [vmem:[%s186 + $0x64] sm:$0xf]
      %v230 = vld [vmem:[%s186 + $0x68] sm:$0xf]
      %v231 = vld [vmem:[%s186 + $0x6c] sm:$0xf]
      %v232 = vld [vmem:[%s186 + $0x70] sm:$0xf]
      %v233 = vld [vmem:[%s186 + $0x74] sm:$0xf]
      %v234 = vld [vmem:[%s186 + $0x78] sm:$0xf]
      %v235 = vld [vmem:[%s186 + $0x7c] sm:$0xf]
      %v236 = vld [vmem:[%s186 + $0x80] sm:$0xf]
      %v237 = vld [vmem:[%s186 + $0x84] sm:$0xf]
      %v238 = vld [vmem:[%s186 + $0x88] sm:$0xf]
      %v239 = vld [vmem:[%s186 + $0x8c] sm:$0xf]
      %v240 = vld [vmem:[%s186 + $0x90] sm:$0xf]
      %v241 = vld [vmem:[%s186 + $0x94] sm:$0xf]
      %v242 = vld [vmem:[%s186 + $0x98] sm:$0xf]
      %v243 = vld [vmem:[%s186 + $0x9c] sm:$0xf]
      %v244 = vld [vmem:[%s186 + $0xa0] sm:$0xf]
      %v245 = vld [vmem:[%s186 + $0xa4] sm:$0xf]
      %v246 = vld [vmem:[%s186 + $0xa8] sm:$0xf]
      %v247 = vld [vmem:[%s186 + $0xac] sm:$0xf]
      %v248 = vld [vmem:[%s186 + $0xb0] sm:$0xf]
      %v249 = vld [vmem:[%s186 + $0xb4] sm:$0xf]
      %v250 = vld [vmem:[%s186 + $0xb8] sm:$0xf]
      %v251 = vld [vmem:[%s186 + $0xbc] sm:$0xf]
      %v252 = vld [vmem:[%s186 + $0xc0] sm:$0xf]
      %v253 = vld [vmem:[%s186 + $0xc4] sm:$0xf]
      %v254 = vld [vmem:[%s186 + $0xc8] sm:$0xf]
      %v255 = vld [vmem:[%s186 + $0xcc] sm:$0xf]
      %v256 = vld [vmem:[%s186 + $0xd0] sm:$0xf]
      %v257 = vld [vmem:[%s186 + $0xd4] sm:$0xf]
      %v258 = vld [vmem:[%s186 + $0xd8] sm:$0xf]
      %v259 = vld [vmem:[%s186 + $0xdc] sm:$0xf]
      %v260 = vld [vmem:[%s186 + $0xe0] sm:$0xf]
      %v261 = vld [vmem:[%s186 + $0xe4] sm:$0xf]
      %v262 = vld [vmem:[%s186 + $0xe8] sm:$0xf]
      %v263 = vld [vmem:[%s186 + $0xec] sm:$0xf]
      %v264 = vld [vmem:[%s186 + $0xf0] sm:$0xf]
      %v265 = vld [vmem:[%s186 + $0xf4] sm:$0xf]
      %v266 = vld [vmem:[%s186 + $0xf8] sm:$0xf]
      %v267 = vld [vmem:[%s186 + $0xfc] sm:$0xf]
      %v268 = vld [vmem:[%s192] sm:$0xf]
      %v269 = vld [vmem:[%s192 + $0x4] sm:$0xf]
      %v270 = vld [vmem:[%s192 + $0x8] sm:$0xf]
      %v271 = vld [vmem:[%s192 + $0xc] sm:$0xf]
      %v336 = vunpack.c.l.b16 %v204
      %v337 = vunpack.c.l.b16 %v205
      %v338 = vunpack.c.l.b16 %v206
      %v339 = vunpack.c.l.b16 %v207
      %v340 = vunpack.c.l.b16 %v208
      %v341 = vunpack.c.l.b16 %v209
      %v342 = vunpack.c.l.b16 %v210
      %v343 = vunpack.c.l.b16 %v211
      %v344 = vunpack.c.l.b16 %v212
      %v345 = vunpack.c.l.b16 %v213
      %v346 = vunpack.c.l.b16 %v214
      %v347 = vunpack.c.l.b16 %v215
      %v348 = vunpack.c.l.b16 %v216
      %v349 = vunpack.c.l.b16 %v217
      %v350 = vunpack.c.l.b16 %v218
      %v351 = vunpack.c.l.b16 %v219
      %v352 = vunpack.c.l.b16 %v220
      %v353 = vunpack.c.l.b16 %v221
      %v354 = vunpack.c.l.b16 %v222
      %v355 = vunpack.c.l.b16 %v223
      %v356 = vunpack.c.l.b16 %v224
      %v357 = vunpack.c.l.b16 %v225
      %v358 = vunpack.c.l.b16 %v226
      %v359 = vunpack.c.l.b16 %v227
      %v360 = vunpack.c.l.b16 %v228
      %v361 = vunpack.c.l.b16 %v229
      %v362 = vunpack.c.l.b16 %v230
      %v363 = vunpack.c.l.b16 %v231
      %v364 = vunpack.c.l.b16 %v232
      %v365 = vunpack.c.l.b16 %v233
      %v366 = vunpack.c.l.b16 %v234
      %v367 = vunpack.c.l.b16 %v235
      %v368 = vunpack.c.l.b16 %v236
      %v369 = vunpack.c.l.b16 %v237
      %v370 = vunpack.c.l.b16 %v238
      %v371 = vunpack.c.l.b16 %v239
      %v372 = vunpack.c.l.b16 %v240
      %v373 = vunpack.c.l.b16 %v241
      %v374 = vunpack.c.l.b16 %v242
      %v375 = vunpack.c.l.b16 %v243
      %v376 = vunpack.c.l.b16 %v244
      %v377 = vunpack.c.l.b16 %v245
      %v378 = vunpack.c.l.b16 %v246
      %v379 = vunpack.c.l.b16 %v247
      %v380 = vunpack.c.l.b16 %v248
      %v381 = vunpack.c.l.b16 %v249
      %v382 = vunpack.c.l.b16 %v250
      %v383 = vunpack.c.l.b16 %v251
      %v384 = vunpack.c.l.b16 %v252
      %v385 = vunpack.c.l.b16 %v253
      %v386 = vunpack.c.l.b16 %v254
      %v387 = vunpack.c.l.b16 %v255
      %v388 = vunpack.c.l.b16 %v256
      %v389 = vunpack.c.l.b16 %v257
      %v390 = vunpack.c.l.b16 %v258
      %v391 = vunpack.c.l.b16 %v259
      %v392 = vunpack.c.l.b16 %v260
      %v393 = vunpack.c.l.b16 %v261
      %v394 = vunpack.c.l.b16 %v262
      %v395 = vunpack.c.l.b16 %v263
      %v396 = vunpack.c.l.b16 %v264
      %v397 = vunpack.c.l.b16 %v265
      %v398 = vunpack.c.l.b16 %v266
      %v399 = vunpack.c.l.b16 %v267
      %v400 = vpack.c.b16 %v337, %v336
      %v401 = vpack.c.b16 %v339, %v338
      %v402 = vpack.c.b16 %v341, %v340
      %v403 = vpack.c.b16 %v343, %v342
      %v404 = vpack.c.b16 %v345, %v344
      %v405 = vpack.c.b16 %v347, %v346
      %v406 = vpack.c.b16 %v349, %v348
      %v407 = vpack.c.b16 %v351, %v350
      %v408 = vpack.c.b16 %v353, %v352
      %v409 = vpack.c.b16 %v355, %v354
      %v410 = vpack.c.b16 %v357, %v356
      %v411 = vpack.c.b16 %v359, %v358
      %v412 = vpack.c.b16 %v361, %v360
      %v413 = vpack.c.b16 %v363, %v362
      %v414 = vpack.c.b16 %v365, %v364
      %v415 = vpack.c.b16 %v367, %v366
      %v416 = vpack.c.b16 %v369, %v368
      %v417 = vpack.c.b16 %v371, %v370
      %v418 = vpack.c.b16 %v373, %v372
      %v419 = vpack.c.b16 %v375, %v374
      %v420 = vpack.c.b16 %v377, %v376
      %v421 = vpack.c.b16 %v379, %v378
      %v422 = vpack.c.b16 %v381, %v380
      %v423 = vpack.c.b16 %v383, %v382
      %v424 = vpack.c.b16 %v385, %v384
      %v425 = vpack.c.b16 %v387, %v386
      %v426 = vpack.c.b16 %v389, %v388
      %v427 = vpack.c.b16 %v391, %v390
      %v428 = vpack.c.b16 %v393, %v392
      %v429 = vpack.c.b16 %v395, %v394
      %v430 = vpack.c.b16 %v397, %v396
      %v431 = vpack.c.b16 %v399, %v398
      %v436 = vunpack.c.l.b16 %v268
      %v437 = vunpack.c.l.b16 %v269
      %v438 = vunpack.c.l.b16 %v270
      %v439 = vunpack.c.l.b16 %v271
      %v440 = vpack.c.b16 %v437, %v436
      %v441 = vpack.c.b16 %v439, %v438
      %vm444 = vcmask 261120
      %v446 = vsel %vm444, %v400, 0
      %v449 = vsel %vm444, %v401, 0
      %v452 = vsel %vm444, %v402, 0
      %v455 = vsel %vm444, %v403, 0
      %v458 = vsel %vm444, %v404, 0
      %v461 = vsel %vm444, %v405, 0
      %v464 = vsel %vm444, %v406, 0
      %v467 = vsel %vm444, %v407, 0
      %v470 = vsel %vm444, %v408, 0
      %v473 = vsel %vm444, %v409, 0
      %v476 = vsel %vm444, %v410, 0
      %v479 = vsel %vm444, %v411, 0
      %v482 = vsel %vm444, %v412, 0
      %v485 = vsel %vm444, %v413, 0
      %v488 = vsel %vm444, %v414, 0
      %v491 = vsel %vm444, %v415, 0
      %v494 = vsel %vm444, %v416, 0
      %v497 = vsel %vm444, %v417, 0
      %v500 = vsel %vm444, %v418, 0
      %v503 = vsel %vm444, %v419, 0
      %v506 = vsel %vm444, %v420, 0
      %v509 = vsel %vm444, %v421, 0
      %v512 = vsel %vm444, %v422, 0
      %v515 = vsel %vm444, %v423, 0
      %v518 = vsel %vm444, %v424, 0
      %v521 = vsel %vm444, %v425, 0
      %v524 = vsel %vm444, %v426, 0
      %v527 = vsel %vm444, %v427, 0
      %v530 = vsel %vm444, %v428, 0
      %v533 = vsel %vm444, %v429, 0
      %v536 = vsel %vm444, %v430, 0
      %v539 = vsel %vm444, %v431, 0
      %541 = vmatpush.bf16.msra.mxu0 0
      %542 = vmatpush.bf16.msra.mxu0 0
      %543 = vmatpush.bf16.msra.mxu0 0
      %544 = vmatpush.bf16.msra.mxu0 0
      %545 = vmatpush.bf16.msra.mxu0 0
      %546 = vmatpush.bf16.msra.mxu0 0
      %547 = vmatpush.bf16.msra.mxu0 %v441
      %548 = vmatpush.bf16.msra.mxu0 %v440
      %549 = vmatmul.bf16.gmra.mxu0 %v446
      %v550 = vpop.f32.mrf.mxu0
      %v551 = vadd.f32 0.0, %v550
      %v552 = vpop.f32.mrf.mxu0
      %v553 = vadd.f32 0.0, %v552
      %554 = vmatmul.bf16.gmra.mxu0 %v449
      %v555 = vpop.f32.mrf.mxu0
      %v556 = vadd.f32 0.0, %v555
      %v557 = vpop.f32.mrf.mxu0
      %v558 = vadd.f32 0.0, %v557
      %559 = vmatmul.bf16.gmra.mxu0 %v452
      %v560 = vpop.f32.mrf.mxu0
      %v561 = vadd.f32 0.0, %v560
      %v562 = vpop.f32.mrf.mxu0
      %v563 = vadd.f32 0.0, %v562
      %564 = vmatmul.bf16.gmra.mxu0 %v455
      %v565 = vpop.f32.mrf.mxu0
      %v566 = vadd.f32 0.0, %v565
      %v567 = vpop.f32.mrf.mxu0
      %v568 = vadd.f32 0.0, %v567
      %569 = vmatmul.bf16.gmra.mxu0 %v458
      %v570 = vpop.f32.mrf.mxu0
      %v571 = vadd.f32 0.0, %v570
      %v572 = vpop.f32.mrf.mxu0
      %v573 = vadd.f32 0.0, %v572
      %574 = vmatmul.bf16.gmra.mxu0 %v461
      %v575 = vpop.f32.mrf.mxu0
      %v576 = vadd.f32 0.0, %v575
      %v577 = vpop.f32.mrf.mxu0
      %v578 = vadd.f32 0.0, %v577
      %579 = vmatmul.bf16.gmra.mxu0 %v464
      %v580 = vpop.f32.mrf.mxu0
      %v581 = vadd.f32 0.0, %v580
      %v582 = vpop.f32.mrf.mxu0
      %v583 = vadd.f32 0.0, %v582
      %584 = vmatmul.bf16.gmra.mxu0 %v467
      %v585 = vpop.f32.mrf.mxu0
      %v586 = vadd.f32 0.0, %v585
      %v587 = vpop.f32.mrf.mxu0
      %v588 = vadd.f32 0.0, %v587
      %589 = vmatmul.bf16.gmra.mxu0 %v470
      %v590 = vpop.f32.mrf.mxu0
      %v591 = vadd.f32 0.0, %v590
      %v592 = vpop.f32.mrf.mxu0
      %v593 = vadd.f32 0.0, %v592
      %594 = vmatmul.bf16.gmra.mxu0 %v473
      %v595 = vpop.f32.mrf.mxu0
      %v596 = vadd.f32 0.0, %v595
      %v597 = vpop.f32.mrf.mxu0
      %v598 = vadd.f32 0.0, %v597
      %599 = vmatmul.bf16.gmra.mxu0 %v476
      %v600 = vpop.f32.mrf.mxu0
      %v601 = vadd.f32 0.0, %v600
      %v602 = vpop.f32.mrf.mxu0
      %v603 = vadd.f32 0.0, %v602
      %604 = vmatmul.bf16.gmra.mxu0 %v479
      %v605 = vpop.f32.mrf.mxu0
      %v606 = vadd.f32 0.0, %v605
      %v607 = vpop.f32.mrf.mxu0
      %v608 = vadd.f32 0.0, %v607
      %609 = vmatmul.bf16.gmra.mxu0 %v482
      %v610 = vpop.f32.mrf.mxu0
      %v611 = vadd.f32 0.0, %v610
      %v612 = vpop.f32.mrf.mxu0
      %v613 = vadd.f32 0.0, %v612
      %614 = vmatmul.bf16.gmra.mxu0 %v485
      %v615 = vpop.f32.mrf.mxu0
      %v616 = vadd.f32 0.0, %v615
      %v617 = vpop.f32.mrf.mxu0
      %v618 = vadd.f32 0.0, %v617
      %619 = vmatmul.bf16.gmra.mxu0 %v488
      %v620 = vpop.f32.mrf.mxu0
      %v621 = vadd.f32 0.0, %v620
      %v622 = vpop.f32.mrf.mxu0
      %v623 = vadd.f32 0.0, %v622
      %624 = vmatmul.bf16.gmra.mxu0 %v491
      %v625 = vpop.f32.mrf.mxu0
      %v626 = vadd.f32 0.0, %v625
      %v627 = vpop.f32.mrf.mxu0
      %v628 = vadd.f32 0.0, %v627
      %629 = vmatmul.bf16.gmra.mxu0 %v494
      %v630 = vpop.f32.mrf.mxu0
      %v631 = vadd.f32 0.0, %v630
      %v632 = vpop.f32.mrf.mxu0
      %v633 = vadd.f32 0.0, %v632
      %634 = vmatmul.bf16.gmra.mxu0 %v497
      %v635 = vpop.f32.mrf.mxu0
      %v636 = vadd.f32 0.0, %v635
      %v637 = vpop.f32.mrf.mxu0
      %v638 = vadd.f32 0.0, %v637
      %639 = vmatmul.bf16.gmra.mxu0 %v500
      %v640 = vpop.f32.mrf.mxu0
      %v641 = vadd.f32 0.0, %v640
      %v642 = vpop.f32.mrf.mxu0
      %v643 = vadd.f32 0.0, %v642
      %644 = vmatmul.bf16.gmra.mxu0 %v503
      %v645 = vpop.f32.mrf.mxu0
      %v646 = vadd.f32 0.0, %v645
      %v647 = vpop.f32.mrf.mxu0
      %v648 = vadd.f32 0.0, %v647
      %649 = vmatmul.bf16.gmra.mxu0 %v506
      %v650 = vpop.f32.mrf.mxu0
      %v651 = vadd.f32 0.0, %v650
      %v652 = vpop.f32.mrf.mxu0
      %v653 = vadd.f32 0.0, %v652
      %654 = vmatmul.bf16.gmra.mxu0 %v509
      %v655 = vpop.f32.mrf.mxu0
      %v656 = vadd.f32 0.0, %v655
      %v657 = vpop.f32.mrf.mxu0
      %v658 = vadd.f32 0.0, %v657
      %659 = vmatmul.bf16.gmra.mxu0 %v512
      %v660 = vpop.f32.mrf.mxu0
      %v661 = vadd.f32 0.0, %v660
      %v662 = vpop.f32.mrf.mxu0
      %v663 = vadd.f32 0.0, %v662
      %664 = vmatmul.bf16.gmra.mxu0 %v515
      %v665 = vpop.f32.mrf.mxu0
      %v666 = vadd.f32 0.0, %v665
      %v667 = vpop.f32.mrf.mxu0
      %v668 = vadd.f32 0.0, %v667
      %669 = vmatmul.bf16.gmra.mxu0 %v518
      %v670 = vpop.f32.mrf.mxu0
      %v671 = vadd.f32 0.0, %v670
      %v672 = vpop.f32.mrf.mxu0
      %v673 = vadd.f32 0.0, %v672
      %674 = vmatmul.bf16.gmra.mxu0 %v521
      %v675 = vpop.f32.mrf.mxu0
      %v676 = vadd.f32 0.0, %v675
      %v677 = vpop.f32.mrf.mxu0
      %v678 = vadd.f32 0.0, %v677
      %679 = vmatmul.bf16.gmra.mxu0 %v524
      %v680 = vpop.f32.mrf.mxu0
      %v681 = vadd.f32 0.0, %v680
      %v682 = vpop.f32.mrf.mxu0
      %v683 = vadd.f32 0.0, %v682
      %684 = vmatmul.bf16.gmra.mxu0 %v527
      %v685 = vpop.f32.mrf.mxu0
      %v686 = vadd.f32 0.0, %v685
      %v687 = vpop.f32.mrf.mxu0
      %v688 = vadd.f32 0.0, %v687
      %689 = vmatmul.bf16.gmra.mxu0 %v530
      %v690 = vpop.f32.mrf.mxu0
      %v691 = vadd.f32 0.0, %v690
      %v692 = vpop.f32.mrf.mxu0
      %v693 = vadd.f32 0.0, %v692
      %694 = vmatmul.bf16.gmra.mxu0 %v533
      %v695 = vpop.f32.mrf.mxu0
      %v696 = vadd.f32 0.0, %v695
      %v697 = vpop.f32.mrf.mxu0
      %v698 = vadd.f32 0.0, %v697
      %699 = vmatmul.bf16.gmra.mxu0 %v536
      %v700 = vpop.f32.mrf.mxu0
      %v701 = vadd.f32 0.0, %v700
      %v702 = vpop.f32.mrf.mxu0
      %v703 = vadd.f32 0.0, %v702
      %704 = vmatmul.bf16.gmra.mxu0 %v539
      %v705 = vpop.f32.mrf.mxu0
      %v706 = vadd.f32 0.0, %v705
      %v707 = vpop.f32.mrf.mxu0
      %v708 = vadd.f32 0.0, %v707
      %709 = vdwg.mxu0
      %v710 = vtanh.pop %v551
      %v711 = vtanh.pop %v553
      %v712 = vtanh.pop %v556
      %v713 = vtanh.pop %v558
      %v714 = vtanh.pop %v561
      %v715 = vtanh.pop %v563
      %v716 = vtanh.pop %v566
      %v717 = vtanh.pop %v568
      %v718 = vtanh.pop %v571
      %v719 = vtanh.pop %v573
      %v720 = vtanh.pop %v576
      %v721 = vtanh.pop %v578
      %v722 = vtanh.pop %v581
      %v723 = vtanh.pop %v583
      %v724 = vtanh.pop %v586
      %v725 = vtanh.pop %v588
      %v726 = vtanh.pop %v591
      %v727 = vtanh.pop %v593
      %v728 = vtanh.pop %v596
      %v729 = vtanh.pop %v598
      %v730 = vtanh.pop %v601
      %v731 = vtanh.pop %v603
      %v732 = vtanh.pop %v606
      %v733 = vtanh.pop %v608
      %v734 = vtanh.pop %v611
      %v735 = vtanh.pop %v613
      %v736 = vtanh.pop %v616
      %v737 = vtanh.pop %v618
      %v738 = vtanh.pop %v621
      %v739 = vtanh.pop %v623
      %v740 = vtanh.pop %v626
      %v741 = vtanh.pop %v628
      %v742 = vtanh.pop %v631
      %v743 = vtanh.pop %v633
      %v744 = vtanh.pop %v636
      %v745 = vtanh.pop %v638
      %v746 = vtanh.pop %v641
      %v747 = vtanh.pop %v643
      %v748 = vtanh.pop %v646
      %v749 = vtanh.pop %v648
      %v750 = vtanh.pop %v651
      %v751 = vtanh.pop %v653
      %v752 = vtanh.pop %v656
      %v753 = vtanh.pop %v658
      %v754 = vtanh.pop %v661
      %v755 = vtanh.pop %v663
      %v756 = vtanh.pop %v666
      %v757 = vtanh.pop %v668
      %v758 = vtanh.pop %v671
      %v759 = vtanh.pop %v673
      %v760 = vtanh.pop %v676
      %v761 = vtanh.pop %v678
      %v762 = vtanh.pop %v681
      %v763 = vtanh.pop %v683
      %v764 = vtanh.pop %v686
      %v765 = vtanh.pop %v688
      %v766 = vtanh.pop %v691
      %v767 = vtanh.pop %v693
      %v768 = vtanh.pop %v696
      %v769 = vtanh.pop %v698
      %v770 = vtanh.pop %v701
      %v771 = vtanh.pop %v703
      %v772 = vtanh.pop %v706
      %v773 = vtanh.pop %v708
      %vm774 = vcmask 23552
      %775 = vst.msk [vmem:[%s201] sm:$0xff] %vm774, %v710
      %776 = vst.msk [vmem:[%s201 + $0x8] sm:$0xff] %vm774, %v711
      %777 = vst.msk [vmem:[%s201 + $0x10] sm:$0xff] %vm774, %v712
      %778 = vst.msk [vmem:[%s201 + $0x18] sm:$0xff] %vm774, %v713
      %779 = vst.msk [vmem:[%s201 + $0x20] sm:$0xff] %vm774, %v714
      %780 = vst.msk [vmem:[%s201 + $0x28] sm:$0xff] %vm774, %v715
      %781 = vst.msk [vmem:[%s201 + $0x30] sm:$0xff] %vm774, %v716
      %782 = vst.msk [vmem:[%s201 + $0x38] sm:$0xff] %vm774, %v717
      %783 = vst.msk [vmem:[%s201 + $0x40] sm:$0xff] %vm774, %v718
      %784 = vst.msk [vmem:[%s201 + $0x48] sm:$0xff] %vm774, %v719
      %785 = vst.msk [vmem:[%s201 + $0x50] sm:$0xff] %vm774, %v720
      %786 = vst.msk [vmem:[%s201 + $0x58] sm:$0xff] %vm774, %v721
      %787 = vst.msk [vmem:[%s201 + $0x60] sm:$0xff] %vm774, %v722
      %788 = vst.msk [vmem:[%s201 + $0x68] sm:$0xff] %vm774, %v723
      %789 = vst.msk [vmem:[%s201 + $0x70] sm:$0xff] %vm774, %v724
      %790 = vst.msk [vmem:[%s201 + $0x78] sm:$0xff] %vm774, %v725
      %791 = vst.msk [vmem:[%s201 + $0x80] sm:$0xff] %vm774, %v726
      %792 = vst.msk [vmem:[%s201 + $0x88] sm:$0xff] %vm774, %v727
      %793 = vst.msk [vmem:[%s201 + $0x90] sm:$0xff] %vm774, %v728
      %794 = vst.msk [vmem:[%s201 + $0x98] sm:$0xff] %vm774, %v729
      %795 = vst.msk [vmem:[%s201 + $0xa0] sm:$0xff] %vm774, %v730
      %796 = vst.msk [vmem:[%s201 + $0xa8] sm:$0xff] %vm774, %v731
      %797 = vst.msk [vmem:[%s201 + $0xb0] sm:$0xff] %vm774, %v732
      %798 = vst.msk [vmem:[%s201 + $0xb8] sm:$0xff] %vm774, %v733
      %799 = vst.msk [vmem:[%s201 + $0xc0] sm:$0xff] %vm774, %v734
      %800 = vst.msk [vmem:[%s201 + $0xc8] sm:$0xff] %vm774, %v735
      %801 = vst.msk [vmem:[%s201 + $0xd0] sm:$0xff] %vm774, %v736
      %802 = vst.msk [vmem:[%s201 + $0xd8] sm:$0xff] %vm774, %v737
      %803 = vst.msk [vmem:[%s201 + $0xe0] sm:$0xff] %vm774, %v738
      %804 = vst.msk [vmem:[%s201 + $0xe8] sm:$0xff] %vm774, %v739
      %805 = vst.msk [vmem:[%s201 + $0xf0] sm:$0xff] %vm774, %v740
      %806 = vst.msk [vmem:[%s201 + $0xf8] sm:$0xff] %vm774, %v741
      %807 = vst.msk [vmem:[%s201 + $0x100] sm:$0xff] %vm774, %v742
      %808 = vst.msk [vmem:[%s201 + $0x108] sm:$0xff] %vm774, %v743
      %809 = vst.msk [vmem:[%s201 + $0x110] sm:$0xff] %vm774, %v744
      %810 = vst.msk [vmem:[%s201 + $0x118] sm:$0xff] %vm774, %v745
      %811 = vst.msk [vmem:[%s201 + $0x120] sm:$0xff] %vm774, %v746
      %812 = vst.msk [vmem:[%s201 + $0x128] sm:$0xff] %vm774, %v747
      %813 = vst.msk [vmem:[%s201 + $0x130] sm:$0xff] %vm774, %v748
      %814 = vst.msk [vmem:[%s201 + $0x138] sm:$0xff] %vm774, %v749
      %815 = vst.msk [vmem:[%s201 + $0x140] sm:$0xff] %vm774, %v750
      %816 = vst.msk [vmem:[%s201 + $0x148] sm:$0xff] %vm774, %v751
      %817 = vst.msk [vmem:[%s201 + $0x150] sm:$0xff] %vm774, %v752
      %818 = vst.msk [vmem:[%s201 + $0x158] sm:$0xff] %vm774, %v753
      %819 = vst.msk [vmem:[%s201 + $0x160] sm:$0xff] %vm774, %v754
      %820 = vst.msk [vmem:[%s201 + $0x168] sm:$0xff] %vm774, %v755
      %821 = vst.msk [vmem:[%s201 + $0x170] sm:$0xff] %vm774, %v756
      %822 = vst.msk [vmem:[%s201 + $0x178] sm:$0xff] %vm774, %v757
      %823 = vst.msk [vmem:[%s201 + $0x180] sm:$0xff] %vm774, %v758
      %824 = vst.msk [vmem:[%s201 + $0x188] sm:$0xff] %vm774, %v759
      %825 = vst.msk [vmem:[%s201 + $0x190] sm:$0xff] %vm774, %v760
      %826 = vst.msk [vmem:[%s201 + $0x198] sm:$0xff] %vm774, %v761
      %827 = vst.msk [vmem:[%s201 + $0x1a0] sm:$0xff] %vm774, %v762
      %828 = vst.msk [vmem:[%s201 + $0x1a8] sm:$0xff] %vm774, %v763
      %829 = vst.msk [vmem:[%s201 + $0x1b0] sm:$0xff] %vm774, %v764
      %830 = vst.msk [vmem:[%s201 + $0x1b8] sm:$0xff] %vm774, %v765
      %831 = vst.msk [vmem:[%s201 + $0x1c0] sm:$0xff] %vm774, %v766
      %832 = vst.msk [vmem:[%s201 + $0x1c8] sm:$0xff] %vm774, %v767
      %833 = vst.msk [vmem:[%s201 + $0x1d0] sm:$0xff] %vm774, %v768
      %834 = vst.msk [vmem:[%s201 + $0x1d8] sm:$0xff] %vm774, %v769
      %835 = vst.msk [vmem:[%s201 + $0x1e0] sm:$0xff] %vm774, %v770
      %836 = vst.msk [vmem:[%s201 + $0x1e8] sm:$0xff] %vm774, %v771
      %837 = vst.msk [vmem:[%s201 + $0x1f0] sm:$0xff] %vm774, %v772
      %838 = vst.msk [vmem:[%s201 + $0x1f8] sm:$0xff] %vm774, %v773
      %s839 = smul.u32 64, %s18
      %p840 = scmp.lt.s32.totalorder %s17, 3
      %s841 = scalar_select %p840, %s17, 3
      %p842 = scmp.lt.s32.totalorder %s839, 1023
      %s843 = scalar_select %p842, %s839, 1023
      %s844 = smul.addr %s841, 1024
      %s845 = sadd.s32 %s843, %s844
      %s846 = smul.addr %s845, 8
      %s847 = scalar_lea.vmem %s2, %s846
      // Predicated region
      $region29: #{generator_forward.21} parent=27 // pred_check
        %p848 = pneg %p99
      $region30: #{generator_forward.21} parent=27 // pred_check_branch
        %850 = sbr.rel (%p848) target = $region32
      $region31: #{generator_forward.21} parent=27 // pred_region
        %s851 = smul.u32 64, %s18
      $region32: #{generator_forward.21} parent=27 // pred_fallthru
        _
    $region28: #{generator_forward.21} parent=5 // pred_fallthru
      _
    %p852 = scmp.le.s32.totalorder 2, %s8
    // Predicated region
    $region33: #{generator_forward.21} parent=5 // pred_check
      %p853 = pneg %p852
    $region34: #{generator_forward.21} parent=5 // pred_check_branch
      %855 = sbr.rel (%p853) target = $region36
    $region35: #{generator_forward.21} parent=5 // pred_region
      %s856 = ssub.s32 %s8, 2
      // Predicated region
      $region37: #{generator_forward.21} parent=35 // pred_check
        %p857 = pneg %p105
      $region38: #{generator_forward.21} parent=35 // pred_check_branch
        %859 = sbr.rel (%p857) target = $region40
      $region39: #{generator_forward.21} parent=35 // pred_region
        %s860 = smul.u32 64, %s20
        %p861 = scmp.lt.s32.totalorder %s19, 3
        %s862 = scalar_select %p861, %s19, 3
        %p863 = scmp.lt.s32.totalorder %s860, 1023
        %s864 = scalar_select %p863, %s860, 1023
        %s865 = smul.addr %s862, 1024
        %s866 = sadd.s32 %s864, %s865
        %s867 = smul.addr %s866, 8
        %s868 = scalar_lea.vmem %s2, %s867
      $region40: #{generator_forward.21} parent=35 // pred_fallthru
        _
    $region36: #{generator_forward.21} parent=5 // pred_fallthru
      _
  $region6: #{generator_forward.21} parent=0 // loop_footer
    %s12 = sadd.s32 1, %s8
  $region7: #{generator_forward.21} parent=0 // loop_footer_branch
    %7 = sbr.rel target = $region3
  $region8: #{generator_forward.21} parent=0 // loop_exit
    _

</llo_original>
